<compile_context>
chip_gen: v6e
topology: v6e:2x2x1
jax: 0.10.0
libtpu: 0.0.40
codegen_flags: <defaults>
</compile_context>

<pallas_src>
import functools

import jax
import jax.numpy as jnp
from jax.experimental import pallas as pl
from jax.experimental.pallas import tpu as pltpu


# ---------------------------------------------------------------------------
# Kernel
# ---------------------------------------------------------------------------
def _conv3x3_from_pad(pad_ref, w_ref, H, W):
    """3x3 conv as 9 accumulating K=Cin MXU matmuls read from a zero-haloed scratch.

    pad_ref: (H+2, W+2, Cin) bf16 VMEM scratch (border already zeroed).
    w_ref:   (9, Cin, Cout)  bf16 weights (BN scale pre-folded into the columns).
    Returns (H*W, Cout) f32.
    """
    Cin = pad_ref.shape[-1]
    Cout = w_ref.shape[-1]
    acc = jnp.zeros((H * W, Cout), jnp.float32)
    for k in range(9):
        ky, kx = divmod(k, 3)
        slab = pad_ref[ky:ky + H, kx:kx + W, :].reshape(H * W, Cin)
        acc = acc + jnp.dot(slab, w_ref[k], preferred_element_type=jnp.float32)
    return acc


def _basic_block_kernel(x_ref, w1_ref, b1_ref, w2_ref, b2_ref,
                        relu_ref, out_ref, xpad_ref, hpad_ref, *, H, W):
    """One batch element of a fused BasicBlock (stride=1, identity shortcut)."""
    C = x_ref.shape[1]
    Cmid = w1_ref.shape[-1]

    # Lane-dense load: block is (1, C, H*W) with H*W on the lane axis.
    x_cm = x_ref[0]                                           # (C, H*W) bf16

    # ---- conv1 halo: zero ONLY the 1-pixel border, then overwrite the interior ----------
    xpad_ref[0:1, :, :] = jnp.zeros((1, W + 2, C), jnp.bfloat16)
    xpad_ref[H + 1:H + 2, :, :] = jnp.zeros((1, W + 2, C), jnp.bfloat16)
    xpad_ref[:, 0:1, :] = jnp.zeros((H + 2, 1, C), jnp.bfloat16)
    xpad_ref[:, W + 1:W + 2, :] = jnp.zeros((H + 2, 1, C), jnp.bfloat16)
    xpad_ref[1:H + 1, 1:W + 1, :] = x_cm.T.reshape(H, W, C).astype(jnp.bfloat16)

    # ---- conv1 (BN scale folded into w1) + bias + ReLU -----------------------------------
    h = _conv3x3_from_pad(xpad_ref, w1_ref, H, W)             # (H*W, Cmid) f32
    h = jnp.maximum(h + b1_ref[...], 0.0)

    # ---- conv2 halo: intermediate activation never leaves VMEM ---------------------------
    hpad_ref[0:1, :, :] = jnp.zeros((1, W + 2, Cmid), jnp.bfloat16)
    hpad_ref[H + 1:H + 2, :, :] = jnp.zeros((1, W + 2, Cmid), jnp.bfloat16)
    hpad_ref[:, 0:1, :] = jnp.zeros((H + 2, 1, Cmid), jnp.bfloat16)
    hpad_ref[:, W + 1:W + 2, :] = jnp.zeros((H + 2, 1, Cmid), jnp.bfloat16)
    hpad_ref[1:H + 1, 1:W + 1, :] = h.reshape(H, W, Cmid).astype(jnp.bfloat16)

    # ---- conv2 (BN scale folded into w2) + bias + residual + ReLU ------------------------
    y = _conv3x3_from_pad(hpad_ref, w2_ref, H, W) + b2_ref[...]      # (H*W, Cout) f32
    y_cm = y.T + x_cm.astype(jnp.float32)                     # residual in C-major
    out_ref[0] = y_cm.astype(out_ref.dtype)                   # pre-relu skip tensor
    relu_ref[0] = jnp.maximum(y_cm, 0.0).astype(relu_ref.dtype)


# ---------------------------------------------------------------------------
# pallas_call wrapper (NCHW in / NCHW out — only free reshapes in the wrapper)
# ---------------------------------------------------------------------------
def basic_block_forward(x_nchw, params):
    """Fused BasicBlock. Returns (relu(out), out) in NCHW, matching the PyTorch module."""
    N, C, H, W = x_nchw.shape
    Cmid = params["w1"].shape[-1]
    Cout = params["w2"].shape[-1]
    assert Cout == C, "identity shortcut requires inplanes == planes (stride=1 path)"
    HW = H * W

    x_flat = x_nchw.reshape(N, C, HW)                         # free reshape, no pad/transpose
    kern = functools.partial(_basic_block_kernel, H=H, W=W)

    relu_flat, out_flat = pl.pallas_call(
        kern,
        out_shape=(
            jax.ShapeDtypeStruct((N, Cout, HW), x_nchw.dtype),        # relu(out)
            jax.ShapeDtypeStruct((N, Cout, HW), x_nchw.dtype),        # out (pre-relu skip)
        ),
        grid=(N,),
        in_specs=[
            pl.BlockSpec((1, C, HW), lambda n: (n, 0, 0)),            # lane-dense activation
            pl.BlockSpec((9, C, Cmid), lambda n: (0, 0, 0)),          # weights: constant index
            pl.BlockSpec((1, Cmid), lambda n: (0, 0)),
            pl.BlockSpec((9, Cmid, Cout), lambda n: (0, 0, 0)),
            pl.BlockSpec((1, Cout), lambda n: (0, 0)),
        ],
        out_specs=[
            pl.BlockSpec((1, Cout, HW), lambda n: (n, 0, 0)),
            pl.BlockSpec((1, Cout, HW), lambda n: (n, 0, 0)),
        ],
        scratch_shapes=[
            pltpu.VMEM((H + 2, W + 2, C), jnp.bfloat16),              # halo-padded input
            pltpu.VMEM((H + 2, W + 2, Cmid), jnp.bfloat16),           # halo-padded intermediate
        ],
        compiler_params=pltpu.CompilerParams(
            dimension_semantics=("parallel",),                        # batch across v7x cores
        ),
    )(x_flat, params["w1"], params["b1"], params["w2"], params["b2"])

    return relu_flat.reshape(N, Cout, H, W), out_flat.reshape(N, Cout, H, W)


# ---------------------------------------------------------------------------
# Parameter init: BN folded into the weights ONCE here (inference semantics).
# Produces kernel-ready tensors: bf16 (9, Cin, Cout) weights with folded scale,
# f32 (1, Cout) biases — no per-forward reshape/astype pass.
# ---------------------------------------------------------------------------
def init_params(key, inplanes, planes, eps=1e-5):
    ks = jax.random.split(key, 10)
    w1 = jax.random.normal(ks[0], (3, 3, inplanes, planes), jnp.float32) * 0.1   # HWIO
    w2 = jax.random.normal(ks[1], (3, 3, planes, planes), jnp.float32) * 0.1
    gamma1 = 1.0 + 0.1 * jax.random.normal(ks[2], (planes,), jnp.float32)
    beta1 = 0.1 * jax.random.normal(ks[3], (planes,), jnp.float32)
    mean1 = 0.1 * jax.random.normal(ks[4], (planes,), jnp.float32)
    var1 = jnp.abs(jax.random.normal(ks[5], (planes,), jnp.float32)) + 0.5
    gamma2 = 1.0 + 0.1 * jax.random.normal(ks[6], (planes,), jnp.float32)
    beta2 = 0.1 * jax.random.normal(ks[7], (planes,), jnp.float32)
    mean2 = 0.1 * jax.random.normal(ks[8], (planes,), jnp.float32)
    var2 = jnp.abs(jax.random.normal(ks[9], (planes,), jnp.float32)) + 0.5
    s1 = gamma1 / jnp.sqrt(var1 + eps)
    b1 = beta1 - mean1 * s1
    s2 = gamma2 / jnp.sqrt(var2 + eps)
    b2 = beta2 - mean2 * s2
    # Fold BN scale into the output-channel columns, cast to bf16, reshape (ky,kx,cin)->rows.
    w1k = (w1 * s1).reshape(9, inplanes, planes).astype(jnp.bfloat16)
    w2k = (w2 * s2).reshape(9, planes, planes).astype(jnp.bfloat16)
    return {
        "w1": w1k, "b1": b1.reshape(1, planes).astype(jnp.float32),
        "w2": w2k, "b2": b2.reshape(1, planes).astype(jnp.float32),
    }


# ---------------------------------------------------------------------------
# Pure-JAX reference (same bf16-in / f32-accumulate numerics, same folded weights)
# ---------------------------------------------------------------------------
def reference_forward(x_nchw, params):
    N, C, H, W = x_nchw.shape
    Cmid = params["w1"].shape[-1]
    Cout = params["w2"].shape[-1]
    x = jnp.transpose(x_nchw, (0, 2, 3, 1)).astype(jnp.bfloat16)      # NHWC bf16
    w1 = params["w1"].reshape(3, 3, C, Cmid)                          # bf16 HWIO, scale folded
    w2 = params["w2"].reshape(3, 3, Cmid, Cout)
    dn = jax.lax.conv_dimension_numbers(x.shape, w1.shape, ("NHWC", "HWIO", "NHWC"))
    h = jax.lax.conv_general_dilated(
        x, w1, (1, 1), "SAME", dimension_numbers=dn, preferred_element_type=jnp.float32)
    h = jnp.maximum(h + params["b1"].reshape(1, 1, 1, Cmid), 0.0).astype(jnp.bfloat16)
    y = jax.lax.conv_general_dilated(
        h, w2, (1, 1), "SAME", dimension_numbers=dn, preferred_element_type=jnp.float32)
    out = y + params["b2"].reshape(1, 1, 1, Cout) + x.astype(jnp.float32)
    relu = jnp.maximum(out, 0.0)
    out_nchw = jnp.transpose(out, (0, 3, 1, 2)).astype(x_nchw.dtype)
    relu_nchw = jnp.transpose(relu, (0, 3, 1, 2)).astype(x_nchw.dtype)
    return relu_nchw, out_nchw


if __name__ == "__main__":
    key = jax.random.PRNGKey(0)
    kx, kp = jax.random.split(key)

    # layer2-style identity BasicBlock: inplanes = planes = 128, stride = 1.
    # N=2 keeps the "parallel" batch axis even (both v7x TensorCores busy).
    N, C, H, W = 2, 128, 16, 16
    x_nchw = jax.random.normal(kx, (N, C, H, W), jnp.float32).astype(jnp.bfloat16)
    params = init_params(kp, C, C)

    relu_out, out = jax.jit(basic_block_forward)(x_nchw, params)
    relu_out = jax.block_until_ready(relu_out)
    out = jax.block_until_ready(out)

    ref_relu, ref_out = reference_forward(x_nchw, params)

    assert relu_out.shape == (N, C, H, W) and out.shape == (N, C, H, W)
    o = out.astype(jnp.float32)
    r = ref_out.astype(jnp.float32)
    max_d = float(jnp.max(jnp.abs(o - r)))
    # bf16 matmul inputs + bf16 activation storage with f32 accumulation in both paths;
    # accumulation-order and bf16-rounding differences stay within this tolerance.
    assert jnp.allclose(o, r, atol=1e-1, rtol=5e-2), f"max|diff|={max_d}"
    assert jnp.allclose(relu_out.astype(jnp.float32), ref_relu.astype(jnp.float32),
                        atol=1e-1, rtol=5e-2)

    print("KERNEL_OK")
</pallas_src>

<mosaic_0001>
module attributes {stable_mosaic.version = 11 : i64} {
  func.func @_basic_block_kernel(%arg0: i32, %arg1: memref<1x128x256xbf16, #tpu.memory_space<vmem>>, %arg2: memref<9x128x128xbf16, #tpu.memory_space<vmem>>, %arg3: memref<1x128xf32, #tpu.memory_space<vmem>>, %arg4: memref<9x128x128xbf16, #tpu.memory_space<vmem>>, %arg5: memref<1x128xf32, #tpu.memory_space<vmem>>, %arg6: memref<1x128x256xbf16, #tpu.memory_space<vmem>>, %arg7: memref<1x128x256xbf16, #tpu.memory_space<vmem>>, %arg8: memref<18x18x128xbf16, #tpu.memory_space<vmem>>, %arg9: memref<18x18x128xbf16, #tpu.memory_space<vmem>>) attributes {dimension_semantics = [#tpu.dimension_semantics<parallel>], iteration_bounds = array<i64: 2>, scalar_prefetch = 0 : i64, scratch_operands = 2 : i64, tpu.core_type = #tpu.core_type<tc>, window_params = [{transform_indices = @transform_0, window_bounds = array<i64: 1, 128, 256>}, {pipeline_mode = #tpu.pipeline_mode<synchronous>, transform_indices = @transform_1, window_bounds = array<i64: 9, 128, 128>}, {pipeline_mode = #tpu.pipeline_mode<synchronous>, transform_indices = @transform_2, window_bounds = array<i64: 1, 128>}, {pipeline_mode = #tpu.pipeline_mode<synchronous>, transform_indices = @transform_3, window_bounds = array<i64: 9, 128, 128>}, {pipeline_mode = #tpu.pipeline_mode<synchronous>, transform_indices = @transform_4, window_bounds = array<i64: 1, 128>}, {transform_indices = @transform_5, window_bounds = array<i64: 1, 128, 256>}, {transform_indices = @transform_6, window_bounds = array<i64: 1, 128, 256>}]} {
    %c0 = arith.constant 0 : index
    %c0_0 = arith.constant 0 : index
    %c0_1 = arith.constant 0 : index
    %0 = vector.load %arg1[%c0, %c0_0, %c0_1] : memref<1x128x256xbf16, #tpu.memory_space<vmem>>, vector<1x128x256xbf16>
    %1 = vector.shape_cast %0 : vector<1x128x256xbf16> to vector<128x256xbf16>
    %cst = arith.constant 0.000000e+00 : bf16
    %2 = vector.broadcast %cst : bf16 to vector<1x18x128xbf16>
    %c0_2 = arith.constant 0 : index
    %c0_3 = arith.constant 0 : index
    %c0_4 = arith.constant 0 : index
    %3 = vector.load %arg8[%c0_2, %c0_3, %c0_4] : memref<18x18x128xbf16, #tpu.memory_space<vmem>>, vector<1x18x128xbf16>
    tpu.vector_store %arg8[%c0_2, %c0_3, %c0_4], %2 {strides = array<i32>} : memref<18x18x128xbf16, #tpu.memory_space<vmem>>, vector<1x18x128xbf16>,
    %cst_5 = arith.constant 0.000000e+00 : bf16
    %4 = vector.broadcast %cst_5 : bf16 to vector<1x18x128xbf16>
    %c17 = arith.constant 17 : index
    %c0_6 = arith.constant 0 : index
    %c0_7 = arith.constant 0 : index
    %5 = vector.load %arg8[%c17, %c0_6, %c0_7] : memref<18x18x128xbf16, #tpu.memory_space<vmem>>, vector<1x18x128xbf16>
    tpu.vector_store %arg8[%c17, %c0_6, %c0_7], %4 {strides = array<i32>} : memref<18x18x128xbf16, #tpu.memory_space<vmem>>, vector<1x18x128xbf16>,
    %cst_8 = arith.constant 0.000000e+00 : bf16
    %6 = vector.broadcast %cst_8 : bf16 to vector<18x1x128xbf16>
    %c0_9 = arith.constant 0 : index
    %c0_10 = arith.constant 0 : index
    %c0_11 = arith.constant 0 : index
    %7 = vector.load %arg8[%c0_9, %c0_10, %c0_11] : memref<18x18x128xbf16, #tpu.memory_space<vmem>>, vector<18x1x128xbf16>
    tpu.vector_store %arg8[%c0_9, %c0_10, %c0_11], %6 {strides = array<i32>} : memref<18x18x128xbf16, #tpu.memory_space<vmem>>, vector<18x1x128xbf16>,
    %cst_12 = arith.constant 0.000000e+00 : bf16
    %8 = vector.broadcast %cst_12 : bf16 to vector<18x1x128xbf16>
    %c0_13 = arith.constant 0 : index
    %c17_14 = arith.constant 17 : index
    %c0_15 = arith.constant 0 : index
    %9 = vector.load %arg8[%c0_13, %c17_14, %c0_15] : memref<18x18x128xbf16, #tpu.memory_space<vmem>>, vector<18x1x128xbf16>
    tpu.vector_store %arg8[%c0_13, %c17_14, %c0_15], %8 {strides = array<i32>} : memref<18x18x128xbf16, #tpu.memory_space<vmem>>, vector<18x1x128xbf16>,
    %10 = tpu.transpose %1, [1, 0] : vector<128x256xbf16> -> vector<256x128xbf16>
    %11 = vector.shape_cast %10 : vector<256x128xbf16> to vector<16x16x128xbf16>
    %c1 = arith.constant 1 : index
    %c1_16 = arith.constant 1 : index
    %c0_17 = arith.constant 0 : index
    %12 = vector.load %arg8[%c1, %c1_16, %c0_17] : memref<18x18x128xbf16, #tpu.memory_space<vmem>>, vector<16x16x128xbf16>
    tpu.vector_store %arg8[%c1, %c1_16, %c0_17], %11 {strides = array<i32>} : memref<18x18x128xbf16, #tpu.memory_space<vmem>>, vector<16x16x128xbf16>,
    %cst_18 = arith.constant 0.000000e+00 : f32
    %13 = vector.broadcast %cst_18 : f32 to vector<256x128xf32>
    %c0_19 = arith.constant 0 : index
    %c0_20 = arith.constant 0 : index
    %c0_21 = arith.constant 0 : index
    %14 = vector.load %arg8[%c0_19, %c0_20, %c0_21] : memref<18x18x128xbf16, #tpu.memory_space<vmem>>, vector<16x16x128xbf16>
    %15 = vector.shape_cast %14 : vector<16x16x128xbf16> to vector<256x128xbf16>
    %c0_22 = arith.constant 0 : index
    %c0_23 = arith.constant 0 : index
    %c0_24 = arith.constant 0 : index
    %16 = vector.load %arg2[%c0_22, %c0_23, %c0_24] : memref<9x128x128xbf16, #tpu.memory_space<vmem>>, vector<1x128x128xbf16>
    %17 = vector.shape_cast %16 : vector<1x128x128xbf16> to vector<128x128xbf16>
    %cst_25 = arith.constant dense<0.000000e+00> : vector<256x128xf32>
    %18 = tpu.matmul %15, %17, %cst_25 {dimension_numbers = #tpu.dot_dimension_numbers<[1], [0], [0], [1], [0, 0, 1, 1], [], []>} : vector<256x128xbf16>, vector<128x128xbf16>, vector<256x128xf32> -> vector<256x128xf32>
    %19 = arith.addf %13, %18 : vector<256x128xf32>
    %c0_26 = arith.constant 0 : index
    %c1_27 = arith.constant 1 : index
    %c0_28 = arith.constant 0 : index
    %20 = vector.load %arg8[%c0_26, %c1_27, %c0_28] : memref<18x18x128xbf16, #tpu.memory_space<vmem>>, vector<16x16x128xbf16>
    %21 = vector.shape_cast %20 : vector<16x16x128xbf16> to vector<256x128xbf16>
    %c1_29 = arith.constant 1 : index
    %c0_30 = arith.constant 0 : index
    %c0_31 = arith.constant 0 : index
    %22 = vector.load %arg2[%c1_29, %c0_30, %c0_31] : memref<9x128x128xbf16, #tpu.memory_space<vmem>>, vector<1x128x128xbf16>
    %23 = vector.shape_cast %22 : vector<1x128x128xbf16> to vector<128x128xbf16>
    %cst_32 = arith.constant dense<0.000000e+00> : vector<256x128xf32>
    %24 = tpu.matmul %21, %23, %cst_32 {dimension_numbers = #tpu.dot_dimension_numbers<[1], [0], [0], [1], [0, 0, 1, 1], [], []>} : vector<256x128xbf16>, vector<128x128xbf16>, vector<256x128xf32> -> vector<256x128xf32>
    %25 = arith.addf %19, %24 : vector<256x128xf32>
    %c0_33 = arith.constant 0 : index
    %c2 = arith.constant 2 : index
    %c0_34 = arith.constant 0 : index
    %26 = vector.load %arg8[%c0_33, %c2, %c0_34] : memref<18x18x128xbf16, #tpu.memory_space<vmem>>, vector<16x16x128xbf16>
    %27 = vector.shape_cast %26 : vector<16x16x128xbf16> to vector<256x128xbf16>
    %c2_35 = arith.constant 2 : index
    %c0_36 = arith.constant 0 : index
    %c0_37 = arith.constant 0 : index
    %28 = vector.load %arg2[%c2_35, %c0_36, %c0_37] : memref<9x128x128xbf16, #tpu.memory_space<vmem>>, vector<1x128x128xbf16>
    %29 = vector.shape_cast %28 : vector<1x128x128xbf16> to vector<128x128xbf16>
    %cst_38 = arith.constant dense<0.000000e+00> : vector<256x128xf32>
    %30 = tpu.matmul %27, %29, %cst_38 {dimension_numbers = #tpu.dot_dimension_numbers<[1], [0], [0], [1], [0, 0, 1, 1], [], []>} : vector<256x128xbf16>, vector<128x128xbf16>, vector<256x128xf32> -> vector<256x128xf32>
    %31 = arith.addf %25, %30 : vector<256x128xf32>
    %c1_39 = arith.constant 1 : index
    %c0_40 = arith.constant 0 : index
    %c0_41 = arith.constant 0 : index
    %32 = vector.load %arg8[%c1_39, %c0_40, %c0_41] : memref<18x18x128xbf16, #tpu.memory_space<vmem>>, vector<16x16x128xbf16>
    %33 = vector.shape_cast %32 : vector<16x16x128xbf16> to vector<256x128xbf16>
    %c3 = arith.constant 3 : index
    %c0_42 = arith.constant 0 : index
    %c0_43 = arith.constant 0 : index
    %34 = vector.load %arg2[%c3, %c0_42, %c0_43] : memref<9x128x128xbf16, #tpu.memory_space<vmem>>, vector<1x128x128xbf16>
    %35 = vector.shape_cast %34 : vector<1x128x128xbf16> to vector<128x128xbf16>
    %cst_44 = arith.constant dense<0.000000e+00> : vector<256x128xf32>
    %36 = tpu.matmul %33, %35, %cst_44 {dimension_numbers = #tpu.dot_dimension_numbers<[1], [0], [0], [1], [0, 0, 1, 1], [], []>} : vector<256x128xbf16>, vector<128x128xbf16>, vector<256x128xf32> -> vector<256x128xf32>
    %37 = arith.addf %31, %36 : vector<256x128xf32>
    %c1_45 = arith.constant 1 : index
    %c1_46 = arith.constant 1 : index
    %c0_47 = arith.constant 0 : index
    %38 = vector.load %arg8[%c1_45, %c1_46, %c0_47] : memref<18x18x128xbf16, #tpu.memory_space<vmem>>, vector<16x16x128xbf16>
    %39 = vector.shape_cast %38 : vector<16x16x128xbf16> to vector<256x128xbf16>
    %c4 = arith.constant 4 : index
    %c0_48 = arith.constant 0 : index
    %c0_49 = arith.constant 0 : index
    %40 = vector.load %arg2[%c4, %c0_48, %c0_49] : memref<9x128x128xbf16, #tpu.memory_space<vmem>>, vector<1x128x128xbf16>
    %41 = vector.shape_cast %40 : vector<1x128x128xbf16> to vector<128x128xbf16>
    %cst_50 = arith.constant dense<0.000000e+00> : vector<256x128xf32>
    %42 = tpu.matmul %39, %41, %cst_50 {dimension_numbers = #tpu.dot_dimension_numbers<[1], [0], [0], [1], [0, 0, 1, 1], [], []>} : vector<256x128xbf16>, vector<128x128xbf16>, vector<256x128xf32> -> vector<256x128xf32>
    %43 = arith.addf %37, %42 : vector<256x128xf32>
    %c1_51 = arith.constant 1 : index
    %c2_52 = arith.constant 2 : index
    %c0_53 = arith.constant 0 : index
    %44 = vector.load %arg8[%c1_51, %c2_52, %c0_53] : memref<18x18x128xbf16, #tpu.memory_space<vmem>>, vector<16x16x128xbf16>
    %45 = vector.shape_cast %44 : vector<16x16x128xbf16> to vector<256x128xbf16>
    %c5 = arith.constant 5 : index
    %c0_54 = arith.constant 0 : index
    %c0_55 = arith.constant 0 : index
    %46 = vector.load %arg2[%c5, %c0_54, %c0_55] : memref<9x128x128xbf16, #tpu.memory_space<vmem>>, vector<1x128x128xbf16>
    %47 = vector.shape_cast %46 : vector<1x128x128xbf16> to vector<128x128xbf16>
    %cst_56 = arith.constant dense<0.000000e+00> : vector<256x128xf32>
    %48 = tpu.matmul %45, %47, %cst_56 {dimension_numbers = #tpu.dot_dimension_numbers<[1], [0], [0], [1], [0, 0, 1, 1], [], []>} : vector<256x128xbf16>, vector<128x128xbf16>, vector<256x128xf32> -> vector<256x128xf32>
    %49 = arith.addf %43, %48 : vector<256x128xf32>
    %c2_57 = arith.constant 2 : index
    %c0_58 = arith.constant 0 : index
    %c0_59 = arith.constant 0 : index
    %50 = vector.load %arg8[%c2_57, %c0_58, %c0_59] : memref<18x18x128xbf16, #tpu.memory_space<vmem>>, vector<16x16x128xbf16>
    %51 = vector.shape_cast %50 : vector<16x16x128xbf16> to vector<256x128xbf16>
    %c6 = arith.constant 6 : index
    %c0_60 = arith.constant 0 : index
    %c0_61 = arith.constant 0 : index
    %52 = vector.load %arg2[%c6, %c0_60, %c0_61] : memref<9x128x128xbf16, #tpu.memory_space<vmem>>, vector<1x128x128xbf16>
    %53 = vector.shape_cast %52 : vector<1x128x128xbf16> to vector<128x128xbf16>
    %cst_62 = arith.constant dense<0.000000e+00> : vector<256x128xf32>
    %54 = tpu.matmul %51, %53, %cst_62 {dimension_numbers = #tpu.dot_dimension_numbers<[1], [0], [0], [1], [0, 0, 1, 1], [], []>} : vector<256x128xbf16>, vector<128x128xbf16>, vector<256x128xf32> -> vector<256x128xf32>
    %55 = arith.addf %49, %54 : vector<256x128xf32>
    %c2_63 = arith.constant 2 : index
    %c1_64 = arith.constant 1 : index
    %c0_65 = arith.constant 0 : index
    %56 = vector.load %arg8[%c2_63, %c1_64, %c0_65] : memref<18x18x128xbf16, #tpu.memory_space<vmem>>, vector<16x16x128xbf16>
    %57 = vector.shape_cast %56 : vector<16x16x128xbf16> to vector<256x128xbf16>
    %c7 = arith.constant 7 : index
    %c0_66 = arith.constant 0 : index
    %c0_67 = arith.constant 0 : index
    %58 = vector.load %arg2[%c7, %c0_66, %c0_67] : memref<9x128x128xbf16, #tpu.memory_space<vmem>>, vector<1x128x128xbf16>
    %59 = vector.shape_cast %58 : vector<1x128x128xbf16> to vector<128x128xbf16>
    %cst_68 = arith.constant dense<0.000000e+00> : vector<256x128xf32>
    %60 = tpu.matmul %57, %59, %cst_68 {dimension_numbers = #tpu.dot_dimension_numbers<[1], [0], [0], [1], [0, 0, 1, 1], [], []>} : vector<256x128xbf16>, vector<128x128xbf16>, vector<256x128xf32> -> vector<256x128xf32>
    %61 = arith.addf %55, %60 : vector<256x128xf32>
    %c2_69 = arith.constant 2 : index
    %c2_70 = arith.constant 2 : index
    %c0_71 = arith.constant 0 : index
    %62 = vector.load %arg8[%c2_69, %c2_70, %c0_71] : memref<18x18x128xbf16, #tpu.memory_space<vmem>>, vector<16x16x128xbf16>
    %63 = vector.shape_cast %62 : vector<16x16x128xbf16> to vector<256x128xbf16>
    %c8 = arith.constant 8 : index
    %c0_72 = arith.constant 0 : index
    %c0_73 = arith.constant 0 : index
    %64 = vector.load %arg2[%c8, %c0_72, %c0_73] : memref<9x128x128xbf16, #tpu.memory_space<vmem>>, vector<1x128x128xbf16>
    %65 = vector.shape_cast %64 : vector<1x128x128xbf16> to vector<128x128xbf16>
    %cst_74 = arith.constant dense<0.000000e+00> : vector<256x128xf32>
    %66 = tpu.matmul %63, %65, %cst_74 {dimension_numbers = #tpu.dot_dimension_numbers<[1], [0], [0], [1], [0, 0, 1, 1], [], []>} : vector<256x128xbf16>, vector<128x128xbf16>, vector<256x128xf32> -> vector<256x128xf32>
    %67 = arith.addf %61, %66 : vector<256x128xf32>
    %c0_75 = arith.constant 0 : index
    %c0_76 = arith.constant 0 : index
    %68 = vector.load %arg3[%c0_75, %c0_76] : memref<1x128xf32, #tpu.memory_space<vmem>>, vector<1x128xf32>
    %69 = vector.broadcast %68 : vector<1x128xf32> to vector<256x128xf32>
    %70 = arith.addf %67, %69 : vector<256x128xf32>
    %cst_77 = arith.constant 0.000000e+00 : f32
    %71 = vector.broadcast %cst_77 : f32 to vector<256x128xf32>
    %72 = arith.maximumf %70, %71 : vector<256x128xf32>
    %cst_78 = arith.constant 0.000000e+00 : bf16
    %73 = vector.broadcast %cst_78 : bf16 to vector<1x18x128xbf16>
    %c0_79 = arith.constant 0 : index
    %c0_80 = arith.constant 0 : index
    %c0_81 = arith.constant 0 : index
    %74 = vector.load %arg9[%c0_79, %c0_80, %c0_81] : memref<18x18x128xbf16, #tpu.memory_space<vmem>>, vector<1x18x128xbf16>
    tpu.vector_store %arg9[%c0_79, %c0_80, %c0_81], %73 {strides = array<i32>} : memref<18x18x128xbf16, #tpu.memory_space<vmem>>, vector<1x18x128xbf16>,
    %cst_82 = arith.constant 0.000000e+00 : bf16
    %75 = vector.broadcast %cst_82 : bf16 to vector<1x18x128xbf16>
    %c17_83 = arith.constant 17 : index
    %c0_84 = arith.constant 0 : index
    %c0_85 = arith.constant 0 : index
    %76 = vector.load %arg9[%c17_83, %c0_84, %c0_85] : memref<18x18x128xbf16, #tpu.memory_space<vmem>>, vector<1x18x128xbf16>
    tpu.vector_store %arg9[%c17_83, %c0_84, %c0_85], %75 {strides = array<i32>} : memref<18x18x128xbf16, #tpu.memory_space<vmem>>, vector<1x18x128xbf16>,
    %cst_86 = arith.constant 0.000000e+00 : bf16
    %77 = vector.broadcast %cst_86 : bf16 to vector<18x1x128xbf16>
    %c0_87 = arith.constant 0 : index
    %c0_88 = arith.constant 0 : index
    %c0_89 = arith.constant 0 : index
    %78 = vector.load %arg9[%c0_87, %c0_88, %c0_89] : memref<18x18x128xbf16, #tpu.memory_space<vmem>>, vector<18x1x128xbf16>
    tpu.vector_store %arg9[%c0_87, %c0_88, %c0_89], %77 {strides = array<i32>} : memref<18x18x128xbf16, #tpu.memory_space<vmem>>, vector<18x1x128xbf16>,
    %cst_90 = arith.constant 0.000000e+00 : bf16
    %79 = vector.broadcast %cst_90 : bf16 to vector<18x1x128xbf16>
    %c0_91 = arith.constant 0 : index
    %c17_92 = arith.constant 17 : index
    %c0_93 = arith.constant 0 : index
    %80 = vector.load %arg9[%c0_91, %c17_92, %c0_93] : memref<18x18x128xbf16, #tpu.memory_space<vmem>>, vector<18x1x128xbf16>
    tpu.vector_store %arg9[%c0_91, %c17_92, %c0_93], %79 {strides = array<i32>} : memref<18x18x128xbf16, #tpu.memory_space<vmem>>, vector<18x1x128xbf16>,
    %81 = vector.shape_cast %72 : vector<256x128xf32> to vector<16x16x128xf32>
    %82 = arith.truncf %81 : vector<16x16x128xf32> to vector<16x16x128xbf16>
    %c1_94 = arith.constant 1 : index
    %c1_95 = arith.constant 1 : index
    %c0_96 = arith.constant 0 : index
    %83 = vector.load %arg9[%c1_94, %c1_95, %c0_96] : memref<18x18x128xbf16, #tpu.memory_space<vmem>>, vector<16x16x128xbf16>
    tpu.vector_store %arg9[%c1_94, %c1_95, %c0_96], %82 {strides = array<i32>} : memref<18x18x128xbf16, #tpu.memory_space<vmem>>, vector<16x16x128xbf16>,
    %cst_97 = arith.constant 0.000000e+00 : f32
    %84 = vector.broadcast %cst_97 : f32 to vector<256x128xf32>
    %c0_98 = arith.constant 0 : index
    %c0_99 = arith.constant 0 : index
    %c0_100 = arith.constant 0 : index
    %85 = vector.load %arg9[%c0_98, %c0_99, %c0_100] : memref<18x18x128xbf16, #tpu.memory_space<vmem>>, vector<16x16x128xbf16>
    %86 = vector.shape_cast %85 : vector<16x16x128xbf16> to vector<256x128xbf16>
    %c0_101 = arith.constant 0 : index
    %c0_102 = arith.constant 0 : index
    %c0_103 = arith.constant 0 : index
    %87 = vector.load %arg4[%c0_101, %c0_102, %c0_103] : memref<9x128x128xbf16, #tpu.memory_space<vmem>>, vector<1x128x128xbf16>
    %88 = vector.shape_cast %87 : vector<1x128x128xbf16> to vector<128x128xbf16>
    %cst_104 = arith.constant dense<0.000000e+00> : vector<256x128xf32>
    %89 = tpu.matmul %86, %88, %cst_104 {dimension_numbers = #tpu.dot_dimension_numbers<[1], [0], [0], [1], [0, 0, 1, 1], [], []>} : vector<256x128xbf16>, vector<128x128xbf16>, vector<256x128xf32> -> vector<256x128xf32>
    %90 = arith.addf %84, %89 : vector<256x128xf32>
    %c0_105 = arith.constant 0 : index
    %c1_106 = arith.constant 1 : index
    %c0_107 = arith.constant 0 : index
    %91 = vector.load %arg9[%c0_105, %c1_106, %c0_107] : memref<18x18x128xbf16, #tpu.memory_space<vmem>>, vector<16x16x128xbf16>
    %92 = vector.shape_cast %91 : vector<16x16x128xbf16> to vector<256x128xbf16>
    %c1_108 = arith.constant 1 : index
    %c0_109 = arith.constant 0 : index
    %c0_110 = arith.constant 0 : index
    %93 = vector.load %arg4[%c1_108, %c0_109, %c0_110] : memref<9x128x128xbf16, #tpu.memory_space<vmem>>, vector<1x128x128xbf16>
    %94 = vector.shape_cast %93 : vector<1x128x128xbf16> to vector<128x128xbf16>
    %cst_111 = arith.constant dense<0.000000e+00> : vector<256x128xf32>
    %95 = tpu.matmul %92, %94, %cst_111 {dimension_numbers = #tpu.dot_dimension_numbers<[1], [0], [0], [1], [0, 0, 1, 1], [], []>} : vector<256x128xbf16>, vector<128x128xbf16>, vector<256x128xf32> -> vector<256x128xf32>
    %96 = arith.addf %90, %95 : vector<256x128xf32>
    %c0_112 = arith.constant 0 : index
    %c2_113 = arith.constant 2 : index
    %c0_114 = arith.constant 0 : index
    %97 = vector.load %arg9[%c0_112, %c2_113, %c0_114] : memref<18x18x128xbf16, #tpu.memory_space<vmem>>, vector<16x16x128xbf16>
    %98 = vector.shape_cast %97 : vector<16x16x128xbf16> to vector<256x128xbf16>
    %c2_115 = arith.constant 2 : index
    %c0_116 = arith.constant 0 : index
    %c0_117 = arith.constant 0 : index
    %99 = vector.load %arg4[%c2_115, %c0_116, %c0_117] : memref<9x128x128xbf16, #tpu.memory_space<vmem>>, vector<1x128x128xbf16>
    %100 = vector.shape_cast %99 : vector<1x128x128xbf16> to vector<128x128xbf16>
    %cst_118 = arith.constant dense<0.000000e+00> : vector<256x128xf32>
    %101 = tpu.matmul %98, %100, %cst_118 {dimension_numbers = #tpu.dot_dimension_numbers<[1], [0], [0], [1], [0, 0, 1, 1], [], []>} : vector<256x128xbf16>, vector<128x128xbf16>, vector<256x128xf32> -> vector<256x128xf32>
    %102 = arith.addf %96, %101 : vector<256x128xf32>
    %c1_119 = arith.constant 1 : index
    %c0_120 = arith.constant 0 : index
    %c0_121 = arith.constant 0 : index
    %103 = vector.load %arg9[%c1_119, %c0_120, %c0_121] : memref<18x18x128xbf16, #tpu.memory_space<vmem>>, vector<16x16x128xbf16>
    %104 = vector.shape_cast %103 : vector<16x16x128xbf16> to vector<256x128xbf16>
    %c3_122 = arith.constant 3 : index
    %c0_123 = arith.constant 0 : index
    %c0_124 = arith.constant 0 : index
    %105 = vector.load %arg4[%c3_122, %c0_123, %c0_124] : memref<9x128x128xbf16, #tpu.memory_space<vmem>>, vector<1x128x128xbf16>
    %106 = vector.shape_cast %105 : vector<1x128x128xbf16> to vector<128x128xbf16>
    %cst_125 = arith.constant dense<0.000000e+00> : vector<256x128xf32>
    %107 = tpu.matmul %104, %106, %cst_125 {dimension_numbers = #tpu.dot_dimension_numbers<[1], [0], [0], [1], [0, 0, 1, 1], [], []>} : vector<256x128xbf16>, vector<128x128xbf16>, vector<256x128xf32> -> vector<256x128xf32>
    %108 = arith.addf %102, %107 : vector<256x128xf32>
    %c1_126 = arith.constant 1 : index
    %c1_127 = arith.constant 1 : index
    %c0_128 = arith.constant 0 : index
    %109 = vector.load %arg9[%c1_126, %c1_127, %c0_128] : memref<18x18x128xbf16, #tpu.memory_space<vmem>>, vector<16x16x128xbf16>
    %110 = vector.shape_cast %109 : vector<16x16x128xbf16> to vector<256x128xbf16>
    %c4_129 = arith.constant 4 : index
    %c0_130 = arith.constant 0 : index
    %c0_131 = arith.constant 0 : index
    %111 = vector.load %arg4[%c4_129, %c0_130, %c0_131] : memref<9x128x128xbf16, #tpu.memory_space<vmem>>, vector<1x128x128xbf16>
    %112 = vector.shape_cast %111 : vector<1x128x128xbf16> to vector<128x128xbf16>
    %cst_132 = arith.constant dense<0.000000e+00> : vector<256x128xf32>
    %113 = tpu.matmul %110, %112, %cst_132 {dimension_numbers = #tpu.dot_dimension_numbers<[1], [0], [0], [1], [0, 0, 1, 1], [], []>} : vector<256x128xbf16>, vector<128x128xbf16>, vector<256x128xf32> -> vector<256x128xf32>
    %114 = arith.addf %108, %113 : vector<256x128xf32>
    %c1_133 = arith.constant 1 : index
    %c2_134 = arith.constant 2 : index
    %c0_135 = arith.constant 0 : index
    %115 = vector.load %arg9[%c1_133, %c2_134, %c0_135] : memref<18x18x128xbf16, #tpu.memory_space<vmem>>, vector<16x16x128xbf16>
    %116 = vector.shape_cast %115 : vector<16x16x128xbf16> to vector<256x128xbf16>
    %c5_136 = arith.constant 5 : index
    %c0_137 = arith.constant 0 : index
    %c0_138 = arith.constant 0 : index
    %117 = vector.load %arg4[%c5_136, %c0_137, %c0_138] : memref<9x128x128xbf16, #tpu.memory_space<vmem>>, vector<1x128x128xbf16>
    %118 = vector.shape_cast %117 : vector<1x128x128xbf16> to vector<128x128xbf16>
    %cst_139 = arith.constant dense<0.000000e+00> : vector<256x128xf32>
    %119 = tpu.matmul %116, %118, %cst_139 {dimension_numbers = #tpu.dot_dimension_numbers<[1], [0], [0], [1], [0, 0, 1, 1], [], []>} : vector<256x128xbf16>, vector<128x128xbf16>, vector<256x128xf32> -> vector<256x128xf32>
    %120 = arith.addf %114, %119 : vector<256x128xf32>
    %c2_140 = arith.constant 2 : index
    %c0_141 = arith.constant 0 : index
    %c0_142 = arith.constant 0 : index
    %121 = vector.load %arg9[%c2_140, %c0_141, %c0_142] : memref<18x18x128xbf16, #tpu.memory_space<vmem>>, vector<16x16x128xbf16>
    %122 = vector.shape_cast %121 : vector<16x16x128xbf16> to vector<256x128xbf16>
    %c6_143 = arith.constant 6 : index
    %c0_144 = arith.constant 0 : index
    %c0_145 = arith.constant 0 : index
    %123 = vector.load %arg4[%c6_143, %c0_144, %c0_145] : memref<9x128x128xbf16, #tpu.memory_space<vmem>>, vector<1x128x128xbf16>
    %124 = vector.shape_cast %123 : vector<1x128x128xbf16> to vector<128x128xbf16>
    %cst_146 = arith.constant dense<0.000000e+00> : vector<256x128xf32>
    %125 = tpu.matmul %122, %124, %cst_146 {dimension_numbers = #tpu.dot_dimension_numbers<[1], [0], [0], [1], [0, 0, 1, 1], [], []>} : vector<256x128xbf16>, vector<128x128xbf16>, vector<256x128xf32> -> vector<256x128xf32>
    %126 = arith.addf %120, %125 : vector<256x128xf32>
    %c2_147 = arith.constant 2 : index
    %c1_148 = arith.constant 1 : index
    %c0_149 = arith.constant 0 : index
    %127 = vector.load %arg9[%c2_147, %c1_148, %c0_149] : memref<18x18x128xbf16, #tpu.memory_space<vmem>>, vector<16x16x128xbf16>
    %128 = vector.shape_cast %127 : vector<16x16x128xbf16> to vector<256x128xbf16>
    %c7_150 = arith.constant 7 : index
    %c0_151 = arith.constant 0 : index
    %c0_152 = arith.constant 0 : index
    %129 = vector.load %arg4[%c7_150, %c0_151, %c0_152] : memref<9x128x128xbf16, #tpu.memory_space<vmem>>, vector<1x128x128xbf16>
    %130 = vector.shape_cast %129 : vector<1x128x128xbf16> to vector<128x128xbf16>
    %cst_153 = arith.constant dense<0.000000e+00> : vector<256x128xf32>
    %131 = tpu.matmul %128, %130, %cst_153 {dimension_numbers = #tpu.dot_dimension_numbers<[1], [0], [0], [1], [0, 0, 1, 1], [], []>} : vector<256x128xbf16>, vector<128x128xbf16>, vector<256x128xf32> -> vector<256x128xf32>
    %132 = arith.addf %126, %131 : vector<256x128xf32>
    %c2_154 = arith.constant 2 : index
    %c2_155 = arith.constant 2 : index
    %c0_156 = arith.constant 0 : index
    %133 = vector.load %arg9[%c2_154, %c2_155, %c0_156] : memref<18x18x128xbf16, #tpu.memory_space<vmem>>, vector<16x16x128xbf16>
    %134 = vector.shape_cast %133 : vector<16x16x128xbf16> to vector<256x128xbf16>
    %c8_157 = arith.constant 8 : index
    %c0_158 = arith.constant 0 : index
    %c0_159 = arith.constant 0 : index
    %135 = vector.load %arg4[%c8_157, %c0_158, %c0_159] : memref<9x128x128xbf16, #tpu.memory_space<vmem>>, vector<1x128x128xbf16>
    %136 = vector.shape_cast %135 : vector<1x128x128xbf16> to vector<128x128xbf16>
    %cst_160 = arith.constant dense<0.000000e+00> : vector<256x128xf32>
    %137 = tpu.matmul %134, %136, %cst_160 {dimension_numbers = #tpu.dot_dimension_numbers<[1], [0], [0], [1], [0, 0, 1, 1], [], []>} : vector<256x128xbf16>, vector<128x128xbf16>, vector<256x128xf32> -> vector<256x128xf32>
    %138 = arith.addf %132, %137 : vector<256x128xf32>
    %c0_161 = arith.constant 0 : index
    %c0_162 = arith.constant 0 : index
    %139 = vector.load %arg5[%c0_161, %c0_162] : memref<1x128xf32, #tpu.memory_space<vmem>>, vector<1x128xf32>
    %140 = vector.broadcast %139 : vector<1x128xf32> to vector<256x128xf32>
    %141 = arith.addf %138, %140 : vector<256x128xf32>
    %142 = tpu.transpose %141, [1, 0] : vector<256x128xf32> -> vector<128x256xf32>
    %143 = arith.extf %1 : vector<128x256xbf16> to vector<128x256xf32>
    %144 = arith.addf %142, %143 : vector<128x256xf32>
    %145 = arith.truncf %144 : vector<128x256xf32> to vector<128x256xbf16>
    %c0_163 = arith.constant 0 : index
    %c0_164 = arith.constant 0 : index
    %c0_165 = arith.constant 0 : index
    %146 = vector.load %arg7[%c0_163, %c0_164, %c0_165] : memref<1x128x256xbf16, #tpu.memory_space<vmem>>, vector<1x128x256xbf16>
    %147 = vector.shape_cast %146 : vector<1x128x256xbf16> to vector<128x256xbf16>
    %148 = vector.shape_cast %145 : vector<128x256xbf16> to vector<1x128x256xbf16>
    tpu.vector_store %arg7[%c0_163, %c0_164, %c0_165], %148 {strides = array<i32>} : memref<1x128x256xbf16, #tpu.memory_space<vmem>>, vector<1x128x256xbf16>,
    %cst_166 = arith.constant 0.000000e+00 : f32
    %149 = vector.broadcast %cst_166 : f32 to vector<128x256xf32>
    %150 = arith.maximumf %144, %149 : vector<128x256xf32>
    %151 = arith.truncf %150 : vector<128x256xf32> to vector<128x256xbf16>
    %c0_167 = arith.constant 0 : index
    %c0_168 = arith.constant 0 : index
    %c0_169 = arith.constant 0 : index
    %152 = vector.load %arg6[%c0_167, %c0_168, %c0_169] : memref<1x128x256xbf16, #tpu.memory_space<vmem>>, vector<1x128x256xbf16>
    %153 = vector.shape_cast %152 : vector<1x128x256xbf16> to vector<128x256xbf16>
    %154 = vector.shape_cast %151 : vector<128x256xbf16> to vector<1x128x256xbf16>
    tpu.vector_store %arg6[%c0_167, %c0_168, %c0_169], %154 {strides = array<i32>} : memref<1x128x256xbf16, #tpu.memory_space<vmem>>, vector<1x128x256xbf16>,
    return
  }
  func.func @transform_0(%arg0: i32) -> (i32, i32, i32) {
    %c0_i32 = arith.constant 0 : i32
    %c0_i32_0 = arith.constant 0 : i32
    %c0_i32_1 = arith.constant 0 : i32
    return %arg0, %c0_i32, %c0_i32_0 : i32, i32, i32
  }
  func.func @transform_1(%arg0: i32) -> (i32, i32, i32) {
    %c0_i32 = arith.constant 0 : i32
    %c0_i32_0 = arith.constant 0 : i32
    %c0_i32_1 = arith.constant 0 : i32
    %c0_i32_2 = arith.constant 0 : i32
    return %c0_i32, %c0_i32_0, %c0_i32_1 : i32, i32, i32
  }
  func.func @transform_2(%arg0: i32) -> (i32, i32) {
    %c0_i32 = arith.constant 0 : i32
    %c0_i32_0 = arith.constant 0 : i32
    %c0_i32_1 = arith.constant 0 : i32
    return %c0_i32, %c0_i32_0 : i32, i32
  }
  func.func @transform_3(%arg0: i32) -> (i32, i32, i32) {
    %c0_i32 = arith.constant 0 : i32
    %c0_i32_0 = arith.constant 0 : i32
    %c0_i32_1 = arith.constant 0 : i32
    %c0_i32_2 = arith.constant 0 : i32
    return %c0_i32, %c0_i32_0, %c0_i32_1 : i32, i32, i32
  }
  func.func @transform_4(%arg0: i32) -> (i32, i32) {
    %c0_i32 = arith.constant 0 : i32
    %c0_i32_0 = arith.constant 0 : i32
    %c0_i32_1 = arith.constant 0 : i32
    return %c0_i32, %c0_i32_0 : i32, i32
  }
  func.func @transform_5(%arg0: i32) -> (i32, i32, i32) {
    %c0_i32 = arith.constant 0 : i32
    %c0_i32_0 = arith.constant 0 : i32
    %c0_i32_1 = arith.constant 0 : i32
    return %arg0, %c0_i32, %c0_i32_0 : i32, i32, i32
  }
  func.func @transform_6(%arg0: i32) -> (i32, i32, i32) {
    %c0_i32 = arith.constant 0 : i32
    %c0_i32_0 = arith.constant 0 : i32
    %c0_i32_1 = arith.constant 0 : i32
    return %arg0, %c0_i32, %c0_i32_0 : i32, i32, i32
  }
}

</mosaic_0001>

<llo_original>
// kernel: basic_block_forward.1
$region0: #{basic_block_forward.1}
  #allocation0 [shape = 'u32[]', space=smem, size = 0x4, offset = 0x4, fixed_abs, tag = 'smem constant byte address 0x4 - core index']
  #allocation1 [shape = 'u32[144,128]{1,0:T(1,128)}', space=vmem, size = 0x12000, scoped, tag = 'internal scratch']
  #allocation2 [shape = 'bf16[18,18,128]{2,1,0:T(8,128)(2,1)}', space=vmem, size = 0x1b000, scoped, tag = 'scratch operand']
  #allocation3 [shape = 'bf16[18,18,128]{2,1,0:T(8,128)(2,1)}', space=vmem, size = 0x1b000, scoped, tag = 'scratch operand']
  %s0 = inlined_call_operand.vmem [shape: bf16[2,128,256], index: 0, kind: input, shape index: {}]
  %s1 = inlined_call_operand.hbm [shape: bf16[9,128,128], index: 1, kind: input, shape index: {}]
  %s2 = inlined_call_operand.vmem [shape: f32[1,128], index: 2, kind: input, shape index: {}]
  %s3 = inlined_call_operand.hbm [shape: bf16[9,128,128], index: 3, kind: input, shape index: {}]
  %s4 = inlined_call_operand.vmem [shape: f32[1,128], index: 4, kind: input, shape index: {}]
  %s5 = inlined_call_operand.vmem [shape: bf16[2,128,256], index: 5, kind: output, shape index: {0}]
  %s6 = inlined_call_operand.vmem [shape: bf16[2,128,256], index: 6, kind: output, shape index: {1}]
  %7 = xla_tuple %s5, %s6
  %s8 = sld [smem:[#allocation0]]
  $region69: #{basic_block_forward.1} parent=0
    _
  %s10 = ssub.s32 1, %s8
  %s11 = scalar_select 0, %s10, %s8
  $region1: #{basic_block_forward.1} parent=0
    #allocation4 [shape = 'u8[294912]{0}', space=vmem, size = 0x48000, scoped, tag = 'input window, operand 1, single buffered']
    #allocation5 [shape = 's32[2]{0}', space=sflag, size = 0x8, scoped, tag = 'scoped memory for basic_block_forward.1']
    #allocation6 [shape = 'u8[294912]{0}', space=vmem, size = 0x48000, scoped, tag = 'input window, operand 3, single buffered']
    #allocation7 [shape = 's32[1]{0}', space=sflag, size = 0x4, scoped, tag = 'scoped memory for basic_block_forward.1']
    %12 = vsyncpa [#allocation5], 0
    %13 = vsyncpa [#allocation7], 0
    loop: start=0, step=1, limit=4
    $region2: #{basic_block_forward.1} parent=1 // loop_pre_header
      _
    $region3: #{basic_block_forward.1} parent=1 // loop_header
      %s15 = sphi 0, %s19
      %p16 = scmp.ge.s32.totalorder %s15, 4
      %s25 = sphi 0, %s27
      %s28 = sphi 0, %s25
      %s29 = sphi 0, %s28
      %s45 = sphi 0, %s29
      %s49 = sphi 0, %s49
      %s51 = sphi 0, %s49
      %s52 = sphi 0, %s51
      %s66 = sphi 0, %s52
      %s70 = sphi 0, %s70
      %s72 = sphi 0, %s70
      %s73 = sphi 0, %s72
      %s87 = sphi 0, %s73
      %s91 = sphi 0, %s91
      %s93 = sphi 0, %s91
      %s94 = sphi 0, %s93
      %s108 = sphi 0, %s94
      %s112 = sphi 0, %s112
      %s114 = sphi 0, %s112
      %s115 = sphi 0, %s114
      %s129 = sphi 0, %s115
      %s135 = sphi 0, %s137
      %s138 = sphi 0, %s135
      %s139 = sphi 0, %s138
      %s155 = sphi 0, %s139
      %s161 = sphi 0, %s163
      %s164 = sphi 0, %s161
      %s165 = sphi 0, %s164
      %s181 = sphi 0, %s165
    $region4: #{basic_block_forward.1} parent=1 // loop_header_branch
      %18 = sbr.rel (%p16) target = $region8
    $region5: #{basic_block_forward.1} parent=1 // loop_body
      %s20 = ssub.s32 %s15, 1
      %s21 = ssub.s32 %s15, 2
      %s22 = sadd.s32 %s15, 1
      %s23 = ssub.s32 %s15, %s22
      %p24 = scmp.eq.s32.totalorder %s23, 0
      %s26 = sadd.s32 %s25, 1
      %s27 = scalar_select %p24, %s25, %s26
      %p30 = pneg %p24
      %p31 = scmp.eq.s32.totalorder %s15, 1
      %p32 = por %p30, %p31
      %p33 = scmp.ne.s32.totalorder %s25, %s28
      %p34 = scmp.eq.s32.totalorder %s15, 0
      %p35 = por %p33, %p34
      %p36 = scmp.ne.s32.totalorder %s25, %s28
      %p37 = scmp.eq.s32.totalorder %s20, 1
      %p38 = por %p36, %p37
      %p39 = scmp.ne.s32.totalorder %s28, %s29
      %p40 = scmp.eq.s32.totalorder %s20, 0
      %p41 = por %p39, %p40
      %p42 = scmp.ne.s32.totalorder %s28, %s29
      %p43 = scmp.eq.s32.totalorder %s21, 1
      %p44 = por %p42, %p43
      %p46 = scmp.ne.s32.totalorder %s29, %s45
      %p47 = scmp.eq.s32.totalorder %s21, 0
      %p48 = por %p46, %p47
      %s50 = sadd.s32 %s49, 1
      %p53 = scmp.eq.s32.totalorder %s15, 1
      %p54 = scmp.ne.s32.totalorder %s49, %s51
      %p55 = scmp.eq.s32.totalorder %s15, 0
      %p56 = por %p54, %p55
      %p57 = scmp.ne.s32.totalorder %s49, %s51
      %p58 = scmp.eq.s32.totalorder %s20, 1
      %p59 = por %p57, %p58
      %p60 = scmp.ne.s32.totalorder %s51, %s52
      %p61 = scmp.eq.s32.totalorder %s20, 0
      %p62 = por %p60, %p61
      %p63 = scmp.ne.s32.totalorder %s51, %s52
      %p64 = scmp.eq.s32.totalorder %s21, 1
      %p65 = por %p63, %p64
      %p67 = scmp.ne.s32.totalorder %s52, %s66
      %p68 = scmp.eq.s32.totalorder %s21, 0
      %p69 = por %p67, %p68
      %s71 = sadd.s32 %s70, 1
      %p74 = scmp.eq.s32.totalorder %s15, 1
      %p75 = scmp.ne.s32.totalorder %s70, %s72
      %p76 = scmp.eq.s32.totalorder %s15, 0
      %p77 = por %p75, %p76
      %p78 = scmp.ne.s32.totalorder %s70, %s72
      %p79 = scmp.eq.s32.totalorder %s20, 1
      %p80 = por %p78, %p79
      %p81 = scmp.ne.s32.totalorder %s72, %s73
      %p82 = scmp.eq.s32.totalorder %s20, 0
      %p83 = por %p81, %p82
      %p84 = scmp.ne.s32.totalorder %s72, %s73
      %p85 = scmp.eq.s32.totalorder %s21, 1
      %p86 = por %p84, %p85
      %p88 = scmp.ne.s32.totalorder %s73, %s87
      %p89 = scmp.eq.s32.totalorder %s21, 0
      %p90 = por %p88, %p89
      %s92 = sadd.s32 %s91, 1
      %p95 = scmp.eq.s32.totalorder %s15, 1
      %p96 = scmp.ne.s32.totalorder %s91, %s93
      %p97 = scmp.eq.s32.totalorder %s15, 0
      %p98 = por %p96, %p97
      %p99 = scmp.ne.s32.totalorder %s91, %s93
      %p100 = scmp.eq.s32.totalorder %s20, 1
      %p101 = por %p99, %p100
      %p102 = scmp.ne.s32.totalorder %s93, %s94
      %p103 = scmp.eq.s32.totalorder %s20, 0
      %p104 = por %p102, %p103
      %p105 = scmp.ne.s32.totalorder %s93, %s94
      %p106 = scmp.eq.s32.totalorder %s21, 1
      %p107 = por %p105, %p106
      %p109 = scmp.ne.s32.totalorder %s94, %s108
      %p110 = scmp.eq.s32.totalorder %s21, 0
      %p111 = por %p109, %p110
      %s113 = sadd.s32 %s112, 1
      %p116 = scmp.eq.s32.totalorder %s15, 1
      %p117 = scmp.ne.s32.totalorder %s112, %s114
      %p118 = scmp.eq.s32.totalorder %s15, 0
      %p119 = por %p117, %p118
      %p120 = scmp.ne.s32.totalorder %s112, %s114
      %p121 = scmp.eq.s32.totalorder %s20, 1
      %p122 = por %p120, %p121
      %p123 = scmp.ne.s32.totalorder %s114, %s115
      %p124 = scmp.eq.s32.totalorder %s20, 0
      %p125 = por %p123, %p124
      %p126 = scmp.ne.s32.totalorder %s114, %s115
      %p127 = scmp.eq.s32.totalorder %s21, 1
      %p128 = por %p126, %p127
      %p130 = scmp.ne.s32.totalorder %s115, %s129
      %p131 = scmp.eq.s32.totalorder %s21, 0
      %p132 = por %p130, %p131
      %s133 = ssub.s32 %s15, %s22
      %p134 = scmp.eq.s32.totalorder %s133, 0
      %s136 = sadd.s32 %s135, 1
      %s137 = scalar_select %p134, %s135, %s136
      %p140 = pneg %p134
      %p141 = scmp.eq.s32.totalorder %s15, 1
      %p142 = por %p140, %p141
      %p143 = scmp.ne.s32.totalorder %s135, %s138
      %p144 = scmp.eq.s32.totalorder %s15, 0
      %p145 = por %p143, %p144
      %p146 = scmp.ne.s32.totalorder %s135, %s138
      %p147 = scmp.eq.s32.totalorder %s20, 1
      %p148 = por %p146, %p147
      %p149 = scmp.ne.s32.totalorder %s138, %s139
      %p150 = scmp.eq.s32.totalorder %s20, 0
      %p151 = por %p149, %p150
      %p152 = scmp.ne.s32.totalorder %s138, %s139
      %p153 = scmp.eq.s32.totalorder %s21, 1
      %p154 = por %p152, %p153
      %p156 = scmp.ne.s32.totalorder %s139, %s155
      %p157 = scmp.eq.s32.totalorder %s21, 0
      %p158 = por %p156, %p157
      %s159 = ssub.s32 %s15, %s22
      %p160 = scmp.eq.s32.totalorder %s159, 0
      %s162 = sadd.s32 %s161, 1
      %s163 = scalar_select %p160, %s161, %s162
      %p166 = pneg %p160
      %p167 = scmp.eq.s32.totalorder %s15, 1
      %p168 = por %p166, %p167
      %p169 = scmp.ne.s32.totalorder %s161, %s164
      %p170 = scmp.eq.s32.totalorder %s15, 0
      %p171 = por %p169, %p170
      %p172 = scmp.ne.s32.totalorder %s161, %s164
      %p173 = scmp.eq.s32.totalorder %s20, 1
      %p174 = por %p172, %p173
      %p175 = scmp.ne.s32.totalorder %s164, %s165
      %p176 = scmp.eq.s32.totalorder %s20, 0
      %p177 = por %p175, %p176
      %p178 = scmp.ne.s32.totalorder %s164, %s165
      %p179 = scmp.eq.s32.totalorder %s21, 1
      %p180 = por %p178, %p179
      %p182 = scmp.ne.s32.totalorder %s165, %s181
      %p183 = scmp.eq.s32.totalorder %s21, 0
      %p184 = por %p182, %p183
      %p185 = scmp.le.s32.totalorder 1, %s15
      %p186 = scmp.lt.s32.totalorder %s15, 3
      %p187 = pnand %p185, %p186
      %p188 = pneg %p187
      // Predicated region
      $region9: #{basic_block_forward.1} parent=5 // pred_check
        _
      $region10: #{basic_block_forward.1} parent=5 // pred_check_branch
        %190 = sbr.rel (%p187) target = $region12
      $region11: #{basic_block_forward.1} parent=5 // pred_region
        %s191 = ssub.s32 %s15, 1
        // Predicated region
        $region13: #{basic_block_forward.1} parent=11 // pred_check
          %p192 = pneg %p62
        $region14: #{basic_block_forward.1} parent=11 // pred_check_branch
          %194 = sbr.rel (%p192) target = $region16
        $region15: #{basic_block_forward.1} parent=11 // pred_region
          %s196 = ssub.s32 9216, 9216
          %197 = vsyncadd [#allocation5], %s196
          %s198 = sshll.u32 [#allocation4], 4
          %s199 = int_to_ptr.vmem [resolvable:$true] %s198
          %204 = dma.hbm_to_vmem [thread:$0]  %s1, 9216, %s199, [#allocation5], 64, 64, 4
        $region16: #{basic_block_forward.1} parent=11 // pred_fallthru
          _
        // Predicated region
        $region17: #{basic_block_forward.1} parent=11 // pred_check
          %p205 = pneg %p83
        $region18: #{basic_block_forward.1} parent=11 // pred_check_branch
          %207 = sbr.rel (%p205) target = $region20
        $region19: #{basic_block_forward.1} parent=11 // pred_region
          _
        $region20: #{basic_block_forward.1} parent=11 // pred_fallthru
          _
        // Predicated region
        $region21: #{basic_block_forward.1} parent=11 // pred_check
          %p208 = pneg %p104
        $region22: #{basic_block_forward.1} parent=11 // pred_check_branch
          %210 = sbr.rel (%p208) target = $region24
        $region23: #{basic_block_forward.1} parent=11 // pred_region
          %s212 = ssub.s32 9216, 9216
          %213 = vsyncadd [#allocation7], %s212
          %s214 = sshll.u32 [#allocation6], 4
          %s215 = int_to_ptr.vmem [resolvable:$true] %s214
          %220 = dma.hbm_to_vmem [thread:$0]  %s3, 9216, %s215, [#allocation7], 64, 64, 4
        $region24: #{basic_block_forward.1} parent=11 // pred_fallthru
          _
        // Predicated region
        $region25: #{basic_block_forward.1} parent=11 // pred_check
          %p221 = pneg %p125
        $region26: #{basic_block_forward.1} parent=11 // pred_check_branch
          %223 = sbr.rel (%p221) target = $region28
        $region27: #{basic_block_forward.1} parent=11 // pred_region
          _
        $region28: #{basic_block_forward.1} parent=11 // pred_fallthru
          _
      $region12: #{basic_block_forward.1} parent=5 // pred_fallthru
        _
      %p224 = scmp.lt.s32.totalorder %s15, 2
      // Predicated region
      $region29: #{basic_block_forward.1} parent=5 // pred_check
        %p225 = pneg %p224
      $region30: #{basic_block_forward.1} parent=5 // pred_check_branch
        %227 = sbr.rel (%p225) target = $region32
      $region31: #{basic_block_forward.1} parent=5 // pred_region
        // Predicated region
        $region33: #{basic_block_forward.1} parent=31 // pred_check
          %p228 = pneg %p35
        $region34: #{basic_block_forward.1} parent=31 // pred_check_branch
          %230 = sbr.rel (%p228) target = $region36
        $region35: #{basic_block_forward.1} parent=31 // pred_region
          %p231 = scmp.lt.s32.totalorder %s15, 1
          %s232 = scalar_select %p231, %s15, 1
          %s233 = smul.addr %s232, 32
          %s234 = smul.addr %s233, 4
          %s235 = scalar_lea.vmem %s0, %s234
        $region36: #{basic_block_forward.1} parent=31 // pred_fallthru
          _
      $region32: #{basic_block_forward.1} parent=5 // pred_fallthru
        _
      %p236 = scmp.le.s32.totalorder 1, %s15
      %p237 = scmp.lt.s32.totalorder %s15, 3
      %p238 = pnand %p236, %p237
      %p239 = pneg %p238
      // Predicated region
      $region37: #{basic_block_forward.1} parent=5 // pred_check
        _
      $region38: #{basic_block_forward.1} parent=5 // pred_check_branch
        %241 = sbr.rel (%p238) target = $region40
      $region39: #{basic_block_forward.1} parent=5 // pred_region
        %s242 = ssub.s32 %s15, 1
        // Predicated region
        $region41: #{basic_block_forward.1} parent=39 // pred_check
          %p243 = pneg %p62
        $region42: #{basic_block_forward.1} parent=39 // pred_check_branch
          %245 = sbr.rel (%p243) target = $region44
        $region43: #{basic_block_forward.1} parent=39 // pred_region
          %246 = dma.done [#allocation5], 9216
        $region44: #{basic_block_forward.1} parent=39 // pred_fallthru
          _
        // Predicated region
        $region45: #{basic_block_forward.1} parent=39 // pred_check
          %p247 = pneg %p104
        $region46: #{basic_block_forward.1} parent=39 // pred_check_branch
          %249 = sbr.rel (%p247) target = $region48
        $region47: #{basic_block_forward.1} parent=39 // pred_region
          %250 = dma.done [#allocation7], 9216
        $region48: #{basic_block_forward.1} parent=39 // pred_fallthru
          _
        %p251 = scmp.lt.s32.totalorder %s20, 1
        %s252 = scalar_select %p251, %s20, 1
        %s253 = smul.addr %s252, 32
        %s254 = smul.addr %s253, 4
        %s255 = scalar_lea.vmem %s0, %s254
        %p256 = pneg %p41
        %p257 = pneg %p38
        %p258 = pneg %p62
        %p259 = pneg %p59
        %p260 = pneg %p83
        %p261 = pneg %p80
        %p262 = pneg %p104
        %p263 = pneg %p101
        %p264 = pneg %p125
        %p265 = pneg %p122
        %p266 = pneg %p151
        %p267 = pneg %p148
        %p268 = scmp.lt.s32.totalorder %s20, 1
        %s269 = scalar_select %p268, %s20, 1
        %s270 = smul.addr %s269, 32
        %s271 = smul.addr %s270, 4
        %s272 = scalar_lea.vmem %s5, %s271
        %p273 = pneg %p177
        %p274 = pneg %p174
        %p275 = scmp.lt.s32.totalorder %s20, 1
        %s276 = scalar_select %p275, %s20, 1
        %s277 = smul.addr %s276, 32
        %s278 = smul.addr %s277, 4
        %s279 = scalar_lea.vmem %s6, %s278
        %p280 = scmp.lt.s32.totalorder %s20, 1
        %s281 = scalar_select %p280, %s20, 1
        %s282 = smul.addr %s281, 32
        %s283 = smul.addr %s282, 4
        %s284 = scalar_lea.vmem %s0, %s283
        %p285 = scmp.lt.s32.totalorder %s20, 1
        %s286 = scalar_select %p285, %s20, 1
        %s287 = smul.addr %s286, 32
        %s288 = smul.addr %s287, 4
        %s289 = scalar_lea.vmem %s5, %s288
        %p290 = scmp.lt.s32.totalorder %s20, 1
        %s291 = scalar_select %p290, %s20, 1
        %s292 = smul.addr %s291, 32
        %s293 = smul.addr %s292, 4
        %s294 = scalar_lea.vmem %s6, %s293
        %v296 = vld [vmem:[%s284] sm:$0xff]
        %v297 = vld [vmem:[%s284 + $0x8] sm:$0xff]
        %v298 = vld [vmem:[%s284 + $0x10] sm:$0xff]
        %v299 = vld [vmem:[%s284 + $0x18] sm:$0xff]
        %v300 = vld [vmem:[%s284 + $0x20] sm:$0xff]
        %v301 = vld [vmem:[%s284 + $0x28] sm:$0xff]
        %v302 = vld [vmem:[%s284 + $0x30] sm:$0xff]
        %v303 = vld [vmem:[%s284 + $0x38] sm:$0xff]
        %v304 = vld [vmem:[%s284 + $0x40] sm:$0xff]
        %v305 = vld [vmem:[%s284 + $0x48] sm:$0xff]
        %v306 = vld [vmem:[%s284 + $0x50] sm:$0xff]
        %v307 = vld [vmem:[%s284 + $0x58] sm:$0xff]
        %v308 = vld [vmem:[%s284 + $0x60] sm:$0xff]
        %v309 = vld [vmem:[%s284 + $0x68] sm:$0xff]
        %v310 = vld [vmem:[%s284 + $0x70] sm:$0xff]
        %v311 = vld [vmem:[%s284 + $0x78] sm:$0xff]
        %312 = vst [vmem:[#allocation2] sm:$0xf] 0
        %313 = vst [vmem:[#allocation2 + $0x4] sm:$0xf] 0
        %314 = vst [vmem:[#allocation2 + $0x8] sm:$0x1] 0
        %s315 = scalar_lea.vmem [#allocation2], 204
        %316 = vst [vmem:[%s315] sm:$0xf] 0
        %317 = vst [vmem:[%s315 + $0x4] sm:$0xf] 0
        %318 = vst [vmem:[%s315 + $0x8] sm:$0x1] 0
        %vm319 = vcmask 1040384
        %vm320 = vsmask.f32 256
        %vm321 = vmand %vm319, %vm320
        %v322 = vld [vmem:[#allocation2] sm:$0x1]
        %v323 = vsel %vm321, 0, %v322
        %324 = vst [vmem:[#allocation2] sm:$0x1] %v323
        %v325 = vld [vmem:[#allocation2 + $0xc] sm:$0x1]
        %v326 = vsel %vm321, 0, %v325
        %327 = vst [vmem:[#allocation2 + $0xc] sm:$0x1] %v326
        %v328 = vld [vmem:[#allocation2 + $0x18] sm:$0x1]
        %v329 = vsel %vm321, 0, %v328
        %330 = vst [vmem:[#allocation2 + $0x18] sm:$0x1] %v329
        %v331 = vld [vmem:[#allocation2 + $0x24] sm:$0x1]
        %v332 = vsel %vm321, 0, %v331
        %333 = vst [vmem:[#allocation2 + $0x24] sm:$0x1] %v332
        %v334 = vld [vmem:[#allocation2 + $0x30] sm:$0x1]
        %v335 = vsel %vm321, 0, %v334
        %336 = vst [vmem:[#allocation2 + $0x30] sm:$0x1] %v335
        %v337 = vld [vmem:[#allocation2 + $0x3c] sm:$0x1]
        %v338 = vsel %vm321, 0, %v337
        %339 = vst [vmem:[#allocation2 + $0x3c] sm:$0x1] %v338
        %v340 = vld [vmem:[#allocation2 + $0x48] sm:$0x1]
        %v341 = vsel %vm321, 0, %v340
        %342 = vst [vmem:[#allocation2 + $0x48] sm:$0x1] %v341
        %v343 = vld [vmem:[#allocation2 + $0x54] sm:$0x1]
        %v344 = vsel %vm321, 0, %v343
        %345 = vst [vmem:[#allocation2 + $0x54] sm:$0x1] %v344
        %v346 = vld [vmem:[#allocation2 + $0x60] sm:$0x1]
        %v347 = vsel %vm321, 0, %v346
        %348 = vst [vmem:[#allocation2 + $0x60] sm:$0x1] %v347
        %v349 = vld [vmem:[#allocation2 + $0x6c] sm:$0x1]
        %v350 = vsel %vm321, 0, %v349
        %351 = vst [vmem:[#allocation2 + $0x6c] sm:$0x1] %v350
        %v352 = vld [vmem:[#allocation2 + $0x78] sm:$0x1]
        %v353 = vsel %vm321, 0, %v352
        %354 = vst [vmem:[#allocation2 + $0x78] sm:$0x1] %v353
        %v355 = vld [vmem:[#allocation2 + $0x84] sm:$0x1]
        %v356 = vsel %vm321, 0, %v355
        %357 = vst [vmem:[#allocation2 + $0x84] sm:$0x1] %v356
        %v358 = vld [vmem:[#allocation2 + $0x90] sm:$0x1]
        %v359 = vsel %vm321, 0, %v358
        %360 = vst [vmem:[#allocation2 + $0x90] sm:$0x1] %v359
        %v361 = vld [vmem:[#allocation2 + $0x9c] sm:$0x1]
        %v362 = vsel %vm321, 0, %v361
        %363 = vst [vmem:[#allocation2 + $0x9c] sm:$0x1] %v362
        %v364 = vld [vmem:[#allocation2 + $0xa8] sm:$0x1]
        %v365 = vsel %vm321, 0, %v364
        %366 = vst [vmem:[#allocation2 + $0xa8] sm:$0x1] %v365
        %v367 = vld [vmem:[#allocation2 + $0xb4] sm:$0x1]
        %v368 = vsel %vm321, 0, %v367
        %369 = vst [vmem:[#allocation2 + $0xb4] sm:$0x1] %v368
        %v370 = vld [vmem:[#allocation2 + $0xc0] sm:$0x1]
        %v371 = vsel %vm321, 0, %v370
        %372 = vst [vmem:[#allocation2 + $0xc0] sm:$0x1] %v371
        %v373 = vld [vmem:[#allocation2 + $0xcc] sm:$0x1]
        %v374 = vsel %vm321, 0, %v373
        %375 = vst [vmem:[#allocation2 + $0xcc] sm:$0x1] %v374
        %vm376 = vsmask.f32 7938
        %vm377 = vmand %vm319, %vm376
        %v378 = vld [vmem:[#allocation2 + $0x8] sm:$0x1]
        %v379 = vsel %vm377, 0, %v378
        %380 = vst [vmem:[#allocation2 + $0x8] sm:$0x1] %v379
        %v381 = vld [vmem:[#allocation2 + $0x14] sm:$0x1]
        %v382 = vsel %vm377, 0, %v381
        %383 = vst [vmem:[#allocation2 + $0x14] sm:$0x1] %v382
        %v384 = vld [vmem:[#allocation2 + $0x20] sm:$0x1]
        %v385 = vsel %vm377, 0, %v384
        %386 = vst [vmem:[#allocation2 + $0x20] sm:$0x1] %v385
        %v387 = vld [vmem:[#allocation2 + $0x2c] sm:$0x1]
        %v388 = vsel %vm377, 0, %v387
        %389 = vst [vmem:[#allocation2 + $0x2c] sm:$0x1] %v388
        %v390 = vld [vmem:[#allocation2 + $0x38] sm:$0x1]
        %v391 = vsel %vm377, 0, %v390
        %392 = vst [vmem:[#allocation2 + $0x38] sm:$0x1] %v391
        %v393 = vld [vmem:[#allocation2 + $0x44] sm:$0x1]
        %v394 = vsel %vm377, 0, %v393
        %395 = vst [vmem:[#allocation2 + $0x44] sm:$0x1] %v394
        %v396 = vld [vmem:[#allocation2 + $0x50] sm:$0x1]
        %v397 = vsel %vm377, 0, %v396
        %398 = vst [vmem:[#allocation2 + $0x50] sm:$0x1] %v397
        %v399 = vld [vmem:[#allocation2 + $0x5c] sm:$0x1]
        %v400 = vsel %vm377, 0, %v399
        %401 = vst [vmem:[#allocation2 + $0x5c] sm:$0x1] %v400
        %v402 = vld [vmem:[#allocation2 + $0x68] sm:$0x1]
        %v403 = vsel %vm377, 0, %v402
        %404 = vst [vmem:[#allocation2 + $0x68] sm:$0x1] %v403
        %v405 = vld [vmem:[#allocation2 + $0x74] sm:$0x1]
        %v406 = vsel %vm377, 0, %v405
        %407 = vst [vmem:[#allocation2 + $0x74] sm:$0x1] %v406
        %v408 = vld [vmem:[#allocation2 + $0x80] sm:$0x1]
        %v409 = vsel %vm377, 0, %v408
        %410 = vst [vmem:[#allocation2 + $0x80] sm:$0x1] %v409
        %v411 = vld [vmem:[#allocation2 + $0x8c] sm:$0x1]
        %v412 = vsel %vm377, 0, %v411
        %413 = vst [vmem:[#allocation2 + $0x8c] sm:$0x1] %v412
        %v414 = vld [vmem:[#allocation2 + $0x98] sm:$0x1]
        %v415 = vsel %vm377, 0, %v414
        %416 = vst [vmem:[#allocation2 + $0x98] sm:$0x1] %v415
        %v417 = vld [vmem:[#allocation2 + $0xa4] sm:$0x1]
        %v418 = vsel %vm377, 0, %v417
        %419 = vst [vmem:[#allocation2 + $0xa4] sm:$0x1] %v418
        %v420 = vld [vmem:[#allocation2 + $0xb0] sm:$0x1]
        %v421 = vsel %vm377, 0, %v420
        %422 = vst [vmem:[#allocation2 + $0xb0] sm:$0x1] %v421
        %v423 = vld [vmem:[#allocation2 + $0xbc] sm:$0x1]
        %v424 = vsel %vm377, 0, %v423
        %425 = vst [vmem:[#allocation2 + $0xbc] sm:$0x1] %v424
        %v426 = vld [vmem:[#allocation2 + $0xc8] sm:$0x1]
        %v427 = vsel %vm377, 0, %v426
        %428 = vst [vmem:[#allocation2 + $0xc8] sm:$0x1] %v427
        %v429 = vld [vmem:[#allocation2 + $0xd4] sm:$0x1]
        %v430 = vsel %vm377, 0, %v429
        %431 = vst [vmem:[#allocation2 + $0xd4] sm:$0x1] %v430
        %v448 = vunpack.c.l.b16 %v296
        %v449 = vunpack.c.h.b16 %v296
        %v450 = vunpack.c.l.b16 %v297
        %v451 = vunpack.c.h.b16 %v297
        %v452 = vunpack.c.l.b16 %v298
        %v453 = vunpack.c.h.b16 %v298
        %v454 = vunpack.c.l.b16 %v299
        %v455 = vunpack.c.h.b16 %v299
        %v456 = vunpack.c.l.b16 %v300
        %v457 = vunpack.c.h.b16 %v300
        %v458 = vunpack.c.l.b16 %v301
        %v459 = vunpack.c.h.b16 %v301
        %v460 = vunpack.c.l.b16 %v302
        %v461 = vunpack.c.h.b16 %v302
        %v462 = vunpack.c.l.b16 %v303
        %v463 = vunpack.c.h.b16 %v303
        %v464 = vunpack.c.l.b16 %v304
        %v465 = vunpack.c.h.b16 %v304
        %v466 = vunpack.c.l.b16 %v305
        %v467 = vunpack.c.h.b16 %v305
        %v468 = vunpack.c.l.b16 %v306
        %v469 = vunpack.c.h.b16 %v306
        %v470 = vunpack.c.l.b16 %v307
        %v471 = vunpack.c.h.b16 %v307
        %v472 = vunpack.c.l.b16 %v308
        %v473 = vunpack.c.h.b16 %v308
        %v474 = vunpack.c.l.b16 %v309
        %v475 = vunpack.c.h.b16 %v309
        %v476 = vunpack.c.l.b16 %v310
        %v477 = vunpack.c.h.b16 %v310
        %v478 = vunpack.c.l.b16 %v311
        %v479 = vunpack.c.h.b16 %v311
        %v480 = vpack.c.b16 %v450, %v448
        %v481 = vpack.c.b16 %v451, %v449
        %v482 = vpack.c.b16 %v454, %v452
        %v483 = vpack.c.b16 %v455, %v453
        %v484 = vpack.c.b16 %v458, %v456
        %v485 = vpack.c.b16 %v459, %v457
        %v486 = vpack.c.b16 %v462, %v460
        %v487 = vpack.c.b16 %v463, %v461
        %v488 = vpack.c.b16 %v466, %v464
        %v489 = vpack.c.b16 %v467, %v465
        %v490 = vpack.c.b16 %v470, %v468
        %v491 = vpack.c.b16 %v471, %v469
        %v492 = vpack.c.b16 %v474, %v472
        %v493 = vpack.c.b16 %v475, %v473
        %v494 = vpack.c.b16 %v478, %v476
        %v495 = vpack.c.b16 %v479, %v477
        %512 = vxpose.xlu0.c.b16.start [1/8] %v480, 128
        %513 = vxpose.xlu0.c.b16.cont [2/8] %v482, 128
        %514 = vxpose.xlu0.c.b16.cont [3/8] %v484, 128
        %515 = vxpose.xlu0.c.b16.cont [4/8] %v486, 128
        %516 = vxpose.xlu0.c.b16.cont [5/8] %v488, 128
        %517 = vxpose.xlu0.c.b16.cont [6/8] %v490, 128
        %518 = vxpose.xlu0.c.b16.cont [7/8] %v492, 128
        %519 = vxpose.xlu0.c.b16.end [8/8] %v494, 128
        %v520 = vpop.trf.xlu0
        %v521 = vpop.trf.xlu0
        %v522 = vpop.trf.xlu0
        %v523 = vpop.trf.xlu0
        %v524 = vpop.trf.xlu0
        %v525 = vpop.trf.xlu0
        %v526 = vpop.trf.xlu0
        %v527 = vpop.trf.xlu0
        %528 = vxpose.xlu0.c.b16.start [1/8] %v481, 128
        %529 = vxpose.xlu0.c.b16.cont [2/8] %v483, 128
        %530 = vxpose.xlu0.c.b16.cont [3/8] %v485, 128
        %531 = vxpose.xlu0.c.b16.cont [4/8] %v487, 128
        %532 = vxpose.xlu0.c.b16.cont [5/8] %v489, 128
        %533 = vxpose.xlu0.c.b16.cont [6/8] %v491, 128
        %534 = vxpose.xlu0.c.b16.cont [7/8] %v493, 128
        %535 = vxpose.xlu0.c.b16.end [8/8] %v495, 128
        %v536 = vpop.trf.xlu0
        %v537 = vpop.trf.xlu0
        %v538 = vpop.trf.xlu0
        %v539 = vpop.trf.xlu0
        %v540 = vpop.trf.xlu0
        %v541 = vpop.trf.xlu0
        %v542 = vpop.trf.xlu0
        %v543 = vpop.trf.xlu0
        %v560 = vunpack.c.l.b16 %v520
        %v561 = vunpack.c.h.b16 %v520
        %v562 = vunpack.c.l.b16 %v521
        %v563 = vunpack.c.h.b16 %v521
        %v564 = vunpack.c.l.b16 %v522
        %v565 = vunpack.c.h.b16 %v522
        %v566 = vunpack.c.l.b16 %v523
        %v567 = vunpack.c.h.b16 %v523
        %v568 = vunpack.c.l.b16 %v524
        %v569 = vunpack.c.h.b16 %v524
        %v570 = vunpack.c.l.b16 %v525
        %v571 = vunpack.c.h.b16 %v525
        %v572 = vunpack.c.l.b16 %v526
        %v573 = vunpack.c.h.b16 %v526
        %v574 = vunpack.c.l.b16 %v527
        %v575 = vunpack.c.h.b16 %v527
        %v576 = vunpack.c.l.b16 %v536
        %v577 = vunpack.c.h.b16 %v536
        %v578 = vunpack.c.l.b16 %v537
        %v579 = vunpack.c.h.b16 %v537
        %v580 = vunpack.c.l.b16 %v538
        %v581 = vunpack.c.h.b16 %v538
        %v582 = vunpack.c.l.b16 %v539
        %v583 = vunpack.c.h.b16 %v539
        %v584 = vunpack.c.l.b16 %v540
        %v585 = vunpack.c.h.b16 %v540
        %v586 = vunpack.c.l.b16 %v541
        %v587 = vunpack.c.h.b16 %v541
        %v588 = vunpack.c.l.b16 %v542
        %v589 = vunpack.c.h.b16 %v542
        %v590 = vunpack.c.l.b16 %v543
        %v591 = vunpack.c.h.b16 %v543
        %v592 = vpack.c.b16 %v560, %v560
        %v593 = vpack.c.b16 %v561, %v561
        %v594 = vpack.c.b16 %v562, %v562
        %v595 = vpack.c.b16 %v563, %v563
        %v596 = vpack.c.b16 %v564, %v564
        %v597 = vpack.c.b16 %v565, %v565
        %v598 = vpack.c.b16 %v566, %v566
        %v599 = vpack.c.b16 %v567, %v567
        %v600 = vpack.c.b16 %v568, %v568
        %v601 = vpack.c.b16 %v569, %v569
        %v602 = vpack.c.b16 %v570, %v570
        %v603 = vpack.c.b16 %v571, %v571
        %v604 = vpack.c.b16 %v572, %v572
        %v605 = vpack.c.b16 %v573, %v573
        %v606 = vpack.c.b16 %v574, %v574
        %v607 = vpack.c.b16 %v575, %v575
        %v608 = vpack.c.b16 %v576, %v576
        %v609 = vpack.c.b16 %v577, %v577
        %v610 = vpack.c.b16 %v578, %v578
        %v611 = vpack.c.b16 %v579, %v579
        %v612 = vpack.c.b16 %v580, %v580
        %v613 = vpack.c.b16 %v581, %v581
        %v614 = vpack.c.b16 %v582, %v582
        %v615 = vpack.c.b16 %v583, %v583
        %v616 = vpack.c.b16 %v584, %v584
        %v617 = vpack.c.b16 %v585, %v585
        %v618 = vpack.c.b16 %v586, %v586
        %v619 = vpack.c.b16 %v587, %v587
        %v620 = vpack.c.b16 %v588, %v588
        %v621 = vpack.c.b16 %v589, %v589
        %v622 = vpack.c.b16 %v590, %v590
        %v623 = vpack.c.b16 %v591, %v591
        %vm624 = vsmask.f32 4368
        %vm625 = vmor %vm320, %vm624
        %v627 = vshrl.u32 %v592, 16
        %v629 = vrot.slane %v627, 7
        %v630 = vshll.u32 %v592, 16
        %v632 = vor.u32 %v629, %v630
        %v633 = vrot.slane %v629, 4
        %v635 = vshrl.u32 %v593, 16
        %v637 = vrot.slane %v635, 7
        %v638 = vshll.u32 %v593, 16
        %v640 = vor.u32 %v637, %v638
        %v641 = vsel %vm625, %v633, %v640
        %v642 = vrot.slane %v637, 4
        %v644 = vshrl.u32 %v594, 16
        %v646 = vrot.slane %v644, 7
        %v647 = vshll.u32 %v594, 16
        %v649 = vor.u32 %v646, %v647
        %v650 = vrot.slane %v646, 4
        %v652 = vshrl.u32 %v595, 16
        %v654 = vrot.slane %v652, 7
        %v655 = vshll.u32 %v595, 16
        %v657 = vor.u32 %v654, %v655
        %v658 = vsel %vm625, %v650, %v657
        %v659 = vrot.slane %v654, 4
        %v661 = vshrl.u32 %v596, 16
        %v663 = vrot.slane %v661, 7
        %v664 = vshll.u32 %v596, 16
        %v666 = vor.u32 %v663, %v664
        %v667 = vrot.slane %v663, 4
        %v669 = vshrl.u32 %v597, 16
        %v671 = vrot.slane %v669, 7
        %v672 = vshll.u32 %v597, 16
        %v674 = vor.u32 %v671, %v672
        %v675 = vsel %vm625, %v667, %v674
        %v676 = vrot.slane %v671, 4
        %v678 = vshrl.u32 %v598, 16
        %v680 = vrot.slane %v678, 7
        %v681 = vshll.u32 %v598, 16
        %v683 = vor.u32 %v680, %v681
        %v684 = vrot.slane %v680, 4
        %v686 = vshrl.u32 %v599, 16
        %v688 = vrot.slane %v686, 7
        %v689 = vshll.u32 %v599, 16
        %v691 = vor.u32 %v688, %v689
        %v692 = vsel %vm625, %v684, %v691
        %v693 = vrot.slane %v688, 4
        %v695 = vshrl.u32 %v600, 16
        %v697 = vrot.slane %v695, 7
        %v698 = vshll.u32 %v600, 16
        %v700 = vor.u32 %v697, %v698
        %v701 = vrot.slane %v697, 4
        %v703 = vshrl.u32 %v601, 16
        %v705 = vrot.slane %v703, 7
        %v706 = vshll.u32 %v601, 16
        %v708 = vor.u32 %v705, %v706
        %v709 = vsel %vm625, %v701, %v708
        %v710 = vrot.slane %v705, 4
        %v712 = vshrl.u32 %v602, 16
        %v714 = vrot.slane %v712, 7
        %v715 = vshll.u32 %v602, 16
        %v717 = vor.u32 %v714, %v715
        %v718 = vrot.slane %v714, 4
        %v720 = vshrl.u32 %v603, 16
        %v722 = vrot.slane %v720, 7
        %v723 = vshll.u32 %v603, 16
        %v725 = vor.u32 %v722, %v723
        %v726 = vsel %vm625, %v718, %v725
        %v727 = vrot.slane %v722, 4
        %v729 = vshrl.u32 %v604, 16
        %v731 = vrot.slane %v729, 7
        %v732 = vshll.u32 %v604, 16
        %v734 = vor.u32 %v731, %v732
        %v735 = vrot.slane %v731, 4
        %v737 = vshrl.u32 %v605, 16
        %v739 = vrot.slane %v737, 7
        %v740 = vshll.u32 %v605, 16
        %v742 = vor.u32 %v739, %v740
        %v743 = vsel %vm625, %v735, %v742
        %v744 = vrot.slane %v739, 4
        %v746 = vshrl.u32 %v606, 16
        %v748 = vrot.slane %v746, 7
        %v749 = vshll.u32 %v606, 16
        %v751 = vor.u32 %v748, %v749
        %v752 = vrot.slane %v748, 4
        %v754 = vshrl.u32 %v607, 16
        %v756 = vrot.slane %v754, 7
        %v757 = vshll.u32 %v607, 16
        %v759 = vor.u32 %v756, %v757
        %v760 = vsel %vm625, %v752, %v759
        %v761 = vrot.slane %v756, 4
        %v763 = vshrl.u32 %v608, 16
        %v765 = vrot.slane %v763, 7
        %v766 = vshll.u32 %v608, 16
        %v768 = vor.u32 %v765, %v766
        %v769 = vrot.slane %v765, 4
        %v771 = vshrl.u32 %v609, 16
        %v773 = vrot.slane %v771, 7
        %v774 = vshll.u32 %v609, 16
        %v776 = vor.u32 %v773, %v774
        %v777 = vsel %vm625, %v769, %v776
        %v778 = vrot.slane %v773, 4
        %v780 = vshrl.u32 %v610, 16
        %v782 = vrot.slane %v780, 7
        %v783 = vshll.u32 %v610, 16
        %v785 = vor.u32 %v782, %v783
        %v786 = vrot.slane %v782, 4
        %v788 = vshrl.u32 %v611, 16
        %v790 = vrot.slane %v788, 7
        %v791 = vshll.u32 %v611, 16
        %v793 = vor.u32 %v790, %v791
        %v794 = vsel %vm625, %v786, %v793
        %v795 = vrot.slane %v790, 4
        %v797 = vshrl.u32 %v612, 16
        %v799 = vrot.slane %v797, 7
        %v800 = vshll.u32 %v612, 16
        %v802 = vor.u32 %v799, %v800
        %v803 = vrot.slane %v799, 4
        %v805 = vshrl.u32 %v613, 16
        %v807 = vrot.slane %v805, 7
        %v808 = vshll.u32 %v613, 16
        %v810 = vor.u32 %v807, %v808
        %v811 = vsel %vm625, %v803, %v810
        %v812 = vrot.slane %v807, 4
        %v814 = vshrl.u32 %v614, 16
        %v816 = vrot.slane %v814, 7
        %v817 = vshll.u32 %v614, 16
        %v819 = vor.u32 %v816, %v817
        %v820 = vrot.slane %v816, 4
        %v822 = vshrl.u32 %v615, 16
        %v824 = vrot.slane %v822, 7
        %v825 = vshll.u32 %v615, 16
        %v827 = vor.u32 %v824, %v825
        %v828 = vsel %vm625, %v820, %v827
        %v829 = vrot.slane %v824, 4
        %v831 = vshrl.u32 %v616, 16
        %v833 = vrot.slane %v831, 7
        %v834 = vshll.u32 %v616, 16
        %v836 = vor.u32 %v833, %v834
        %v837 = vrot.slane %v833, 4
        %v839 = vshrl.u32 %v617, 16
        %v841 = vrot.slane %v839, 7
        %v842 = vshll.u32 %v617, 16
        %v844 = vor.u32 %v841, %v842
        %v845 = vsel %vm625, %v837, %v844
        %v846 = vrot.slane %v841, 4
        %v848 = vshrl.u32 %v618, 16
        %v850 = vrot.slane %v848, 7
        %v851 = vshll.u32 %v618, 16
        %v853 = vor.u32 %v850, %v851
        %v854 = vrot.slane %v850, 4
        %v856 = vshrl.u32 %v619, 16
        %v858 = vrot.slane %v856, 7
        %v859 = vshll.u32 %v619, 16
        %v861 = vor.u32 %v858, %v859
        %v862 = vsel %vm625, %v854, %v861
        %v863 = vrot.slane %v858, 4
        %v865 = vshrl.u32 %v620, 16
        %v867 = vrot.slane %v865, 7
        %v868 = vshll.u32 %v620, 16
        %v870 = vor.u32 %v867, %v868
        %v871 = vrot.slane %v867, 4
        %v873 = vshrl.u32 %v621, 16
        %v875 = vrot.slane %v873, 7
        %v876 = vshll.u32 %v621, 16
        %v878 = vor.u32 %v875, %v876
        %v879 = vsel %vm625, %v871, %v878
        %v880 = vrot.slane %v875, 4
        %v882 = vshrl.u32 %v622, 16
        %v884 = vrot.slane %v882, 7
        %v885 = vshll.u32 %v622, 16
        %v887 = vor.u32 %v884, %v885
        %v888 = vrot.slane %v884, 4
        %v890 = vshrl.u32 %v623, 16
        %v892 = vrot.slane %v890, 7
        %v893 = vshll.u32 %v623, 16
        %v895 = vor.u32 %v892, %v893
        %v896 = vsel %vm625, %v888, %v895
        %v897 = vrot.slane %v892, 4
        %s946 = scalar_lea.vmem [#allocation2], 12
        %vm947 = vcmask 1043456
        %vm948 = vmand %vm947, %vm376
        %v949 = vld [vmem:[%s946] sm:$0xf]
        %v950 = vsel %vm948, %v632, %v949
        %951 = vst [vmem:[%s946] sm:$0xf] %v950
        %952 = vst [vmem:[%s946 + $0x4] sm:$0xf] %v641
        %v953 = vld [vmem:[%s946 + $0x8] sm:$0x1]
        %v954 = vsel %vm321, %v642, %v953
        %955 = vst [vmem:[%s946 + $0x8] sm:$0x1] %v954
        %v956 = vld [vmem:[%s946 + $0xc] sm:$0xf]
        %v957 = vsel %vm948, %v649, %v956
        %958 = vst [vmem:[%s946 + $0xc] sm:$0xf] %v957
        %959 = vst [vmem:[%s946 + $0x10] sm:$0xf] %v658
        %v960 = vld [vmem:[%s946 + $0x14] sm:$0x1]
        %v961 = vsel %vm321, %v659, %v960
        %962 = vst [vmem:[%s946 + $0x14] sm:$0x1] %v961
        %v963 = vld [vmem:[%s946 + $0x18] sm:$0xf]
        %v964 = vsel %vm948, %v666, %v963
        %965 = vst [vmem:[%s946 + $0x18] sm:$0xf] %v964
        %966 = vst [vmem:[%s946 + $0x1c] sm:$0xf] %v675
        %v967 = vld [vmem:[%s946 + $0x20] sm:$0x1]
        %v968 = vsel %vm321, %v676, %v967
        %969 = vst [vmem:[%s946 + $0x20] sm:$0x1] %v968
        %v970 = vld [vmem:[%s946 + $0x24] sm:$0xf]
        %v971 = vsel %vm948, %v683, %v970
        %972 = vst [vmem:[%s946 + $0x24] sm:$0xf] %v971
        %973 = vst [vmem:[%s946 + $0x28] sm:$0xf] %v692
        %v974 = vld [vmem:[%s946 + $0x2c] sm:$0x1]
        %v975 = vsel %vm321, %v693, %v974
        %976 = vst [vmem:[%s946 + $0x2c] sm:$0x1] %v975
        %v977 = vld [vmem:[%s946 + $0x30] sm:$0xf]
        %v978 = vsel %vm948, %v700, %v977
        %979 = vst [vmem:[%s946 + $0x30] sm:$0xf] %v978
        %980 = vst [vmem:[%s946 + $0x34] sm:$0xf] %v709
        %v981 = vld [vmem:[%s946 + $0x38] sm:$0x1]
        %v982 = vsel %vm321, %v710, %v981
        %983 = vst [vmem:[%s946 + $0x38] sm:$0x1] %v982
        %v984 = vld [vmem:[%s946 + $0x3c] sm:$0xf]
        %v985 = vsel %vm948, %v717, %v984
        %986 = vst [vmem:[%s946 + $0x3c] sm:$0xf] %v985
        %987 = vst [vmem:[%s946 + $0x40] sm:$0xf] %v726
        %v988 = vld [vmem:[%s946 + $0x44] sm:$0x1]
        %v989 = vsel %vm321, %v727, %v988
        %990 = vst [vmem:[%s946 + $0x44] sm:$0x1] %v989
        %v991 = vld [vmem:[%s946 + $0x48] sm:$0xf]
        %v992 = vsel %vm948, %v734, %v991
        %993 = vst [vmem:[%s946 + $0x48] sm:$0xf] %v992
        %994 = vst [vmem:[%s946 + $0x4c] sm:$0xf] %v743
        %v995 = vld [vmem:[%s946 + $0x50] sm:$0x1]
        %v996 = vsel %vm321, %v744, %v995
        %997 = vst [vmem:[%s946 + $0x50] sm:$0x1] %v996
        %v998 = vld [vmem:[%s946 + $0x54] sm:$0xf]
        %v999 = vsel %vm948, %v751, %v998
        %1000 = vst [vmem:[%s946 + $0x54] sm:$0xf] %v999
        %1001 = vst [vmem:[%s946 + $0x58] sm:$0xf] %v760
        %v1002 = vld [vmem:[%s946 + $0x5c] sm:$0x1]
        %v1003 = vsel %vm321, %v761, %v1002
        %1004 = vst [vmem:[%s946 + $0x5c] sm:$0x1] %v1003
        %v1005 = vld [vmem:[%s946 + $0x60] sm:$0xf]
        %v1006 = vsel %vm948, %v768, %v1005
        %1007 = vst [vmem:[%s946 + $0x60] sm:$0xf] %v1006
        %1008 = vst [vmem:[%s946 + $0x64] sm:$0xf] %v777
        %v1009 = vld [vmem:[%s946 + $0x68] sm:$0x1]
        %v1010 = vsel %vm321, %v778, %v1009
        %1011 = vst [vmem:[%s946 + $0x68] sm:$0x1] %v1010
        %v1012 = vld [vmem:[%s946 + $0x6c] sm:$0xf]
        %v1013 = vsel %vm948, %v785, %v1012
        %1014 = vst [vmem:[%s946 + $0x6c] sm:$0xf] %v1013
        %1015 = vst [vmem:[%s946 + $0x70] sm:$0xf] %v794
        %v1016 = vld [vmem:[%s946 + $0x74] sm:$0x1]
        %v1017 = vsel %vm321, %v795, %v1016
        %1018 = vst [vmem:[%s946 + $0x74] sm:$0x1] %v1017
        %v1019 = vld [vmem:[%s946 + $0x78] sm:$0xf]
        %v1020 = vsel %vm948, %v802, %v1019
        %1021 = vst [vmem:[%s946 + $0x78] sm:$0xf] %v1020
        %1022 = vst [vmem:[%s946 + $0x7c] sm:$0xf] %v811
        %v1023 = vld [vmem:[%s946 + $0x80] sm:$0x1]
        %v1024 = vsel %vm321, %v812, %v1023
        %1025 = vst [vmem:[%s946 + $0x80] sm:$0x1] %v1024
        %v1026 = vld [vmem:[%s946 + $0x84] sm:$0xf]
        %v1027 = vsel %vm948, %v819, %v1026
        %1028 = vst [vmem:[%s946 + $0x84] sm:$0xf] %v1027
        %1029 = vst [vmem:[%s946 + $0x88] sm:$0xf] %v828
        %v1030 = vld [vmem:[%s946 + $0x8c] sm:$0x1]
        %v1031 = vsel %vm321, %v829, %v1030
        %1032 = vst [vmem:[%s946 + $0x8c] sm:$0x1] %v1031
        %v1033 = vld [vmem:[%s946 + $0x90] sm:$0xf]
        %v1034 = vsel %vm948, %v836, %v1033
        %1035 = vst [vmem:[%s946 + $0x90] sm:$0xf] %v1034
        %1036 = vst [vmem:[%s946 + $0x94] sm:$0xf] %v845
        %v1037 = vld [vmem:[%s946 + $0x98] sm:$0x1]
        %v1038 = vsel %vm321, %v846, %v1037
        %1039 = vst [vmem:[%s946 + $0x98] sm:$0x1] %v1038
        %v1040 = vld [vmem:[%s946 + $0x9c] sm:$0xf]
        %v1041 = vsel %vm948, %v853, %v1040
        %1042 = vst [vmem:[%s946 + $0x9c] sm:$0xf] %v1041
        %1043 = vst [vmem:[%s946 + $0xa0] sm:$0xf] %v862
        %v1044 = vld [vmem:[%s946 + $0xa4] sm:$0x1]
        %v1045 = vsel %vm321, %v863, %v1044
        %1046 = vst [vmem:[%s946 + $0xa4] sm:$0x1] %v1045
        %v1047 = vld [vmem:[%s946 + $0xa8] sm:$0xf]
        %v1048 = vsel %vm948, %v870, %v1047
        %1049 = vst [vmem:[%s946 + $0xa8] sm:$0xf] %v1048
        %1050 = vst [vmem:[%s946 + $0xac] sm:$0xf] %v879
        %v1051 = vld [vmem:[%s946 + $0xb0] sm:$0x1]
        %v1052 = vsel %vm321, %v880, %v1051
        %1053 = vst [vmem:[%s946 + $0xb0] sm:$0x1] %v1052
        %v1054 = vld [vmem:[%s946 + $0xb4] sm:$0xf]
        %v1055 = vsel %vm948, %v887, %v1054
        %1056 = vst [vmem:[%s946 + $0xb4] sm:$0xf] %v1055
        %1057 = vst [vmem:[%s946 + $0xb8] sm:$0xf] %v896
        %v1058 = vld [vmem:[%s946 + $0xbc] sm:$0x1]
        %v1059 = vsel %vm321, %v897, %v1058
        %1060 = vst [vmem:[%s946 + $0xbc] sm:$0x1] %v1059
        %v1061 = vld [vmem:[#allocation2] sm:$0xf]
        %v1062 = vld [vmem:[#allocation2 + $0x4] sm:$0xf]
        %v1063 = vld [vmem:[#allocation2 + $0xc] sm:$0xf]
        %v1064 = vld [vmem:[#allocation2 + $0x10] sm:$0xf]
        %v1065 = vld [vmem:[#allocation2 + $0x18] sm:$0xf]
        %v1066 = vld [vmem:[#allocation2 + $0x1c] sm:$0xf]
        %v1067 = vld [vmem:[#allocation2 + $0x24] sm:$0xf]
        %v1068 = vld [vmem:[#allocation2 + $0x28] sm:$0xf]
        %v1069 = vld [vmem:[#allocation2 + $0x30] sm:$0xf]
        %v1070 = vld [vmem:[#allocation2 + $0x34] sm:$0xf]
        %v1071 = vld [vmem:[#allocation2 + $0x3c] sm:$0xf]
        %v1072 = vld [vmem:[#allocation2 + $0x40] sm:$0xf]
        %v1073 = vld [vmem:[#allocation2 + $0x48] sm:$0xf]
        %v1074 = vld [vmem:[#allocation2 + $0x4c] sm:$0xf]
        %v1075 = vld [vmem:[#allocation2 + $0x54] sm:$0xf]
        %v1076 = vld [vmem:[#allocation2 + $0x58] sm:$0xf]
        %v1077 = vld [vmem:[#allocation2 + $0x60] sm:$0xf]
        %v1078 = vld [vmem:[#allocation2 + $0x64] sm:$0xf]
        %v1079 = vld [vmem:[#allocation2 + $0x6c] sm:$0xf]
        %v1080 = vld [vmem:[#allocation2 + $0x70] sm:$0xf]
        %v1081 = vld [vmem:[#allocation2 + $0x78] sm:$0xf]
        %v1082 = vld [vmem:[#allocation2 + $0x7c] sm:$0xf]
        %v1083 = vld [vmem:[#allocation2 + $0x84] sm:$0xf]
        %v1084 = vld [vmem:[#allocation2 + $0x88] sm:$0xf]
        %v1085 = vld [vmem:[#allocation2 + $0x90] sm:$0xf]
        %v1086 = vld [vmem:[#allocation2 + $0x94] sm:$0xf]
        %v1087 = vld [vmem:[#allocation2 + $0x9c] sm:$0xf]
        %v1088 = vld [vmem:[#allocation2 + $0xa0] sm:$0xf]
        %v1089 = vld [vmem:[#allocation2 + $0xa8] sm:$0xf]
        %v1090 = vld [vmem:[#allocation2 + $0xac] sm:$0xf]
        %v1091 = vld [vmem:[#allocation2 + $0xb4] sm:$0xf]
        %v1092 = vld [vmem:[#allocation2 + $0xb8] sm:$0xf]
        %v1093 = vld [vmem:[#allocation4] sm:$0xf]
        %v1094 = vld [vmem:[#allocation4 + $0x4] sm:$0xf]
        %v1095 = vld [vmem:[#allocation4 + $0x8] sm:$0xf]
        %v1096 = vld [vmem:[#allocation4 + $0xc] sm:$0xf]
        %v1097 = vld [vmem:[#allocation4 + $0x10] sm:$0xf]
        %v1098 = vld [vmem:[#allocation4 + $0x14] sm:$0xf]
        %v1099 = vld [vmem:[#allocation4 + $0x18] sm:$0xf]
        %v1100 = vld [vmem:[#allocation4 + $0x1c] sm:$0xf]
        %v1101 = vld [vmem:[#allocation4 + $0x20] sm:$0xf]
        %v1102 = vld [vmem:[#allocation4 + $0x24] sm:$0xf]
        %v1103 = vld [vmem:[#allocation4 + $0x28] sm:$0xf]
        %v1104 = vld [vmem:[#allocation4 + $0x2c] sm:$0xf]
        %v1105 = vld [vmem:[#allocation4 + $0x30] sm:$0xf]
        %v1106 = vld [vmem:[#allocation4 + $0x34] sm:$0xf]
        %v1107 = vld [vmem:[#allocation4 + $0x38] sm:$0xf]
        %v1108 = vld [vmem:[#allocation4 + $0x3c] sm:$0xf]
        %v1109 = vld [vmem:[#allocation2 + $0x8] sm:$0x1]
        %v1110 = vld [vmem:[#allocation2 + $0x14] sm:$0x1]
        %v1111 = vld [vmem:[#allocation2 + $0x20] sm:$0x1]
        %v1112 = vld [vmem:[#allocation2 + $0x2c] sm:$0x1]
        %v1113 = vld [vmem:[#allocation2 + $0x38] sm:$0x1]
        %v1114 = vld [vmem:[#allocation2 + $0x44] sm:$0x1]
        %v1115 = vld [vmem:[#allocation2 + $0x50] sm:$0x1]
        %v1116 = vld [vmem:[#allocation2 + $0x5c] sm:$0x1]
        %v1117 = vld [vmem:[#allocation2 + $0x68] sm:$0x1]
        %v1118 = vld [vmem:[#allocation2 + $0x74] sm:$0x1]
        %v1119 = vld [vmem:[#allocation2 + $0x80] sm:$0x1]
        %v1120 = vld [vmem:[#allocation2 + $0x8c] sm:$0x1]
        %v1121 = vld [vmem:[#allocation2 + $0x98] sm:$0x1]
        %v1122 = vld [vmem:[#allocation2 + $0xa4] sm:$0x1]
        %v1123 = vld [vmem:[#allocation2 + $0xb0] sm:$0x1]
        %v1124 = vld [vmem:[#allocation2 + $0xbc] sm:$0x1]
        %vm1125 = vsmask.f32 3328
        %vm1126 = vsmask.f32 7440
        %vm1127 = vmor %vm1125, %vm1126
        %v1129 = vshrl.u32 %v1061, 16
        %v1131 = vrot.slane %v1129, 4
        %v1132 = vshll.u32 %v1061, 16
        %v1134 = vrot.slane %v1132, 5
        %v1135 = vor.u32 %v1131, %v1134
        %v1136 = vrot.slane %v1135, 4
        %v1138 = vshll.u32 %v1062, 16
        %v1140 = vrot.slane %v1138, 5
        %v1141 = vsel %vm1127, %v1136, %v1140
        %v1142 = vshrl.u32 %v1062, 16
        %v1144 = vrot.slane %v1142, 4
        %v1145 = vor.u32 %v1144, %v1140
        %v1146 = vrot.slane %v1145, 4
        %v1148 = vshll.u32 %v1109, 16
        %v1150 = vrot.slane %v1148, 5
        %v1151 = vsel %vm1127, %v1146, %v1150
        %v1153 = vshrl.u32 %v1063, 16
        %v1155 = vrot.slane %v1153, 4
        %v1156 = vshll.u32 %v1063, 16
        %v1158 = vrot.slane %v1156, 5
        %v1159 = vor.u32 %v1155, %v1158
        %v1160 = vrot.slane %v1159, 4
        %v1162 = vshll.u32 %v1064, 16
        %v1164 = vrot.slane %v1162, 5
        %v1165 = vsel %vm1127, %v1160, %v1164
        %v1166 = vshrl.u32 %v1064, 16
        %v1168 = vrot.slane %v1166, 4
        %v1169 = vor.u32 %v1168, %v1164
        %v1170 = vrot.slane %v1169, 4
        %v1172 = vshll.u32 %v1110, 16
        %v1174 = vrot.slane %v1172, 5
        %v1175 = vsel %vm1127, %v1170, %v1174
        %v1177 = vshrl.u32 %v1065, 16
        %v1179 = vrot.slane %v1177, 4
        %v1180 = vshll.u32 %v1065, 16
        %v1182 = vrot.slane %v1180, 5
        %v1183 = vor.u32 %v1179, %v1182
        %v1184 = vrot.slane %v1183, 4
        %v1186 = vshll.u32 %v1066, 16
        %v1188 = vrot.slane %v1186, 5
        %v1189 = vsel %vm1127, %v1184, %v1188
        %v1190 = vshrl.u32 %v1066, 16
        %v1192 = vrot.slane %v1190, 4
        %v1193 = vor.u32 %v1192, %v1188
        %v1194 = vrot.slane %v1193, 4
        %v1196 = vshll.u32 %v1111, 16
        %v1198 = vrot.slane %v1196, 5
        %v1199 = vsel %vm1127, %v1194, %v1198
        %v1201 = vshrl.u32 %v1067, 16
        %v1203 = vrot.slane %v1201, 4
        %v1204 = vshll.u32 %v1067, 16
        %v1206 = vrot.slane %v1204, 5
        %v1207 = vor.u32 %v1203, %v1206
        %v1208 = vrot.slane %v1207, 4
        %v1210 = vshll.u32 %v1068, 16
        %v1212 = vrot.slane %v1210, 5
        %v1213 = vsel %vm1127, %v1208, %v1212
        %v1214 = vshrl.u32 %v1068, 16
        %v1216 = vrot.slane %v1214, 4
        %v1217 = vor.u32 %v1216, %v1212
        %v1218 = vrot.slane %v1217, 4
        %v1220 = vshll.u32 %v1112, 16
        %v1222 = vrot.slane %v1220, 5
        %v1223 = vsel %vm1127, %v1218, %v1222
        %v1225 = vshrl.u32 %v1069, 16
        %v1227 = vrot.slane %v1225, 4
        %v1228 = vshll.u32 %v1069, 16
        %v1230 = vrot.slane %v1228, 5
        %v1231 = vor.u32 %v1227, %v1230
        %v1232 = vrot.slane %v1231, 4
        %v1234 = vshll.u32 %v1070, 16
        %v1236 = vrot.slane %v1234, 5
        %v1237 = vsel %vm1127, %v1232, %v1236
        %v1238 = vshrl.u32 %v1070, 16
        %v1240 = vrot.slane %v1238, 4
        %v1241 = vor.u32 %v1240, %v1236
        %v1242 = vrot.slane %v1241, 4
        %v1244 = vshll.u32 %v1113, 16
        %v1246 = vrot.slane %v1244, 5
        %v1247 = vsel %vm1127, %v1242, %v1246
        %v1249 = vshrl.u32 %v1071, 16
        %v1251 = vrot.slane %v1249, 4
        %v1252 = vshll.u32 %v1071, 16
        %v1254 = vrot.slane %v1252, 5
        %v1255 = vor.u32 %v1251, %v1254
        %v1256 = vrot.slane %v1255, 4
        %v1258 = vshll.u32 %v1072, 16
        %v1260 = vrot.slane %v1258, 5
        %v1261 = vsel %vm1127, %v1256, %v1260
        %v1262 = vshrl.u32 %v1072, 16
        %v1264 = vrot.slane %v1262, 4
        %v1265 = vor.u32 %v1264, %v1260
        %v1266 = vrot.slane %v1265, 4
        %v1268 = vshll.u32 %v1114, 16
        %v1270 = vrot.slane %v1268, 5
        %v1271 = vsel %vm1127, %v1266, %v1270
        %v1273 = vshrl.u32 %v1073, 16
        %v1275 = vrot.slane %v1273, 4
        %v1276 = vshll.u32 %v1073, 16
        %v1278 = vrot.slane %v1276, 5
        %v1279 = vor.u32 %v1275, %v1278
        %v1280 = vrot.slane %v1279, 4
        %v1282 = vshll.u32 %v1074, 16
        %v1284 = vrot.slane %v1282, 5
        %v1285 = vsel %vm1127, %v1280, %v1284
        %v1286 = vshrl.u32 %v1074, 16
        %v1288 = vrot.slane %v1286, 4
        %v1289 = vor.u32 %v1288, %v1284
        %v1290 = vrot.slane %v1289, 4
        %v1292 = vshll.u32 %v1115, 16
        %v1294 = vrot.slane %v1292, 5
        %v1295 = vsel %vm1127, %v1290, %v1294
        %v1297 = vshrl.u32 %v1075, 16
        %v1299 = vrot.slane %v1297, 4
        %v1300 = vshll.u32 %v1075, 16
        %v1302 = vrot.slane %v1300, 5
        %v1303 = vor.u32 %v1299, %v1302
        %v1304 = vrot.slane %v1303, 4
        %v1306 = vshll.u32 %v1076, 16
        %v1308 = vrot.slane %v1306, 5
        %v1309 = vsel %vm1127, %v1304, %v1308
        %v1310 = vshrl.u32 %v1076, 16
        %v1312 = vrot.slane %v1310, 4
        %v1313 = vor.u32 %v1312, %v1308
        %v1314 = vrot.slane %v1313, 4
        %v1316 = vshll.u32 %v1116, 16
        %v1318 = vrot.slane %v1316, 5
        %v1319 = vsel %vm1127, %v1314, %v1318
        %v1321 = vshrl.u32 %v1077, 16
        %v1323 = vrot.slane %v1321, 4
        %v1324 = vshll.u32 %v1077, 16
        %v1326 = vrot.slane %v1324, 5
        %v1327 = vor.u32 %v1323, %v1326
        %v1328 = vrot.slane %v1327, 4
        %v1330 = vshll.u32 %v1078, 16
        %v1332 = vrot.slane %v1330, 5
        %v1333 = vsel %vm1127, %v1328, %v1332
        %v1334 = vshrl.u32 %v1078, 16
        %v1336 = vrot.slane %v1334, 4
        %v1337 = vor.u32 %v1336, %v1332
        %v1338 = vrot.slane %v1337, 4
        %v1340 = vshll.u32 %v1117, 16
        %v1342 = vrot.slane %v1340, 5
        %v1343 = vsel %vm1127, %v1338, %v1342
        %v1345 = vshrl.u32 %v1079, 16
        %v1347 = vrot.slane %v1345, 4
        %v1348 = vshll.u32 %v1079, 16
        %v1350 = vrot.slane %v1348, 5
        %v1351 = vor.u32 %v1347, %v1350
        %v1352 = vrot.slane %v1351, 4
        %v1354 = vshll.u32 %v1080, 16
        %v1356 = vrot.slane %v1354, 5
        %v1357 = vsel %vm1127, %v1352, %v1356
        %v1358 = vshrl.u32 %v1080, 16
        %v1360 = vrot.slane %v1358, 4
        %v1361 = vor.u32 %v1360, %v1356
        %v1362 = vrot.slane %v1361, 4
        %v1364 = vshll.u32 %v1118, 16
        %v1366 = vrot.slane %v1364, 5
        %v1367 = vsel %vm1127, %v1362, %v1366
        %v1369 = vshrl.u32 %v1081, 16
        %v1371 = vrot.slane %v1369, 4
        %v1372 = vshll.u32 %v1081, 16
        %v1374 = vrot.slane %v1372, 5
        %v1375 = vor.u32 %v1371, %v1374
        %v1376 = vrot.slane %v1375, 4
        %v1378 = vshll.u32 %v1082, 16
        %v1380 = vrot.slane %v1378, 5
        %v1381 = vsel %vm1127, %v1376, %v1380
        %v1382 = vshrl.u32 %v1082, 16
        %v1384 = vrot.slane %v1382, 4
        %v1385 = vor.u32 %v1384, %v1380
        %v1386 = vrot.slane %v1385, 4
        %v1388 = vshll.u32 %v1119, 16
        %v1390 = vrot.slane %v1388, 5
        %v1391 = vsel %vm1127, %v1386, %v1390
        %v1393 = vshrl.u32 %v1083, 16
        %v1395 = vrot.slane %v1393, 4
        %v1396 = vshll.u32 %v1083, 16
        %v1398 = vrot.slane %v1396, 5
        %v1399 = vor.u32 %v1395, %v1398
        %v1400 = vrot.slane %v1399, 4
        %v1402 = vshll.u32 %v1084, 16
        %v1404 = vrot.slane %v1402, 5
        %v1405 = vsel %vm1127, %v1400, %v1404
        %v1406 = vshrl.u32 %v1084, 16
        %v1408 = vrot.slane %v1406, 4
        %v1409 = vor.u32 %v1408, %v1404
        %v1410 = vrot.slane %v1409, 4
        %v1412 = vshll.u32 %v1120, 16
        %v1414 = vrot.slane %v1412, 5
        %v1415 = vsel %vm1127, %v1410, %v1414
        %v1417 = vshrl.u32 %v1085, 16
        %v1419 = vrot.slane %v1417, 4
        %v1420 = vshll.u32 %v1085, 16
        %v1422 = vrot.slane %v1420, 5
        %v1423 = vor.u32 %v1419, %v1422
        %v1424 = vrot.slane %v1423, 4
        %v1426 = vshll.u32 %v1086, 16
        %v1428 = vrot.slane %v1426, 5
        %v1429 = vsel %vm1127, %v1424, %v1428
        %v1430 = vshrl.u32 %v1086, 16
        %v1432 = vrot.slane %v1430, 4
        %v1433 = vor.u32 %v1432, %v1428
        %v1434 = vrot.slane %v1433, 4
        %v1436 = vshll.u32 %v1121, 16
        %v1438 = vrot.slane %v1436, 5
        %v1439 = vsel %vm1127, %v1434, %v1438
        %v1441 = vshrl.u32 %v1087, 16
        %v1443 = vrot.slane %v1441, 4
        %v1444 = vshll.u32 %v1087, 16
        %v1446 = vrot.slane %v1444, 5
        %v1447 = vor.u32 %v1443, %v1446
        %v1448 = vrot.slane %v1447, 4
        %v1450 = vshll.u32 %v1088, 16
        %v1452 = vrot.slane %v1450, 5
        %v1453 = vsel %vm1127, %v1448, %v1452
        %v1454 = vshrl.u32 %v1088, 16
        %v1456 = vrot.slane %v1454, 4
        %v1457 = vor.u32 %v1456, %v1452
        %v1458 = vrot.slane %v1457, 4
        %v1460 = vshll.u32 %v1122, 16
        %v1462 = vrot.slane %v1460, 5
        %v1463 = vsel %vm1127, %v1458, %v1462
        %v1465 = vshrl.u32 %v1089, 16
        %v1467 = vrot.slane %v1465, 4
        %v1468 = vshll.u32 %v1089, 16
        %v1470 = vrot.slane %v1468, 5
        %v1471 = vor.u32 %v1467, %v1470
        %v1472 = vrot.slane %v1471, 4
        %v1474 = vshll.u32 %v1090, 16
        %v1476 = vrot.slane %v1474, 5
        %v1477 = vsel %vm1127, %v1472, %v1476
        %v1478 = vshrl.u32 %v1090, 16
        %v1480 = vrot.slane %v1478, 4
        %v1481 = vor.u32 %v1480, %v1476
        %v1482 = vrot.slane %v1481, 4
        %v1484 = vshll.u32 %v1123, 16
        %v1486 = vrot.slane %v1484, 5
        %v1487 = vsel %vm1127, %v1482, %v1486
        %v1489 = vshrl.u32 %v1091, 16
        %v1491 = vrot.slane %v1489, 4
        %v1492 = vshll.u32 %v1091, 16
        %v1494 = vrot.slane %v1492, 5
        %v1495 = vor.u32 %v1491, %v1494
        %v1496 = vrot.slane %v1495, 4
        %v1498 = vshll.u32 %v1092, 16
        %v1500 = vrot.slane %v1498, 5
        %v1501 = vsel %vm1127, %v1496, %v1500
        %v1502 = vshrl.u32 %v1092, 16
        %v1504 = vrot.slane %v1502, 4
        %v1505 = vor.u32 %v1504, %v1500
        %v1506 = vrot.slane %v1505, 4
        %v1508 = vshll.u32 %v1124, 16
        %v1510 = vrot.slane %v1508, 5
        %v1511 = vsel %vm1127, %v1506, %v1510
        %s1512 = scalar_lea.vmem [#allocation4], 64
        %v1513 = vld [vmem:[%s1512] sm:$0xf]
        %v1514 = vld [vmem:[%s1512 + $0x4] sm:$0xf]
        %v1515 = vld [vmem:[%s1512 + $0x8] sm:$0xf]
        %v1516 = vld [vmem:[%s1512 + $0xc] sm:$0xf]
        %v1517 = vld [vmem:[%s1512 + $0x10] sm:$0xf]
        %v1518 = vld [vmem:[%s1512 + $0x14] sm:$0xf]
        %v1519 = vld [vmem:[%s1512 + $0x18] sm:$0xf]
        %v1520 = vld [vmem:[%s1512 + $0x1c] sm:$0xf]
        %v1521 = vld [vmem:[%s1512 + $0x20] sm:$0xf]
        %v1522 = vld [vmem:[%s1512 + $0x24] sm:$0xf]
        %v1523 = vld [vmem:[%s1512 + $0x28] sm:$0xf]
        %v1524 = vld [vmem:[%s1512 + $0x2c] sm:$0xf]
        %v1525 = vld [vmem:[%s1512 + $0x30] sm:$0xf]
        %v1526 = vld [vmem:[%s1512 + $0x34] sm:$0xf]
        %v1527 = vld [vmem:[%s1512 + $0x38] sm:$0xf]
        %v1528 = vld [vmem:[%s1512 + $0x3c] sm:$0xf]
        %v1529 = vunpack.c.l.b16 %v1141
        %v1530 = vunpack.c.l.b16 %v1151
        %v1531 = vunpack.c.l.b16 %v1165
        %v1532 = vunpack.c.l.b16 %v1175
        %v1533 = vunpack.c.l.b16 %v1189
        %v1534 = vunpack.c.l.b16 %v1199
        %v1535 = vunpack.c.l.b16 %v1213
        %v1536 = vunpack.c.l.b16 %v1223
        %v1537 = vunpack.c.l.b16 %v1237
        %v1538 = vunpack.c.l.b16 %v1247
        %v1539 = vunpack.c.l.b16 %v1261
        %v1540 = vunpack.c.l.b16 %v1271
        %v1541 = vunpack.c.l.b16 %v1285
        %v1542 = vunpack.c.l.b16 %v1295
        %v1543 = vunpack.c.l.b16 %v1309
        %v1544 = vunpack.c.l.b16 %v1319
        %v1545 = vunpack.c.l.b16 %v1333
        %v1546 = vunpack.c.l.b16 %v1343
        %v1547 = vunpack.c.l.b16 %v1357
        %v1548 = vunpack.c.l.b16 %v1367
        %v1549 = vunpack.c.l.b16 %v1381
        %v1550 = vunpack.c.l.b16 %v1391
        %v1551 = vunpack.c.l.b16 %v1405
        %v1552 = vunpack.c.l.b16 %v1415
        %v1553 = vunpack.c.l.b16 %v1429
        %v1554 = vunpack.c.l.b16 %v1439
        %v1555 = vunpack.c.l.b16 %v1453
        %v1556 = vunpack.c.l.b16 %v1463
        %v1557 = vunpack.c.l.b16 %v1477
        %v1558 = vunpack.c.l.b16 %v1487
        %v1559 = vunpack.c.l.b16 %v1501
        %v1560 = vunpack.c.l.b16 %v1511
        %v1561 = vpack.c.b16 %v1530, %v1529
        %v1562 = vpack.c.b16 %v1532, %v1531
        %v1563 = vpack.c.b16 %v1534, %v1533
        %v1564 = vpack.c.b16 %v1536, %v1535
        %v1565 = vpack.c.b16 %v1538, %v1537
        %v1566 = vpack.c.b16 %v1540, %v1539
        %v1567 = vpack.c.b16 %v1542, %v1541
        %v1568 = vpack.c.b16 %v1544, %v1543
        %v1569 = vpack.c.b16 %v1546, %v1545
        %v1570 = vpack.c.b16 %v1548, %v1547
        %v1571 = vpack.c.b16 %v1550, %v1549
        %v1572 = vpack.c.b16 %v1552, %v1551
        %v1573 = vpack.c.b16 %v1554, %v1553
        %v1574 = vpack.c.b16 %v1556, %v1555
        %v1575 = vpack.c.b16 %v1558, %v1557
        %v1576 = vpack.c.b16 %v1560, %v1559
        %v1609 = vunpack.c.l.b16 %v1513
        %v1610 = vunpack.c.l.b16 %v1514
        %v1611 = vunpack.c.l.b16 %v1515
        %v1612 = vunpack.c.l.b16 %v1516
        %v1613 = vunpack.c.l.b16 %v1517
        %v1614 = vunpack.c.l.b16 %v1518
        %v1615 = vunpack.c.l.b16 %v1519
        %v1616 = vunpack.c.l.b16 %v1520
        %v1617 = vunpack.c.l.b16 %v1521
        %v1618 = vunpack.c.l.b16 %v1522
        %v1619 = vunpack.c.l.b16 %v1523
        %v1620 = vunpack.c.l.b16 %v1524
        %v1621 = vunpack.c.l.b16 %v1525
        %v1622 = vunpack.c.l.b16 %v1526
        %v1623 = vunpack.c.l.b16 %v1527
        %v1624 = vunpack.c.l.b16 %v1528
        %v1625 = vpack.c.b16 %v1610, %v1609
        %v1626 = vpack.c.b16 %v1612, %v1611
        %v1627 = vpack.c.b16 %v1614, %v1613
        %v1628 = vpack.c.b16 %v1616, %v1615
        %v1629 = vpack.c.b16 %v1618, %v1617
        %v1630 = vpack.c.b16 %v1620, %v1619
        %v1631 = vpack.c.b16 %v1622, %v1621
        %v1632 = vpack.c.b16 %v1624, %v1623
        %1641 = vmatprep.subr.bf16.mxu0 0
        %1642 = vmatpush1.bf16.msra.mxu0 %v1632
        %1643 = vmatprep.subr.bf16.mxu0 0
        %1644 = vmatpush1.bf16.msra.mxu0 %v1631
        %1645 = vmatprep.subr.bf16.mxu0 0
        %1646 = vmatpush1.bf16.msra.mxu0 %v1630
        %1647 = vmatprep.subr.bf16.mxu0 0
        %1648 = vmatpush1.bf16.msra.mxu0 %v1629
        %1649 = vmatprep.subr.bf16.mxu0 0
        %1650 = vmatpush1.bf16.msra.mxu0 %v1628
        %1651 = vmatprep.subr.bf16.mxu0 0
        %1652 = vmatpush1.bf16.msra.mxu0 %v1627
        %1653 = vmatprep.subr.bf16.mxu0 0
        %1654 = vmatpush1.bf16.msra.mxu0 %v1626
        %1655 = vmatprep.subr.bf16.mxu0 0
        %1656 = vmatpush1.bf16.msra.mxu0 %v1625
        %1657 = vmatprep.subr.bf16.mxu0 0
        %1658 = vmatpush2.bf16.msra.mxu0 0
        %1659 = vmatprep.subr.bf16.mxu0 0
        %1660 = vmatpush2.bf16.msra.mxu0 0
        %1661 = vmatprep.subr.bf16.mxu0 0
        %1662 = vmatpush2.bf16.msra.mxu0 0
        %1663 = vmatprep.subr.bf16.mxu0 0
        %1664 = vmatpush2.bf16.msra.mxu0 0
        %1665 = vmatprep.subr.bf16.mxu0 0
        %1666 = vmatpush2.bf16.msra.mxu0 0
        %1667 = vmatprep.subr.bf16.mxu0 0
        %1668 = vmatpush2.bf16.msra.mxu0 0
        %1669 = vmatprep.subr.bf16.mxu0 0
        %1670 = vmatpush2.bf16.msra.mxu0 0
        %1671 = vmatprep.subr.bf16.mxu0 0
        %1672 = vmatpush2.bf16.msra.mxu0 0
        %1673 = vmatprep.mubr.bf16.mxu0 0
        %1674 = vmatmul.mubr.bf16.gmra.mxu0 %v1561
        %v1675 = vpop.f32.mrf.mxu0
        %v1676 = vadd.f32 0.0, %v1675
        %v1677 = vpop.f32.mrf.mxu0
        %v1678 = vpop.f32.mrf.mxu0
        %v1679 = vadd.f32 0.0, %v1678
        %v1680 = vpop.f32.mrf.mxu0
        %1681 = vmatprep.mubr.bf16.mxu0 0
        %1682 = vmatmul.mubr.bf16.gmra.mxu0 %v1562
        %v1683 = vpop.f32.mrf.mxu0
        %v1684 = vadd.f32 0.0, %v1683
        %v1685 = vpop.f32.mrf.mxu0
        %v1686 = vpop.f32.mrf.mxu0
        %v1687 = vadd.f32 0.0, %v1686
        %v1688 = vpop.f32.mrf.mxu0
        %1689 = vmatprep.mubr.bf16.mxu0 0
        %1690 = vmatmul.mubr.bf16.gmra.mxu0 %v1563
        %v1691 = vpop.f32.mrf.mxu0
        %v1692 = vadd.f32 0.0, %v1691
        %v1693 = vpop.f32.mrf.mxu0
        %v1694 = vpop.f32.mrf.mxu0
        %v1695 = vadd.f32 0.0, %v1694
        %v1696 = vpop.f32.mrf.mxu0
        %1697 = vmatprep.mubr.bf16.mxu0 0
        %1698 = vmatmul.mubr.bf16.gmra.mxu0 %v1564
        %v1699 = vpop.f32.mrf.mxu0
        %v1700 = vadd.f32 0.0, %v1699
        %v1701 = vpop.f32.mrf.mxu0
        %v1702 = vpop.f32.mrf.mxu0
        %v1703 = vadd.f32 0.0, %v1702
        %v1704 = vpop.f32.mrf.mxu0
        %1705 = vmatprep.mubr.bf16.mxu0 0
        %1706 = vmatmul.mubr.bf16.gmra.mxu0 %v1565
        %v1707 = vpop.f32.mrf.mxu0
        %v1708 = vadd.f32 0.0, %v1707
        %v1709 = vpop.f32.mrf.mxu0
        %v1710 = vpop.f32.mrf.mxu0
        %v1711 = vadd.f32 0.0, %v1710
        %v1712 = vpop.f32.mrf.mxu0
        %1713 = vmatprep.mubr.bf16.mxu0 0
        %1714 = vmatmul.mubr.bf16.gmra.mxu0 %v1566
        %v1715 = vpop.f32.mrf.mxu0
        %v1716 = vadd.f32 0.0, %v1715
        %v1717 = vpop.f32.mrf.mxu0
        %v1718 = vpop.f32.mrf.mxu0
        %v1719 = vadd.f32 0.0, %v1718
        %v1720 = vpop.f32.mrf.mxu0
        %1721 = vmatprep.mubr.bf16.mxu0 0
        %1722 = vmatmul.mubr.bf16.gmra.mxu0 %v1567
        %v1723 = vpop.f32.mrf.mxu0
        %v1724 = vadd.f32 0.0, %v1723
        %v1725 = vpop.f32.mrf.mxu0
        %v1726 = vpop.f32.mrf.mxu0
        %v1727 = vadd.f32 0.0, %v1726
        %v1728 = vpop.f32.mrf.mxu0
        %1729 = vmatprep.mubr.bf16.mxu0 0
        %1730 = vmatmul.mubr.bf16.gmra.mxu0 %v1568
        %v1731 = vpop.f32.mrf.mxu0
        %v1732 = vadd.f32 0.0, %v1731
        %v1733 = vpop.f32.mrf.mxu0
        %v1734 = vpop.f32.mrf.mxu0
        %v1735 = vadd.f32 0.0, %v1734
        %v1736 = vpop.f32.mrf.mxu0
        %1737 = vmatprep.mubr.bf16.mxu0 0
        %1738 = vmatmul.mubr.bf16.gmra.mxu0 %v1569
        %v1739 = vpop.f32.mrf.mxu0
        %v1740 = vadd.f32 0.0, %v1739
        %v1741 = vpop.f32.mrf.mxu0
        %v1742 = vpop.f32.mrf.mxu0
        %v1743 = vadd.f32 0.0, %v1742
        %v1744 = vpop.f32.mrf.mxu0
        %1745 = vmatprep.mubr.bf16.mxu0 0
        %1746 = vmatmul.mubr.bf16.gmra.mxu0 %v1570
        %v1747 = vpop.f32.mrf.mxu0
        %v1748 = vadd.f32 0.0, %v1747
        %v1749 = vpop.f32.mrf.mxu0
        %v1750 = vpop.f32.mrf.mxu0
        %v1751 = vadd.f32 0.0, %v1750
        %v1752 = vpop.f32.mrf.mxu0
        %1753 = vmatprep.mubr.bf16.mxu0 0
        %1754 = vmatmul.mubr.bf16.gmra.mxu0 %v1571
        %v1755 = vpop.f32.mrf.mxu0
        %v1756 = vadd.f32 0.0, %v1755
        %v1757 = vpop.f32.mrf.mxu0
        %v1758 = vpop.f32.mrf.mxu0
        %v1759 = vadd.f32 0.0, %v1758
        %v1760 = vpop.f32.mrf.mxu0
        %1761 = vmatprep.mubr.bf16.mxu0 0
        %1762 = vmatmul.mubr.bf16.gmra.mxu0 %v1572
        %v1763 = vpop.f32.mrf.mxu0
        %v1764 = vadd.f32 0.0, %v1763
        %v1765 = vpop.f32.mrf.mxu0
        %v1766 = vpop.f32.mrf.mxu0
        %v1767 = vadd.f32 0.0, %v1766
        %v1768 = vpop.f32.mrf.mxu0
        %1769 = vmatprep.mubr.bf16.mxu0 0
        %1770 = vmatmul.mubr.bf16.gmra.mxu0 %v1573
        %v1771 = vpop.f32.mrf.mxu0
        %v1772 = vadd.f32 0.0, %v1771
        %v1773 = vpop.f32.mrf.mxu0
        %v1774 = vpop.f32.mrf.mxu0
        %v1775 = vadd.f32 0.0, %v1774
        %v1776 = vpop.f32.mrf.mxu0
        %1777 = vmatprep.mubr.bf16.mxu0 0
        %1778 = vmatmul.mubr.bf16.gmra.mxu0 %v1574
        %v1779 = vpop.f32.mrf.mxu0
        %v1780 = vadd.f32 0.0, %v1779
        %v1781 = vpop.f32.mrf.mxu0
        %v1782 = vpop.f32.mrf.mxu0
        %v1783 = vadd.f32 0.0, %v1782
        %v1784 = vpop.f32.mrf.mxu0
        %1785 = vmatprep.mubr.bf16.mxu0 0
        %1786 = vmatmul.mubr.bf16.gmra.mxu0 %v1575
        %v1787 = vpop.f32.mrf.mxu0
        %v1788 = vadd.f32 0.0, %v1787
        %v1789 = vpop.f32.mrf.mxu0
        %v1790 = vpop.f32.mrf.mxu0
        %v1791 = vadd.f32 0.0, %v1790
        %v1792 = vpop.f32.mrf.mxu0
        %1793 = vmatprep.mubr.bf16.mxu0 0
        %1794 = vmatmul.mubr.bf16.gmra.mxu0 %v1576
        %v1795 = vpop.f32.mrf.mxu0
        %v1796 = vadd.f32 0.0, %v1795
        %v1797 = vpop.f32.mrf.mxu0
        %v1798 = vpop.f32.mrf.mxu0
        %v1799 = vadd.f32 0.0, %v1798
        %v1800 = vpop.f32.mrf.mxu0
        %1801 = vdwg.mxu0
        %v1834 = vunpack.c.l.b16 %v1061
        %v1835 = vunpack.c.l.b16 %v1062
        %v1836 = vunpack.c.l.b16 %v1063
        %v1837 = vunpack.c.l.b16 %v1064
        %v1838 = vunpack.c.l.b16 %v1065
        %v1839 = vunpack.c.l.b16 %v1066
        %v1840 = vunpack.c.l.b16 %v1067
        %v1841 = vunpack.c.l.b16 %v1068
        %v1842 = vunpack.c.l.b16 %v1069
        %v1843 = vunpack.c.l.b16 %v1070
        %v1844 = vunpack.c.l.b16 %v1071
        %v1845 = vunpack.c.l.b16 %v1072
        %v1846 = vunpack.c.l.b16 %v1073
        %v1847 = vunpack.c.l.b16 %v1074
        %v1848 = vunpack.c.l.b16 %v1075
        %v1849 = vunpack.c.l.b16 %v1076
        %v1850 = vunpack.c.l.b16 %v1077
        %v1851 = vunpack.c.l.b16 %v1078
        %v1852 = vunpack.c.l.b16 %v1079
        %v1853 = vunpack.c.l.b16 %v1080
        %v1854 = vunpack.c.l.b16 %v1081
        %v1855 = vunpack.c.l.b16 %v1082
        %v1856 = vunpack.c.l.b16 %v1083
        %v1857 = vunpack.c.l.b16 %v1084
        %v1858 = vunpack.c.l.b16 %v1085
        %v1859 = vunpack.c.l.b16 %v1086
        %v1860 = vunpack.c.l.b16 %v1087
        %v1861 = vunpack.c.l.b16 %v1088
        %v1862 = vunpack.c.l.b16 %v1089
        %v1863 = vunpack.c.l.b16 %v1090
        %v1864 = vunpack.c.l.b16 %v1091
        %v1865 = vunpack.c.l.b16 %v1092
        %v1866 = vpack.c.b16 %v1835, %v1834
        %v1867 = vpack.c.b16 %v1837, %v1836
        %v1868 = vpack.c.b16 %v1839, %v1838
        %v1869 = vpack.c.b16 %v1841, %v1840
        %v1870 = vpack.c.b16 %v1843, %v1842
        %v1871 = vpack.c.b16 %v1845, %v1844
        %v1872 = vpack.c.b16 %v1847, %v1846
        %v1873 = vpack.c.b16 %v1849, %v1848
        %v1874 = vpack.c.b16 %v1851, %v1850
        %v1875 = vpack.c.b16 %v1853, %v1852
        %v1876 = vpack.c.b16 %v1855, %v1854
        %v1877 = vpack.c.b16 %v1857, %v1856
        %v1878 = vpack.c.b16 %v1859, %v1858
        %v1879 = vpack.c.b16 %v1861, %v1860
        %v1880 = vpack.c.b16 %v1863, %v1862
        %v1881 = vpack.c.b16 %v1865, %v1864
        %v1914 = vunpack.c.l.b16 %v1093
        %v1915 = vunpack.c.l.b16 %v1094
        %v1916 = vunpack.c.l.b16 %v1095
        %v1917 = vunpack.c.l.b16 %v1096
        %v1918 = vunpack.c.l.b16 %v1097
        %v1919 = vunpack.c.l.b16 %v1098
        %v1920 = vunpack.c.l.b16 %v1099
        %v1921 = vunpack.c.l.b16 %v1100
        %v1922 = vunpack.c.l.b16 %v1101
        %v1923 = vunpack.c.l.b16 %v1102
        %v1924 = vunpack.c.l.b16 %v1103
        %v1925 = vunpack.c.l.b16 %v1104
        %v1926 = vunpack.c.l.b16 %v1105
        %v1927 = vunpack.c.l.b16 %v1106
        %v1928 = vunpack.c.l.b16 %v1107
        %v1929 = vunpack.c.l.b16 %v1108
        %v1930 = vpack.c.b16 %v1915, %v1914
        %v1931 = vpack.c.b16 %v1917, %v1916
        %v1932 = vpack.c.b16 %v1919, %v1918
        %v1933 = vpack.c.b16 %v1921, %v1920
        %v1934 = vpack.c.b16 %v1923, %v1922
        %v1935 = vpack.c.b16 %v1925, %v1924
        %v1936 = vpack.c.b16 %v1927, %v1926
        %v1937 = vpack.c.b16 %v1929, %v1928
        %1946 = vmatprep.subr.bf16.mxu0 0
        %1947 = vmatpush1.bf16.msra.mxu0 %v1937
        %1948 = vmatprep.subr.bf16.mxu0 0
        %1949 = vmatpush1.bf16.msra.mxu0 %v1936
        %1950 = vmatprep.subr.bf16.mxu0 0
        %1951 = vmatpush1.bf16.msra.mxu0 %v1935
        %1952 = vmatprep.subr.bf16.mxu0 0
        %1953 = vmatpush1.bf16.msra.mxu0 %v1934
        %1954 = vmatprep.subr.bf16.mxu0 0
        %1955 = vmatpush1.bf16.msra.mxu0 %v1933
        %1956 = vmatprep.subr.bf16.mxu0 0
        %1957 = vmatpush1.bf16.msra.mxu0 %v1932
        %1958 = vmatprep.subr.bf16.mxu0 0
        %1959 = vmatpush1.bf16.msra.mxu0 %v1931
        %1960 = vmatprep.subr.bf16.mxu0 0
        %1961 = vmatpush1.bf16.msra.mxu0 %v1930
        %1962 = vmatprep.subr.bf16.mxu0 0
        %1963 = vmatpush2.bf16.msra.mxu0 0
        %1964 = vmatprep.subr.bf16.mxu0 0
        %1965 = vmatpush2.bf16.msra.mxu0 0
        %1966 = vmatprep.subr.bf16.mxu0 0
        %1967 = vmatpush2.bf16.msra.mxu0 0
        %1968 = vmatprep.subr.bf16.mxu0 0
        %1969 = vmatpush2.bf16.msra.mxu0 0
        %1970 = vmatprep.subr.bf16.mxu0 0
        %1971 = vmatpush2.bf16.msra.mxu0 0
        %1972 = vmatprep.subr.bf16.mxu0 0
        %1973 = vmatpush2.bf16.msra.mxu0 0
        %1974 = vmatprep.subr.bf16.mxu0 0
        %1975 = vmatpush2.bf16.msra.mxu0 0
        %1976 = vmatprep.subr.bf16.mxu0 0
        %1977 = vmatpush2.bf16.msra.mxu0 0
        %1978 = vmatprep.mubr.bf16.mxu0 0
        %1979 = vmatmul.mubr.bf16.gmra.mxu0 %v1866
        %v1980 = vpop.f32.mrf.mxu0
        %v1981 = vadd.f32 %v1676, %v1980
        %v1982 = vpop.f32.mrf.mxu0
        %v1983 = vpop.f32.mrf.mxu0
        %v1984 = vadd.f32 %v1679, %v1983
        %v1985 = vpop.f32.mrf.mxu0
        %1986 = vmatprep.mubr.bf16.mxu0 0
        %1987 = vmatmul.mubr.bf16.gmra.mxu0 %v1867
        %v1988 = vpop.f32.mrf.mxu0
        %v1989 = vadd.f32 %v1684, %v1988
        %v1990 = vpop.f32.mrf.mxu0
        %v1991 = vpop.f32.mrf.mxu0
        %v1992 = vadd.f32 %v1687, %v1991
        %v1993 = vpop.f32.mrf.mxu0
        %1994 = vmatprep.mubr.bf16.mxu0 0
        %1995 = vmatmul.mubr.bf16.gmra.mxu0 %v1868
        %v1996 = vpop.f32.mrf.mxu0
        %v1997 = vadd.f32 %v1692, %v1996
        %v1998 = vpop.f32.mrf.mxu0
        %v1999 = vpop.f32.mrf.mxu0
        %v2000 = vadd.f32 %v1695, %v1999
        %v2001 = vpop.f32.mrf.mxu0
        %2002 = vmatprep.mubr.bf16.mxu0 0
        %2003 = vmatmul.mubr.bf16.gmra.mxu0 %v1869
        %v2004 = vpop.f32.mrf.mxu0
        %v2005 = vadd.f32 %v1700, %v2004
        %v2006 = vpop.f32.mrf.mxu0
        %v2007 = vpop.f32.mrf.mxu0
        %v2008 = vadd.f32 %v1703, %v2007
        %v2009 = vpop.f32.mrf.mxu0
        %2010 = vmatprep.mubr.bf16.mxu0 0
        %2011 = vmatmul.mubr.bf16.gmra.mxu0 %v1870
        %v2012 = vpop.f32.mrf.mxu0
        %v2013 = vadd.f32 %v1708, %v2012
        %v2014 = vpop.f32.mrf.mxu0
        %v2015 = vpop.f32.mrf.mxu0
        %v2016 = vadd.f32 %v1711, %v2015
        %v2017 = vpop.f32.mrf.mxu0
        %2018 = vmatprep.mubr.bf16.mxu0 0
        %2019 = vmatmul.mubr.bf16.gmra.mxu0 %v1871
        %v2020 = vpop.f32.mrf.mxu0
        %v2021 = vadd.f32 %v1716, %v2020
        %v2022 = vpop.f32.mrf.mxu0
        %v2023 = vpop.f32.mrf.mxu0
        %v2024 = vadd.f32 %v1719, %v2023
        %v2025 = vpop.f32.mrf.mxu0
        %2026 = vmatprep.mubr.bf16.mxu0 0
        %2027 = vmatmul.mubr.bf16.gmra.mxu0 %v1872
        %v2028 = vpop.f32.mrf.mxu0
        %v2029 = vadd.f32 %v1724, %v2028
        %v2030 = vpop.f32.mrf.mxu0
        %v2031 = vpop.f32.mrf.mxu0
        %v2032 = vadd.f32 %v1727, %v2031
        %v2033 = vpop.f32.mrf.mxu0
        %2034 = vmatprep.mubr.bf16.mxu0 0
        %2035 = vmatmul.mubr.bf16.gmra.mxu0 %v1873
        %v2036 = vpop.f32.mrf.mxu0
        %v2037 = vadd.f32 %v1732, %v2036
        %v2038 = vpop.f32.mrf.mxu0
        %v2039 = vpop.f32.mrf.mxu0
        %v2040 = vadd.f32 %v1735, %v2039
        %v2041 = vpop.f32.mrf.mxu0
        %2042 = vmatprep.mubr.bf16.mxu0 0
        %2043 = vmatmul.mubr.bf16.gmra.mxu0 %v1874
        %v2044 = vpop.f32.mrf.mxu0
        %v2045 = vadd.f32 %v1740, %v2044
        %v2046 = vpop.f32.mrf.mxu0
        %v2047 = vpop.f32.mrf.mxu0
        %v2048 = vadd.f32 %v1743, %v2047
        %v2049 = vpop.f32.mrf.mxu0
        %2050 = vmatprep.mubr.bf16.mxu0 0
        %2051 = vmatmul.mubr.bf16.gmra.mxu0 %v1875
        %v2052 = vpop.f32.mrf.mxu0
        %v2053 = vadd.f32 %v1748, %v2052
        %v2054 = vpop.f32.mrf.mxu0
        %v2055 = vpop.f32.mrf.mxu0
        %v2056 = vadd.f32 %v1751, %v2055
        %v2057 = vpop.f32.mrf.mxu0
        %2058 = vmatprep.mubr.bf16.mxu0 0
        %2059 = vmatmul.mubr.bf16.gmra.mxu0 %v1876
        %v2060 = vpop.f32.mrf.mxu0
        %v2061 = vadd.f32 %v1756, %v2060
        %v2062 = vpop.f32.mrf.mxu0
        %v2063 = vpop.f32.mrf.mxu0
        %v2064 = vadd.f32 %v1759, %v2063
        %v2065 = vpop.f32.mrf.mxu0
        %2066 = vmatprep.mubr.bf16.mxu0 0
        %2067 = vmatmul.mubr.bf16.gmra.mxu0 %v1877
        %v2068 = vpop.f32.mrf.mxu0
        %v2069 = vadd.f32 %v1764, %v2068
        %v2070 = vpop.f32.mrf.mxu0
        %v2071 = vpop.f32.mrf.mxu0
        %v2072 = vadd.f32 %v1767, %v2071
        %v2073 = vpop.f32.mrf.mxu0
        %2074 = vmatprep.mubr.bf16.mxu0 0
        %2075 = vmatmul.mubr.bf16.gmra.mxu0 %v1878
        %v2076 = vpop.f32.mrf.mxu0
        %v2077 = vadd.f32 %v1772, %v2076
        %v2078 = vpop.f32.mrf.mxu0
        %v2079 = vpop.f32.mrf.mxu0
        %v2080 = vadd.f32 %v1775, %v2079
        %v2081 = vpop.f32.mrf.mxu0
        %2082 = vmatprep.mubr.bf16.mxu0 0
        %2083 = vmatmul.mubr.bf16.gmra.mxu0 %v1879
        %v2084 = vpop.f32.mrf.mxu0
        %v2085 = vadd.f32 %v1780, %v2084
        %v2086 = vpop.f32.mrf.mxu0
        %v2087 = vpop.f32.mrf.mxu0
        %v2088 = vadd.f32 %v1783, %v2087
        %v2089 = vpop.f32.mrf.mxu0
        %2090 = vmatprep.mubr.bf16.mxu0 0
        %2091 = vmatmul.mubr.bf16.gmra.mxu0 %v1880
        %v2092 = vpop.f32.mrf.mxu0
        %v2093 = vadd.f32 %v1788, %v2092
        %v2094 = vpop.f32.mrf.mxu0
        %v2095 = vpop.f32.mrf.mxu0
        %v2096 = vadd.f32 %v1791, %v2095
        %v2097 = vpop.f32.mrf.mxu0
        %2098 = vmatprep.mubr.bf16.mxu0 0
        %2099 = vmatmul.mubr.bf16.gmra.mxu0 %v1881
        %v2100 = vpop.f32.mrf.mxu0
        %v2101 = vadd.f32 %v1796, %v2100
        %v2102 = vpop.f32.mrf.mxu0
        %v2103 = vpop.f32.mrf.mxu0
        %v2104 = vadd.f32 %v1799, %v2103
        %v2105 = vpop.f32.mrf.mxu0
        %2106 = vdwg.mxu0
        %v2107 = vld [vmem:[#allocation2] sm:$0xe]
        %v2108 = vld [vmem:[#allocation2 + $0xc] sm:$0xe]
        %v2109 = vld [vmem:[#allocation2 + $0x18] sm:$0xe]
        %v2110 = vld [vmem:[#allocation2 + $0x24] sm:$0xe]
        %v2111 = vld [vmem:[#allocation2 + $0x30] sm:$0xe]
        %v2112 = vld [vmem:[#allocation2 + $0x3c] sm:$0xe]
        %v2113 = vld [vmem:[#allocation2 + $0x48] sm:$0xe]
        %v2114 = vld [vmem:[#allocation2 + $0x54] sm:$0xe]
        %v2115 = vld [vmem:[#allocation2 + $0x60] sm:$0xe]
        %v2116 = vld [vmem:[#allocation2 + $0x6c] sm:$0xe]
        %v2117 = vld [vmem:[#allocation2 + $0x78] sm:$0xe]
        %v2118 = vld [vmem:[#allocation2 + $0x84] sm:$0xe]
        %v2119 = vld [vmem:[#allocation2 + $0x90] sm:$0xe]
        %v2120 = vld [vmem:[#allocation2 + $0x9c] sm:$0xe]
        %v2121 = vld [vmem:[#allocation2 + $0xa8] sm:$0xe]
        %v2122 = vld [vmem:[#allocation2 + $0xb4] sm:$0xe]
        %vm2155 = vcmask 1042432
        %vm2156 = vcmask 1046532
        %vm2157 = vmor %vm2155, %vm2156
        %v2158 = vrot.slane %v2107, 5
        %v2159 = vrot.slane %v2158, 4
        %v2160 = vrot.slane %v1062, 5
        %v2161 = vsel %vm2157, %v2159, %v2160
        %v2162 = vrot.slane %v2160, 4
        %v2163 = vrot.slane %v1109, 5
        %v2164 = vsel %vm2157, %v2162, %v2163
        %v2165 = vrot.slane %v2108, 5
        %v2166 = vrot.slane %v2165, 4
        %v2167 = vrot.slane %v1064, 5
        %v2168 = vsel %vm2157, %v2166, %v2167
        %v2169 = vrot.slane %v2167, 4
        %v2170 = vrot.slane %v1110, 5
        %v2171 = vsel %vm2157, %v2169, %v2170
        %v2172 = vrot.slane %v2109, 5
        %v2173 = vrot.slane %v2172, 4
        %v2174 = vrot.slane %v1066, 5
        %v2175 = vsel %vm2157, %v2173, %v2174
        %v2176 = vrot.slane %v2174, 4
        %v2177 = vrot.slane %v1111, 5
        %v2178 = vsel %vm2157, %v2176, %v2177
        %v2179 = vrot.slane %v2110, 5
        %v2180 = vrot.slane %v2179, 4
        %v2181 = vrot.slane %v1068, 5
        %v2182 = vsel %vm2157, %v2180, %v2181
        %v2183 = vrot.slane %v2181, 4
        %v2184 = vrot.slane %v1112, 5
        %v2185 = vsel %vm2157, %v2183, %v2184
        %v2186 = vrot.slane %v2111, 5
        %v2187 = vrot.slane %v2186, 4
        %v2188 = vrot.slane %v1070, 5
        %v2189 = vsel %vm2157, %v2187, %v2188
        %v2190 = vrot.slane %v2188, 4
        %v2191 = vrot.slane %v1113, 5
        %v2192 = vsel %vm2157, %v2190, %v2191
        %v2193 = vrot.slane %v2112, 5
        %v2194 = vrot.slane %v2193, 4
        %v2195 = vrot.slane %v1072, 5
        %v2196 = vsel %vm2157, %v2194, %v2195
        %v2197 = vrot.slane %v2195, 4
        %v2198 = vrot.slane %v1114, 5
        %v2199 = vsel %vm2157, %v2197, %v2198
        %v2200 = vrot.slane %v2113, 5
        %v2201 = vrot.slane %v2200, 4
        %v2202 = vrot.slane %v1074, 5
        %v2203 = vsel %vm2157, %v2201, %v2202
        %v2204 = vrot.slane %v2202, 4
        %v2205 = vrot.slane %v1115, 5
        %v2206 = vsel %vm2157, %v2204, %v2205
        %v2207 = vrot.slane %v2114, 5
        %v2208 = vrot.slane %v2207, 4
        %v2209 = vrot.slane %v1076, 5
        %v2210 = vsel %vm2157, %v2208, %v2209
        %v2211 = vrot.slane %v2209, 4
        %v2212 = vrot.slane %v1116, 5
        %v2213 = vsel %vm2157, %v2211, %v2212
        %v2214 = vrot.slane %v2115, 5
        %v2215 = vrot.slane %v2214, 4
        %v2216 = vrot.slane %v1078, 5
        %v2217 = vsel %vm2157, %v2215, %v2216
        %v2218 = vrot.slane %v2216, 4
        %v2219 = vrot.slane %v1117, 5
        %v2220 = vsel %vm2157, %v2218, %v2219
        %v2221 = vrot.slane %v2116, 5
        %v2222 = vrot.slane %v2221, 4
        %v2223 = vrot.slane %v1080, 5
        %v2224 = vsel %vm2157, %v2222, %v2223
        %v2225 = vrot.slane %v2223, 4
        %v2226 = vrot.slane %v1118, 5
        %v2227 = vsel %vm2157, %v2225, %v2226
        %v2228 = vrot.slane %v2117, 5
        %v2229 = vrot.slane %v2228, 4
        %v2230 = vrot.slane %v1082, 5
        %v2231 = vsel %vm2157, %v2229, %v2230
        %v2232 = vrot.slane %v2230, 4
        %v2233 = vrot.slane %v1119, 5
        %v2234 = vsel %vm2157, %v2232, %v2233
        %v2235 = vrot.slane %v2118, 5
        %v2236 = vrot.slane %v2235, 4
        %v2237 = vrot.slane %v1084, 5
        %v2238 = vsel %vm2157, %v2236, %v2237
        %v2239 = vrot.slane %v2237, 4
        %v2240 = vrot.slane %v1120, 5
        %v2241 = vsel %vm2157, %v2239, %v2240
        %v2242 = vrot.slane %v2119, 5
        %v2243 = vrot.slane %v2242, 4
        %v2244 = vrot.slane %v1086, 5
        %v2245 = vsel %vm2157, %v2243, %v2244
        %v2246 = vrot.slane %v2244, 4
        %v2247 = vrot.slane %v1121, 5
        %v2248 = vsel %vm2157, %v2246, %v2247
        %v2249 = vrot.slane %v2120, 5
        %v2250 = vrot.slane %v2249, 4
        %v2251 = vrot.slane %v1088, 5
        %v2252 = vsel %vm2157, %v2250, %v2251
        %v2253 = vrot.slane %v2251, 4
        %v2254 = vrot.slane %v1122, 5
        %v2255 = vsel %vm2157, %v2253, %v2254
        %v2256 = vrot.slane %v2121, 5
        %v2257 = vrot.slane %v2256, 4
        %v2258 = vrot.slane %v1090, 5
        %v2259 = vsel %vm2157, %v2257, %v2258
        %v2260 = vrot.slane %v2258, 4
        %v2261 = vrot.slane %v1123, 5
        %v2262 = vsel %vm2157, %v2260, %v2261
        %v2263 = vrot.slane %v2122, 5
        %v2264 = vrot.slane %v2263, 4
        %v2265 = vrot.slane %v1092, 5
        %v2266 = vsel %vm2157, %v2264, %v2265
        %v2267 = vrot.slane %v2265, 4
        %v2268 = vrot.slane %v1124, 5
        %v2269 = vsel %vm2157, %v2267, %v2268
        %s2270 = scalar_lea.vmem [#allocation4], 128
        %v2271 = vld [vmem:[%s2270] sm:$0xf]
        %v2272 = vld [vmem:[%s2270 + $0x4] sm:$0xf]
        %v2273 = vld [vmem:[%s2270 + $0x8] sm:$0xf]
        %v2274 = vld [vmem:[%s2270 + $0xc] sm:$0xf]
        %v2275 = vld [vmem:[%s2270 + $0x10] sm:$0xf]
        %v2276 = vld [vmem:[%s2270 + $0x14] sm:$0xf]
        %v2277 = vld [vmem:[%s2270 + $0x18] sm:$0xf]
        %v2278 = vld [vmem:[%s2270 + $0x1c] sm:$0xf]
        %v2279 = vld [vmem:[%s2270 + $0x20] sm:$0xf]
        %v2280 = vld [vmem:[%s2270 + $0x24] sm:$0xf]
        %v2281 = vld [vmem:[%s2270 + $0x28] sm:$0xf]
        %v2282 = vld [vmem:[%s2270 + $0x2c] sm:$0xf]
        %v2283 = vld [vmem:[%s2270 + $0x30] sm:$0xf]
        %v2284 = vld [vmem:[%s2270 + $0x34] sm:$0xf]
        %v2285 = vld [vmem:[%s2270 + $0x38] sm:$0xf]
        %v2286 = vld [vmem:[%s2270 + $0x3c] sm:$0xf]
        %v2287 = vunpack.c.l.b16 %v2161
        %v2288 = vunpack.c.l.b16 %v2164
        %v2289 = vunpack.c.l.b16 %v2168
        %v2290 = vunpack.c.l.b16 %v2171
        %v2291 = vunpack.c.l.b16 %v2175
        %v2292 = vunpack.c.l.b16 %v2178
        %v2293 = vunpack.c.l.b16 %v2182
        %v2294 = vunpack.c.l.b16 %v2185
        %v2295 = vunpack.c.l.b16 %v2189
        %v2296 = vunpack.c.l.b16 %v2192
        %v2297 = vunpack.c.l.b16 %v2196
        %v2298 = vunpack.c.l.b16 %v2199
        %v2299 = vunpack.c.l.b16 %v2203
        %v2300 = vunpack.c.l.b16 %v2206
        %v2301 = vunpack.c.l.b16 %v2210
        %v2302 = vunpack.c.l.b16 %v2213
        %v2303 = vunpack.c.l.b16 %v2217
        %v2304 = vunpack.c.l.b16 %v2220
        %v2305 = vunpack.c.l.b16 %v2224
        %v2306 = vunpack.c.l.b16 %v2227
        %v2307 = vunpack.c.l.b16 %v2231
        %v2308 = vunpack.c.l.b16 %v2234
        %v2309 = vunpack.c.l.b16 %v2238
        %v2310 = vunpack.c.l.b16 %v2241
        %v2311 = vunpack.c.l.b16 %v2245
        %v2312 = vunpack.c.l.b16 %v2248
        %v2313 = vunpack.c.l.b16 %v2252
        %v2314 = vunpack.c.l.b16 %v2255
        %v2315 = vunpack.c.l.b16 %v2259
        %v2316 = vunpack.c.l.b16 %v2262
        %v2317 = vunpack.c.l.b16 %v2266
        %v2318 = vunpack.c.l.b16 %v2269
        %v2319 = vpack.c.b16 %v2288, %v2287
        %v2320 = vpack.c.b16 %v2290, %v2289
        %v2321 = vpack.c.b16 %v2292, %v2291
        %v2322 = vpack.c.b16 %v2294, %v2293
        %v2323 = vpack.c.b16 %v2296, %v2295
        %v2324 = vpack.c.b16 %v2298, %v2297
        %v2325 = vpack.c.b16 %v2300, %v2299
        %v2326 = vpack.c.b16 %v2302, %v2301
        %v2327 = vpack.c.b16 %v2304, %v2303
        %v2328 = vpack.c.b16 %v2306, %v2305
        %v2329 = vpack.c.b16 %v2308, %v2307
        %v2330 = vpack.c.b16 %v2310, %v2309
        %v2331 = vpack.c.b16 %v2312, %v2311
        %v2332 = vpack.c.b16 %v2314, %v2313
        %v2333 = vpack.c.b16 %v2316, %v2315
        %v2334 = vpack.c.b16 %v2318, %v2317
        %v2367 = vunpack.c.l.b16 %v2271
        %v2368 = vunpack.c.l.b16 %v2272
        %v2369 = vunpack.c.l.b16 %v2273
        %v2370 = vunpack.c.l.b16 %v2274
        %v2371 = vunpack.c.l.b16 %v2275
        %v2372 = vunpack.c.l.b16 %v2276
        %v2373 = vunpack.c.l.b16 %v2277
        %v2374 = vunpack.c.l.b16 %v2278
        %v2375 = vunpack.c.l.b16 %v2279
        %v2376 = vunpack.c.l.b16 %v2280
        %v2377 = vunpack.c.l.b16 %v2281
        %v2378 = vunpack.c.l.b16 %v2282
        %v2379 = vunpack.c.l.b16 %v2283
        %v2380 = vunpack.c.l.b16 %v2284
        %v2381 = vunpack.c.l.b16 %v2285
        %v2382 = vunpack.c.l.b16 %v2286
        %v2383 = vpack.c.b16 %v2368, %v2367
        %v2384 = vpack.c.b16 %v2370, %v2369
        %v2385 = vpack.c.b16 %v2372, %v2371
        %v2386 = vpack.c.b16 %v2374, %v2373
        %v2387 = vpack.c.b16 %v2376, %v2375
        %v2388 = vpack.c.b16 %v2378, %v2377
        %v2389 = vpack.c.b16 %v2380, %v2379
        %v2390 = vpack.c.b16 %v2382, %v2381
        %2399 = vmatprep.subr.bf16.mxu0 0
        %2400 = vmatpush1.bf16.msra.mxu0 %v2390
        %2401 = vmatprep.subr.bf16.mxu0 0
        %2402 = vmatpush1.bf16.msra.mxu0 %v2389
        %2403 = vmatprep.subr.bf16.mxu0 0
        %2404 = vmatpush1.bf16.msra.mxu0 %v2388
        %2405 = vmatprep.subr.bf16.mxu0 0
        %2406 = vmatpush1.bf16.msra.mxu0 %v2387
        %2407 = vmatprep.subr.bf16.mxu0 0
        %2408 = vmatpush1.bf16.msra.mxu0 %v2386
        %2409 = vmatprep.subr.bf16.mxu0 0
        %2410 = vmatpush1.bf16.msra.mxu0 %v2385
        %2411 = vmatprep.subr.bf16.mxu0 0
        %2412 = vmatpush1.bf16.msra.mxu0 %v2384
        %2413 = vmatprep.subr.bf16.mxu0 0
        %2414 = vmatpush1.bf16.msra.mxu0 %v2383
        %2415 = vmatprep.subr.bf16.mxu0 0
        %2416 = vmatpush2.bf16.msra.mxu0 0
        %2417 = vmatprep.subr.bf16.mxu0 0
        %2418 = vmatpush2.bf16.msra.mxu0 0
        %2419 = vmatprep.subr.bf16.mxu0 0
        %2420 = vmatpush2.bf16.msra.mxu0 0
        %2421 = vmatprep.subr.bf16.mxu0 0
        %2422 = vmatpush2.bf16.msra.mxu0 0
        %2423 = vmatprep.subr.bf16.mxu0 0
        %2424 = vmatpush2.bf16.msra.mxu0 0
        %2425 = vmatprep.subr.bf16.mxu0 0
        %2426 = vmatpush2.bf16.msra.mxu0 0
        %2427 = vmatprep.subr.bf16.mxu0 0
        %2428 = vmatpush2.bf16.msra.mxu0 0
        %2429 = vmatprep.subr.bf16.mxu0 0
        %2430 = vmatpush2.bf16.msra.mxu0 0
        %2431 = vmatprep.mubr.bf16.mxu0 0
        %2432 = vmatmul.mubr.bf16.gmra.mxu0 %v2319
        %v2433 = vpop.f32.mrf.mxu0
        %v2434 = vadd.f32 0.0, %v2433
        %v2435 = vpop.f32.mrf.mxu0
        %v2436 = vpop.f32.mrf.mxu0
        %v2437 = vadd.f32 0.0, %v2436
        %v2438 = vpop.f32.mrf.mxu0
        %2439 = vmatprep.mubr.bf16.mxu0 0
        %2440 = vmatmul.mubr.bf16.gmra.mxu0 %v2320
        %v2441 = vpop.f32.mrf.mxu0
        %v2442 = vadd.f32 0.0, %v2441
        %v2443 = vpop.f32.mrf.mxu0
        %v2444 = vpop.f32.mrf.mxu0
        %v2445 = vadd.f32 0.0, %v2444
        %v2446 = vpop.f32.mrf.mxu0
        %2447 = vmatprep.mubr.bf16.mxu0 0
        %2448 = vmatmul.mubr.bf16.gmra.mxu0 %v2321
        %v2449 = vpop.f32.mrf.mxu0
        %v2450 = vadd.f32 0.0, %v2449
        %v2451 = vpop.f32.mrf.mxu0
        %v2452 = vpop.f32.mrf.mxu0
        %v2453 = vadd.f32 0.0, %v2452
        %v2454 = vpop.f32.mrf.mxu0
        %2455 = vmatprep.mubr.bf16.mxu0 0
        %2456 = vmatmul.mubr.bf16.gmra.mxu0 %v2322
        %v2457 = vpop.f32.mrf.mxu0
        %v2458 = vadd.f32 0.0, %v2457
        %v2459 = vpop.f32.mrf.mxu0
        %v2460 = vpop.f32.mrf.mxu0
        %v2461 = vadd.f32 0.0, %v2460
        %v2462 = vpop.f32.mrf.mxu0
        %2463 = vmatprep.mubr.bf16.mxu0 0
        %2464 = vmatmul.mubr.bf16.gmra.mxu0 %v2323
        %v2465 = vpop.f32.mrf.mxu0
        %v2466 = vadd.f32 0.0, %v2465
        %v2467 = vpop.f32.mrf.mxu0
        %v2468 = vpop.f32.mrf.mxu0
        %v2469 = vadd.f32 0.0, %v2468
        %v2470 = vpop.f32.mrf.mxu0
        %2471 = vmatprep.mubr.bf16.mxu0 0
        %2472 = vmatmul.mubr.bf16.gmra.mxu0 %v2324
        %v2473 = vpop.f32.mrf.mxu0
        %v2474 = vadd.f32 0.0, %v2473
        %v2475 = vpop.f32.mrf.mxu0
        %v2476 = vpop.f32.mrf.mxu0
        %v2477 = vadd.f32 0.0, %v2476
        %v2478 = vpop.f32.mrf.mxu0
        %2479 = vmatprep.mubr.bf16.mxu0 0
        %2480 = vmatmul.mubr.bf16.gmra.mxu0 %v2325
        %v2481 = vpop.f32.mrf.mxu0
        %v2482 = vadd.f32 0.0, %v2481
        %v2483 = vpop.f32.mrf.mxu0
        %v2484 = vpop.f32.mrf.mxu0
        %v2485 = vadd.f32 0.0, %v2484
        %v2486 = vpop.f32.mrf.mxu0
        %2487 = vmatprep.mubr.bf16.mxu0 0
        %2488 = vmatmul.mubr.bf16.gmra.mxu0 %v2326
        %v2489 = vpop.f32.mrf.mxu0
        %v2490 = vadd.f32 0.0, %v2489
        %v2491 = vpop.f32.mrf.mxu0
        %v2492 = vpop.f32.mrf.mxu0
        %v2493 = vadd.f32 0.0, %v2492
        %v2494 = vpop.f32.mrf.mxu0
        %2495 = vmatprep.mubr.bf16.mxu0 0
        %2496 = vmatmul.mubr.bf16.gmra.mxu0 %v2327
        %v2497 = vpop.f32.mrf.mxu0
        %v2498 = vadd.f32 0.0, %v2497
        %v2499 = vpop.f32.mrf.mxu0
        %v2500 = vpop.f32.mrf.mxu0
        %v2501 = vadd.f32 0.0, %v2500
        %v2502 = vpop.f32.mrf.mxu0
        %2503 = vmatprep.mubr.bf16.mxu0 0
        %2504 = vmatmul.mubr.bf16.gmra.mxu0 %v2328
        %v2505 = vpop.f32.mrf.mxu0
        %v2506 = vadd.f32 0.0, %v2505
        %v2507 = vpop.f32.mrf.mxu0
        %v2508 = vpop.f32.mrf.mxu0
        %v2509 = vadd.f32 0.0, %v2508
        %v2510 = vpop.f32.mrf.mxu0
        %2511 = vmatprep.mubr.bf16.mxu0 0
        %2512 = vmatmul.mubr.bf16.gmra.mxu0 %v2329
        %v2513 = vpop.f32.mrf.mxu0
        %v2514 = vadd.f32 0.0, %v2513
        %v2515 = vpop.f32.mrf.mxu0
        %v2516 = vpop.f32.mrf.mxu0
        %v2517 = vadd.f32 0.0, %v2516
        %v2518 = vpop.f32.mrf.mxu0
        %2519 = vmatprep.mubr.bf16.mxu0 0
        %2520 = vmatmul.mubr.bf16.gmra.mxu0 %v2330
        %v2521 = vpop.f32.mrf.mxu0
        %v2522 = vadd.f32 0.0, %v2521
        %v2523 = vpop.f32.mrf.mxu0
        %v2524 = vpop.f32.mrf.mxu0
        %v2525 = vadd.f32 0.0, %v2524
        %v2526 = vpop.f32.mrf.mxu0
        %2527 = vmatprep.mubr.bf16.mxu0 0
        %2528 = vmatmul.mubr.bf16.gmra.mxu0 %v2331
        %v2529 = vpop.f32.mrf.mxu0
        %v2530 = vadd.f32 0.0, %v2529
        %v2531 = vpop.f32.mrf.mxu0
        %v2532 = vpop.f32.mrf.mxu0
        %v2533 = vadd.f32 0.0, %v2532
        %v2534 = vpop.f32.mrf.mxu0
        %2535 = vmatprep.mubr.bf16.mxu0 0
        %2536 = vmatmul.mubr.bf16.gmra.mxu0 %v2332
        %v2537 = vpop.f32.mrf.mxu0
        %v2538 = vadd.f32 0.0, %v2537
        %v2539 = vpop.f32.mrf.mxu0
        %v2540 = vpop.f32.mrf.mxu0
        %v2541 = vadd.f32 0.0, %v2540
        %v2542 = vpop.f32.mrf.mxu0
        %2543 = vmatprep.mubr.bf16.mxu0 0
        %2544 = vmatmul.mubr.bf16.gmra.mxu0 %v2333
        %v2545 = vpop.f32.mrf.mxu0
        %v2546 = vadd.f32 0.0, %v2545
        %v2547 = vpop.f32.mrf.mxu0
        %v2548 = vpop.f32.mrf.mxu0
        %v2549 = vadd.f32 0.0, %v2548
        %v2550 = vpop.f32.mrf.mxu0
        %2551 = vmatprep.mubr.bf16.mxu0 0
        %2552 = vmatmul.mubr.bf16.gmra.mxu0 %v2334
        %v2553 = vpop.f32.mrf.mxu0
        %v2554 = vadd.f32 0.0, %v2553
        %v2555 = vpop.f32.mrf.mxu0
        %v2556 = vpop.f32.mrf.mxu0
        %v2557 = vadd.f32 0.0, %v2556
        %v2558 = vpop.f32.mrf.mxu0
        %2559 = vdwg.mxu0
        %v2560 = vadd.f32 %v1981, %v2434
        %v2561 = vadd.f32 %v1984, %v2437
        %v2562 = vadd.f32 %v1989, %v2442
        %v2563 = vadd.f32 %v1992, %v2445
        %v2564 = vadd.f32 %v1997, %v2450
        %v2565 = vadd.f32 %v2000, %v2453
        %v2566 = vadd.f32 %v2005, %v2458
        %v2567 = vadd.f32 %v2008, %v2461
        %v2568 = vadd.f32 %v2013, %v2466
        %v2569 = vadd.f32 %v2016, %v2469
        %v2570 = vadd.f32 %v2021, %v2474
        %v2571 = vadd.f32 %v2024, %v2477
        %v2572 = vadd.f32 %v2029, %v2482
        %v2573 = vadd.f32 %v2032, %v2485
        %v2574 = vadd.f32 %v2037, %v2490
        %v2575 = vadd.f32 %v2040, %v2493
        %v2576 = vadd.f32 %v2045, %v2498
        %v2577 = vadd.f32 %v2048, %v2501
        %v2578 = vadd.f32 %v2053, %v2506
        %v2579 = vadd.f32 %v2056, %v2509
        %v2580 = vadd.f32 %v2061, %v2514
        %v2581 = vadd.f32 %v2064, %v2517
        %v2582 = vadd.f32 %v2069, %v2522
        %v2583 = vadd.f32 %v2072, %v2525
        %v2584 = vadd.f32 %v2077, %v2530
        %v2585 = vadd.f32 %v2080, %v2533
        %v2586 = vadd.f32 %v2085, %v2538
        %v2587 = vadd.f32 %v2088, %v2541
        %v2588 = vadd.f32 %v2093, %v2546
        %v2589 = vadd.f32 %v2096, %v2549
        %v2590 = vadd.f32 %v2101, %v2554
        %v2591 = vadd.f32 %v2104, %v2557
        %v2592 = vld [vmem:[%s946] sm:$0xf]
        %v2593 = vld [vmem:[%s946 + $0x4] sm:$0xf]
        %v2594 = vld [vmem:[%s946 + $0xc] sm:$0xf]
        %v2595 = vld [vmem:[%s946 + $0x10] sm:$0xf]
        %v2596 = vld [vmem:[%s946 + $0x18] sm:$0xf]
        %v2597 = vld [vmem:[%s946 + $0x1c] sm:$0xf]
        %v2598 = vld [vmem:[%s946 + $0x24] sm:$0xf]
        %v2599 = vld [vmem:[%s946 + $0x28] sm:$0xf]
        %v2600 = vld [vmem:[%s946 + $0x30] sm:$0xf]
        %v2601 = vld [vmem:[%s946 + $0x34] sm:$0xf]
        %v2602 = vld [vmem:[%s946 + $0x3c] sm:$0xf]
        %v2603 = vld [vmem:[%s946 + $0x40] sm:$0xf]
        %v2604 = vld [vmem:[%s946 + $0x48] sm:$0xf]
        %v2605 = vld [vmem:[%s946 + $0x4c] sm:$0xf]
        %v2606 = vld [vmem:[%s946 + $0x54] sm:$0xf]
        %v2607 = vld [vmem:[%s946 + $0x58] sm:$0xf]
        %v2608 = vld [vmem:[%s946 + $0x60] sm:$0xf]
        %v2609 = vld [vmem:[%s946 + $0x64] sm:$0xf]
        %v2610 = vld [vmem:[%s946 + $0x6c] sm:$0xf]
        %v2611 = vld [vmem:[%s946 + $0x70] sm:$0xf]
        %v2612 = vld [vmem:[%s946 + $0x78] sm:$0xf]
        %v2613 = vld [vmem:[%s946 + $0x7c] sm:$0xf]
        %v2614 = vld [vmem:[%s946 + $0x84] sm:$0xf]
        %v2615 = vld [vmem:[%s946 + $0x88] sm:$0xf]
        %v2616 = vld [vmem:[%s946 + $0x90] sm:$0xf]
        %v2617 = vld [vmem:[%s946 + $0x94] sm:$0xf]
        %v2618 = vld [vmem:[%s946 + $0x9c] sm:$0xf]
        %v2619 = vld [vmem:[%s946 + $0xa0] sm:$0xf]
        %v2620 = vld [vmem:[%s946 + $0xa8] sm:$0xf]
        %v2621 = vld [vmem:[%s946 + $0xac] sm:$0xf]
        %v2622 = vld [vmem:[%s946 + $0xb4] sm:$0xf]
        %v2623 = vld [vmem:[%s946 + $0xb8] sm:$0xf]
        %s2624 = scalar_lea.vmem [#allocation4], 192
        %v2625 = vld [vmem:[%s2624] sm:$0xf]
        %v2626 = vld [vmem:[%s2624 + $0x4] sm:$0xf]
        %v2627 = vld [vmem:[%s2624 + $0x8] sm:$0xf]
        %v2628 = vld [vmem:[%s2624 + $0xc] sm:$0xf]
        %v2629 = vld [vmem:[%s2624 + $0x10] sm:$0xf]
        %v2630 = vld [vmem:[%s2624 + $0x14] sm:$0xf]
        %v2631 = vld [vmem:[%s2624 + $0x18] sm:$0xf]
        %v2632 = vld [vmem:[%s2624 + $0x1c] sm:$0xf]
        %v2633 = vld [vmem:[%s2624 + $0x20] sm:$0xf]
        %v2634 = vld [vmem:[%s2624 + $0x24] sm:$0xf]
        %v2635 = vld [vmem:[%s2624 + $0x28] sm:$0xf]
        %v2636 = vld [vmem:[%s2624 + $0x2c] sm:$0xf]
        %v2637 = vld [vmem:[%s2624 + $0x30] sm:$0xf]
        %v2638 = vld [vmem:[%s2624 + $0x34] sm:$0xf]
        %v2639 = vld [vmem:[%s2624 + $0x38] sm:$0xf]
        %v2640 = vld [vmem:[%s2624 + $0x3c] sm:$0xf]
        %v2673 = vunpack.c.l.b16 %v2592
        %v2674 = vunpack.c.l.b16 %v2593
        %v2675 = vunpack.c.l.b16 %v2594
        %v2676 = vunpack.c.l.b16 %v2595
        %v2677 = vunpack.c.l.b16 %v2596
        %v2678 = vunpack.c.l.b16 %v2597
        %v2679 = vunpack.c.l.b16 %v2598
        %v2680 = vunpack.c.l.b16 %v2599
        %v2681 = vunpack.c.l.b16 %v2600
        %v2682 = vunpack.c.l.b16 %v2601
        %v2683 = vunpack.c.l.b16 %v2602
        %v2684 = vunpack.c.l.b16 %v2603
        %v2685 = vunpack.c.l.b16 %v2604
        %v2686 = vunpack.c.l.b16 %v2605
        %v2687 = vunpack.c.l.b16 %v2606
        %v2688 = vunpack.c.l.b16 %v2607
        %v2689 = vunpack.c.l.b16 %v2608
        %v2690 = vunpack.c.l.b16 %v2609
        %v2691 = vunpack.c.l.b16 %v2610
        %v2692 = vunpack.c.l.b16 %v2611
        %v2693 = vunpack.c.l.b16 %v2612
        %v2694 = vunpack.c.l.b16 %v2613
        %v2695 = vunpack.c.l.b16 %v2614
        %v2696 = vunpack.c.l.b16 %v2615
        %v2697 = vunpack.c.l.b16 %v2616
        %v2698 = vunpack.c.l.b16 %v2617
        %v2699 = vunpack.c.l.b16 %v2618
        %v2700 = vunpack.c.l.b16 %v2619
        %v2701 = vunpack.c.l.b16 %v2620
        %v2702 = vunpack.c.l.b16 %v2621
        %v2703 = vunpack.c.l.b16 %v2622
        %v2704 = vunpack.c.l.b16 %v2623
        %v2705 = vpack.c.b16 %v2674, %v2673
        %v2706 = vpack.c.b16 %v2676, %v2675
        %v2707 = vpack.c.b16 %v2678, %v2677
        %v2708 = vpack.c.b16 %v2680, %v2679
        %v2709 = vpack.c.b16 %v2682, %v2681
        %v2710 = vpack.c.b16 %v2684, %v2683
        %v2711 = vpack.c.b16 %v2686, %v2685
        %v2712 = vpack.c.b16 %v2688, %v2687
        %v2713 = vpack.c.b16 %v2690, %v2689
        %v2714 = vpack.c.b16 %v2692, %v2691
        %v2715 = vpack.c.b16 %v2694, %v2693
        %v2716 = vpack.c.b16 %v2696, %v2695
        %v2717 = vpack.c.b16 %v2698, %v2697
        %v2718 = vpack.c.b16 %v2700, %v2699
        %v2719 = vpack.c.b16 %v2702, %v2701
        %v2720 = vpack.c.b16 %v2704, %v2703
        %v2753 = vunpack.c.l.b16 %v2625
        %v2754 = vunpack.c.l.b16 %v2626
        %v2755 = vunpack.c.l.b16 %v2627
        %v2756 = vunpack.c.l.b16 %v2628
        %v2757 = vunpack.c.l.b16 %v2629
        %v2758 = vunpack.c.l.b16 %v2630
        %v2759 = vunpack.c.l.b16 %v2631
        %v2760 = vunpack.c.l.b16 %v2632
        %v2761 = vunpack.c.l.b16 %v2633
        %v2762 = vunpack.c.l.b16 %v2634
        %v2763 = vunpack.c.l.b16 %v2635
        %v2764 = vunpack.c.l.b16 %v2636
        %v2765 = vunpack.c.l.b16 %v2637
        %v2766 = vunpack.c.l.b16 %v2638
        %v2767 = vunpack.c.l.b16 %v2639
        %v2768 = vunpack.c.l.b16 %v2640
        %v2769 = vpack.c.b16 %v2754, %v2753
        %v2770 = vpack.c.b16 %v2756, %v2755
        %v2771 = vpack.c.b16 %v2758, %v2757
        %v2772 = vpack.c.b16 %v2760, %v2759
        %v2773 = vpack.c.b16 %v2762, %v2761
        %v2774 = vpack.c.b16 %v2764, %v2763
        %v2775 = vpack.c.b16 %v2766, %v2765
        %v2776 = vpack.c.b16 %v2768, %v2767
        %2785 = vmatprep.subr.bf16.mxu0 0
        %2786 = vmatpush1.bf16.msra.mxu0 %v2776
        %2787 = vmatprep.subr.bf16.mxu0 0
        %2788 = vmatpush1.bf16.msra.mxu0 %v2775
        %2789 = vmatprep.subr.bf16.mxu0 0
        %2790 = vmatpush1.bf16.msra.mxu0 %v2774
        %2791 = vmatprep.subr.bf16.mxu0 0
        %2792 = vmatpush1.bf16.msra.mxu0 %v2773
        %2793 = vmatprep.subr.bf16.mxu0 0
        %2794 = vmatpush1.bf16.msra.mxu0 %v2772
        %2795 = vmatprep.subr.bf16.mxu0 0
        %2796 = vmatpush1.bf16.msra.mxu0 %v2771
        %2797 = vmatprep.subr.bf16.mxu0 0
        %2798 = vmatpush1.bf16.msra.mxu0 %v2770
        %2799 = vmatprep.subr.bf16.mxu0 0
        %2800 = vmatpush1.bf16.msra.mxu0 %v2769
        %2801 = vmatprep.subr.bf16.mxu0 0
        %2802 = vmatpush2.bf16.msra.mxu0 0
        %2803 = vmatprep.subr.bf16.mxu0 0
        %2804 = vmatpush2.bf16.msra.mxu0 0
        %2805 = vmatprep.subr.bf16.mxu0 0
        %2806 = vmatpush2.bf16.msra.mxu0 0
        %2807 = vmatprep.subr.bf16.mxu0 0
        %2808 = vmatpush2.bf16.msra.mxu0 0
        %2809 = vmatprep.subr.bf16.mxu0 0
        %2810 = vmatpush2.bf16.msra.mxu0 0
        %2811 = vmatprep.subr.bf16.mxu0 0
        %2812 = vmatpush2.bf16.msra.mxu0 0
        %2813 = vmatprep.subr.bf16.mxu0 0
        %2814 = vmatpush2.bf16.msra.mxu0 0
        %2815 = vmatprep.subr.bf16.mxu0 0
        %2816 = vmatpush2.bf16.msra.mxu0 0
        %2817 = vmatprep.mubr.bf16.mxu0 0
        %2818 = vmatmul.mubr.bf16.gmra.mxu0 %v2705
        %v2819 = vpop.f32.mrf.mxu0
        %v2820 = vadd.f32 0.0, %v2819
        %v2821 = vpop.f32.mrf.mxu0
        %v2822 = vpop.f32.mrf.mxu0
        %v2823 = vadd.f32 0.0, %v2822
        %v2824 = vpop.f32.mrf.mxu0
        %2825 = vmatprep.mubr.bf16.mxu0 0
        %2826 = vmatmul.mubr.bf16.gmra.mxu0 %v2706
        %v2827 = vpop.f32.mrf.mxu0
        %v2828 = vadd.f32 0.0, %v2827
        %v2829 = vpop.f32.mrf.mxu0
        %v2830 = vpop.f32.mrf.mxu0
        %v2831 = vadd.f32 0.0, %v2830
        %v2832 = vpop.f32.mrf.mxu0
        %2833 = vmatprep.mubr.bf16.mxu0 0
        %2834 = vmatmul.mubr.bf16.gmra.mxu0 %v2707
        %v2835 = vpop.f32.mrf.mxu0
        %v2836 = vadd.f32 0.0, %v2835
        %v2837 = vpop.f32.mrf.mxu0
        %v2838 = vpop.f32.mrf.mxu0
        %v2839 = vadd.f32 0.0, %v2838
        %v2840 = vpop.f32.mrf.mxu0
        %2841 = vmatprep.mubr.bf16.mxu0 0
        %2842 = vmatmul.mubr.bf16.gmra.mxu0 %v2708
        %v2843 = vpop.f32.mrf.mxu0
        %v2844 = vadd.f32 0.0, %v2843
        %v2845 = vpop.f32.mrf.mxu0
        %v2846 = vpop.f32.mrf.mxu0
        %v2847 = vadd.f32 0.0, %v2846
        %v2848 = vpop.f32.mrf.mxu0
        %2849 = vmatprep.mubr.bf16.mxu0 0
        %2850 = vmatmul.mubr.bf16.gmra.mxu0 %v2709
        %v2851 = vpop.f32.mrf.mxu0
        %v2852 = vadd.f32 0.0, %v2851
        %v2853 = vpop.f32.mrf.mxu0
        %v2854 = vpop.f32.mrf.mxu0
        %v2855 = vadd.f32 0.0, %v2854
        %v2856 = vpop.f32.mrf.mxu0
        %2857 = vmatprep.mubr.bf16.mxu0 0
        %2858 = vmatmul.mubr.bf16.gmra.mxu0 %v2710
        %v2859 = vpop.f32.mrf.mxu0
        %v2860 = vadd.f32 0.0, %v2859
        %v2861 = vpop.f32.mrf.mxu0
        %v2862 = vpop.f32.mrf.mxu0
        %v2863 = vadd.f32 0.0, %v2862
        %v2864 = vpop.f32.mrf.mxu0
        %2865 = vmatprep.mubr.bf16.mxu0 0
        %2866 = vmatmul.mubr.bf16.gmra.mxu0 %v2711
        %v2867 = vpop.f32.mrf.mxu0
        %v2868 = vadd.f32 0.0, %v2867
        %v2869 = vpop.f32.mrf.mxu0
        %v2870 = vpop.f32.mrf.mxu0
        %v2871 = vadd.f32 0.0, %v2870
        %v2872 = vpop.f32.mrf.mxu0
        %2873 = vmatprep.mubr.bf16.mxu0 0
        %2874 = vmatmul.mubr.bf16.gmra.mxu0 %v2712
        %v2875 = vpop.f32.mrf.mxu0
        %v2876 = vadd.f32 0.0, %v2875
        %v2877 = vpop.f32.mrf.mxu0
        %v2878 = vpop.f32.mrf.mxu0
        %v2879 = vadd.f32 0.0, %v2878
        %v2880 = vpop.f32.mrf.mxu0
        %2881 = vmatprep.mubr.bf16.mxu0 0
        %2882 = vmatmul.mubr.bf16.gmra.mxu0 %v2713
        %v2883 = vpop.f32.mrf.mxu0
        %v2884 = vadd.f32 0.0, %v2883
        %v2885 = vpop.f32.mrf.mxu0
        %v2886 = vpop.f32.mrf.mxu0
        %v2887 = vadd.f32 0.0, %v2886
        %v2888 = vpop.f32.mrf.mxu0
        %2889 = vmatprep.mubr.bf16.mxu0 0
        %2890 = vmatmul.mubr.bf16.gmra.mxu0 %v2714
        %v2891 = vpop.f32.mrf.mxu0
        %v2892 = vadd.f32 0.0, %v2891
        %v2893 = vpop.f32.mrf.mxu0
        %v2894 = vpop.f32.mrf.mxu0
        %v2895 = vadd.f32 0.0, %v2894
        %v2896 = vpop.f32.mrf.mxu0
        %2897 = vmatprep.mubr.bf16.mxu0 0
        %2898 = vmatmul.mubr.bf16.gmra.mxu0 %v2715
        %v2899 = vpop.f32.mrf.mxu0
        %v2900 = vadd.f32 0.0, %v2899
        %v2901 = vpop.f32.mrf.mxu0
        %v2902 = vpop.f32.mrf.mxu0
        %v2903 = vadd.f32 0.0, %v2902
        %v2904 = vpop.f32.mrf.mxu0
        %2905 = vmatprep.mubr.bf16.mxu0 0
        %2906 = vmatmul.mubr.bf16.gmra.mxu0 %v2716
        %v2907 = vpop.f32.mrf.mxu0
        %v2908 = vadd.f32 0.0, %v2907
        %v2909 = vpop.f32.mrf.mxu0
        %v2910 = vpop.f32.mrf.mxu0
        %v2911 = vadd.f32 0.0, %v2910
        %v2912 = vpop.f32.mrf.mxu0
        %2913 = vmatprep.mubr.bf16.mxu0 0
        %2914 = vmatmul.mubr.bf16.gmra.mxu0 %v2717
        %v2915 = vpop.f32.mrf.mxu0
        %v2916 = vadd.f32 0.0, %v2915
        %v2917 = vpop.f32.mrf.mxu0
        %v2918 = vpop.f32.mrf.mxu0
        %v2919 = vadd.f32 0.0, %v2918
        %v2920 = vpop.f32.mrf.mxu0
        %2921 = vmatprep.mubr.bf16.mxu0 0
        %2922 = vmatmul.mubr.bf16.gmra.mxu0 %v2718
        %v2923 = vpop.f32.mrf.mxu0
        %v2924 = vadd.f32 0.0, %v2923
        %v2925 = vpop.f32.mrf.mxu0
        %v2926 = vpop.f32.mrf.mxu0
        %v2927 = vadd.f32 0.0, %v2926
        %v2928 = vpop.f32.mrf.mxu0
        %2929 = vmatprep.mubr.bf16.mxu0 0
        %2930 = vmatmul.mubr.bf16.gmra.mxu0 %v2719
        %v2931 = vpop.f32.mrf.mxu0
        %v2932 = vadd.f32 0.0, %v2931
        %v2933 = vpop.f32.mrf.mxu0
        %v2934 = vpop.f32.mrf.mxu0
        %v2935 = vadd.f32 0.0, %v2934
        %v2936 = vpop.f32.mrf.mxu0
        %2937 = vmatprep.mubr.bf16.mxu0 0
        %2938 = vmatmul.mubr.bf16.gmra.mxu0 %v2720
        %v2939 = vpop.f32.mrf.mxu0
        %v2940 = vadd.f32 0.0, %v2939
        %v2941 = vpop.f32.mrf.mxu0
        %v2942 = vpop.f32.mrf.mxu0
        %v2943 = vadd.f32 0.0, %v2942
        %v2944 = vpop.f32.mrf.mxu0
        %2945 = vdwg.mxu0
        %v2946 = vadd.f32 %v2560, %v2820
        %v2947 = vadd.f32 %v2561, %v2823
        %v2948 = vadd.f32 %v2562, %v2828
        %v2949 = vadd.f32 %v2563, %v2831
        %v2950 = vadd.f32 %v2564, %v2836
        %v2951 = vadd.f32 %v2565, %v2839
        %v2952 = vadd.f32 %v2566, %v2844
        %v2953 = vadd.f32 %v2567, %v2847
        %v2954 = vadd.f32 %v2568, %v2852
        %v2955 = vadd.f32 %v2569, %v2855
        %v2956 = vadd.f32 %v2570, %v2860
        %v2957 = vadd.f32 %v2571, %v2863
        %v2958 = vadd.f32 %v2572, %v2868
        %v2959 = vadd.f32 %v2573, %v2871
        %v2960 = vadd.f32 %v2574, %v2876
        %v2961 = vadd.f32 %v2575, %v2879
        %v2962 = vadd.f32 %v2576, %v2884
        %v2963 = vadd.f32 %v2577, %v2887
        %v2964 = vadd.f32 %v2578, %v2892
        %v2965 = vadd.f32 %v2579, %v2895
        %v2966 = vadd.f32 %v2580, %v2900
        %v2967 = vadd.f32 %v2581, %v2903
        %v2968 = vadd.f32 %v2582, %v2908
        %v2969 = vadd.f32 %v2583, %v2911
        %v2970 = vadd.f32 %v2584, %v2916
        %v2971 = vadd.f32 %v2585, %v2919
        %v2972 = vadd.f32 %v2586, %v2924
        %v2973 = vadd.f32 %v2587, %v2927
        %v2974 = vadd.f32 %v2588, %v2932
        %v2975 = vadd.f32 %v2589, %v2935
        %v2976 = vadd.f32 %v2590, %v2940
        %v2977 = vadd.f32 %v2591, %v2943
        %v2978 = vld [vmem:[%s946] sm:$0xf]
        %v2979 = vld [vmem:[%s946 + $0x4] sm:$0xf]
        %v2980 = vld [vmem:[%s946 + $0x8] sm:$0x1]
        %v2981 = vld [vmem:[%s946 + $0xc] sm:$0xf]
        %v2982 = vld [vmem:[%s946 + $0x10] sm:$0xf]
        %v2983 = vld [vmem:[%s946 + $0x14] sm:$0x1]
        %v2984 = vld [vmem:[%s946 + $0x18] sm:$0xf]
        %v2985 = vld [vmem:[%s946 + $0x1c] sm:$0xf]
        %v2986 = vld [vmem:[%s946 + $0x20] sm:$0x1]
        %v2987 = vld [vmem:[%s946 + $0x24] sm:$0xf]
        %v2988 = vld [vmem:[%s946 + $0x28] sm:$0xf]
        %v2989 = vld [vmem:[%s946 + $0x2c] sm:$0x1]
        %v2990 = vld [vmem:[%s946 + $0x30] sm:$0xf]
        %v2991 = vld [vmem:[%s946 + $0x34] sm:$0xf]
        %v2992 = vld [vmem:[%s946 + $0x38] sm:$0x1]
        %v2993 = vld [vmem:[%s946 + $0x3c] sm:$0xf]
        %v2994 = vld [vmem:[%s946 + $0x40] sm:$0xf]
        %v2995 = vld [vmem:[%s946 + $0x44] sm:$0x1]
        %v2996 = vld [vmem:[%s946 + $0x48] sm:$0xf]
        %v2997 = vld [vmem:[%s946 + $0x4c] sm:$0xf]
        %v2998 = vld [vmem:[%s946 + $0x50] sm:$0x1]
        %v2999 = vld [vmem:[%s946 + $0x54] sm:$0xf]
        %v3000 = vld [vmem:[%s946 + $0x58] sm:$0xf]
        %v3001 = vld [vmem:[%s946 + $0x5c] sm:$0x1]
        %v3002 = vld [vmem:[%s946 + $0x60] sm:$0xf]
        %v3003 = vld [vmem:[%s946 + $0x64] sm:$0xf]
        %v3004 = vld [vmem:[%s946 + $0x68] sm:$0x1]
        %v3005 = vld [vmem:[%s946 + $0x6c] sm:$0xf]
        %v3006 = vld [vmem:[%s946 + $0x70] sm:$0xf]
        %v3007 = vld [vmem:[%s946 + $0x74] sm:$0x1]
        %v3008 = vld [vmem:[%s946 + $0x78] sm:$0xf]
        %v3009 = vld [vmem:[%s946 + $0x7c] sm:$0xf]
        %v3010 = vld [vmem:[%s946 + $0x80] sm:$0x1]
        %v3011 = vld [vmem:[%s946 + $0x84] sm:$0xf]
        %v3012 = vld [vmem:[%s946 + $0x88] sm:$0xf]
        %v3013 = vld [vmem:[%s946 + $0x8c] sm:$0x1]
        %v3014 = vld [vmem:[%s946 + $0x90] sm:$0xf]
        %v3015 = vld [vmem:[%s946 + $0x94] sm:$0xf]
        %v3016 = vld [vmem:[%s946 + $0x98] sm:$0x1]
        %v3017 = vld [vmem:[%s946 + $0x9c] sm:$0xf]
        %v3018 = vld [vmem:[%s946 + $0xa0] sm:$0xf]
        %v3019 = vld [vmem:[%s946 + $0xa4] sm:$0x1]
        %v3020 = vld [vmem:[%s946 + $0xa8] sm:$0xf]
        %v3021 = vld [vmem:[%s946 + $0xac] sm:$0xf]
        %v3022 = vld [vmem:[%s946 + $0xb0] sm:$0x1]
        %v3023 = vld [vmem:[%s946 + $0xb4] sm:$0xf]
        %v3024 = vld [vmem:[%s946 + $0xb8] sm:$0xf]
        %v3025 = vld [vmem:[%s946 + $0xbc] sm:$0x1]
        %v3027 = vshrl.u32 %v2978, 16
        %v3029 = vrot.slane %v3027, 4
        %v3030 = vshll.u32 %v2978, 16
        %v3032 = vrot.slane %v3030, 5
        %v3033 = vor.u32 %v3029, %v3032
        %v3034 = vrot.slane %v3033, 4
        %v3036 = vshll.u32 %v2979, 16
        %v3038 = vrot.slane %v3036, 5
        %v3039 = vsel %vm1127, %v3034, %v3038
        %v3040 = vshrl.u32 %v2979, 16
        %v3042 = vrot.slane %v3040, 4
        %v3043 = vor.u32 %v3042, %v3038
        %v3044 = vrot.slane %v3043, 4
        %v3046 = vshll.u32 %v2980, 16
        %v3048 = vrot.slane %v3046, 5
        %v3049 = vsel %vm1127, %v3044, %v3048
        %v3051 = vshrl.u32 %v2981, 16
        %v3053 = vrot.slane %v3051, 4
        %v3054 = vshll.u32 %v2981, 16
        %v3056 = vrot.slane %v3054, 5
        %v3057 = vor.u32 %v3053, %v3056
        %v3058 = vrot.slane %v3057, 4
        %v3060 = vshll.u32 %v2982, 16
        %v3062 = vrot.slane %v3060, 5
        %v3063 = vsel %vm1127, %v3058, %v3062
        %v3064 = vshrl.u32 %v2982, 16
        %v3066 = vrot.slane %v3064, 4
        %v3067 = vor.u32 %v3066, %v3062
        %v3068 = vrot.slane %v3067, 4
        %v3070 = vshll.u32 %v2983, 16
        %v3072 = vrot.slane %v3070, 5
        %v3073 = vsel %vm1127, %v3068, %v3072
        %v3075 = vshrl.u32 %v2984, 16
        %v3077 = vrot.slane %v3075, 4
        %v3078 = vshll.u32 %v2984, 16
        %v3080 = vrot.slane %v3078, 5
        %v3081 = vor.u32 %v3077, %v3080
        %v3082 = vrot.slane %v3081, 4
        %v3084 = vshll.u32 %v2985, 16
        %v3086 = vrot.slane %v3084, 5
        %v3087 = vsel %vm1127, %v3082, %v3086
        %v3088 = vshrl.u32 %v2985, 16
        %v3090 = vrot.slane %v3088, 4
        %v3091 = vor.u32 %v3090, %v3086
        %v3092 = vrot.slane %v3091, 4
        %v3094 = vshll.u32 %v2986, 16
        %v3096 = vrot.slane %v3094, 5
        %v3097 = vsel %vm1127, %v3092, %v3096
        %v3099 = vshrl.u32 %v2987, 16
        %v3101 = vrot.slane %v3099, 4
        %v3102 = vshll.u32 %v2987, 16
        %v3104 = vrot.slane %v3102, 5
        %v3105 = vor.u32 %v3101, %v3104
        %v3106 = vrot.slane %v3105, 4
        %v3108 = vshll.u32 %v2988, 16
        %v3110 = vrot.slane %v3108, 5
        %v3111 = vsel %vm1127, %v3106, %v3110
        %v3112 = vshrl.u32 %v2988, 16
        %v3114 = vrot.slane %v3112, 4
        %v3115 = vor.u32 %v3114, %v3110
        %v3116 = vrot.slane %v3115, 4
        %v3118 = vshll.u32 %v2989, 16
        %v3120 = vrot.slane %v3118, 5
        %v3121 = vsel %vm1127, %v3116, %v3120
        %v3123 = vshrl.u32 %v2990, 16
        %v3125 = vrot.slane %v3123, 4
        %v3126 = vshll.u32 %v2990, 16
        %v3128 = vrot.slane %v3126, 5
        %v3129 = vor.u32 %v3125, %v3128
        %v3130 = vrot.slane %v3129, 4
        %v3132 = vshll.u32 %v2991, 16
        %v3134 = vrot.slane %v3132, 5
        %v3135 = vsel %vm1127, %v3130, %v3134
        %v3136 = vshrl.u32 %v2991, 16
        %v3138 = vrot.slane %v3136, 4
        %v3139 = vor.u32 %v3138, %v3134
        %v3140 = vrot.slane %v3139, 4
        %v3142 = vshll.u32 %v2992, 16
        %v3144 = vrot.slane %v3142, 5
        %v3145 = vsel %vm1127, %v3140, %v3144
        %v3147 = vshrl.u32 %v2993, 16
        %v3149 = vrot.slane %v3147, 4
        %v3150 = vshll.u32 %v2993, 16
        %v3152 = vrot.slane %v3150, 5
        %v3153 = vor.u32 %v3149, %v3152
        %v3154 = vrot.slane %v3153, 4
        %v3156 = vshll.u32 %v2994, 16
        %v3158 = vrot.slane %v3156, 5
        %v3159 = vsel %vm1127, %v3154, %v3158
        %v3160 = vshrl.u32 %v2994, 16
        %v3162 = vrot.slane %v3160, 4
        %v3163 = vor.u32 %v3162, %v3158
        %v3164 = vrot.slane %v3163, 4
        %v3166 = vshll.u32 %v2995, 16
        %v3168 = vrot.slane %v3166, 5
        %v3169 = vsel %vm1127, %v3164, %v3168
        %v3171 = vshrl.u32 %v2996, 16
        %v3173 = vrot.slane %v3171, 4
        %v3174 = vshll.u32 %v2996, 16
        %v3176 = vrot.slane %v3174, 5
        %v3177 = vor.u32 %v3173, %v3176
        %v3178 = vrot.slane %v3177, 4
        %v3180 = vshll.u32 %v2997, 16
        %v3182 = vrot.slane %v3180, 5
        %v3183 = vsel %vm1127, %v3178, %v3182
        %v3184 = vshrl.u32 %v2997, 16
        %v3186 = vrot.slane %v3184, 4
        %v3187 = vor.u32 %v3186, %v3182
        %v3188 = vrot.slane %v3187, 4
        %v3190 = vshll.u32 %v2998, 16
        %v3192 = vrot.slane %v3190, 5
        %v3193 = vsel %vm1127, %v3188, %v3192
        %v3195 = vshrl.u32 %v2999, 16
        %v3197 = vrot.slane %v3195, 4
        %v3198 = vshll.u32 %v2999, 16
        %v3200 = vrot.slane %v3198, 5
        %v3201 = vor.u32 %v3197, %v3200
        %v3202 = vrot.slane %v3201, 4
        %v3204 = vshll.u32 %v3000, 16
        %v3206 = vrot.slane %v3204, 5
        %v3207 = vsel %vm1127, %v3202, %v3206
        %v3208 = vshrl.u32 %v3000, 16
        %v3210 = vrot.slane %v3208, 4
        %v3211 = vor.u32 %v3210, %v3206
        %v3212 = vrot.slane %v3211, 4
        %v3214 = vshll.u32 %v3001, 16
        %v3216 = vrot.slane %v3214, 5
        %v3217 = vsel %vm1127, %v3212, %v3216
        %v3219 = vshrl.u32 %v3002, 16
        %v3221 = vrot.slane %v3219, 4
        %v3222 = vshll.u32 %v3002, 16
        %v3224 = vrot.slane %v3222, 5
        %v3225 = vor.u32 %v3221, %v3224
        %v3226 = vrot.slane %v3225, 4
        %v3228 = vshll.u32 %v3003, 16
        %v3230 = vrot.slane %v3228, 5
        %v3231 = vsel %vm1127, %v3226, %v3230
        %v3232 = vshrl.u32 %v3003, 16
        %v3234 = vrot.slane %v3232, 4
        %v3235 = vor.u32 %v3234, %v3230
        %v3236 = vrot.slane %v3235, 4
        %v3238 = vshll.u32 %v3004, 16
        %v3240 = vrot.slane %v3238, 5
        %v3241 = vsel %vm1127, %v3236, %v3240
        %v3243 = vshrl.u32 %v3005, 16
        %v3245 = vrot.slane %v3243, 4
        %v3246 = vshll.u32 %v3005, 16
        %v3248 = vrot.slane %v3246, 5
        %v3249 = vor.u32 %v3245, %v3248
        %v3250 = vrot.slane %v3249, 4
        %v3252 = vshll.u32 %v3006, 16
        %v3254 = vrot.slane %v3252, 5
        %v3255 = vsel %vm1127, %v3250, %v3254
        %v3256 = vshrl.u32 %v3006, 16
        %v3258 = vrot.slane %v3256, 4
        %v3259 = vor.u32 %v3258, %v3254
        %v3260 = vrot.slane %v3259, 4
        %v3262 = vshll.u32 %v3007, 16
        %v3264 = vrot.slane %v3262, 5
        %v3265 = vsel %vm1127, %v3260, %v3264
        %v3267 = vshrl.u32 %v3008, 16
        %v3269 = vrot.slane %v3267, 4
        %v3270 = vshll.u32 %v3008, 16
        %v3272 = vrot.slane %v3270, 5
        %v3273 = vor.u32 %v3269, %v3272
        %v3274 = vrot.slane %v3273, 4
        %v3276 = vshll.u32 %v3009, 16
        %v3278 = vrot.slane %v3276, 5
        %v3279 = vsel %vm1127, %v3274, %v3278
        %v3280 = vshrl.u32 %v3009, 16
        %v3282 = vrot.slane %v3280, 4
        %v3283 = vor.u32 %v3282, %v3278
        %v3284 = vrot.slane %v3283, 4
        %v3286 = vshll.u32 %v3010, 16
        %v3288 = vrot.slane %v3286, 5
        %v3289 = vsel %vm1127, %v3284, %v3288
        %v3291 = vshrl.u32 %v3011, 16
        %v3293 = vrot.slane %v3291, 4
        %v3294 = vshll.u32 %v3011, 16
        %v3296 = vrot.slane %v3294, 5
        %v3297 = vor.u32 %v3293, %v3296
        %v3298 = vrot.slane %v3297, 4
        %v3300 = vshll.u32 %v3012, 16
        %v3302 = vrot.slane %v3300, 5
        %v3303 = vsel %vm1127, %v3298, %v3302
        %v3304 = vshrl.u32 %v3012, 16
        %v3306 = vrot.slane %v3304, 4
        %v3307 = vor.u32 %v3306, %v3302
        %v3308 = vrot.slane %v3307, 4
        %v3310 = vshll.u32 %v3013, 16
        %v3312 = vrot.slane %v3310, 5
        %v3313 = vsel %vm1127, %v3308, %v3312
        %v3315 = vshrl.u32 %v3014, 16
        %v3317 = vrot.slane %v3315, 4
        %v3318 = vshll.u32 %v3014, 16
        %v3320 = vrot.slane %v3318, 5
        %v3321 = vor.u32 %v3317, %v3320
        %v3322 = vrot.slane %v3321, 4
        %v3324 = vshll.u32 %v3015, 16
        %v3326 = vrot.slane %v3324, 5
        %v3327 = vsel %vm1127, %v3322, %v3326
        %v3328 = vshrl.u32 %v3015, 16
        %v3330 = vrot.slane %v3328, 4
        %v3331 = vor.u32 %v3330, %v3326
        %v3332 = vrot.slane %v3331, 4
        %v3334 = vshll.u32 %v3016, 16
        %v3336 = vrot.slane %v3334, 5
        %v3337 = vsel %vm1127, %v3332, %v3336
        %v3339 = vshrl.u32 %v3017, 16
        %v3341 = vrot.slane %v3339, 4
        %v3342 = vshll.u32 %v3017, 16
        %v3344 = vrot.slane %v3342, 5
        %v3345 = vor.u32 %v3341, %v3344
        %v3346 = vrot.slane %v3345, 4
        %v3348 = vshll.u32 %v3018, 16
        %v3350 = vrot.slane %v3348, 5
        %v3351 = vsel %vm1127, %v3346, %v3350
        %v3352 = vshrl.u32 %v3018, 16
        %v3354 = vrot.slane %v3352, 4
        %v3355 = vor.u32 %v3354, %v3350
        %v3356 = vrot.slane %v3355, 4
        %v3358 = vshll.u32 %v3019, 16
        %v3360 = vrot.slane %v3358, 5
        %v3361 = vsel %vm1127, %v3356, %v3360
        %v3363 = vshrl.u32 %v3020, 16
        %v3365 = vrot.slane %v3363, 4
        %v3366 = vshll.u32 %v3020, 16
        %v3368 = vrot.slane %v3366, 5
        %v3369 = vor.u32 %v3365, %v3368
        %v3370 = vrot.slane %v3369, 4
        %v3372 = vshll.u32 %v3021, 16
        %v3374 = vrot.slane %v3372, 5
        %v3375 = vsel %vm1127, %v3370, %v3374
        %v3376 = vshrl.u32 %v3021, 16
        %v3378 = vrot.slane %v3376, 4
        %v3379 = vor.u32 %v3378, %v3374
        %v3380 = vrot.slane %v3379, 4
        %v3382 = vshll.u32 %v3022, 16
        %v3384 = vrot.slane %v3382, 5
        %v3385 = vsel %vm1127, %v3380, %v3384
        %v3387 = vshrl.u32 %v3023, 16
        %v3389 = vrot.slane %v3387, 4
        %v3390 = vshll.u32 %v3023, 16
        %v3392 = vrot.slane %v3390, 5
        %v3393 = vor.u32 %v3389, %v3392
        %v3394 = vrot.slane %v3393, 4
        %v3396 = vshll.u32 %v3024, 16
        %v3398 = vrot.slane %v3396, 5
        %v3399 = vsel %vm1127, %v3394, %v3398
        %v3400 = vshrl.u32 %v3024, 16
        %v3402 = vrot.slane %v3400, 4
        %v3403 = vor.u32 %v3402, %v3398
        %v3404 = vrot.slane %v3403, 4
        %v3406 = vshll.u32 %v3025, 16
        %v3408 = vrot.slane %v3406, 5
        %v3409 = vsel %vm1127, %v3404, %v3408
        %s3410 = scalar_lea.vmem [#allocation4], 256
        %v3411 = vld [vmem:[%s3410] sm:$0xf]
        %v3412 = vld [vmem:[%s3410 + $0x4] sm:$0xf]
        %v3413 = vld [vmem:[%s3410 + $0x8] sm:$0xf]
        %v3414 = vld [vmem:[%s3410 + $0xc] sm:$0xf]
        %v3415 = vld [vmem:[%s3410 + $0x10] sm:$0xf]
        %v3416 = vld [vmem:[%s3410 + $0x14] sm:$0xf]
        %v3417 = vld [vmem:[%s3410 + $0x18] sm:$0xf]
        %v3418 = vld [vmem:[%s3410 + $0x1c] sm:$0xf]
        %v3419 = vld [vmem:[%s3410 + $0x20] sm:$0xf]
        %v3420 = vld [vmem:[%s3410 + $0x24] sm:$0xf]
        %v3421 = vld [vmem:[%s3410 + $0x28] sm:$0xf]
        %v3422 = vld [vmem:[%s3410 + $0x2c] sm:$0xf]
        %v3423 = vld [vmem:[%s3410 + $0x30] sm:$0xf]
        %v3424 = vld [vmem:[%s3410 + $0x34] sm:$0xf]
        %v3425 = vld [vmem:[%s3410 + $0x38] sm:$0xf]
        %v3426 = vld [vmem:[%s3410 + $0x3c] sm:$0xf]
        %v3427 = vunpack.c.l.b16 %v3039
        %v3428 = vunpack.c.l.b16 %v3049
        %v3429 = vunpack.c.l.b16 %v3063
        %v3430 = vunpack.c.l.b16 %v3073
        %v3431 = vunpack.c.l.b16 %v3087
        %v3432 = vunpack.c.l.b16 %v3097
        %v3433 = vunpack.c.l.b16 %v3111
        %v3434 = vunpack.c.l.b16 %v3121
        %v3435 = vunpack.c.l.b16 %v3135
        %v3436 = vunpack.c.l.b16 %v3145
        %v3437 = vunpack.c.l.b16 %v3159
        %v3438 = vunpack.c.l.b16 %v3169
        %v3439 = vunpack.c.l.b16 %v3183
        %v3440 = vunpack.c.l.b16 %v3193
        %v3441 = vunpack.c.l.b16 %v3207
        %v3442 = vunpack.c.l.b16 %v3217
        %v3443 = vunpack.c.l.b16 %v3231
        %v3444 = vunpack.c.l.b16 %v3241
        %v3445 = vunpack.c.l.b16 %v3255
        %v3446 = vunpack.c.l.b16 %v3265
        %v3447 = vunpack.c.l.b16 %v3279
        %v3448 = vunpack.c.l.b16 %v3289
        %v3449 = vunpack.c.l.b16 %v3303
        %v3450 = vunpack.c.l.b16 %v3313
        %v3451 = vunpack.c.l.b16 %v3327
        %v3452 = vunpack.c.l.b16 %v3337
        %v3453 = vunpack.c.l.b16 %v3351
        %v3454 = vunpack.c.l.b16 %v3361
        %v3455 = vunpack.c.l.b16 %v3375
        %v3456 = vunpack.c.l.b16 %v3385
        %v3457 = vunpack.c.l.b16 %v3399
        %v3458 = vunpack.c.l.b16 %v3409
        %v3459 = vpack.c.b16 %v3428, %v3427
        %v3460 = vpack.c.b16 %v3430, %v3429
        %v3461 = vpack.c.b16 %v3432, %v3431
        %v3462 = vpack.c.b16 %v3434, %v3433
        %v3463 = vpack.c.b16 %v3436, %v3435
        %v3464 = vpack.c.b16 %v3438, %v3437
        %v3465 = vpack.c.b16 %v3440, %v3439
        %v3466 = vpack.c.b16 %v3442, %v3441
        %v3467 = vpack.c.b16 %v3444, %v3443
        %v3468 = vpack.c.b16 %v3446, %v3445
        %v3469 = vpack.c.b16 %v3448, %v3447
        %v3470 = vpack.c.b16 %v3450, %v3449
        %v3471 = vpack.c.b16 %v3452, %v3451
        %v3472 = vpack.c.b16 %v3454, %v3453
        %v3473 = vpack.c.b16 %v3456, %v3455
        %v3474 = vpack.c.b16 %v3458, %v3457
        %v3507 = vunpack.c.l.b16 %v3411
        %v3508 = vunpack.c.l.b16 %v3412
        %v3509 = vunpack.c.l.b16 %v3413
        %v3510 = vunpack.c.l.b16 %v3414
        %v3511 = vunpack.c.l.b16 %v3415
        %v3512 = vunpack.c.l.b16 %v3416
        %v3513 = vunpack.c.l.b16 %v3417
        %v3514 = vunpack.c.l.b16 %v3418
        %v3515 = vunpack.c.l.b16 %v3419
        %v3516 = vunpack.c.l.b16 %v3420
        %v3517 = vunpack.c.l.b16 %v3421
        %v3518 = vunpack.c.l.b16 %v3422
        %v3519 = vunpack.c.l.b16 %v3423
        %v3520 = vunpack.c.l.b16 %v3424
        %v3521 = vunpack.c.l.b16 %v3425
        %v3522 = vunpack.c.l.b16 %v3426
        %v3523 = vpack.c.b16 %v3508, %v3507
        %v3524 = vpack.c.b16 %v3510, %v3509
        %v3525 = vpack.c.b16 %v3512, %v3511
        %v3526 = vpack.c.b16 %v3514, %v3513
        %v3527 = vpack.c.b16 %v3516, %v3515
        %v3528 = vpack.c.b16 %v3518, %v3517
        %v3529 = vpack.c.b16 %v3520, %v3519
        %v3530 = vpack.c.b16 %v3522, %v3521
        %3539 = vmatprep.subr.bf16.mxu0 0
        %3540 = vmatpush1.bf16.msra.mxu0 %v3530
        %3541 = vmatprep.subr.bf16.mxu0 0
        %3542 = vmatpush1.bf16.msra.mxu0 %v3529
        %3543 = vmatprep.subr.bf16.mxu0 0
        %3544 = vmatpush1.bf16.msra.mxu0 %v3528
        %3545 = vmatprep.subr.bf16.mxu0 0
        %3546 = vmatpush1.bf16.msra.mxu0 %v3527
        %3547 = vmatprep.subr.bf16.mxu0 0
        %3548 = vmatpush1.bf16.msra.mxu0 %v3526
        %3549 = vmatprep.subr.bf16.mxu0 0
        %3550 = vmatpush1.bf16.msra.mxu0 %v3525
        %3551 = vmatprep.subr.bf16.mxu0 0
        %3552 = vmatpush1.bf16.msra.mxu0 %v3524
        %3553 = vmatprep.subr.bf16.mxu0 0
        %3554 = vmatpush1.bf16.msra.mxu0 %v3523
        %3555 = vmatprep.subr.bf16.mxu0 0
        %3556 = vmatpush2.bf16.msra.mxu0 0
        %3557 = vmatprep.subr.bf16.mxu0 0
        %3558 = vmatpush2.bf16.msra.mxu0 0
        %3559 = vmatprep.subr.bf16.mxu0 0
        %3560 = vmatpush2.bf16.msra.mxu0 0
        %3561 = vmatprep.subr.bf16.mxu0 0
        %3562 = vmatpush2.bf16.msra.mxu0 0
        %3563 = vmatprep.subr.bf16.mxu0 0
        %3564 = vmatpush2.bf16.msra.mxu0 0
        %3565 = vmatprep.subr.bf16.mxu0 0
        %3566 = vmatpush2.bf16.msra.mxu0 0
        %3567 = vmatprep.subr.bf16.mxu0 0
        %3568 = vmatpush2.bf16.msra.mxu0 0
        %3569 = vmatprep.subr.bf16.mxu0 0
        %3570 = vmatpush2.bf16.msra.mxu0 0
        %3571 = vmatprep.mubr.bf16.mxu0 0
        %3572 = vmatmul.mubr.bf16.gmra.mxu0 %v3459
        %v3573 = vpop.f32.mrf.mxu0
        %v3574 = vadd.f32 0.0, %v3573
        %v3575 = vpop.f32.mrf.mxu0
        %v3576 = vpop.f32.mrf.mxu0
        %v3577 = vadd.f32 0.0, %v3576
        %v3578 = vpop.f32.mrf.mxu0
        %3579 = vmatprep.mubr.bf16.mxu0 0
        %3580 = vmatmul.mubr.bf16.gmra.mxu0 %v3460
        %v3581 = vpop.f32.mrf.mxu0
        %v3582 = vadd.f32 0.0, %v3581
        %v3583 = vpop.f32.mrf.mxu0
        %v3584 = vpop.f32.mrf.mxu0
        %v3585 = vadd.f32 0.0, %v3584
        %v3586 = vpop.f32.mrf.mxu0
        %3587 = vmatprep.mubr.bf16.mxu0 0
        %3588 = vmatmul.mubr.bf16.gmra.mxu0 %v3461
        %v3589 = vpop.f32.mrf.mxu0
        %v3590 = vadd.f32 0.0, %v3589
        %v3591 = vpop.f32.mrf.mxu0
        %v3592 = vpop.f32.mrf.mxu0
        %v3593 = vadd.f32 0.0, %v3592
        %v3594 = vpop.f32.mrf.mxu0
        %3595 = vmatprep.mubr.bf16.mxu0 0
        %3596 = vmatmul.mubr.bf16.gmra.mxu0 %v3462
        %v3597 = vpop.f32.mrf.mxu0
        %v3598 = vadd.f32 0.0, %v3597
        %v3599 = vpop.f32.mrf.mxu0
        %v3600 = vpop.f32.mrf.mxu0
        %v3601 = vadd.f32 0.0, %v3600
        %v3602 = vpop.f32.mrf.mxu0
        %3603 = vmatprep.mubr.bf16.mxu0 0
        %3604 = vmatmul.mubr.bf16.gmra.mxu0 %v3463
        %v3605 = vpop.f32.mrf.mxu0
        %v3606 = vadd.f32 0.0, %v3605
        %v3607 = vpop.f32.mrf.mxu0
        %v3608 = vpop.f32.mrf.mxu0
        %v3609 = vadd.f32 0.0, %v3608
        %v3610 = vpop.f32.mrf.mxu0
        %3611 = vmatprep.mubr.bf16.mxu0 0
        %3612 = vmatmul.mubr.bf16.gmra.mxu0 %v3464
        %v3613 = vpop.f32.mrf.mxu0
        %v3614 = vadd.f32 0.0, %v3613
        %v3615 = vpop.f32.mrf.mxu0
        %v3616 = vpop.f32.mrf.mxu0
        %v3617 = vadd.f32 0.0, %v3616
        %v3618 = vpop.f32.mrf.mxu0
        %3619 = vmatprep.mubr.bf16.mxu0 0
        %3620 = vmatmul.mubr.bf16.gmra.mxu0 %v3465
        %v3621 = vpop.f32.mrf.mxu0
        %v3622 = vadd.f32 0.0, %v3621
        %v3623 = vpop.f32.mrf.mxu0
        %v3624 = vpop.f32.mrf.mxu0
        %v3625 = vadd.f32 0.0, %v3624
        %v3626 = vpop.f32.mrf.mxu0
        %3627 = vmatprep.mubr.bf16.mxu0 0
        %3628 = vmatmul.mubr.bf16.gmra.mxu0 %v3466
        %v3629 = vpop.f32.mrf.mxu0
        %v3630 = vadd.f32 0.0, %v3629
        %v3631 = vpop.f32.mrf.mxu0
        %v3632 = vpop.f32.mrf.mxu0
        %v3633 = vadd.f32 0.0, %v3632
        %v3634 = vpop.f32.mrf.mxu0
        %3635 = vmatprep.mubr.bf16.mxu0 0
        %3636 = vmatmul.mubr.bf16.gmra.mxu0 %v3467
        %v3637 = vpop.f32.mrf.mxu0
        %v3638 = vadd.f32 0.0, %v3637
        %v3639 = vpop.f32.mrf.mxu0
        %v3640 = vpop.f32.mrf.mxu0
        %v3641 = vadd.f32 0.0, %v3640
        %v3642 = vpop.f32.mrf.mxu0
        %3643 = vmatprep.mubr.bf16.mxu0 0
        %3644 = vmatmul.mubr.bf16.gmra.mxu0 %v3468
        %v3645 = vpop.f32.mrf.mxu0
        %v3646 = vadd.f32 0.0, %v3645
        %v3647 = vpop.f32.mrf.mxu0
        %v3648 = vpop.f32.mrf.mxu0
        %v3649 = vadd.f32 0.0, %v3648
        %v3650 = vpop.f32.mrf.mxu0
        %3651 = vmatprep.mubr.bf16.mxu0 0
        %3652 = vmatmul.mubr.bf16.gmra.mxu0 %v3469
        %v3653 = vpop.f32.mrf.mxu0
        %v3654 = vadd.f32 0.0, %v3653
        %v3655 = vpop.f32.mrf.mxu0
        %v3656 = vpop.f32.mrf.mxu0
        %v3657 = vadd.f32 0.0, %v3656
        %v3658 = vpop.f32.mrf.mxu0
        %3659 = vmatprep.mubr.bf16.mxu0 0
        %3660 = vmatmul.mubr.bf16.gmra.mxu0 %v3470
        %v3661 = vpop.f32.mrf.mxu0
        %v3662 = vadd.f32 0.0, %v3661
        %v3663 = vpop.f32.mrf.mxu0
        %v3664 = vpop.f32.mrf.mxu0
        %v3665 = vadd.f32 0.0, %v3664
        %v3666 = vpop.f32.mrf.mxu0
        %3667 = vmatprep.mubr.bf16.mxu0 0
        %3668 = vmatmul.mubr.bf16.gmra.mxu0 %v3471
        %v3669 = vpop.f32.mrf.mxu0
        %v3670 = vadd.f32 0.0, %v3669
        %v3671 = vpop.f32.mrf.mxu0
        %v3672 = vpop.f32.mrf.mxu0
        %v3673 = vadd.f32 0.0, %v3672
        %v3674 = vpop.f32.mrf.mxu0
        %3675 = vmatprep.mubr.bf16.mxu0 0
        %3676 = vmatmul.mubr.bf16.gmra.mxu0 %v3472
        %v3677 = vpop.f32.mrf.mxu0
        %v3678 = vadd.f32 0.0, %v3677
        %v3679 = vpop.f32.mrf.mxu0
        %v3680 = vpop.f32.mrf.mxu0
        %v3681 = vadd.f32 0.0, %v3680
        %v3682 = vpop.f32.mrf.mxu0
        %3683 = vmatprep.mubr.bf16.mxu0 0
        %3684 = vmatmul.mubr.bf16.gmra.mxu0 %v3473
        %v3685 = vpop.f32.mrf.mxu0
        %v3686 = vadd.f32 0.0, %v3685
        %v3687 = vpop.f32.mrf.mxu0
        %v3688 = vpop.f32.mrf.mxu0
        %v3689 = vadd.f32 0.0, %v3688
        %v3690 = vpop.f32.mrf.mxu0
        %3691 = vmatprep.mubr.bf16.mxu0 0
        %3692 = vmatmul.mubr.bf16.gmra.mxu0 %v3474
        %v3693 = vpop.f32.mrf.mxu0
        %v3694 = vadd.f32 0.0, %v3693
        %v3695 = vpop.f32.mrf.mxu0
        %v3696 = vpop.f32.mrf.mxu0
        %v3697 = vadd.f32 0.0, %v3696
        %v3698 = vpop.f32.mrf.mxu0
        %3699 = vdwg.mxu0
        %v3700 = vadd.f32 %v2946, %v3574
        %v3701 = vadd.f32 %v2947, %v3577
        %v3702 = vadd.f32 %v2948, %v3582
        %v3703 = vadd.f32 %v2949, %v3585
        %v3704 = vadd.f32 %v2950, %v3590
        %v3705 = vadd.f32 %v2951, %v3593
        %v3706 = vadd.f32 %v2952, %v3598
        %v3707 = vadd.f32 %v2953, %v3601
        %v3708 = vadd.f32 %v2954, %v3606
        %v3709 = vadd.f32 %v2955, %v3609
        %v3710 = vadd.f32 %v2956, %v3614
        %v3711 = vadd.f32 %v2957, %v3617
        %v3712 = vadd.f32 %v2958, %v3622
        %v3713 = vadd.f32 %v2959, %v3625
        %v3714 = vadd.f32 %v2960, %v3630
        %v3715 = vadd.f32 %v2961, %v3633
        %v3716 = vadd.f32 %v2962, %v3638
        %v3717 = vadd.f32 %v2963, %v3641
        %v3718 = vadd.f32 %v2964, %v3646
        %v3719 = vadd.f32 %v2965, %v3649
        %v3720 = vadd.f32 %v2966, %v3654
        %v3721 = vadd.f32 %v2967, %v3657
        %v3722 = vadd.f32 %v2968, %v3662
        %v3723 = vadd.f32 %v2969, %v3665
        %v3724 = vadd.f32 %v2970, %v3670
        %v3725 = vadd.f32 %v2971, %v3673
        %v3726 = vadd.f32 %v2972, %v3678
        %v3727 = vadd.f32 %v2973, %v3681
        %v3728 = vadd.f32 %v2974, %v3686
        %v3729 = vadd.f32 %v2975, %v3689
        %v3730 = vadd.f32 %v2976, %v3694
        %v3731 = vadd.f32 %v2977, %v3697
        %v3732 = vld [vmem:[%s946] sm:$0xe]
        %v3733 = vld [vmem:[%s946 + $0xc] sm:$0xe]
        %v3734 = vld [vmem:[%s946 + $0x18] sm:$0xe]
        %v3735 = vld [vmem:[%s946 + $0x24] sm:$0xe]
        %v3736 = vld [vmem:[%s946 + $0x30] sm:$0xe]
        %v3737 = vld [vmem:[%s946 + $0x3c] sm:$0xe]
        %v3738 = vld [vmem:[%s946 + $0x48] sm:$0xe]
        %v3739 = vld [vmem:[%s946 + $0x54] sm:$0xe]
        %v3740 = vld [vmem:[%s946 + $0x60] sm:$0xe]
        %v3741 = vld [vmem:[%s946 + $0x6c] sm:$0xe]
        %v3742 = vld [vmem:[%s946 + $0x78] sm:$0xe]
        %v3743 = vld [vmem:[%s946 + $0x84] sm:$0xe]
        %v3744 = vld [vmem:[%s946 + $0x90] sm:$0xe]
        %v3745 = vld [vmem:[%s946 + $0x9c] sm:$0xe]
        %v3746 = vld [vmem:[%s946 + $0xa8] sm:$0xe]
        %v3747 = vld [vmem:[%s946 + $0xb4] sm:$0xe]
        %v3796 = vrot.slane %v3732, 5
        %v3797 = vrot.slane %v3796, 4
        %v3798 = vrot.slane %v2979, 5
        %v3799 = vsel %vm2157, %v3797, %v3798
        %v3800 = vrot.slane %v3798, 4
        %v3801 = vrot.slane %v2980, 5
        %v3802 = vsel %vm2157, %v3800, %v3801
        %v3803 = vrot.slane %v3733, 5
        %v3804 = vrot.slane %v3803, 4
        %v3805 = vrot.slane %v2982, 5
        %v3806 = vsel %vm2157, %v3804, %v3805
        %v3807 = vrot.slane %v3805, 4
        %v3808 = vrot.slane %v2983, 5
        %v3809 = vsel %vm2157, %v3807, %v3808
        %v3810 = vrot.slane %v3734, 5
        %v3811 = vrot.slane %v3810, 4
        %v3812 = vrot.slane %v2985, 5
        %v3813 = vsel %vm2157, %v3811, %v3812
        %v3814 = vrot.slane %v3812, 4
        %v3815 = vrot.slane %v2986, 5
        %v3816 = vsel %vm2157, %v3814, %v3815
        %v3817 = vrot.slane %v3735, 5
        %v3818 = vrot.slane %v3817, 4
        %v3819 = vrot.slane %v2988, 5
        %v3820 = vsel %vm2157, %v3818, %v3819
        %v3821 = vrot.slane %v3819, 4
        %v3822 = vrot.slane %v2989, 5
        %v3823 = vsel %vm2157, %v3821, %v3822
        %v3824 = vrot.slane %v3736, 5
        %v3825 = vrot.slane %v3824, 4
        %v3826 = vrot.slane %v2991, 5
        %v3827 = vsel %vm2157, %v3825, %v3826
        %v3828 = vrot.slane %v3826, 4
        %v3829 = vrot.slane %v2992, 5
        %v3830 = vsel %vm2157, %v3828, %v3829
        %v3831 = vrot.slane %v3737, 5
        %v3832 = vrot.slane %v3831, 4
        %v3833 = vrot.slane %v2994, 5
        %v3834 = vsel %vm2157, %v3832, %v3833
        %v3835 = vrot.slane %v3833, 4
        %v3836 = vrot.slane %v2995, 5
        %v3837 = vsel %vm2157, %v3835, %v3836
        %v3838 = vrot.slane %v3738, 5
        %v3839 = vrot.slane %v3838, 4
        %v3840 = vrot.slane %v2997, 5
        %v3841 = vsel %vm2157, %v3839, %v3840
        %v3842 = vrot.slane %v3840, 4
        %v3843 = vrot.slane %v2998, 5
        %v3844 = vsel %vm2157, %v3842, %v3843
        %v3845 = vrot.slane %v3739, 5
        %v3846 = vrot.slane %v3845, 4
        %v3847 = vrot.slane %v3000, 5
        %v3848 = vsel %vm2157, %v3846, %v3847
        %v3849 = vrot.slane %v3847, 4
        %v3850 = vrot.slane %v3001, 5
        %v3851 = vsel %vm2157, %v3849, %v3850
        %v3852 = vrot.slane %v3740, 5
        %v3853 = vrot.slane %v3852, 4
        %v3854 = vrot.slane %v3003, 5
        %v3855 = vsel %vm2157, %v3853, %v3854
        %v3856 = vrot.slane %v3854, 4
        %v3857 = vrot.slane %v3004, 5
        %v3858 = vsel %vm2157, %v3856, %v3857
        %v3859 = vrot.slane %v3741, 5
        %v3860 = vrot.slane %v3859, 4
        %v3861 = vrot.slane %v3006, 5
        %v3862 = vsel %vm2157, %v3860, %v3861
        %v3863 = vrot.slane %v3861, 4
        %v3864 = vrot.slane %v3007, 5
        %v3865 = vsel %vm2157, %v3863, %v3864
        %v3866 = vrot.slane %v3742, 5
        %v3867 = vrot.slane %v3866, 4
        %v3868 = vrot.slane %v3009, 5
        %v3869 = vsel %vm2157, %v3867, %v3868
        %v3870 = vrot.slane %v3868, 4
        %v3871 = vrot.slane %v3010, 5
        %v3872 = vsel %vm2157, %v3870, %v3871
        %v3873 = vrot.slane %v3743, 5
        %v3874 = vrot.slane %v3873, 4
        %v3875 = vrot.slane %v3012, 5
        %v3876 = vsel %vm2157, %v3874, %v3875
        %v3877 = vrot.slane %v3875, 4
        %v3878 = vrot.slane %v3013, 5
        %v3879 = vsel %vm2157, %v3877, %v3878
        %v3880 = vrot.slane %v3744, 5
        %v3881 = vrot.slane %v3880, 4
        %v3882 = vrot.slane %v3015, 5
        %v3883 = vsel %vm2157, %v3881, %v3882
        %v3884 = vrot.slane %v3882, 4
        %v3885 = vrot.slane %v3016, 5
        %v3886 = vsel %vm2157, %v3884, %v3885
        %v3887 = vrot.slane %v3745, 5
        %v3888 = vrot.slane %v3887, 4
        %v3889 = vrot.slane %v3018, 5
        %v3890 = vsel %vm2157, %v3888, %v3889
        %v3891 = vrot.slane %v3889, 4
        %v3892 = vrot.slane %v3019, 5
        %v3893 = vsel %vm2157, %v3891, %v3892
        %v3894 = vrot.slane %v3746, 5
        %v3895 = vrot.slane %v3894, 4
        %v3896 = vrot.slane %v3021, 5
        %v3897 = vsel %vm2157, %v3895, %v3896
        %v3898 = vrot.slane %v3896, 4
        %v3899 = vrot.slane %v3022, 5
        %v3900 = vsel %vm2157, %v3898, %v3899
        %v3901 = vrot.slane %v3747, 5
        %v3902 = vrot.slane %v3901, 4
        %v3903 = vrot.slane %v3024, 5
        %v3904 = vsel %vm2157, %v3902, %v3903
        %v3905 = vrot.slane %v3903, 4
        %v3906 = vrot.slane %v3025, 5
        %v3907 = vsel %vm2157, %v3905, %v3906
        %s3908 = scalar_lea.vmem [#allocation4], 320
        %v3909 = vld [vmem:[%s3908] sm:$0xf]
        %v3910 = vld [vmem:[%s3908 + $0x4] sm:$0xf]
        %v3911 = vld [vmem:[%s3908 + $0x8] sm:$0xf]
        %v3912 = vld [vmem:[%s3908 + $0xc] sm:$0xf]
        %v3913 = vld [vmem:[%s3908 + $0x10] sm:$0xf]
        %v3914 = vld [vmem:[%s3908 + $0x14] sm:$0xf]
        %v3915 = vld [vmem:[%s3908 + $0x18] sm:$0xf]
        %v3916 = vld [vmem:[%s3908 + $0x1c] sm:$0xf]
        %v3917 = vld [vmem:[%s3908 + $0x20] sm:$0xf]
        %v3918 = vld [vmem:[%s3908 + $0x24] sm:$0xf]
        %v3919 = vld [vmem:[%s3908 + $0x28] sm:$0xf]
        %v3920 = vld [vmem:[%s3908 + $0x2c] sm:$0xf]
        %v3921 = vld [vmem:[%s3908 + $0x30] sm:$0xf]
        %v3922 = vld [vmem:[%s3908 + $0x34] sm:$0xf]
        %v3923 = vld [vmem:[%s3908 + $0x38] sm:$0xf]
        %v3924 = vld [vmem:[%s3908 + $0x3c] sm:$0xf]
        %v3925 = vunpack.c.l.b16 %v3799
        %v3926 = vunpack.c.l.b16 %v3802
        %v3927 = vunpack.c.l.b16 %v3806
        %v3928 = vunpack.c.l.b16 %v3809
        %v3929 = vunpack.c.l.b16 %v3813
        %v3930 = vunpack.c.l.b16 %v3816
        %v3931 = vunpack.c.l.b16 %v3820
        %v3932 = vunpack.c.l.b16 %v3823
        %v3933 = vunpack.c.l.b16 %v3827
        %v3934 = vunpack.c.l.b16 %v3830
        %v3935 = vunpack.c.l.b16 %v3834
        %v3936 = vunpack.c.l.b16 %v3837
        %v3937 = vunpack.c.l.b16 %v3841
        %v3938 = vunpack.c.l.b16 %v3844
        %v3939 = vunpack.c.l.b16 %v3848
        %v3940 = vunpack.c.l.b16 %v3851
        %v3941 = vunpack.c.l.b16 %v3855
        %v3942 = vunpack.c.l.b16 %v3858
        %v3943 = vunpack.c.l.b16 %v3862
        %v3944 = vunpack.c.l.b16 %v3865
        %v3945 = vunpack.c.l.b16 %v3869
        %v3946 = vunpack.c.l.b16 %v3872
        %v3947 = vunpack.c.l.b16 %v3876
        %v3948 = vunpack.c.l.b16 %v3879
        %v3949 = vunpack.c.l.b16 %v3883
        %v3950 = vunpack.c.l.b16 %v3886
        %v3951 = vunpack.c.l.b16 %v3890
        %v3952 = vunpack.c.l.b16 %v3893
        %v3953 = vunpack.c.l.b16 %v3897
        %v3954 = vunpack.c.l.b16 %v3900
        %v3955 = vunpack.c.l.b16 %v3904
        %v3956 = vunpack.c.l.b16 %v3907
        %v3957 = vpack.c.b16 %v3926, %v3925
        %v3958 = vpack.c.b16 %v3928, %v3927
        %v3959 = vpack.c.b16 %v3930, %v3929
        %v3960 = vpack.c.b16 %v3932, %v3931
        %v3961 = vpack.c.b16 %v3934, %v3933
        %v3962 = vpack.c.b16 %v3936, %v3935
        %v3963 = vpack.c.b16 %v3938, %v3937
        %v3964 = vpack.c.b16 %v3940, %v3939
        %v3965 = vpack.c.b16 %v3942, %v3941
        %v3966 = vpack.c.b16 %v3944, %v3943
        %v3967 = vpack.c.b16 %v3946, %v3945
        %v3968 = vpack.c.b16 %v3948, %v3947
        %v3969 = vpack.c.b16 %v3950, %v3949
        %v3970 = vpack.c.b16 %v3952, %v3951
        %v3971 = vpack.c.b16 %v3954, %v3953
        %v3972 = vpack.c.b16 %v3956, %v3955
        %v4005 = vunpack.c.l.b16 %v3909
        %v4006 = vunpack.c.l.b16 %v3910
        %v4007 = vunpack.c.l.b16 %v3911
        %v4008 = vunpack.c.l.b16 %v3912
        %v4009 = vunpack.c.l.b16 %v3913
        %v4010 = vunpack.c.l.b16 %v3914
        %v4011 = vunpack.c.l.b16 %v3915
        %v4012 = vunpack.c.l.b16 %v3916
        %v4013 = vunpack.c.l.b16 %v3917
        %v4014 = vunpack.c.l.b16 %v3918
        %v4015 = vunpack.c.l.b16 %v3919
        %v4016 = vunpack.c.l.b16 %v3920
        %v4017 = vunpack.c.l.b16 %v3921
        %v4018 = vunpack.c.l.b16 %v3922
        %v4019 = vunpack.c.l.b16 %v3923
        %v4020 = vunpack.c.l.b16 %v3924
        %v4021 = vpack.c.b16 %v4006, %v4005
        %v4022 = vpack.c.b16 %v4008, %v4007
        %v4023 = vpack.c.b16 %v4010, %v4009
        %v4024 = vpack.c.b16 %v4012, %v4011
        %v4025 = vpack.c.b16 %v4014, %v4013
        %v4026 = vpack.c.b16 %v4016, %v4015
        %v4027 = vpack.c.b16 %v4018, %v4017
        %v4028 = vpack.c.b16 %v4020, %v4019
        %4037 = vmatprep.subr.bf16.mxu0 0
        %4038 = vmatpush1.bf16.msra.mxu0 %v4028
        %4039 = vmatprep.subr.bf16.mxu0 0
        %4040 = vmatpush1.bf16.msra.mxu0 %v4027
        %4041 = vmatprep.subr.bf16.mxu0 0
        %4042 = vmatpush1.bf16.msra.mxu0 %v4026
        %4043 = vmatprep.subr.bf16.mxu0 0
        %4044 = vmatpush1.bf16.msra.mxu0 %v4025
        %4045 = vmatprep.subr.bf16.mxu0 0
        %4046 = vmatpush1.bf16.msra.mxu0 %v4024
        %4047 = vmatprep.subr.bf16.mxu0 0
        %4048 = vmatpush1.bf16.msra.mxu0 %v4023
        %4049 = vmatprep.subr.bf16.mxu0 0
        %4050 = vmatpush1.bf16.msra.mxu0 %v4022
        %4051 = vmatprep.subr.bf16.mxu0 0
        %4052 = vmatpush1.bf16.msra.mxu0 %v4021
        %4053 = vmatprep.subr.bf16.mxu0 0
        %4054 = vmatpush2.bf16.msra.mxu0 0
        %4055 = vmatprep.subr.bf16.mxu0 0
        %4056 = vmatpush2.bf16.msra.mxu0 0
        %4057 = vmatprep.subr.bf16.mxu0 0
        %4058 = vmatpush2.bf16.msra.mxu0 0
        %4059 = vmatprep.subr.bf16.mxu0 0
        %4060 = vmatpush2.bf16.msra.mxu0 0
        %4061 = vmatprep.subr.bf16.mxu0 0
        %4062 = vmatpush2.bf16.msra.mxu0 0
        %4063 = vmatprep.subr.bf16.mxu0 0
        %4064 = vmatpush2.bf16.msra.mxu0 0
        %4065 = vmatprep.subr.bf16.mxu0 0
        %4066 = vmatpush2.bf16.msra.mxu0 0
        %4067 = vmatprep.subr.bf16.mxu0 0
        %4068 = vmatpush2.bf16.msra.mxu0 0
        %4069 = vmatprep.mubr.bf16.mxu0 0
        %4070 = vmatmul.mubr.bf16.gmra.mxu0 %v3957
        %v4071 = vpop.f32.mrf.mxu0
        %v4072 = vadd.f32 0.0, %v4071
        %v4073 = vpop.f32.mrf.mxu0
        %v4074 = vpop.f32.mrf.mxu0
        %v4075 = vadd.f32 0.0, %v4074
        %v4076 = vpop.f32.mrf.mxu0
        %4077 = vmatprep.mubr.bf16.mxu0 0
        %4078 = vmatmul.mubr.bf16.gmra.mxu0 %v3958
        %v4079 = vpop.f32.mrf.mxu0
        %v4080 = vadd.f32 0.0, %v4079
        %v4081 = vpop.f32.mrf.mxu0
        %v4082 = vpop.f32.mrf.mxu0
        %v4083 = vadd.f32 0.0, %v4082
        %v4084 = vpop.f32.mrf.mxu0
        %4085 = vmatprep.mubr.bf16.mxu0 0
        %4086 = vmatmul.mubr.bf16.gmra.mxu0 %v3959
        %v4087 = vpop.f32.mrf.mxu0
        %v4088 = vadd.f32 0.0, %v4087
        %v4089 = vpop.f32.mrf.mxu0
        %v4090 = vpop.f32.mrf.mxu0
        %v4091 = vadd.f32 0.0, %v4090
        %v4092 = vpop.f32.mrf.mxu0
        %4093 = vmatprep.mubr.bf16.mxu0 0
        %4094 = vmatmul.mubr.bf16.gmra.mxu0 %v3960
        %v4095 = vpop.f32.mrf.mxu0
        %v4096 = vadd.f32 0.0, %v4095
        %v4097 = vpop.f32.mrf.mxu0
        %v4098 = vpop.f32.mrf.mxu0
        %v4099 = vadd.f32 0.0, %v4098
        %v4100 = vpop.f32.mrf.mxu0
        %4101 = vmatprep.mubr.bf16.mxu0 0
        %4102 = vmatmul.mubr.bf16.gmra.mxu0 %v3961
        %v4103 = vpop.f32.mrf.mxu0
        %v4104 = vadd.f32 0.0, %v4103
        %v4105 = vpop.f32.mrf.mxu0
        %v4106 = vpop.f32.mrf.mxu0
        %v4107 = vadd.f32 0.0, %v4106
        %v4108 = vpop.f32.mrf.mxu0
        %4109 = vmatprep.mubr.bf16.mxu0 0
        %4110 = vmatmul.mubr.bf16.gmra.mxu0 %v3962
        %v4111 = vpop.f32.mrf.mxu0
        %v4112 = vadd.f32 0.0, %v4111
        %v4113 = vpop.f32.mrf.mxu0
        %v4114 = vpop.f32.mrf.mxu0
        %v4115 = vadd.f32 0.0, %v4114
        %v4116 = vpop.f32.mrf.mxu0
        %4117 = vmatprep.mubr.bf16.mxu0 0
        %4118 = vmatmul.mubr.bf16.gmra.mxu0 %v3963
        %v4119 = vpop.f32.mrf.mxu0
        %v4120 = vadd.f32 0.0, %v4119
        %v4121 = vpop.f32.mrf.mxu0
        %v4122 = vpop.f32.mrf.mxu0
        %v4123 = vadd.f32 0.0, %v4122
        %v4124 = vpop.f32.mrf.mxu0
        %4125 = vmatprep.mubr.bf16.mxu0 0
        %4126 = vmatmul.mubr.bf16.gmra.mxu0 %v3964
        %v4127 = vpop.f32.mrf.mxu0
        %v4128 = vadd.f32 0.0, %v4127
        %v4129 = vpop.f32.mrf.mxu0
        %v4130 = vpop.f32.mrf.mxu0
        %v4131 = vadd.f32 0.0, %v4130
        %v4132 = vpop.f32.mrf.mxu0
        %4133 = vmatprep.mubr.bf16.mxu0 0
        %4134 = vmatmul.mubr.bf16.gmra.mxu0 %v3965
        %v4135 = vpop.f32.mrf.mxu0
        %v4136 = vadd.f32 0.0, %v4135
        %v4137 = vpop.f32.mrf.mxu0
        %v4138 = vpop.f32.mrf.mxu0
        %v4139 = vadd.f32 0.0, %v4138
        %v4140 = vpop.f32.mrf.mxu0
        %4141 = vmatprep.mubr.bf16.mxu0 0
        %4142 = vmatmul.mubr.bf16.gmra.mxu0 %v3966
        %v4143 = vpop.f32.mrf.mxu0
        %v4144 = vadd.f32 0.0, %v4143
        %v4145 = vpop.f32.mrf.mxu0
        %v4146 = vpop.f32.mrf.mxu0
        %v4147 = vadd.f32 0.0, %v4146
        %v4148 = vpop.f32.mrf.mxu0
        %4149 = vmatprep.mubr.bf16.mxu0 0
        %4150 = vmatmul.mubr.bf16.gmra.mxu0 %v3967
        %v4151 = vpop.f32.mrf.mxu0
        %v4152 = vadd.f32 0.0, %v4151
        %v4153 = vpop.f32.mrf.mxu0
        %v4154 = vpop.f32.mrf.mxu0
        %v4155 = vadd.f32 0.0, %v4154
        %v4156 = vpop.f32.mrf.mxu0
        %4157 = vmatprep.mubr.bf16.mxu0 0
        %4158 = vmatmul.mubr.bf16.gmra.mxu0 %v3968
        %v4159 = vpop.f32.mrf.mxu0
        %v4160 = vadd.f32 0.0, %v4159
        %v4161 = vpop.f32.mrf.mxu0
        %v4162 = vpop.f32.mrf.mxu0
        %v4163 = vadd.f32 0.0, %v4162
        %v4164 = vpop.f32.mrf.mxu0
        %4165 = vmatprep.mubr.bf16.mxu0 0
        %4166 = vmatmul.mubr.bf16.gmra.mxu0 %v3969
        %v4167 = vpop.f32.mrf.mxu0
        %v4168 = vadd.f32 0.0, %v4167
        %v4169 = vpop.f32.mrf.mxu0
        %v4170 = vpop.f32.mrf.mxu0
        %v4171 = vadd.f32 0.0, %v4170
        %v4172 = vpop.f32.mrf.mxu0
        %4173 = vmatprep.mubr.bf16.mxu0 0
        %4174 = vmatmul.mubr.bf16.gmra.mxu0 %v3970
        %v4175 = vpop.f32.mrf.mxu0
        %v4176 = vadd.f32 0.0, %v4175
        %v4177 = vpop.f32.mrf.mxu0
        %v4178 = vpop.f32.mrf.mxu0
        %v4179 = vadd.f32 0.0, %v4178
        %v4180 = vpop.f32.mrf.mxu0
        %4181 = vmatprep.mubr.bf16.mxu0 0
        %4182 = vmatmul.mubr.bf16.gmra.mxu0 %v3971
        %v4183 = vpop.f32.mrf.mxu0
        %v4184 = vadd.f32 0.0, %v4183
        %v4185 = vpop.f32.mrf.mxu0
        %v4186 = vpop.f32.mrf.mxu0
        %v4187 = vadd.f32 0.0, %v4186
        %v4188 = vpop.f32.mrf.mxu0
        %4189 = vmatprep.mubr.bf16.mxu0 0
        %4190 = vmatmul.mubr.bf16.gmra.mxu0 %v3972
        %v4191 = vpop.f32.mrf.mxu0
        %v4192 = vadd.f32 0.0, %v4191
        %v4193 = vpop.f32.mrf.mxu0
        %v4194 = vpop.f32.mrf.mxu0
        %v4195 = vadd.f32 0.0, %v4194
        %v4196 = vpop.f32.mrf.mxu0
        %4197 = vdwg.mxu0
        %v4198 = vadd.f32 %v3700, %v4072
        %v4199 = vadd.f32 %v3701, %v4075
        %v4200 = vadd.f32 %v3702, %v4080
        %v4201 = vadd.f32 %v3703, %v4083
        %v4202 = vadd.f32 %v3704, %v4088
        %v4203 = vadd.f32 %v3705, %v4091
        %v4204 = vadd.f32 %v3706, %v4096
        %v4205 = vadd.f32 %v3707, %v4099
        %v4206 = vadd.f32 %v3708, %v4104
        %v4207 = vadd.f32 %v3709, %v4107
        %v4208 = vadd.f32 %v3710, %v4112
        %v4209 = vadd.f32 %v3711, %v4115
        %v4210 = vadd.f32 %v3712, %v4120
        %v4211 = vadd.f32 %v3713, %v4123
        %v4212 = vadd.f32 %v3714, %v4128
        %v4213 = vadd.f32 %v3715, %v4131
        %v4214 = vadd.f32 %v3716, %v4136
        %v4215 = vadd.f32 %v3717, %v4139
        %v4216 = vadd.f32 %v3718, %v4144
        %v4217 = vadd.f32 %v3719, %v4147
        %v4218 = vadd.f32 %v3720, %v4152
        %v4219 = vadd.f32 %v3721, %v4155
        %v4220 = vadd.f32 %v3722, %v4160
        %v4221 = vadd.f32 %v3723, %v4163
        %v4222 = vadd.f32 %v3724, %v4168
        %v4223 = vadd.f32 %v3725, %v4171
        %v4224 = vadd.f32 %v3726, %v4176
        %v4225 = vadd.f32 %v3727, %v4179
        %v4226 = vadd.f32 %v3728, %v4184
        %v4227 = vadd.f32 %v3729, %v4187
        %v4228 = vadd.f32 %v3730, %v4192
        %v4229 = vadd.f32 %v3731, %v4195
        %s4230 = scalar_lea.vmem [#allocation2], 24
        %v4231 = vld [vmem:[%s4230] sm:$0xf]
        %v4232 = vld [vmem:[%s4230 + $0x4] sm:$0xf]
        %v4233 = vld [vmem:[%s4230 + $0xc] sm:$0xf]
        %v4234 = vld [vmem:[%s4230 + $0x10] sm:$0xf]
        %v4235 = vld [vmem:[%s4230 + $0x18] sm:$0xf]
        %v4236 = vld [vmem:[%s4230 + $0x1c] sm:$0xf]
        %v4237 = vld [vmem:[%s4230 + $0x24] sm:$0xf]
        %v4238 = vld [vmem:[%s4230 + $0x28] sm:$0xf]
        %v4239 = vld [vmem:[%s4230 + $0x30] sm:$0xf]
        %v4240 = vld [vmem:[%s4230 + $0x34] sm:$0xf]
        %v4241 = vld [vmem:[%s4230 + $0x3c] sm:$0xf]
        %v4242 = vld [vmem:[%s4230 + $0x40] sm:$0xf]
        %v4243 = vld [vmem:[%s4230 + $0x48] sm:$0xf]
        %v4244 = vld [vmem:[%s4230 + $0x4c] sm:$0xf]
        %v4245 = vld [vmem:[%s4230 + $0x54] sm:$0xf]
        %v4246 = vld [vmem:[%s4230 + $0x58] sm:$0xf]
        %v4247 = vld [vmem:[%s4230 + $0x60] sm:$0xf]
        %v4248 = vld [vmem:[%s4230 + $0x64] sm:$0xf]
        %v4249 = vld [vmem:[%s4230 + $0x6c] sm:$0xf]
        %v4250 = vld [vmem:[%s4230 + $0x70] sm:$0xf]
        %v4251 = vld [vmem:[%s4230 + $0x78] sm:$0xf]
        %v4252 = vld [vmem:[%s4230 + $0x7c] sm:$0xf]
        %v4253 = vld [vmem:[%s4230 + $0x84] sm:$0xf]
        %v4254 = vld [vmem:[%s4230 + $0x88] sm:$0xf]
        %v4255 = vld [vmem:[%s4230 + $0x90] sm:$0xf]
        %v4256 = vld [vmem:[%s4230 + $0x94] sm:$0xf]
        %v4257 = vld [vmem:[%s4230 + $0x9c] sm:$0xf]
        %v4258 = vld [vmem:[%s4230 + $0xa0] sm:$0xf]
        %v4259 = vld [vmem:[%s4230 + $0xa8] sm:$0xf]
        %v4260 = vld [vmem:[%s4230 + $0xac] sm:$0xf]
        %v4261 = vld [vmem:[%s4230 + $0xb4] sm:$0xf]
        %v4262 = vld [vmem:[%s4230 + $0xb8] sm:$0xf]
        %s4263 = scalar_lea.vmem [#allocation4], 384
        %v4264 = vld [vmem:[%s4263] sm:$0xf]
        %v4265 = vld [vmem:[%s4263 + $0x4] sm:$0xf]
        %v4266 = vld [vmem:[%s4263 + $0x8] sm:$0xf]
        %v4267 = vld [vmem:[%s4263 + $0xc] sm:$0xf]
        %v4268 = vld [vmem:[%s4263 + $0x10] sm:$0xf]
        %v4269 = vld [vmem:[%s4263 + $0x14] sm:$0xf]
        %v4270 = vld [vmem:[%s4263 + $0x18] sm:$0xf]
        %v4271 = vld [vmem:[%s4263 + $0x1c] sm:$0xf]
        %v4272 = vld [vmem:[%s4263 + $0x20] sm:$0xf]
        %v4273 = vld [vmem:[%s4263 + $0x24] sm:$0xf]
        %v4274 = vld [vmem:[%s4263 + $0x28] sm:$0xf]
        %v4275 = vld [vmem:[%s4263 + $0x2c] sm:$0xf]
        %v4276 = vld [vmem:[%s4263 + $0x30] sm:$0xf]
        %v4277 = vld [vmem:[%s4263 + $0x34] sm:$0xf]
        %v4278 = vld [vmem:[%s4263 + $0x38] sm:$0xf]
        %v4279 = vld [vmem:[%s4263 + $0x3c] sm:$0xf]
        %v4312 = vunpack.c.l.b16 %v4231
        %v4313 = vunpack.c.l.b16 %v4232
        %v4314 = vunpack.c.l.b16 %v4233
        %v4315 = vunpack.c.l.b16 %v4234
        %v4316 = vunpack.c.l.b16 %v4235
        %v4317 = vunpack.c.l.b16 %v4236
        %v4318 = vunpack.c.l.b16 %v4237
        %v4319 = vunpack.c.l.b16 %v4238
        %v4320 = vunpack.c.l.b16 %v4239
        %v4321 = vunpack.c.l.b16 %v4240
        %v4322 = vunpack.c.l.b16 %v4241
        %v4323 = vunpack.c.l.b16 %v4242
        %v4324 = vunpack.c.l.b16 %v4243
        %v4325 = vunpack.c.l.b16 %v4244
        %v4326 = vunpack.c.l.b16 %v4245
        %v4327 = vunpack.c.l.b16 %v4246
        %v4328 = vunpack.c.l.b16 %v4247
        %v4329 = vunpack.c.l.b16 %v4248
        %v4330 = vunpack.c.l.b16 %v4249
        %v4331 = vunpack.c.l.b16 %v4250
        %v4332 = vunpack.c.l.b16 %v4251
        %v4333 = vunpack.c.l.b16 %v4252
        %v4334 = vunpack.c.l.b16 %v4253
        %v4335 = vunpack.c.l.b16 %v4254
        %v4336 = vunpack.c.l.b16 %v4255
        %v4337 = vunpack.c.l.b16 %v4256
        %v4338 = vunpack.c.l.b16 %v4257
        %v4339 = vunpack.c.l.b16 %v4258
        %v4340 = vunpack.c.l.b16 %v4259
        %v4341 = vunpack.c.l.b16 %v4260
        %v4342 = vunpack.c.l.b16 %v4261
        %v4343 = vunpack.c.l.b16 %v4262
        %v4344 = vpack.c.b16 %v4313, %v4312
        %v4345 = vpack.c.b16 %v4315, %v4314
        %v4346 = vpack.c.b16 %v4317, %v4316
        %v4347 = vpack.c.b16 %v4319, %v4318
        %v4348 = vpack.c.b16 %v4321, %v4320
        %v4349 = vpack.c.b16 %v4323, %v4322
        %v4350 = vpack.c.b16 %v4325, %v4324
        %v4351 = vpack.c.b16 %v4327, %v4326
        %v4352 = vpack.c.b16 %v4329, %v4328
        %v4353 = vpack.c.b16 %v4331, %v4330
        %v4354 = vpack.c.b16 %v4333, %v4332
        %v4355 = vpack.c.b16 %v4335, %v4334
        %v4356 = vpack.c.b16 %v4337, %v4336
        %v4357 = vpack.c.b16 %v4339, %v4338
        %v4358 = vpack.c.b16 %v4341, %v4340
        %v4359 = vpack.c.b16 %v4343, %v4342
        %v4392 = vunpack.c.l.b16 %v4264
        %v4393 = vunpack.c.l.b16 %v4265
        %v4394 = vunpack.c.l.b16 %v4266
        %v4395 = vunpack.c.l.b16 %v4267
        %v4396 = vunpack.c.l.b16 %v4268
        %v4397 = vunpack.c.l.b16 %v4269
        %v4398 = vunpack.c.l.b16 %v4270
        %v4399 = vunpack.c.l.b16 %v4271
        %v4400 = vunpack.c.l.b16 %v4272
        %v4401 = vunpack.c.l.b16 %v4273
        %v4402 = vunpack.c.l.b16 %v4274
        %v4403 = vunpack.c.l.b16 %v4275
        %v4404 = vunpack.c.l.b16 %v4276
        %v4405 = vunpack.c.l.b16 %v4277
        %v4406 = vunpack.c.l.b16 %v4278
        %v4407 = vunpack.c.l.b16 %v4279
        %v4408 = vpack.c.b16 %v4393, %v4392
        %v4409 = vpack.c.b16 %v4395, %v4394
        %v4410 = vpack.c.b16 %v4397, %v4396
        %v4411 = vpack.c.b16 %v4399, %v4398
        %v4412 = vpack.c.b16 %v4401, %v4400
        %v4413 = vpack.c.b16 %v4403, %v4402
        %v4414 = vpack.c.b16 %v4405, %v4404
        %v4415 = vpack.c.b16 %v4407, %v4406
        %4424 = vmatprep.subr.bf16.mxu0 0
        %4425 = vmatpush1.bf16.msra.mxu0 %v4415
        %4426 = vmatprep.subr.bf16.mxu0 0
        %4427 = vmatpush1.bf16.msra.mxu0 %v4414
        %4428 = vmatprep.subr.bf16.mxu0 0
        %4429 = vmatpush1.bf16.msra.mxu0 %v4413
        %4430 = vmatprep.subr.bf16.mxu0 0
        %4431 = vmatpush1.bf16.msra.mxu0 %v4412
        %4432 = vmatprep.subr.bf16.mxu0 0
        %4433 = vmatpush1.bf16.msra.mxu0 %v4411
        %4434 = vmatprep.subr.bf16.mxu0 0
        %4435 = vmatpush1.bf16.msra.mxu0 %v4410
        %4436 = vmatprep.subr.bf16.mxu0 0
        %4437 = vmatpush1.bf16.msra.mxu0 %v4409
        %4438 = vmatprep.subr.bf16.mxu0 0
        %4439 = vmatpush1.bf16.msra.mxu0 %v4408
        %4440 = vmatprep.subr.bf16.mxu0 0
        %4441 = vmatpush2.bf16.msra.mxu0 0
        %4442 = vmatprep.subr.bf16.mxu0 0
        %4443 = vmatpush2.bf16.msra.mxu0 0
        %4444 = vmatprep.subr.bf16.mxu0 0
        %4445 = vmatpush2.bf16.msra.mxu0 0
        %4446 = vmatprep.subr.bf16.mxu0 0
        %4447 = vmatpush2.bf16.msra.mxu0 0
        %4448 = vmatprep.subr.bf16.mxu0 0
        %4449 = vmatpush2.bf16.msra.mxu0 0
        %4450 = vmatprep.subr.bf16.mxu0 0
        %4451 = vmatpush2.bf16.msra.mxu0 0
        %4452 = vmatprep.subr.bf16.mxu0 0
        %4453 = vmatpush2.bf16.msra.mxu0 0
        %4454 = vmatprep.subr.bf16.mxu0 0
        %4455 = vmatpush2.bf16.msra.mxu0 0
        %4456 = vmatprep.mubr.bf16.mxu0 0
        %4457 = vmatmul.mubr.bf16.gmra.mxu0 %v4344
        %v4458 = vpop.f32.mrf.mxu0
        %v4459 = vadd.f32 0.0, %v4458
        %v4460 = vpop.f32.mrf.mxu0
        %v4461 = vpop.f32.mrf.mxu0
        %v4462 = vadd.f32 0.0, %v4461
        %v4463 = vpop.f32.mrf.mxu0
        %4464 = vmatprep.mubr.bf16.mxu0 0
        %4465 = vmatmul.mubr.bf16.gmra.mxu0 %v4345
        %v4466 = vpop.f32.mrf.mxu0
        %v4467 = vadd.f32 0.0, %v4466
        %v4468 = vpop.f32.mrf.mxu0
        %v4469 = vpop.f32.mrf.mxu0
        %v4470 = vadd.f32 0.0, %v4469
        %v4471 = vpop.f32.mrf.mxu0
        %4472 = vmatprep.mubr.bf16.mxu0 0
        %4473 = vmatmul.mubr.bf16.gmra.mxu0 %v4346
        %v4474 = vpop.f32.mrf.mxu0
        %v4475 = vadd.f32 0.0, %v4474
        %v4476 = vpop.f32.mrf.mxu0
        %v4477 = vpop.f32.mrf.mxu0
        %v4478 = vadd.f32 0.0, %v4477
        %v4479 = vpop.f32.mrf.mxu0
        %4480 = vmatprep.mubr.bf16.mxu0 0
        %4481 = vmatmul.mubr.bf16.gmra.mxu0 %v4347
        %v4482 = vpop.f32.mrf.mxu0
        %v4483 = vadd.f32 0.0, %v4482
        %v4484 = vpop.f32.mrf.mxu0
        %v4485 = vpop.f32.mrf.mxu0
        %v4486 = vadd.f32 0.0, %v4485
        %v4487 = vpop.f32.mrf.mxu0
        %4488 = vmatprep.mubr.bf16.mxu0 0
        %4489 = vmatmul.mubr.bf16.gmra.mxu0 %v4348
        %v4490 = vpop.f32.mrf.mxu0
        %v4491 = vadd.f32 0.0, %v4490
        %v4492 = vpop.f32.mrf.mxu0
        %v4493 = vpop.f32.mrf.mxu0
        %v4494 = vadd.f32 0.0, %v4493
        %v4495 = vpop.f32.mrf.mxu0
        %4496 = vmatprep.mubr.bf16.mxu0 0
        %4497 = vmatmul.mubr.bf16.gmra.mxu0 %v4349
        %v4498 = vpop.f32.mrf.mxu0
        %v4499 = vadd.f32 0.0, %v4498
        %v4500 = vpop.f32.mrf.mxu0
        %v4501 = vpop.f32.mrf.mxu0
        %v4502 = vadd.f32 0.0, %v4501
        %v4503 = vpop.f32.mrf.mxu0
        %4504 = vmatprep.mubr.bf16.mxu0 0
        %4505 = vmatmul.mubr.bf16.gmra.mxu0 %v4350
        %v4506 = vpop.f32.mrf.mxu0
        %v4507 = vadd.f32 0.0, %v4506
        %v4508 = vpop.f32.mrf.mxu0
        %v4509 = vpop.f32.mrf.mxu0
        %v4510 = vadd.f32 0.0, %v4509
        %v4511 = vpop.f32.mrf.mxu0
        %4512 = vmatprep.mubr.bf16.mxu0 0
        %4513 = vmatmul.mubr.bf16.gmra.mxu0 %v4351
        %v4514 = vpop.f32.mrf.mxu0
        %v4515 = vadd.f32 0.0, %v4514
        %v4516 = vpop.f32.mrf.mxu0
        %v4517 = vpop.f32.mrf.mxu0
        %v4518 = vadd.f32 0.0, %v4517
        %v4519 = vpop.f32.mrf.mxu0
        %4520 = vmatprep.mubr.bf16.mxu0 0
        %4521 = vmatmul.mubr.bf16.gmra.mxu0 %v4352
        %v4522 = vpop.f32.mrf.mxu0
        %v4523 = vadd.f32 0.0, %v4522
        %v4524 = vpop.f32.mrf.mxu0
        %v4525 = vpop.f32.mrf.mxu0
        %v4526 = vadd.f32 0.0, %v4525
        %v4527 = vpop.f32.mrf.mxu0
        %4528 = vmatprep.mubr.bf16.mxu0 0
        %4529 = vmatmul.mubr.bf16.gmra.mxu0 %v4353
        %v4530 = vpop.f32.mrf.mxu0
        %v4531 = vadd.f32 0.0, %v4530
        %v4532 = vpop.f32.mrf.mxu0
        %v4533 = vpop.f32.mrf.mxu0
        %v4534 = vadd.f32 0.0, %v4533
        %v4535 = vpop.f32.mrf.mxu0
        %4536 = vmatprep.mubr.bf16.mxu0 0
        %4537 = vmatmul.mubr.bf16.gmra.mxu0 %v4354
        %v4538 = vpop.f32.mrf.mxu0
        %v4539 = vadd.f32 0.0, %v4538
        %v4540 = vpop.f32.mrf.mxu0
        %v4541 = vpop.f32.mrf.mxu0
        %v4542 = vadd.f32 0.0, %v4541
        %v4543 = vpop.f32.mrf.mxu0
        %4544 = vmatprep.mubr.bf16.mxu0 0
        %4545 = vmatmul.mubr.bf16.gmra.mxu0 %v4355
        %v4546 = vpop.f32.mrf.mxu0
        %v4547 = vadd.f32 0.0, %v4546
        %v4548 = vpop.f32.mrf.mxu0
        %v4549 = vpop.f32.mrf.mxu0
        %v4550 = vadd.f32 0.0, %v4549
        %v4551 = vpop.f32.mrf.mxu0
        %4552 = vmatprep.mubr.bf16.mxu0 0
        %4553 = vmatmul.mubr.bf16.gmra.mxu0 %v4356
        %v4554 = vpop.f32.mrf.mxu0
        %v4555 = vadd.f32 0.0, %v4554
        %v4556 = vpop.f32.mrf.mxu0
        %v4557 = vpop.f32.mrf.mxu0
        %v4558 = vadd.f32 0.0, %v4557
        %v4559 = vpop.f32.mrf.mxu0
        %4560 = vmatprep.mubr.bf16.mxu0 0
        %4561 = vmatmul.mubr.bf16.gmra.mxu0 %v4357
        %v4562 = vpop.f32.mrf.mxu0
        %v4563 = vadd.f32 0.0, %v4562
        %v4564 = vpop.f32.mrf.mxu0
        %v4565 = vpop.f32.mrf.mxu0
        %v4566 = vadd.f32 0.0, %v4565
        %v4567 = vpop.f32.mrf.mxu0
        %4568 = vmatprep.mubr.bf16.mxu0 0
        %4569 = vmatmul.mubr.bf16.gmra.mxu0 %v4358
        %v4570 = vpop.f32.mrf.mxu0
        %v4571 = vadd.f32 0.0, %v4570
        %v4572 = vpop.f32.mrf.mxu0
        %v4573 = vpop.f32.mrf.mxu0
        %v4574 = vadd.f32 0.0, %v4573
        %v4575 = vpop.f32.mrf.mxu0
        %4576 = vmatprep.mubr.bf16.mxu0 0
        %4577 = vmatmul.mubr.bf16.gmra.mxu0 %v4359
        %v4578 = vpop.f32.mrf.mxu0
        %v4579 = vadd.f32 0.0, %v4578
        %v4580 = vpop.f32.mrf.mxu0
        %v4581 = vpop.f32.mrf.mxu0
        %v4582 = vadd.f32 0.0, %v4581
        %v4583 = vpop.f32.mrf.mxu0
        %4584 = vdwg.mxu0
        %v4585 = vadd.f32 %v4198, %v4459
        %v4586 = vadd.f32 %v4199, %v4462
        %v4587 = vadd.f32 %v4200, %v4467
        %v4588 = vadd.f32 %v4201, %v4470
        %v4589 = vadd.f32 %v4202, %v4475
        %v4590 = vadd.f32 %v4203, %v4478
        %v4591 = vadd.f32 %v4204, %v4483
        %v4592 = vadd.f32 %v4205, %v4486
        %v4593 = vadd.f32 %v4206, %v4491
        %v4594 = vadd.f32 %v4207, %v4494
        %v4595 = vadd.f32 %v4208, %v4499
        %v4596 = vadd.f32 %v4209, %v4502
        %v4597 = vadd.f32 %v4210, %v4507
        %v4598 = vadd.f32 %v4211, %v4510
        %v4599 = vadd.f32 %v4212, %v4515
        %v4600 = vadd.f32 %v4213, %v4518
        %v4601 = vadd.f32 %v4214, %v4523
        %v4602 = vadd.f32 %v4215, %v4526
        %v4603 = vadd.f32 %v4216, %v4531
        %v4604 = vadd.f32 %v4217, %v4534
        %v4605 = vadd.f32 %v4218, %v4539
        %v4606 = vadd.f32 %v4219, %v4542
        %v4607 = vadd.f32 %v4220, %v4547
        %v4608 = vadd.f32 %v4221, %v4550
        %v4609 = vadd.f32 %v4222, %v4555
        %v4610 = vadd.f32 %v4223, %v4558
        %v4611 = vadd.f32 %v4224, %v4563
        %v4612 = vadd.f32 %v4225, %v4566
        %v4613 = vadd.f32 %v4226, %v4571
        %v4614 = vadd.f32 %v4227, %v4574
        %v4615 = vadd.f32 %v4228, %v4579
        %v4616 = vadd.f32 %v4229, %v4582
        %v4617 = vld [vmem:[%s4230] sm:$0xf]
        %v4618 = vld [vmem:[%s4230 + $0x4] sm:$0xf]
        %v4619 = vld [vmem:[%s4230 + $0x8] sm:$0x1]
        %v4620 = vld [vmem:[%s4230 + $0xc] sm:$0xf]
        %v4621 = vld [vmem:[%s4230 + $0x10] sm:$0xf]
        %v4622 = vld [vmem:[%s4230 + $0x14] sm:$0x1]
        %v4623 = vld [vmem:[%s4230 + $0x18] sm:$0xf]
        %v4624 = vld [vmem:[%s4230 + $0x1c] sm:$0xf]
        %v4625 = vld [vmem:[%s4230 + $0x20] sm:$0x1]
        %v4626 = vld [vmem:[%s4230 + $0x24] sm:$0xf]
        %v4627 = vld [vmem:[%s4230 + $0x28] sm:$0xf]
        %v4628 = vld [vmem:[%s4230 + $0x2c] sm:$0x1]
        %v4629 = vld [vmem:[%s4230 + $0x30] sm:$0xf]
        %v4630 = vld [vmem:[%s4230 + $0x34] sm:$0xf]
        %v4631 = vld [vmem:[%s4230 + $0x38] sm:$0x1]
        %v4632 = vld [vmem:[%s4230 + $0x3c] sm:$0xf]
        %v4633 = vld [vmem:[%s4230 + $0x40] sm:$0xf]
        %v4634 = vld [vmem:[%s4230 + $0x44] sm:$0x1]
        %v4635 = vld [vmem:[%s4230 + $0x48] sm:$0xf]
        %v4636 = vld [vmem:[%s4230 + $0x4c] sm:$0xf]
        %v4637 = vld [vmem:[%s4230 + $0x50] sm:$0x1]
        %v4638 = vld [vmem:[%s4230 + $0x54] sm:$0xf]
        %v4639 = vld [vmem:[%s4230 + $0x58] sm:$0xf]
        %v4640 = vld [vmem:[%s4230 + $0x5c] sm:$0x1]
        %v4641 = vld [vmem:[%s4230 + $0x60] sm:$0xf]
        %v4642 = vld [vmem:[%s4230 + $0x64] sm:$0xf]
        %v4643 = vld [vmem:[%s4230 + $0x68] sm:$0x1]
        %v4644 = vld [vmem:[%s4230 + $0x6c] sm:$0xf]
        %v4645 = vld [vmem:[%s4230 + $0x70] sm:$0xf]
        %v4646 = vld [vmem:[%s4230 + $0x74] sm:$0x1]
        %v4647 = vld [vmem:[%s4230 + $0x78] sm:$0xf]
        %v4648 = vld [vmem:[%s4230 + $0x7c] sm:$0xf]
        %v4649 = vld [vmem:[%s4230 + $0x80] sm:$0x1]
        %v4650 = vld [vmem:[%s4230 + $0x84] sm:$0xf]
        %v4651 = vld [vmem:[%s4230 + $0x88] sm:$0xf]
        %v4652 = vld [vmem:[%s4230 + $0x8c] sm:$0x1]
        %v4653 = vld [vmem:[%s4230 + $0x90] sm:$0xf]
        %v4654 = vld [vmem:[%s4230 + $0x94] sm:$0xf]
        %v4655 = vld [vmem:[%s4230 + $0x98] sm:$0x1]
        %v4656 = vld [vmem:[%s4230 + $0x9c] sm:$0xf]
        %v4657 = vld [vmem:[%s4230 + $0xa0] sm:$0xf]
        %v4658 = vld [vmem:[%s4230 + $0xa4] sm:$0x1]
        %v4659 = vld [vmem:[%s4230 + $0xa8] sm:$0xf]
        %v4660 = vld [vmem:[%s4230 + $0xac] sm:$0xf]
        %v4661 = vld [vmem:[%s4230 + $0xb0] sm:$0x1]
        %v4662 = vld [vmem:[%s4230 + $0xb4] sm:$0xf]
        %v4663 = vld [vmem:[%s4230 + $0xb8] sm:$0xf]
        %v4664 = vld [vmem:[%s4230 + $0xbc] sm:$0x1]
        %v4666 = vshrl.u32 %v4617, 16
        %v4668 = vrot.slane %v4666, 4
        %v4669 = vshll.u32 %v4617, 16
        %v4671 = vrot.slane %v4669, 5
        %v4672 = vor.u32 %v4668, %v4671
        %v4673 = vrot.slane %v4672, 4
        %v4675 = vshll.u32 %v4618, 16
        %v4677 = vrot.slane %v4675, 5
        %v4678 = vsel %vm1127, %v4673, %v4677
        %v4679 = vshrl.u32 %v4618, 16
        %v4681 = vrot.slane %v4679, 4
        %v4682 = vor.u32 %v4681, %v4677
        %v4683 = vrot.slane %v4682, 4
        %v4685 = vshll.u32 %v4619, 16
        %v4687 = vrot.slane %v4685, 5
        %v4688 = vsel %vm1127, %v4683, %v4687
        %v4690 = vshrl.u32 %v4620, 16
        %v4692 = vrot.slane %v4690, 4
        %v4693 = vshll.u32 %v4620, 16
        %v4695 = vrot.slane %v4693, 5
        %v4696 = vor.u32 %v4692, %v4695
        %v4697 = vrot.slane %v4696, 4
        %v4699 = vshll.u32 %v4621, 16
        %v4701 = vrot.slane %v4699, 5
        %v4702 = vsel %vm1127, %v4697, %v4701
        %v4703 = vshrl.u32 %v4621, 16
        %v4705 = vrot.slane %v4703, 4
        %v4706 = vor.u32 %v4705, %v4701
        %v4707 = vrot.slane %v4706, 4
        %v4709 = vshll.u32 %v4622, 16
        %v4711 = vrot.slane %v4709, 5
        %v4712 = vsel %vm1127, %v4707, %v4711
        %v4714 = vshrl.u32 %v4623, 16
        %v4716 = vrot.slane %v4714, 4
        %v4717 = vshll.u32 %v4623, 16
        %v4719 = vrot.slane %v4717, 5
        %v4720 = vor.u32 %v4716, %v4719
        %v4721 = vrot.slane %v4720, 4
        %v4723 = vshll.u32 %v4624, 16
        %v4725 = vrot.slane %v4723, 5
        %v4726 = vsel %vm1127, %v4721, %v4725
        %v4727 = vshrl.u32 %v4624, 16
        %v4729 = vrot.slane %v4727, 4
        %v4730 = vor.u32 %v4729, %v4725
        %v4731 = vrot.slane %v4730, 4
        %v4733 = vshll.u32 %v4625, 16
        %v4735 = vrot.slane %v4733, 5
        %v4736 = vsel %vm1127, %v4731, %v4735
        %v4738 = vshrl.u32 %v4626, 16
        %v4740 = vrot.slane %v4738, 4
        %v4741 = vshll.u32 %v4626, 16
        %v4743 = vrot.slane %v4741, 5
        %v4744 = vor.u32 %v4740, %v4743
        %v4745 = vrot.slane %v4744, 4
        %v4747 = vshll.u32 %v4627, 16
        %v4749 = vrot.slane %v4747, 5
        %v4750 = vsel %vm1127, %v4745, %v4749
        %v4751 = vshrl.u32 %v4627, 16
        %v4753 = vrot.slane %v4751, 4
        %v4754 = vor.u32 %v4753, %v4749
        %v4755 = vrot.slane %v4754, 4
        %v4757 = vshll.u32 %v4628, 16
        %v4759 = vrot.slane %v4757, 5
        %v4760 = vsel %vm1127, %v4755, %v4759
        %v4762 = vshrl.u32 %v4629, 16
        %v4764 = vrot.slane %v4762, 4
        %v4765 = vshll.u32 %v4629, 16
        %v4767 = vrot.slane %v4765, 5
        %v4768 = vor.u32 %v4764, %v4767
        %v4769 = vrot.slane %v4768, 4
        %v4771 = vshll.u32 %v4630, 16
        %v4773 = vrot.slane %v4771, 5
        %v4774 = vsel %vm1127, %v4769, %v4773
        %v4775 = vshrl.u32 %v4630, 16
        %v4777 = vrot.slane %v4775, 4
        %v4778 = vor.u32 %v4777, %v4773
        %v4779 = vrot.slane %v4778, 4
        %v4781 = vshll.u32 %v4631, 16
        %v4783 = vrot.slane %v4781, 5
        %v4784 = vsel %vm1127, %v4779, %v4783
        %v4786 = vshrl.u32 %v4632, 16
        %v4788 = vrot.slane %v4786, 4
        %v4789 = vshll.u32 %v4632, 16
        %v4791 = vrot.slane %v4789, 5
        %v4792 = vor.u32 %v4788, %v4791
        %v4793 = vrot.slane %v4792, 4
        %v4795 = vshll.u32 %v4633, 16
        %v4797 = vrot.slane %v4795, 5
        %v4798 = vsel %vm1127, %v4793, %v4797
        %v4799 = vshrl.u32 %v4633, 16
        %v4801 = vrot.slane %v4799, 4
        %v4802 = vor.u32 %v4801, %v4797
        %v4803 = vrot.slane %v4802, 4
        %v4805 = vshll.u32 %v4634, 16
        %v4807 = vrot.slane %v4805, 5
        %v4808 = vsel %vm1127, %v4803, %v4807
        %v4810 = vshrl.u32 %v4635, 16
        %v4812 = vrot.slane %v4810, 4
        %v4813 = vshll.u32 %v4635, 16
        %v4815 = vrot.slane %v4813, 5
        %v4816 = vor.u32 %v4812, %v4815
        %v4817 = vrot.slane %v4816, 4
        %v4819 = vshll.u32 %v4636, 16
        %v4821 = vrot.slane %v4819, 5
        %v4822 = vsel %vm1127, %v4817, %v4821
        %v4823 = vshrl.u32 %v4636, 16
        %v4825 = vrot.slane %v4823, 4
        %v4826 = vor.u32 %v4825, %v4821
        %v4827 = vrot.slane %v4826, 4
        %v4829 = vshll.u32 %v4637, 16
        %v4831 = vrot.slane %v4829, 5
        %v4832 = vsel %vm1127, %v4827, %v4831
        %v4834 = vshrl.u32 %v4638, 16
        %v4836 = vrot.slane %v4834, 4
        %v4837 = vshll.u32 %v4638, 16
        %v4839 = vrot.slane %v4837, 5
        %v4840 = vor.u32 %v4836, %v4839
        %v4841 = vrot.slane %v4840, 4
        %v4843 = vshll.u32 %v4639, 16
        %v4845 = vrot.slane %v4843, 5
        %v4846 = vsel %vm1127, %v4841, %v4845
        %v4847 = vshrl.u32 %v4639, 16
        %v4849 = vrot.slane %v4847, 4
        %v4850 = vor.u32 %v4849, %v4845
        %v4851 = vrot.slane %v4850, 4
        %v4853 = vshll.u32 %v4640, 16
        %v4855 = vrot.slane %v4853, 5
        %v4856 = vsel %vm1127, %v4851, %v4855
        %v4858 = vshrl.u32 %v4641, 16
        %v4860 = vrot.slane %v4858, 4
        %v4861 = vshll.u32 %v4641, 16
        %v4863 = vrot.slane %v4861, 5
        %v4864 = vor.u32 %v4860, %v4863
        %v4865 = vrot.slane %v4864, 4
        %v4867 = vshll.u32 %v4642, 16
        %v4869 = vrot.slane %v4867, 5
        %v4870 = vsel %vm1127, %v4865, %v4869
        %v4871 = vshrl.u32 %v4642, 16
        %v4873 = vrot.slane %v4871, 4
        %v4874 = vor.u32 %v4873, %v4869
        %v4875 = vrot.slane %v4874, 4
        %v4877 = vshll.u32 %v4643, 16
        %v4879 = vrot.slane %v4877, 5
        %v4880 = vsel %vm1127, %v4875, %v4879
        %v4882 = vshrl.u32 %v4644, 16
        %v4884 = vrot.slane %v4882, 4
        %v4885 = vshll.u32 %v4644, 16
        %v4887 = vrot.slane %v4885, 5
        %v4888 = vor.u32 %v4884, %v4887
        %v4889 = vrot.slane %v4888, 4
        %v4891 = vshll.u32 %v4645, 16
        %v4893 = vrot.slane %v4891, 5
        %v4894 = vsel %vm1127, %v4889, %v4893
        %v4895 = vshrl.u32 %v4645, 16
        %v4897 = vrot.slane %v4895, 4
        %v4898 = vor.u32 %v4897, %v4893
        %v4899 = vrot.slane %v4898, 4
        %v4901 = vshll.u32 %v4646, 16
        %v4903 = vrot.slane %v4901, 5
        %v4904 = vsel %vm1127, %v4899, %v4903
        %v4906 = vshrl.u32 %v4647, 16
        %v4908 = vrot.slane %v4906, 4
        %v4909 = vshll.u32 %v4647, 16
        %v4911 = vrot.slane %v4909, 5
        %v4912 = vor.u32 %v4908, %v4911
        %v4913 = vrot.slane %v4912, 4
        %v4915 = vshll.u32 %v4648, 16
        %v4917 = vrot.slane %v4915, 5
        %v4918 = vsel %vm1127, %v4913, %v4917
        %v4919 = vshrl.u32 %v4648, 16
        %v4921 = vrot.slane %v4919, 4
        %v4922 = vor.u32 %v4921, %v4917
        %v4923 = vrot.slane %v4922, 4
        %v4925 = vshll.u32 %v4649, 16
        %v4927 = vrot.slane %v4925, 5
        %v4928 = vsel %vm1127, %v4923, %v4927
        %v4930 = vshrl.u32 %v4650, 16
        %v4932 = vrot.slane %v4930, 4
        %v4933 = vshll.u32 %v4650, 16
        %v4935 = vrot.slane %v4933, 5
        %v4936 = vor.u32 %v4932, %v4935
        %v4937 = vrot.slane %v4936, 4
        %v4939 = vshll.u32 %v4651, 16
        %v4941 = vrot.slane %v4939, 5
        %v4942 = vsel %vm1127, %v4937, %v4941
        %v4943 = vshrl.u32 %v4651, 16
        %v4945 = vrot.slane %v4943, 4
        %v4946 = vor.u32 %v4945, %v4941
        %v4947 = vrot.slane %v4946, 4
        %v4949 = vshll.u32 %v4652, 16
        %v4951 = vrot.slane %v4949, 5
        %v4952 = vsel %vm1127, %v4947, %v4951
        %v4954 = vshrl.u32 %v4653, 16
        %v4956 = vrot.slane %v4954, 4
        %v4957 = vshll.u32 %v4653, 16
        %v4959 = vrot.slane %v4957, 5
        %v4960 = vor.u32 %v4956, %v4959
        %v4961 = vrot.slane %v4960, 4
        %v4963 = vshll.u32 %v4654, 16
        %v4965 = vrot.slane %v4963, 5
        %v4966 = vsel %vm1127, %v4961, %v4965
        %v4967 = vshrl.u32 %v4654, 16
        %v4969 = vrot.slane %v4967, 4
        %v4970 = vor.u32 %v4969, %v4965
        %v4971 = vrot.slane %v4970, 4
        %v4973 = vshll.u32 %v4655, 16
        %v4975 = vrot.slane %v4973, 5
        %v4976 = vsel %vm1127, %v4971, %v4975
        %v4978 = vshrl.u32 %v4656, 16
        %v4980 = vrot.slane %v4978, 4
        %v4981 = vshll.u32 %v4656, 16
        %v4983 = vrot.slane %v4981, 5
        %v4984 = vor.u32 %v4980, %v4983
        %v4985 = vrot.slane %v4984, 4
        %v4987 = vshll.u32 %v4657, 16
        %v4989 = vrot.slane %v4987, 5
        %v4990 = vsel %vm1127, %v4985, %v4989
        %v4991 = vshrl.u32 %v4657, 16
        %v4993 = vrot.slane %v4991, 4
        %v4994 = vor.u32 %v4993, %v4989
        %v4995 = vrot.slane %v4994, 4
        %v4997 = vshll.u32 %v4658, 16
        %v4999 = vrot.slane %v4997, 5
        %v5000 = vsel %vm1127, %v4995, %v4999
        %v5002 = vshrl.u32 %v4659, 16
        %v5004 = vrot.slane %v5002, 4
        %v5005 = vshll.u32 %v4659, 16
        %v5007 = vrot.slane %v5005, 5
        %v5008 = vor.u32 %v5004, %v5007
        %v5009 = vrot.slane %v5008, 4
        %v5011 = vshll.u32 %v4660, 16
        %v5013 = vrot.slane %v5011, 5
        %v5014 = vsel %vm1127, %v5009, %v5013
        %v5015 = vshrl.u32 %v4660, 16
        %v5017 = vrot.slane %v5015, 4
        %v5018 = vor.u32 %v5017, %v5013
        %v5019 = vrot.slane %v5018, 4
        %v5021 = vshll.u32 %v4661, 16
        %v5023 = vrot.slane %v5021, 5
        %v5024 = vsel %vm1127, %v5019, %v5023
        %v5026 = vshrl.u32 %v4662, 16
        %v5028 = vrot.slane %v5026, 4
        %v5029 = vshll.u32 %v4662, 16
        %v5031 = vrot.slane %v5029, 5
        %v5032 = vor.u32 %v5028, %v5031
        %v5033 = vrot.slane %v5032, 4
        %v5035 = vshll.u32 %v4663, 16
        %v5037 = vrot.slane %v5035, 5
        %v5038 = vsel %vm1127, %v5033, %v5037
        %v5039 = vshrl.u32 %v4663, 16
        %v5041 = vrot.slane %v5039, 4
        %v5042 = vor.u32 %v5041, %v5037
        %v5043 = vrot.slane %v5042, 4
        %v5045 = vshll.u32 %v4664, 16
        %v5047 = vrot.slane %v5045, 5
        %v5048 = vsel %vm1127, %v5043, %v5047
        %s5049 = scalar_lea.vmem [#allocation4], 448
        %v5050 = vld [vmem:[%s5049] sm:$0xf]
        %v5051 = vld [vmem:[%s5049 + $0x4] sm:$0xf]
        %v5052 = vld [vmem:[%s5049 + $0x8] sm:$0xf]
        %v5053 = vld [vmem:[%s5049 + $0xc] sm:$0xf]
        %v5054 = vld [vmem:[%s5049 + $0x10] sm:$0xf]
        %v5055 = vld [vmem:[%s5049 + $0x14] sm:$0xf]
        %v5056 = vld [vmem:[%s5049 + $0x18] sm:$0xf]
        %v5057 = vld [vmem:[%s5049 + $0x1c] sm:$0xf]
        %v5058 = vld [vmem:[%s5049 + $0x20] sm:$0xf]
        %v5059 = vld [vmem:[%s5049 + $0x24] sm:$0xf]
        %v5060 = vld [vmem:[%s5049 + $0x28] sm:$0xf]
        %v5061 = vld [vmem:[%s5049 + $0x2c] sm:$0xf]
        %v5062 = vld [vmem:[%s5049 + $0x30] sm:$0xf]
        %v5063 = vld [vmem:[%s5049 + $0x34] sm:$0xf]
        %v5064 = vld [vmem:[%s5049 + $0x38] sm:$0xf]
        %v5065 = vld [vmem:[%s5049 + $0x3c] sm:$0xf]
        %v5066 = vunpack.c.l.b16 %v4678
        %v5067 = vunpack.c.l.b16 %v4688
        %v5068 = vunpack.c.l.b16 %v4702
        %v5069 = vunpack.c.l.b16 %v4712
        %v5070 = vunpack.c.l.b16 %v4726
        %v5071 = vunpack.c.l.b16 %v4736
        %v5072 = vunpack.c.l.b16 %v4750
        %v5073 = vunpack.c.l.b16 %v4760
        %v5074 = vunpack.c.l.b16 %v4774
        %v5075 = vunpack.c.l.b16 %v4784
        %v5076 = vunpack.c.l.b16 %v4798
        %v5077 = vunpack.c.l.b16 %v4808
        %v5078 = vunpack.c.l.b16 %v4822
        %v5079 = vunpack.c.l.b16 %v4832
        %v5080 = vunpack.c.l.b16 %v4846
        %v5081 = vunpack.c.l.b16 %v4856
        %v5082 = vunpack.c.l.b16 %v4870
        %v5083 = vunpack.c.l.b16 %v4880
        %v5084 = vunpack.c.l.b16 %v4894
        %v5085 = vunpack.c.l.b16 %v4904
        %v5086 = vunpack.c.l.b16 %v4918
        %v5087 = vunpack.c.l.b16 %v4928
        %v5088 = vunpack.c.l.b16 %v4942
        %v5089 = vunpack.c.l.b16 %v4952
        %v5090 = vunpack.c.l.b16 %v4966
        %v5091 = vunpack.c.l.b16 %v4976
        %v5092 = vunpack.c.l.b16 %v4990
        %v5093 = vunpack.c.l.b16 %v5000
        %v5094 = vunpack.c.l.b16 %v5014
        %v5095 = vunpack.c.l.b16 %v5024
        %v5096 = vunpack.c.l.b16 %v5038
        %v5097 = vunpack.c.l.b16 %v5048
        %v5098 = vpack.c.b16 %v5067, %v5066
        %v5099 = vpack.c.b16 %v5069, %v5068
        %v5100 = vpack.c.b16 %v5071, %v5070
        %v5101 = vpack.c.b16 %v5073, %v5072
        %v5102 = vpack.c.b16 %v5075, %v5074
        %v5103 = vpack.c.b16 %v5077, %v5076
        %v5104 = vpack.c.b16 %v5079, %v5078
        %v5105 = vpack.c.b16 %v5081, %v5080
        %v5106 = vpack.c.b16 %v5083, %v5082
        %v5107 = vpack.c.b16 %v5085, %v5084
        %v5108 = vpack.c.b16 %v5087, %v5086
        %v5109 = vpack.c.b16 %v5089, %v5088
        %v5110 = vpack.c.b16 %v5091, %v5090
        %v5111 = vpack.c.b16 %v5093, %v5092
        %v5112 = vpack.c.b16 %v5095, %v5094
        %v5113 = vpack.c.b16 %v5097, %v5096
        %v5146 = vunpack.c.l.b16 %v5050
        %v5147 = vunpack.c.l.b16 %v5051
        %v5148 = vunpack.c.l.b16 %v5052
        %v5149 = vunpack.c.l.b16 %v5053
        %v5150 = vunpack.c.l.b16 %v5054
        %v5151 = vunpack.c.l.b16 %v5055
        %v5152 = vunpack.c.l.b16 %v5056
        %v5153 = vunpack.c.l.b16 %v5057
        %v5154 = vunpack.c.l.b16 %v5058
        %v5155 = vunpack.c.l.b16 %v5059
        %v5156 = vunpack.c.l.b16 %v5060
        %v5157 = vunpack.c.l.b16 %v5061
        %v5158 = vunpack.c.l.b16 %v5062
        %v5159 = vunpack.c.l.b16 %v5063
        %v5160 = vunpack.c.l.b16 %v5064
        %v5161 = vunpack.c.l.b16 %v5065
        %v5162 = vpack.c.b16 %v5147, %v5146
        %v5163 = vpack.c.b16 %v5149, %v5148
        %v5164 = vpack.c.b16 %v5151, %v5150
        %v5165 = vpack.c.b16 %v5153, %v5152
        %v5166 = vpack.c.b16 %v5155, %v5154
        %v5167 = vpack.c.b16 %v5157, %v5156
        %v5168 = vpack.c.b16 %v5159, %v5158
        %v5169 = vpack.c.b16 %v5161, %v5160
        %5178 = vmatprep.subr.bf16.mxu0 0
        %5179 = vmatpush1.bf16.msra.mxu0 %v5169
        %5180 = vmatprep.subr.bf16.mxu0 0
        %5181 = vmatpush1.bf16.msra.mxu0 %v5168
        %5182 = vmatprep.subr.bf16.mxu0 0
        %5183 = vmatpush1.bf16.msra.mxu0 %v5167
        %5184 = vmatprep.subr.bf16.mxu0 0
        %5185 = vmatpush1.bf16.msra.mxu0 %v5166
        %5186 = vmatprep.subr.bf16.mxu0 0
        %5187 = vmatpush1.bf16.msra.mxu0 %v5165
        %5188 = vmatprep.subr.bf16.mxu0 0
        %5189 = vmatpush1.bf16.msra.mxu0 %v5164
        %5190 = vmatprep.subr.bf16.mxu0 0
        %5191 = vmatpush1.bf16.msra.mxu0 %v5163
        %5192 = vmatprep.subr.bf16.mxu0 0
        %5193 = vmatpush1.bf16.msra.mxu0 %v5162
        %5194 = vmatprep.subr.bf16.mxu0 0
        %5195 = vmatpush2.bf16.msra.mxu0 0
        %5196 = vmatprep.subr.bf16.mxu0 0
        %5197 = vmatpush2.bf16.msra.mxu0 0
        %5198 = vmatprep.subr.bf16.mxu0 0
        %5199 = vmatpush2.bf16.msra.mxu0 0
        %5200 = vmatprep.subr.bf16.mxu0 0
        %5201 = vmatpush2.bf16.msra.mxu0 0
        %5202 = vmatprep.subr.bf16.mxu0 0
        %5203 = vmatpush2.bf16.msra.mxu0 0
        %5204 = vmatprep.subr.bf16.mxu0 0
        %5205 = vmatpush2.bf16.msra.mxu0 0
        %5206 = vmatprep.subr.bf16.mxu0 0
        %5207 = vmatpush2.bf16.msra.mxu0 0
        %5208 = vmatprep.subr.bf16.mxu0 0
        %5209 = vmatpush2.bf16.msra.mxu0 0
        %5210 = vmatprep.mubr.bf16.mxu0 0
        %5211 = vmatmul.mubr.bf16.gmra.mxu0 %v5098
        %v5212 = vpop.f32.mrf.mxu0
        %v5213 = vadd.f32 0.0, %v5212
        %v5214 = vpop.f32.mrf.mxu0
        %v5215 = vpop.f32.mrf.mxu0
        %v5216 = vadd.f32 0.0, %v5215
        %v5217 = vpop.f32.mrf.mxu0
        %5218 = vmatprep.mubr.bf16.mxu0 0
        %5219 = vmatmul.mubr.bf16.gmra.mxu0 %v5099
        %v5220 = vpop.f32.mrf.mxu0
        %v5221 = vadd.f32 0.0, %v5220
        %v5222 = vpop.f32.mrf.mxu0
        %v5223 = vpop.f32.mrf.mxu0
        %v5224 = vadd.f32 0.0, %v5223
        %v5225 = vpop.f32.mrf.mxu0
        %5226 = vmatprep.mubr.bf16.mxu0 0
        %5227 = vmatmul.mubr.bf16.gmra.mxu0 %v5100
        %v5228 = vpop.f32.mrf.mxu0
        %v5229 = vadd.f32 0.0, %v5228
        %v5230 = vpop.f32.mrf.mxu0
        %v5231 = vpop.f32.mrf.mxu0
        %v5232 = vadd.f32 0.0, %v5231
        %v5233 = vpop.f32.mrf.mxu0
        %5234 = vmatprep.mubr.bf16.mxu0 0
        %5235 = vmatmul.mubr.bf16.gmra.mxu0 %v5101
        %v5236 = vpop.f32.mrf.mxu0
        %v5237 = vadd.f32 0.0, %v5236
        %v5238 = vpop.f32.mrf.mxu0
        %v5239 = vpop.f32.mrf.mxu0
        %v5240 = vadd.f32 0.0, %v5239
        %v5241 = vpop.f32.mrf.mxu0
        %5242 = vmatprep.mubr.bf16.mxu0 0
        %5243 = vmatmul.mubr.bf16.gmra.mxu0 %v5102
        %v5244 = vpop.f32.mrf.mxu0
        %v5245 = vadd.f32 0.0, %v5244
        %v5246 = vpop.f32.mrf.mxu0
        %v5247 = vpop.f32.mrf.mxu0
        %v5248 = vadd.f32 0.0, %v5247
        %v5249 = vpop.f32.mrf.mxu0
        %5250 = vmatprep.mubr.bf16.mxu0 0
        %5251 = vmatmul.mubr.bf16.gmra.mxu0 %v5103
        %v5252 = vpop.f32.mrf.mxu0
        %v5253 = vadd.f32 0.0, %v5252
        %v5254 = vpop.f32.mrf.mxu0
        %v5255 = vpop.f32.mrf.mxu0
        %v5256 = vadd.f32 0.0, %v5255
        %v5257 = vpop.f32.mrf.mxu0
        %5258 = vmatprep.mubr.bf16.mxu0 0
        %5259 = vmatmul.mubr.bf16.gmra.mxu0 %v5104
        %v5260 = vpop.f32.mrf.mxu0
        %v5261 = vadd.f32 0.0, %v5260
        %v5262 = vpop.f32.mrf.mxu0
        %v5263 = vpop.f32.mrf.mxu0
        %v5264 = vadd.f32 0.0, %v5263
        %v5265 = vpop.f32.mrf.mxu0
        %5266 = vmatprep.mubr.bf16.mxu0 0
        %5267 = vmatmul.mubr.bf16.gmra.mxu0 %v5105
        %v5268 = vpop.f32.mrf.mxu0
        %v5269 = vadd.f32 0.0, %v5268
        %v5270 = vpop.f32.mrf.mxu0
        %v5271 = vpop.f32.mrf.mxu0
        %v5272 = vadd.f32 0.0, %v5271
        %v5273 = vpop.f32.mrf.mxu0
        %5274 = vmatprep.mubr.bf16.mxu0 0
        %5275 = vmatmul.mubr.bf16.gmra.mxu0 %v5106
        %v5276 = vpop.f32.mrf.mxu0
        %v5277 = vadd.f32 0.0, %v5276
        %v5278 = vpop.f32.mrf.mxu0
        %v5279 = vpop.f32.mrf.mxu0
        %v5280 = vadd.f32 0.0, %v5279
        %v5281 = vpop.f32.mrf.mxu0
        %5282 = vmatprep.mubr.bf16.mxu0 0
        %5283 = vmatmul.mubr.bf16.gmra.mxu0 %v5107
        %v5284 = vpop.f32.mrf.mxu0
        %v5285 = vadd.f32 0.0, %v5284
        %v5286 = vpop.f32.mrf.mxu0
        %v5287 = vpop.f32.mrf.mxu0
        %v5288 = vadd.f32 0.0, %v5287
        %v5289 = vpop.f32.mrf.mxu0
        %5290 = vmatprep.mubr.bf16.mxu0 0
        %5291 = vmatmul.mubr.bf16.gmra.mxu0 %v5108
        %v5292 = vpop.f32.mrf.mxu0
        %v5293 = vadd.f32 0.0, %v5292
        %v5294 = vpop.f32.mrf.mxu0
        %v5295 = vpop.f32.mrf.mxu0
        %v5296 = vadd.f32 0.0, %v5295
        %v5297 = vpop.f32.mrf.mxu0
        %5298 = vmatprep.mubr.bf16.mxu0 0
        %5299 = vmatmul.mubr.bf16.gmra.mxu0 %v5109
        %v5300 = vpop.f32.mrf.mxu0
        %v5301 = vadd.f32 0.0, %v5300
        %v5302 = vpop.f32.mrf.mxu0
        %v5303 = vpop.f32.mrf.mxu0
        %v5304 = vadd.f32 0.0, %v5303
        %v5305 = vpop.f32.mrf.mxu0
        %5306 = vmatprep.mubr.bf16.mxu0 0
        %5307 = vmatmul.mubr.bf16.gmra.mxu0 %v5110
        %v5308 = vpop.f32.mrf.mxu0
        %v5309 = vadd.f32 0.0, %v5308
        %v5310 = vpop.f32.mrf.mxu0
        %v5311 = vpop.f32.mrf.mxu0
        %v5312 = vadd.f32 0.0, %v5311
        %v5313 = vpop.f32.mrf.mxu0
        %5314 = vmatprep.mubr.bf16.mxu0 0
        %5315 = vmatmul.mubr.bf16.gmra.mxu0 %v5111
        %v5316 = vpop.f32.mrf.mxu0
        %v5317 = vadd.f32 0.0, %v5316
        %v5318 = vpop.f32.mrf.mxu0
        %v5319 = vpop.f32.mrf.mxu0
        %v5320 = vadd.f32 0.0, %v5319
        %v5321 = vpop.f32.mrf.mxu0
        %5322 = vmatprep.mubr.bf16.mxu0 0
        %5323 = vmatmul.mubr.bf16.gmra.mxu0 %v5112
        %v5324 = vpop.f32.mrf.mxu0
        %v5325 = vadd.f32 0.0, %v5324
        %v5326 = vpop.f32.mrf.mxu0
        %v5327 = vpop.f32.mrf.mxu0
        %v5328 = vadd.f32 0.0, %v5327
        %v5329 = vpop.f32.mrf.mxu0
        %5330 = vmatprep.mubr.bf16.mxu0 0
        %5331 = vmatmul.mubr.bf16.gmra.mxu0 %v5113
        %v5332 = vpop.f32.mrf.mxu0
        %v5333 = vadd.f32 0.0, %v5332
        %v5334 = vpop.f32.mrf.mxu0
        %v5335 = vpop.f32.mrf.mxu0
        %v5336 = vadd.f32 0.0, %v5335
        %v5337 = vpop.f32.mrf.mxu0
        %5338 = vdwg.mxu0
        %v5339 = vadd.f32 %v4585, %v5213
        %v5340 = vadd.f32 %v4586, %v5216
        %v5341 = vadd.f32 %v4587, %v5221
        %v5342 = vadd.f32 %v4588, %v5224
        %v5343 = vadd.f32 %v4589, %v5229
        %v5344 = vadd.f32 %v4590, %v5232
        %v5345 = vadd.f32 %v4591, %v5237
        %v5346 = vadd.f32 %v4592, %v5240
        %v5347 = vadd.f32 %v4593, %v5245
        %v5348 = vadd.f32 %v4594, %v5248
        %v5349 = vadd.f32 %v4595, %v5253
        %v5350 = vadd.f32 %v4596, %v5256
        %v5351 = vadd.f32 %v4597, %v5261
        %v5352 = vadd.f32 %v4598, %v5264
        %v5353 = vadd.f32 %v4599, %v5269
        %v5354 = vadd.f32 %v4600, %v5272
        %v5355 = vadd.f32 %v4601, %v5277
        %v5356 = vadd.f32 %v4602, %v5280
        %v5357 = vadd.f32 %v4603, %v5285
        %v5358 = vadd.f32 %v4604, %v5288
        %v5359 = vadd.f32 %v4605, %v5293
        %v5360 = vadd.f32 %v4606, %v5296
        %v5361 = vadd.f32 %v4607, %v5301
        %v5362 = vadd.f32 %v4608, %v5304
        %v5363 = vadd.f32 %v4609, %v5309
        %v5364 = vadd.f32 %v4610, %v5312
        %v5365 = vadd.f32 %v4611, %v5317
        %v5366 = vadd.f32 %v4612, %v5320
        %v5367 = vadd.f32 %v4613, %v5325
        %v5368 = vadd.f32 %v4614, %v5328
        %v5369 = vadd.f32 %v4615, %v5333
        %v5370 = vadd.f32 %v4616, %v5336
        %v5371 = vld [vmem:[%s4230] sm:$0xe]
        %v5372 = vld [vmem:[%s4230 + $0xc] sm:$0xe]
        %v5373 = vld [vmem:[%s4230 + $0x18] sm:$0xe]
        %v5374 = vld [vmem:[%s4230 + $0x24] sm:$0xe]
        %v5375 = vld [vmem:[%s4230 + $0x30] sm:$0xe]
        %v5376 = vld [vmem:[%s4230 + $0x3c] sm:$0xe]
        %v5377 = vld [vmem:[%s4230 + $0x48] sm:$0xe]
        %v5378 = vld [vmem:[%s4230 + $0x54] sm:$0xe]
        %v5379 = vld [vmem:[%s4230 + $0x60] sm:$0xe]
        %v5380 = vld [vmem:[%s4230 + $0x6c] sm:$0xe]
        %v5381 = vld [vmem:[%s4230 + $0x78] sm:$0xe]
        %v5382 = vld [vmem:[%s4230 + $0x84] sm:$0xe]
        %v5383 = vld [vmem:[%s4230 + $0x90] sm:$0xe]
        %v5384 = vld [vmem:[%s4230 + $0x9c] sm:$0xe]
        %v5385 = vld [vmem:[%s4230 + $0xa8] sm:$0xe]
        %v5386 = vld [vmem:[%s4230 + $0xb4] sm:$0xe]
        %v5435 = vrot.slane %v5371, 5
        %v5436 = vrot.slane %v5435, 4
        %v5437 = vrot.slane %v4618, 5
        %v5438 = vsel %vm2157, %v5436, %v5437
        %v5439 = vrot.slane %v5437, 4
        %v5440 = vrot.slane %v4619, 5
        %v5441 = vsel %vm2157, %v5439, %v5440
        %v5442 = vrot.slane %v5372, 5
        %v5443 = vrot.slane %v5442, 4
        %v5444 = vrot.slane %v4621, 5
        %v5445 = vsel %vm2157, %v5443, %v5444
        %v5446 = vrot.slane %v5444, 4
        %v5447 = vrot.slane %v4622, 5
        %v5448 = vsel %vm2157, %v5446, %v5447
        %v5449 = vrot.slane %v5373, 5
        %v5450 = vrot.slane %v5449, 4
        %v5451 = vrot.slane %v4624, 5
        %v5452 = vsel %vm2157, %v5450, %v5451
        %v5453 = vrot.slane %v5451, 4
        %v5454 = vrot.slane %v4625, 5
        %v5455 = vsel %vm2157, %v5453, %v5454
        %v5456 = vrot.slane %v5374, 5
        %v5457 = vrot.slane %v5456, 4
        %v5458 = vrot.slane %v4627, 5
        %v5459 = vsel %vm2157, %v5457, %v5458
        %v5460 = vrot.slane %v5458, 4
        %v5461 = vrot.slane %v4628, 5
        %v5462 = vsel %vm2157, %v5460, %v5461
        %v5463 = vrot.slane %v5375, 5
        %v5464 = vrot.slane %v5463, 4
        %v5465 = vrot.slane %v4630, 5
        %v5466 = vsel %vm2157, %v5464, %v5465
        %v5467 = vrot.slane %v5465, 4
        %v5468 = vrot.slane %v4631, 5
        %v5469 = vsel %vm2157, %v5467, %v5468
        %v5470 = vrot.slane %v5376, 5
        %v5471 = vrot.slane %v5470, 4
        %v5472 = vrot.slane %v4633, 5
        %v5473 = vsel %vm2157, %v5471, %v5472
        %v5474 = vrot.slane %v5472, 4
        %v5475 = vrot.slane %v4634, 5
        %v5476 = vsel %vm2157, %v5474, %v5475
        %v5477 = vrot.slane %v5377, 5
        %v5478 = vrot.slane %v5477, 4
        %v5479 = vrot.slane %v4636, 5
        %v5480 = vsel %vm2157, %v5478, %v5479
        %v5481 = vrot.slane %v5479, 4
        %v5482 = vrot.slane %v4637, 5
        %v5483 = vsel %vm2157, %v5481, %v5482
        %v5484 = vrot.slane %v5378, 5
        %v5485 = vrot.slane %v5484, 4
        %v5486 = vrot.slane %v4639, 5
        %v5487 = vsel %vm2157, %v5485, %v5486
        %v5488 = vrot.slane %v5486, 4
        %v5489 = vrot.slane %v4640, 5
        %v5490 = vsel %vm2157, %v5488, %v5489
        %v5491 = vrot.slane %v5379, 5
        %v5492 = vrot.slane %v5491, 4
        %v5493 = vrot.slane %v4642, 5
        %v5494 = vsel %vm2157, %v5492, %v5493
        %v5495 = vrot.slane %v5493, 4
        %v5496 = vrot.slane %v4643, 5
        %v5497 = vsel %vm2157, %v5495, %v5496
        %v5498 = vrot.slane %v5380, 5
        %v5499 = vrot.slane %v5498, 4
        %v5500 = vrot.slane %v4645, 5
        %v5501 = vsel %vm2157, %v5499, %v5500
        %v5502 = vrot.slane %v5500, 4
        %v5503 = vrot.slane %v4646, 5
        %v5504 = vsel %vm2157, %v5502, %v5503
        %v5505 = vrot.slane %v5381, 5
        %v5506 = vrot.slane %v5505, 4
        %v5507 = vrot.slane %v4648, 5
        %v5508 = vsel %vm2157, %v5506, %v5507
        %v5509 = vrot.slane %v5507, 4
        %v5510 = vrot.slane %v4649, 5
        %v5511 = vsel %vm2157, %v5509, %v5510
        %v5512 = vrot.slane %v5382, 5
        %v5513 = vrot.slane %v5512, 4
        %v5514 = vrot.slane %v4651, 5
        %v5515 = vsel %vm2157, %v5513, %v5514
        %v5516 = vrot.slane %v5514, 4
        %v5517 = vrot.slane %v4652, 5
        %v5518 = vsel %vm2157, %v5516, %v5517
        %v5519 = vrot.slane %v5383, 5
        %v5520 = vrot.slane %v5519, 4
        %v5521 = vrot.slane %v4654, 5
        %v5522 = vsel %vm2157, %v5520, %v5521
        %v5523 = vrot.slane %v5521, 4
        %v5524 = vrot.slane %v4655, 5
        %v5525 = vsel %vm2157, %v5523, %v5524
        %v5526 = vrot.slane %v5384, 5
        %v5527 = vrot.slane %v5526, 4
        %v5528 = vrot.slane %v4657, 5
        %v5529 = vsel %vm2157, %v5527, %v5528
        %v5530 = vrot.slane %v5528, 4
        %v5531 = vrot.slane %v4658, 5
        %v5532 = vsel %vm2157, %v5530, %v5531
        %v5533 = vrot.slane %v5385, 5
        %v5534 = vrot.slane %v5533, 4
        %v5535 = vrot.slane %v4660, 5
        %v5536 = vsel %vm2157, %v5534, %v5535
        %v5537 = vrot.slane %v5535, 4
        %v5538 = vrot.slane %v4661, 5
        %v5539 = vsel %vm2157, %v5537, %v5538
        %v5540 = vrot.slane %v5386, 5
        %v5541 = vrot.slane %v5540, 4
        %v5542 = vrot.slane %v4663, 5
        %v5543 = vsel %vm2157, %v5541, %v5542
        %v5544 = vrot.slane %v5542, 4
        %v5545 = vrot.slane %v4664, 5
        %v5546 = vsel %vm2157, %v5544, %v5545
        %s5547 = scalar_lea.vmem [#allocation4], 512
        %v5548 = vld [vmem:[%s5547] sm:$0xf]
        %v5549 = vld [vmem:[%s5547 + $0x4] sm:$0xf]
        %v5550 = vld [vmem:[%s5547 + $0x8] sm:$0xf]
        %v5551 = vld [vmem:[%s5547 + $0xc] sm:$0xf]
        %v5552 = vld [vmem:[%s5547 + $0x10] sm:$0xf]
        %v5553 = vld [vmem:[%s5547 + $0x14] sm:$0xf]
        %v5554 = vld [vmem:[%s5547 + $0x18] sm:$0xf]
        %v5555 = vld [vmem:[%s5547 + $0x1c] sm:$0xf]
        %v5556 = vld [vmem:[%s5547 + $0x20] sm:$0xf]
        %v5557 = vld [vmem:[%s5547 + $0x24] sm:$0xf]
        %v5558 = vld [vmem:[%s5547 + $0x28] sm:$0xf]
        %v5559 = vld [vmem:[%s5547 + $0x2c] sm:$0xf]
        %v5560 = vld [vmem:[%s5547 + $0x30] sm:$0xf]
        %v5561 = vld [vmem:[%s5547 + $0x34] sm:$0xf]
        %v5562 = vld [vmem:[%s5547 + $0x38] sm:$0xf]
        %v5563 = vld [vmem:[%s5547 + $0x3c] sm:$0xf]
        %v5564 = vunpack.c.l.b16 %v5438
        %v5565 = vunpack.c.l.b16 %v5441
        %v5566 = vunpack.c.l.b16 %v5445
        %v5567 = vunpack.c.l.b16 %v5448
        %v5568 = vunpack.c.l.b16 %v5452
        %v5569 = vunpack.c.l.b16 %v5455
        %v5570 = vunpack.c.l.b16 %v5459
        %v5571 = vunpack.c.l.b16 %v5462
        %v5572 = vunpack.c.l.b16 %v5466
        %v5573 = vunpack.c.l.b16 %v5469
        %v5574 = vunpack.c.l.b16 %v5473
        %v5575 = vunpack.c.l.b16 %v5476
        %v5576 = vunpack.c.l.b16 %v5480
        %v5577 = vunpack.c.l.b16 %v5483
        %v5578 = vunpack.c.l.b16 %v5487
        %v5579 = vunpack.c.l.b16 %v5490
        %v5580 = vunpack.c.l.b16 %v5494
        %v5581 = vunpack.c.l.b16 %v5497
        %v5582 = vunpack.c.l.b16 %v5501
        %v5583 = vunpack.c.l.b16 %v5504
        %v5584 = vunpack.c.l.b16 %v5508
        %v5585 = vunpack.c.l.b16 %v5511
        %v5586 = vunpack.c.l.b16 %v5515
        %v5587 = vunpack.c.l.b16 %v5518
        %v5588 = vunpack.c.l.b16 %v5522
        %v5589 = vunpack.c.l.b16 %v5525
        %v5590 = vunpack.c.l.b16 %v5529
        %v5591 = vunpack.c.l.b16 %v5532
        %v5592 = vunpack.c.l.b16 %v5536
        %v5593 = vunpack.c.l.b16 %v5539
        %v5594 = vunpack.c.l.b16 %v5543
        %v5595 = vunpack.c.l.b16 %v5546
        %v5596 = vpack.c.b16 %v5565, %v5564
        %v5597 = vpack.c.b16 %v5567, %v5566
        %v5598 = vpack.c.b16 %v5569, %v5568
        %v5599 = vpack.c.b16 %v5571, %v5570
        %v5600 = vpack.c.b16 %v5573, %v5572
        %v5601 = vpack.c.b16 %v5575, %v5574
        %v5602 = vpack.c.b16 %v5577, %v5576
        %v5603 = vpack.c.b16 %v5579, %v5578
        %v5604 = vpack.c.b16 %v5581, %v5580
        %v5605 = vpack.c.b16 %v5583, %v5582
        %v5606 = vpack.c.b16 %v5585, %v5584
        %v5607 = vpack.c.b16 %v5587, %v5586
        %v5608 = vpack.c.b16 %v5589, %v5588
        %v5609 = vpack.c.b16 %v5591, %v5590
        %v5610 = vpack.c.b16 %v5593, %v5592
        %v5611 = vpack.c.b16 %v5595, %v5594
        %v5644 = vunpack.c.l.b16 %v5548
        %v5645 = vunpack.c.l.b16 %v5549
        %v5646 = vunpack.c.l.b16 %v5550
        %v5647 = vunpack.c.l.b16 %v5551
        %v5648 = vunpack.c.l.b16 %v5552
        %v5649 = vunpack.c.l.b16 %v5553
        %v5650 = vunpack.c.l.b16 %v5554
        %v5651 = vunpack.c.l.b16 %v5555
        %v5652 = vunpack.c.l.b16 %v5556
        %v5653 = vunpack.c.l.b16 %v5557
        %v5654 = vunpack.c.l.b16 %v5558
        %v5655 = vunpack.c.l.b16 %v5559
        %v5656 = vunpack.c.l.b16 %v5560
        %v5657 = vunpack.c.l.b16 %v5561
        %v5658 = vunpack.c.l.b16 %v5562
        %v5659 = vunpack.c.l.b16 %v5563
        %v5660 = vpack.c.b16 %v5645, %v5644
        %v5661 = vpack.c.b16 %v5647, %v5646
        %v5662 = vpack.c.b16 %v5649, %v5648
        %v5663 = vpack.c.b16 %v5651, %v5650
        %v5664 = vpack.c.b16 %v5653, %v5652
        %v5665 = vpack.c.b16 %v5655, %v5654
        %v5666 = vpack.c.b16 %v5657, %v5656
        %v5667 = vpack.c.b16 %v5659, %v5658
        %5676 = vmatprep.subr.bf16.mxu0 0
        %5677 = vmatpush1.bf16.msra.mxu0 %v5667
        %5678 = vmatprep.subr.bf16.mxu0 0
        %5679 = vmatpush1.bf16.msra.mxu0 %v5666
        %5680 = vmatprep.subr.bf16.mxu0 0
        %5681 = vmatpush1.bf16.msra.mxu0 %v5665
        %5682 = vmatprep.subr.bf16.mxu0 0
        %5683 = vmatpush1.bf16.msra.mxu0 %v5664
        %5684 = vmatprep.subr.bf16.mxu0 0
        %5685 = vmatpush1.bf16.msra.mxu0 %v5663
        %5686 = vmatprep.subr.bf16.mxu0 0
        %5687 = vmatpush1.bf16.msra.mxu0 %v5662
        %5688 = vmatprep.subr.bf16.mxu0 0
        %5689 = vmatpush1.bf16.msra.mxu0 %v5661
        %5690 = vmatprep.subr.bf16.mxu0 0
        %5691 = vmatpush1.bf16.msra.mxu0 %v5660
        %5692 = vmatprep.subr.bf16.mxu0 0
        %5693 = vmatpush2.bf16.msra.mxu0 0
        %5694 = vmatprep.subr.bf16.mxu0 0
        %5695 = vmatpush2.bf16.msra.mxu0 0
        %5696 = vmatprep.subr.bf16.mxu0 0
        %5697 = vmatpush2.bf16.msra.mxu0 0
        %5698 = vmatprep.subr.bf16.mxu0 0
        %5699 = vmatpush2.bf16.msra.mxu0 0
        %5700 = vmatprep.subr.bf16.mxu0 0
        %5701 = vmatpush2.bf16.msra.mxu0 0
        %5702 = vmatprep.subr.bf16.mxu0 0
        %5703 = vmatpush2.bf16.msra.mxu0 0
        %5704 = vmatprep.subr.bf16.mxu0 0
        %5705 = vmatpush2.bf16.msra.mxu0 0
        %5706 = vmatprep.subr.bf16.mxu0 0
        %5707 = vmatpush2.bf16.msra.mxu0 0
        %5708 = vmatprep.mubr.bf16.mxu0 0
        %5709 = vmatmul.mubr.bf16.gmra.mxu0 %v5596
        %v5710 = vpop.f32.mrf.mxu0
        %v5711 = vadd.f32 0.0, %v5710
        %v5712 = vpop.f32.mrf.mxu0
        %v5713 = vpop.f32.mrf.mxu0
        %v5714 = vadd.f32 0.0, %v5713
        %v5715 = vpop.f32.mrf.mxu0
        %5716 = vmatprep.mubr.bf16.mxu0 0
        %5717 = vmatmul.mubr.bf16.gmra.mxu0 %v5597
        %v5718 = vpop.f32.mrf.mxu0
        %v5719 = vadd.f32 0.0, %v5718
        %v5720 = vpop.f32.mrf.mxu0
        %v5721 = vpop.f32.mrf.mxu0
        %v5722 = vadd.f32 0.0, %v5721
        %v5723 = vpop.f32.mrf.mxu0
        %5724 = vmatprep.mubr.bf16.mxu0 0
        %5725 = vmatmul.mubr.bf16.gmra.mxu0 %v5598
        %v5726 = vpop.f32.mrf.mxu0
        %v5727 = vadd.f32 0.0, %v5726
        %v5728 = vpop.f32.mrf.mxu0
        %v5729 = vpop.f32.mrf.mxu0
        %v5730 = vadd.f32 0.0, %v5729
        %v5731 = vpop.f32.mrf.mxu0
        %5732 = vmatprep.mubr.bf16.mxu0 0
        %5733 = vmatmul.mubr.bf16.gmra.mxu0 %v5599
        %v5734 = vpop.f32.mrf.mxu0
        %v5735 = vadd.f32 0.0, %v5734
        %v5736 = vpop.f32.mrf.mxu0
        %v5737 = vpop.f32.mrf.mxu0
        %v5738 = vadd.f32 0.0, %v5737
        %v5739 = vpop.f32.mrf.mxu0
        %5740 = vmatprep.mubr.bf16.mxu0 0
        %5741 = vmatmul.mubr.bf16.gmra.mxu0 %v5600
        %v5742 = vpop.f32.mrf.mxu0
        %v5743 = vadd.f32 0.0, %v5742
        %v5744 = vpop.f32.mrf.mxu0
        %v5745 = vpop.f32.mrf.mxu0
        %v5746 = vadd.f32 0.0, %v5745
        %v5747 = vpop.f32.mrf.mxu0
        %5748 = vmatprep.mubr.bf16.mxu0 0
        %5749 = vmatmul.mubr.bf16.gmra.mxu0 %v5601
        %v5750 = vpop.f32.mrf.mxu0
        %v5751 = vadd.f32 0.0, %v5750
        %v5752 = vpop.f32.mrf.mxu0
        %v5753 = vpop.f32.mrf.mxu0
        %v5754 = vadd.f32 0.0, %v5753
        %v5755 = vpop.f32.mrf.mxu0
        %5756 = vmatprep.mubr.bf16.mxu0 0
        %5757 = vmatmul.mubr.bf16.gmra.mxu0 %v5602
        %v5758 = vpop.f32.mrf.mxu0
        %v5759 = vadd.f32 0.0, %v5758
        %v5760 = vpop.f32.mrf.mxu0
        %v5761 = vpop.f32.mrf.mxu0
        %v5762 = vadd.f32 0.0, %v5761
        %v5763 = vpop.f32.mrf.mxu0
        %5764 = vmatprep.mubr.bf16.mxu0 0
        %5765 = vmatmul.mubr.bf16.gmra.mxu0 %v5603
        %v5766 = vpop.f32.mrf.mxu0
        %v5767 = vadd.f32 0.0, %v5766
        %v5768 = vpop.f32.mrf.mxu0
        %v5769 = vpop.f32.mrf.mxu0
        %v5770 = vadd.f32 0.0, %v5769
        %v5771 = vpop.f32.mrf.mxu0
        %5772 = vmatprep.mubr.bf16.mxu0 0
        %5773 = vmatmul.mubr.bf16.gmra.mxu0 %v5604
        %v5774 = vpop.f32.mrf.mxu0
        %v5775 = vadd.f32 0.0, %v5774
        %v5776 = vpop.f32.mrf.mxu0
        %v5777 = vpop.f32.mrf.mxu0
        %v5778 = vadd.f32 0.0, %v5777
        %v5779 = vpop.f32.mrf.mxu0
        %5780 = vmatprep.mubr.bf16.mxu0 0
        %5781 = vmatmul.mubr.bf16.gmra.mxu0 %v5605
        %v5782 = vpop.f32.mrf.mxu0
        %v5783 = vadd.f32 0.0, %v5782
        %v5784 = vpop.f32.mrf.mxu0
        %v5785 = vpop.f32.mrf.mxu0
        %v5786 = vadd.f32 0.0, %v5785
        %v5787 = vpop.f32.mrf.mxu0
        %5788 = vmatprep.mubr.bf16.mxu0 0
        %5789 = vmatmul.mubr.bf16.gmra.mxu0 %v5606
        %v5790 = vpop.f32.mrf.mxu0
        %v5791 = vadd.f32 0.0, %v5790
        %v5792 = vpop.f32.mrf.mxu0
        %v5793 = vpop.f32.mrf.mxu0
        %v5794 = vadd.f32 0.0, %v5793
        %v5795 = vpop.f32.mrf.mxu0
        %5796 = vmatprep.mubr.bf16.mxu0 0
        %5797 = vmatmul.mubr.bf16.gmra.mxu0 %v5607
        %v5798 = vpop.f32.mrf.mxu0
        %v5799 = vadd.f32 0.0, %v5798
        %v5800 = vpop.f32.mrf.mxu0
        %v5801 = vpop.f32.mrf.mxu0
        %v5802 = vadd.f32 0.0, %v5801
        %v5803 = vpop.f32.mrf.mxu0
        %5804 = vmatprep.mubr.bf16.mxu0 0
        %5805 = vmatmul.mubr.bf16.gmra.mxu0 %v5608
        %v5806 = vpop.f32.mrf.mxu0
        %v5807 = vadd.f32 0.0, %v5806
        %v5808 = vpop.f32.mrf.mxu0
        %v5809 = vpop.f32.mrf.mxu0
        %v5810 = vadd.f32 0.0, %v5809
        %v5811 = vpop.f32.mrf.mxu0
        %5812 = vmatprep.mubr.bf16.mxu0 0
        %5813 = vmatmul.mubr.bf16.gmra.mxu0 %v5609
        %v5814 = vpop.f32.mrf.mxu0
        %v5815 = vadd.f32 0.0, %v5814
        %v5816 = vpop.f32.mrf.mxu0
        %v5817 = vpop.f32.mrf.mxu0
        %v5818 = vadd.f32 0.0, %v5817
        %v5819 = vpop.f32.mrf.mxu0
        %5820 = vmatprep.mubr.bf16.mxu0 0
        %5821 = vmatmul.mubr.bf16.gmra.mxu0 %v5610
        %v5822 = vpop.f32.mrf.mxu0
        %v5823 = vadd.f32 0.0, %v5822
        %v5824 = vpop.f32.mrf.mxu0
        %v5825 = vpop.f32.mrf.mxu0
        %v5826 = vadd.f32 0.0, %v5825
        %v5827 = vpop.f32.mrf.mxu0
        %5828 = vmatprep.mubr.bf16.mxu0 0
        %5829 = vmatmul.mubr.bf16.gmra.mxu0 %v5611
        %v5830 = vpop.f32.mrf.mxu0
        %v5831 = vadd.f32 0.0, %v5830
        %v5832 = vpop.f32.mrf.mxu0
        %v5833 = vpop.f32.mrf.mxu0
        %v5834 = vadd.f32 0.0, %v5833
        %v5835 = vpop.f32.mrf.mxu0
        %5836 = vdwg.mxu0
        %v5837 = vadd.f32 %v5339, %v5711
        %v5838 = vadd.f32 %v5340, %v5714
        %v5839 = vadd.f32 %v5341, %v5719
        %v5840 = vadd.f32 %v5342, %v5722
        %v5841 = vadd.f32 %v5343, %v5727
        %v5842 = vadd.f32 %v5344, %v5730
        %v5843 = vadd.f32 %v5345, %v5735
        %v5844 = vadd.f32 %v5346, %v5738
        %v5845 = vadd.f32 %v5347, %v5743
        %v5846 = vadd.f32 %v5348, %v5746
        %v5847 = vadd.f32 %v5349, %v5751
        %v5848 = vadd.f32 %v5350, %v5754
        %v5849 = vadd.f32 %v5351, %v5759
        %v5850 = vadd.f32 %v5352, %v5762
        %v5851 = vadd.f32 %v5353, %v5767
        %v5852 = vadd.f32 %v5354, %v5770
        %v5853 = vadd.f32 %v5355, %v5775
        %v5854 = vadd.f32 %v5356, %v5778
        %v5855 = vadd.f32 %v5357, %v5783
        %v5856 = vadd.f32 %v5358, %v5786
        %v5857 = vadd.f32 %v5359, %v5791
        %v5858 = vadd.f32 %v5360, %v5794
        %v5859 = vadd.f32 %v5361, %v5799
        %v5860 = vadd.f32 %v5362, %v5802
        %v5861 = vadd.f32 %v5363, %v5807
        %v5862 = vadd.f32 %v5364, %v5810
        %v5863 = vadd.f32 %v5365, %v5815
        %v5864 = vadd.f32 %v5366, %v5818
        %v5865 = vadd.f32 %v5367, %v5823
        %v5866 = vadd.f32 %v5368, %v5826
        %v5867 = vadd.f32 %v5369, %v5831
        %v5868 = vadd.f32 %v5370, %v5834
        %v5869 = vld [vmem:[%s2] sm:$0x1]
        %v5871 = vlaneseq
        %v5872 = vshrl.u32 %v5871, 7
        %v5873 = vsub.s32 0, %v5872
        %v5874 = vrot.slane %v5869, %v5873
        %v5876 = vadd.f32 %v5837, %v5874
        %v5877 = vadd.f32 %v5838, %v5874
        %v5878 = vadd.f32 %v5839, %v5874
        %v5879 = vadd.f32 %v5840, %v5874
        %v5880 = vadd.f32 %v5841, %v5874
        %v5881 = vadd.f32 %v5842, %v5874
        %v5882 = vadd.f32 %v5843, %v5874
        %v5883 = vadd.f32 %v5844, %v5874
        %v5884 = vadd.f32 %v5845, %v5874
        %v5885 = vadd.f32 %v5846, %v5874
        %v5886 = vadd.f32 %v5847, %v5874
        %v5887 = vadd.f32 %v5848, %v5874
        %v5888 = vadd.f32 %v5849, %v5874
        %v5889 = vadd.f32 %v5850, %v5874
        %v5890 = vadd.f32 %v5851, %v5874
        %v5891 = vadd.f32 %v5852, %v5874
        %v5892 = vadd.f32 %v5853, %v5874
        %v5893 = vadd.f32 %v5854, %v5874
        %v5894 = vadd.f32 %v5855, %v5874
        %v5895 = vadd.f32 %v5856, %v5874
        %v5896 = vadd.f32 %v5857, %v5874
        %v5897 = vadd.f32 %v5858, %v5874
        %v5898 = vadd.f32 %v5859, %v5874
        %v5899 = vadd.f32 %v5860, %v5874
        %v5900 = vadd.f32 %v5861, %v5874
        %v5901 = vadd.f32 %v5862, %v5874
        %v5902 = vadd.f32 %v5863, %v5874
        %v5903 = vadd.f32 %v5864, %v5874
        %v5904 = vadd.f32 %v5865, %v5874
        %v5905 = vadd.f32 %v5866, %v5874
        %v5906 = vadd.f32 %v5867, %v5874
        %v5907 = vadd.f32 %v5868, %v5874
        %v5908 = vmax.f32 %v5876, 0.0
        %v5909 = vmax.f32 %v5877, 0.0
        %v5910 = vmax.f32 %v5878, 0.0
        %v5911 = vmax.f32 %v5879, 0.0
        %v5912 = vmax.f32 %v5880, 0.0
        %v5913 = vmax.f32 %v5881, 0.0
        %v5914 = vmax.f32 %v5882, 0.0
        %v5915 = vmax.f32 %v5883, 0.0
        %v5916 = vmax.f32 %v5884, 0.0
        %v5917 = vmax.f32 %v5885, 0.0
        %v5918 = vmax.f32 %v5886, 0.0
        %v5919 = vmax.f32 %v5887, 0.0
        %v5920 = vmax.f32 %v5888, 0.0
        %v5921 = vmax.f32 %v5889, 0.0
        %v5922 = vmax.f32 %v5890, 0.0
        %v5923 = vmax.f32 %v5891, 0.0
        %v5924 = vmax.f32 %v5892, 0.0
        %v5925 = vmax.f32 %v5893, 0.0
        %v5926 = vmax.f32 %v5894, 0.0
        %v5927 = vmax.f32 %v5895, 0.0
        %v5928 = vmax.f32 %v5896, 0.0
        %v5929 = vmax.f32 %v5897, 0.0
        %v5930 = vmax.f32 %v5898, 0.0
        %v5931 = vmax.f32 %v5899, 0.0
        %v5932 = vmax.f32 %v5900, 0.0
        %v5933 = vmax.f32 %v5901, 0.0
        %v5934 = vmax.f32 %v5902, 0.0
        %v5935 = vmax.f32 %v5903, 0.0
        %v5936 = vmax.f32 %v5904, 0.0
        %v5937 = vmax.f32 %v5905, 0.0
        %v5938 = vmax.f32 %v5906, 0.0
        %v5939 = vmax.f32 %v5907, 0.0
        %5940 = vst [vmem:[#allocation3] sm:$0xf] 0
        %5941 = vst [vmem:[#allocation3 + $0x4] sm:$0xf] 0
        %5942 = vst [vmem:[#allocation3 + $0x8] sm:$0x1] 0
        %s5943 = scalar_lea.vmem [#allocation3], 204
        %5944 = vst [vmem:[%s5943] sm:$0xf] 0
        %5945 = vst [vmem:[%s5943 + $0x4] sm:$0xf] 0
        %5946 = vst [vmem:[%s5943 + $0x8] sm:$0x1] 0
        %v5947 = vld [vmem:[#allocation3] sm:$0x1]
        %v5948 = vsel %vm321, 0, %v5947
        %5949 = vst [vmem:[#allocation3] sm:$0x1] %v5948
        %v5950 = vld [vmem:[#allocation3 + $0xc] sm:$0x1]
        %v5951 = vsel %vm321, 0, %v5950
        %5952 = vst [vmem:[#allocation3 + $0xc] sm:$0x1] %v5951
        %v5953 = vld [vmem:[#allocation3 + $0x18] sm:$0x1]
        %v5954 = vsel %vm321, 0, %v5953
        %5955 = vst [vmem:[#allocation3 + $0x18] sm:$0x1] %v5954
        %v5956 = vld [vmem:[#allocation3 + $0x24] sm:$0x1]
        %v5957 = vsel %vm321, 0, %v5956
        %5958 = vst [vmem:[#allocation3 + $0x24] sm:$0x1] %v5957
        %v5959 = vld [vmem:[#allocation3 + $0x30] sm:$0x1]
        %v5960 = vsel %vm321, 0, %v5959
        %5961 = vst [vmem:[#allocation3 + $0x30] sm:$0x1] %v5960
        %v5962 = vld [vmem:[#allocation3 + $0x3c] sm:$0x1]
        %v5963 = vsel %vm321, 0, %v5962
        %5964 = vst [vmem:[#allocation3 + $0x3c] sm:$0x1] %v5963
        %v5965 = vld [vmem:[#allocation3 + $0x48] sm:$0x1]
        %v5966 = vsel %vm321, 0, %v5965
        %5967 = vst [vmem:[#allocation3 + $0x48] sm:$0x1] %v5966
        %v5968 = vld [vmem:[#allocation3 + $0x54] sm:$0x1]
        %v5969 = vsel %vm321, 0, %v5968
        %5970 = vst [vmem:[#allocation3 + $0x54] sm:$0x1] %v5969
        %v5971 = vld [vmem:[#allocation3 + $0x60] sm:$0x1]
        %v5972 = vsel %vm321, 0, %v5971
        %5973 = vst [vmem:[#allocation3 + $0x60] sm:$0x1] %v5972
        %v5974 = vld [vmem:[#allocation3 + $0x6c] sm:$0x1]
        %v5975 = vsel %vm321, 0, %v5974
        %5976 = vst [vmem:[#allocation3 + $0x6c] sm:$0x1] %v5975
        %v5977 = vld [vmem:[#allocation3 + $0x78] sm:$0x1]
        %v5978 = vsel %vm321, 0, %v5977
        %5979 = vst [vmem:[#allocation3 + $0x78] sm:$0x1] %v5978
        %v5980 = vld [vmem:[#allocation3 + $0x84] sm:$0x1]
        %v5981 = vsel %vm321, 0, %v5980
        %5982 = vst [vmem:[#allocation3 + $0x84] sm:$0x1] %v5981
        %v5983 = vld [vmem:[#allocation3 + $0x90] sm:$0x1]
        %v5984 = vsel %vm321, 0, %v5983
        %5985 = vst [vmem:[#allocation3 + $0x90] sm:$0x1] %v5984
        %v5986 = vld [vmem:[#allocation3 + $0x9c] sm:$0x1]
        %v5987 = vsel %vm321, 0, %v5986
        %5988 = vst [vmem:[#allocation3 + $0x9c] sm:$0x1] %v5987
        %v5989 = vld [vmem:[#allocation3 + $0xa8] sm:$0x1]
        %v5990 = vsel %vm321, 0, %v5989
        %5991 = vst [vmem:[#allocation3 + $0xa8] sm:$0x1] %v5990
        %v5992 = vld [vmem:[#allocation3 + $0xb4] sm:$0x1]
        %v5993 = vsel %vm321, 0, %v5992
        %5994 = vst [vmem:[#allocation3 + $0xb4] sm:$0x1] %v5993
        %v5995 = vld [vmem:[#allocation3 + $0xc0] sm:$0x1]
        %v5996 = vsel %vm321, 0, %v5995
        %5997 = vst [vmem:[#allocation3 + $0xc0] sm:$0x1] %v5996
        %v5998 = vld [vmem:[#allocation3 + $0xcc] sm:$0x1]
        %v5999 = vsel %vm321, 0, %v5998
        %6000 = vst [vmem:[#allocation3 + $0xcc] sm:$0x1] %v5999
        %v6001 = vld [vmem:[#allocation3 + $0x8] sm:$0x1]
        %v6002 = vsel %vm377, 0, %v6001
        %6003 = vst [vmem:[#allocation3 + $0x8] sm:$0x1] %v6002
        %v6004 = vld [vmem:[#allocation3 + $0x14] sm:$0x1]
        %v6005 = vsel %vm377, 0, %v6004
        %6006 = vst [vmem:[#allocation3 + $0x14] sm:$0x1] %v6005
        %v6007 = vld [vmem:[#allocation3 + $0x20] sm:$0x1]
        %v6008 = vsel %vm377, 0, %v6007
        %6009 = vst [vmem:[#allocation3 + $0x20] sm:$0x1] %v6008
        %v6010 = vld [vmem:[#allocation3 + $0x2c] sm:$0x1]
        %v6011 = vsel %vm377, 0, %v6010
        %6012 = vst [vmem:[#allocation3 + $0x2c] sm:$0x1] %v6011
        %v6013 = vld [vmem:[#allocation3 + $0x38] sm:$0x1]
        %v6014 = vsel %vm377, 0, %v6013
        %6015 = vst [vmem:[#allocation3 + $0x38] sm:$0x1] %v6014
        %v6016 = vld [vmem:[#allocation3 + $0x44] sm:$0x1]
        %v6017 = vsel %vm377, 0, %v6016
        %6018 = vst [vmem:[#allocation3 + $0x44] sm:$0x1] %v6017
        %v6019 = vld [vmem:[#allocation3 + $0x50] sm:$0x1]
        %v6020 = vsel %vm377, 0, %v6019
        %6021 = vst [vmem:[#allocation3 + $0x50] sm:$0x1] %v6020
        %v6022 = vld [vmem:[#allocation3 + $0x5c] sm:$0x1]
        %v6023 = vsel %vm377, 0, %v6022
        %6024 = vst [vmem:[#allocation3 + $0x5c] sm:$0x1] %v6023
        %v6025 = vld [vmem:[#allocation3 + $0x68] sm:$0x1]
        %v6026 = vsel %vm377, 0, %v6025
        %6027 = vst [vmem:[#allocation3 + $0x68] sm:$0x1] %v6026
        %v6028 = vld [vmem:[#allocation3 + $0x74] sm:$0x1]
        %v6029 = vsel %vm377, 0, %v6028
        %6030 = vst [vmem:[#allocation3 + $0x74] sm:$0x1] %v6029
        %v6031 = vld [vmem:[#allocation3 + $0x80] sm:$0x1]
        %v6032 = vsel %vm377, 0, %v6031
        %6033 = vst [vmem:[#allocation3 + $0x80] sm:$0x1] %v6032
        %v6034 = vld [vmem:[#allocation3 + $0x8c] sm:$0x1]
        %v6035 = vsel %vm377, 0, %v6034
        %6036 = vst [vmem:[#allocation3 + $0x8c] sm:$0x1] %v6035
        %v6037 = vld [vmem:[#allocation3 + $0x98] sm:$0x1]
        %v6038 = vsel %vm377, 0, %v6037
        %6039 = vst [vmem:[#allocation3 + $0x98] sm:$0x1] %v6038
        %v6040 = vld [vmem:[#allocation3 + $0xa4] sm:$0x1]
        %v6041 = vsel %vm377, 0, %v6040
        %6042 = vst [vmem:[#allocation3 + $0xa4] sm:$0x1] %v6041
        %v6043 = vld [vmem:[#allocation3 + $0xb0] sm:$0x1]
        %v6044 = vsel %vm377, 0, %v6043
        %6045 = vst [vmem:[#allocation3 + $0xb0] sm:$0x1] %v6044
        %v6046 = vld [vmem:[#allocation3 + $0xbc] sm:$0x1]
        %v6047 = vsel %vm377, 0, %v6046
        %6048 = vst [vmem:[#allocation3 + $0xbc] sm:$0x1] %v6047
        %v6049 = vld [vmem:[#allocation3 + $0xc8] sm:$0x1]
        %v6050 = vsel %vm377, 0, %v6049
        %6051 = vst [vmem:[#allocation3 + $0xc8] sm:$0x1] %v6050
        %v6052 = vld [vmem:[#allocation3 + $0xd4] sm:$0x1]
        %v6053 = vsel %vm377, 0, %v6052
        %6054 = vst [vmem:[#allocation3 + $0xd4] sm:$0x1] %v6053
        %v6055 = vpack.c.bf16 %v5909, %v5908
        %v6056 = vpack.c.bf16 %v5911, %v5910
        %v6057 = vpack.c.bf16 %v5913, %v5912
        %v6058 = vpack.c.bf16 %v5915, %v5914
        %v6059 = vpack.c.bf16 %v5917, %v5916
        %v6060 = vpack.c.bf16 %v5919, %v5918
        %v6061 = vpack.c.bf16 %v5921, %v5920
        %v6062 = vpack.c.bf16 %v5923, %v5922
        %v6063 = vpack.c.bf16 %v5925, %v5924
        %v6064 = vpack.c.bf16 %v5927, %v5926
        %v6065 = vpack.c.bf16 %v5929, %v5928
        %v6066 = vpack.c.bf16 %v5931, %v5930
        %v6067 = vpack.c.bf16 %v5933, %v5932
        %v6068 = vpack.c.bf16 %v5935, %v5934
        %v6069 = vpack.c.bf16 %v5937, %v5936
        %v6070 = vpack.c.bf16 %v5939, %v5938
        %v6087 = vunpack.c.l.b16 %v6055
        %v6088 = vunpack.c.h.b16 %v6055
        %v6089 = vunpack.c.l.b16 %v6056
        %v6090 = vunpack.c.h.b16 %v6056
        %v6091 = vunpack.c.l.b16 %v6057
        %v6092 = vunpack.c.h.b16 %v6057
        %v6093 = vunpack.c.l.b16 %v6058
        %v6094 = vunpack.c.h.b16 %v6058
        %v6095 = vunpack.c.l.b16 %v6059
        %v6096 = vunpack.c.h.b16 %v6059
        %v6097 = vunpack.c.l.b16 %v6060
        %v6098 = vunpack.c.h.b16 %v6060
        %v6099 = vunpack.c.l.b16 %v6061
        %v6100 = vunpack.c.h.b16 %v6061
        %v6101 = vunpack.c.l.b16 %v6062
        %v6102 = vunpack.c.h.b16 %v6062
        %v6103 = vunpack.c.l.b16 %v6063
        %v6104 = vunpack.c.h.b16 %v6063
        %v6105 = vunpack.c.l.b16 %v6064
        %v6106 = vunpack.c.h.b16 %v6064
        %v6107 = vunpack.c.l.b16 %v6065
        %v6108 = vunpack.c.h.b16 %v6065
        %v6109 = vunpack.c.l.b16 %v6066
        %v6110 = vunpack.c.h.b16 %v6066
        %v6111 = vunpack.c.l.b16 %v6067
        %v6112 = vunpack.c.h.b16 %v6067
        %v6113 = vunpack.c.l.b16 %v6068
        %v6114 = vunpack.c.h.b16 %v6068
        %v6115 = vunpack.c.l.b16 %v6069
        %v6116 = vunpack.c.h.b16 %v6069
        %v6117 = vunpack.c.l.b16 %v6070
        %v6118 = vunpack.c.h.b16 %v6070
        %v6119 = vpack.c.b16 %v6087, %v6087
        %v6120 = vpack.c.b16 %v6088, %v6088
        %v6121 = vpack.c.b16 %v6089, %v6089
        %v6122 = vpack.c.b16 %v6090, %v6090
        %v6123 = vpack.c.b16 %v6091, %v6091
        %v6124 = vpack.c.b16 %v6092, %v6092
        %v6125 = vpack.c.b16 %v6093, %v6093
        %v6126 = vpack.c.b16 %v6094, %v6094
        %v6127 = vpack.c.b16 %v6095, %v6095
        %v6128 = vpack.c.b16 %v6096, %v6096
        %v6129 = vpack.c.b16 %v6097, %v6097
        %v6130 = vpack.c.b16 %v6098, %v6098
        %v6131 = vpack.c.b16 %v6099, %v6099
        %v6132 = vpack.c.b16 %v6100, %v6100
        %v6133 = vpack.c.b16 %v6101, %v6101
        %v6134 = vpack.c.b16 %v6102, %v6102
        %v6135 = vpack.c.b16 %v6103, %v6103
        %v6136 = vpack.c.b16 %v6104, %v6104
        %v6137 = vpack.c.b16 %v6105, %v6105
        %v6138 = vpack.c.b16 %v6106, %v6106
        %v6139 = vpack.c.b16 %v6107, %v6107
        %v6140 = vpack.c.b16 %v6108, %v6108
        %v6141 = vpack.c.b16 %v6109, %v6109
        %v6142 = vpack.c.b16 %v6110, %v6110
        %v6143 = vpack.c.b16 %v6111, %v6111
        %v6144 = vpack.c.b16 %v6112, %v6112
        %v6145 = vpack.c.b16 %v6113, %v6113
        %v6146 = vpack.c.b16 %v6114, %v6114
        %v6147 = vpack.c.b16 %v6115, %v6115
        %v6148 = vpack.c.b16 %v6116, %v6116
        %v6149 = vpack.c.b16 %v6117, %v6117
        %v6150 = vpack.c.b16 %v6118, %v6118
        %v6152 = vshrl.u32 %v6119, 16
        %v6154 = vrot.slane %v6152, 7
        %v6155 = vshll.u32 %v6119, 16
        %v6157 = vor.u32 %v6154, %v6155
        %v6158 = vrot.slane %v6154, 4
        %v6160 = vshrl.u32 %v6120, 16
        %v6162 = vrot.slane %v6160, 7
        %v6163 = vshll.u32 %v6120, 16
        %v6165 = vor.u32 %v6162, %v6163
        %v6166 = vsel %vm625, %v6158, %v6165
        %v6167 = vrot.slane %v6162, 4
        %v6169 = vshrl.u32 %v6121, 16
        %v6171 = vrot.slane %v6169, 7
        %v6172 = vshll.u32 %v6121, 16
        %v6174 = vor.u32 %v6171, %v6172
        %v6175 = vrot.slane %v6171, 4
        %v6177 = vshrl.u32 %v6122, 16
        %v6179 = vrot.slane %v6177, 7
        %v6180 = vshll.u32 %v6122, 16
        %v6182 = vor.u32 %v6179, %v6180
        %v6183 = vsel %vm625, %v6175, %v6182
        %v6184 = vrot.slane %v6179, 4
        %v6186 = vshrl.u32 %v6123, 16
        %v6188 = vrot.slane %v6186, 7
        %v6189 = vshll.u32 %v6123, 16
        %v6191 = vor.u32 %v6188, %v6189
        %v6192 = vrot.slane %v6188, 4
        %v6194 = vshrl.u32 %v6124, 16
        %v6196 = vrot.slane %v6194, 7
        %v6197 = vshll.u32 %v6124, 16
        %v6199 = vor.u32 %v6196, %v6197
        %v6200 = vsel %vm625, %v6192, %v6199
        %v6201 = vrot.slane %v6196, 4
        %v6203 = vshrl.u32 %v6125, 16
        %v6205 = vrot.slane %v6203, 7
        %v6206 = vshll.u32 %v6125, 16
        %v6208 = vor.u32 %v6205, %v6206
        %v6209 = vrot.slane %v6205, 4
        %v6211 = vshrl.u32 %v6126, 16
        %v6213 = vrot.slane %v6211, 7
        %v6214 = vshll.u32 %v6126, 16
        %v6216 = vor.u32 %v6213, %v6214
        %v6217 = vsel %vm625, %v6209, %v6216
        %v6218 = vrot.slane %v6213, 4
        %v6220 = vshrl.u32 %v6127, 16
        %v6222 = vrot.slane %v6220, 7
        %v6223 = vshll.u32 %v6127, 16
        %v6225 = vor.u32 %v6222, %v6223
        %v6226 = vrot.slane %v6222, 4
        %v6228 = vshrl.u32 %v6128, 16
        %v6230 = vrot.slane %v6228, 7
        %v6231 = vshll.u32 %v6128, 16
        %v6233 = vor.u32 %v6230, %v6231
        %v6234 = vsel %vm625, %v6226, %v6233
        %v6235 = vrot.slane %v6230, 4
        %v6237 = vshrl.u32 %v6129, 16
        %v6239 = vrot.slane %v6237, 7
        %v6240 = vshll.u32 %v6129, 16
        %v6242 = vor.u32 %v6239, %v6240
        %v6243 = vrot.slane %v6239, 4
        %v6245 = vshrl.u32 %v6130, 16
        %v6247 = vrot.slane %v6245, 7
        %v6248 = vshll.u32 %v6130, 16
        %v6250 = vor.u32 %v6247, %v6248
        %v6251 = vsel %vm625, %v6243, %v6250
        %v6252 = vrot.slane %v6247, 4
        %v6254 = vshrl.u32 %v6131, 16
        %v6256 = vrot.slane %v6254, 7
        %v6257 = vshll.u32 %v6131, 16
        %v6259 = vor.u32 %v6256, %v6257
        %v6260 = vrot.slane %v6256, 4
        %v6262 = vshrl.u32 %v6132, 16
        %v6264 = vrot.slane %v6262, 7
        %v6265 = vshll.u32 %v6132, 16
        %v6267 = vor.u32 %v6264, %v6265
        %v6268 = vsel %vm625, %v6260, %v6267
        %v6269 = vrot.slane %v6264, 4
        %v6271 = vshrl.u32 %v6133, 16
        %v6273 = vrot.slane %v6271, 7
        %v6274 = vshll.u32 %v6133, 16
        %v6276 = vor.u32 %v6273, %v6274
        %v6277 = vrot.slane %v6273, 4
        %v6279 = vshrl.u32 %v6134, 16
        %v6281 = vrot.slane %v6279, 7
        %v6282 = vshll.u32 %v6134, 16
        %v6284 = vor.u32 %v6281, %v6282
        %v6285 = vsel %vm625, %v6277, %v6284
        %v6286 = vrot.slane %v6281, 4
        %v6288 = vshrl.u32 %v6135, 16
        %v6290 = vrot.slane %v6288, 7
        %v6291 = vshll.u32 %v6135, 16
        %v6293 = vor.u32 %v6290, %v6291
        %v6294 = vrot.slane %v6290, 4
        %v6296 = vshrl.u32 %v6136, 16
        %v6298 = vrot.slane %v6296, 7
        %v6299 = vshll.u32 %v6136, 16
        %v6301 = vor.u32 %v6298, %v6299
        %v6302 = vsel %vm625, %v6294, %v6301
        %v6303 = vrot.slane %v6298, 4
        %v6305 = vshrl.u32 %v6137, 16
        %v6307 = vrot.slane %v6305, 7
        %v6308 = vshll.u32 %v6137, 16
        %v6310 = vor.u32 %v6307, %v6308
        %v6311 = vrot.slane %v6307, 4
        %v6313 = vshrl.u32 %v6138, 16
        %v6315 = vrot.slane %v6313, 7
        %v6316 = vshll.u32 %v6138, 16
        %v6318 = vor.u32 %v6315, %v6316
        %v6319 = vsel %vm625, %v6311, %v6318
        %v6320 = vrot.slane %v6315, 4
        %v6322 = vshrl.u32 %v6139, 16
        %v6324 = vrot.slane %v6322, 7
        %v6325 = vshll.u32 %v6139, 16
        %v6327 = vor.u32 %v6324, %v6325
        %v6328 = vrot.slane %v6324, 4
        %v6330 = vshrl.u32 %v6140, 16
        %v6332 = vrot.slane %v6330, 7
        %v6333 = vshll.u32 %v6140, 16
        %v6335 = vor.u32 %v6332, %v6333
        %v6336 = vsel %vm625, %v6328, %v6335
        %v6337 = vrot.slane %v6332, 4
        %v6339 = vshrl.u32 %v6141, 16
        %v6341 = vrot.slane %v6339, 7
        %v6342 = vshll.u32 %v6141, 16
        %v6344 = vor.u32 %v6341, %v6342
        %v6345 = vrot.slane %v6341, 4
        %v6347 = vshrl.u32 %v6142, 16
        %v6349 = vrot.slane %v6347, 7
        %v6350 = vshll.u32 %v6142, 16
        %v6352 = vor.u32 %v6349, %v6350
        %v6353 = vsel %vm625, %v6345, %v6352
        %v6354 = vrot.slane %v6349, 4
        %v6356 = vshrl.u32 %v6143, 16
        %v6358 = vrot.slane %v6356, 7
        %v6359 = vshll.u32 %v6143, 16
        %v6361 = vor.u32 %v6358, %v6359
        %v6362 = vrot.slane %v6358, 4
        %v6364 = vshrl.u32 %v6144, 16
        %v6366 = vrot.slane %v6364, 7
        %v6367 = vshll.u32 %v6144, 16
        %v6369 = vor.u32 %v6366, %v6367
        %v6370 = vsel %vm625, %v6362, %v6369
        %v6371 = vrot.slane %v6366, 4
        %v6373 = vshrl.u32 %v6145, 16
        %v6375 = vrot.slane %v6373, 7
        %v6376 = vshll.u32 %v6145, 16
        %v6378 = vor.u32 %v6375, %v6376
        %v6379 = vrot.slane %v6375, 4
        %v6381 = vshrl.u32 %v6146, 16
        %v6383 = vrot.slane %v6381, 7
        %v6384 = vshll.u32 %v6146, 16
        %v6386 = vor.u32 %v6383, %v6384
        %v6387 = vsel %vm625, %v6379, %v6386
        %v6388 = vrot.slane %v6383, 4
        %v6390 = vshrl.u32 %v6147, 16
        %v6392 = vrot.slane %v6390, 7
        %v6393 = vshll.u32 %v6147, 16
        %v6395 = vor.u32 %v6392, %v6393
        %v6396 = vrot.slane %v6392, 4
        %v6398 = vshrl.u32 %v6148, 16
        %v6400 = vrot.slane %v6398, 7
        %v6401 = vshll.u32 %v6148, 16
        %v6403 = vor.u32 %v6400, %v6401
        %v6404 = vsel %vm625, %v6396, %v6403
        %v6405 = vrot.slane %v6400, 4
        %v6407 = vshrl.u32 %v6149, 16
        %v6409 = vrot.slane %v6407, 7
        %v6410 = vshll.u32 %v6149, 16
        %v6412 = vor.u32 %v6409, %v6410
        %v6413 = vrot.slane %v6409, 4
        %v6415 = vshrl.u32 %v6150, 16
        %v6417 = vrot.slane %v6415, 7
        %v6418 = vshll.u32 %v6150, 16
        %v6420 = vor.u32 %v6417, %v6418
        %v6421 = vsel %vm625, %v6413, %v6420
        %v6422 = vrot.slane %v6417, 4
        %s6471 = scalar_lea.vmem [#allocation3], 12
        %v6472 = vld [vmem:[%s6471] sm:$0xf]
        %v6473 = vsel %vm948, %v6157, %v6472
        %6474 = vst [vmem:[%s6471] sm:$0xf] %v6473
        %6475 = vst [vmem:[%s6471 + $0x4] sm:$0xf] %v6166
        %v6476 = vld [vmem:[%s6471 + $0x8] sm:$0x1]
        %v6477 = vsel %vm321, %v6167, %v6476
        %6478 = vst [vmem:[%s6471 + $0x8] sm:$0x1] %v6477
        %v6479 = vld [vmem:[%s6471 + $0xc] sm:$0xf]
        %v6480 = vsel %vm948, %v6174, %v6479
        %6481 = vst [vmem:[%s6471 + $0xc] sm:$0xf] %v6480
        %6482 = vst [vmem:[%s6471 + $0x10] sm:$0xf] %v6183
        %v6483 = vld [vmem:[%s6471 + $0x14] sm:$0x1]
        %v6484 = vsel %vm321, %v6184, %v6483
        %6485 = vst [vmem:[%s6471 + $0x14] sm:$0x1] %v6484
        %v6486 = vld [vmem:[%s6471 + $0x18] sm:$0xf]
        %v6487 = vsel %vm948, %v6191, %v6486
        %6488 = vst [vmem:[%s6471 + $0x18] sm:$0xf] %v6487
        %6489 = vst [vmem:[%s6471 + $0x1c] sm:$0xf] %v6200
        %v6490 = vld [vmem:[%s6471 + $0x20] sm:$0x1]
        %v6491 = vsel %vm321, %v6201, %v6490
        %6492 = vst [vmem:[%s6471 + $0x20] sm:$0x1] %v6491
        %v6493 = vld [vmem:[%s6471 + $0x24] sm:$0xf]
        %v6494 = vsel %vm948, %v6208, %v6493
        %6495 = vst [vmem:[%s6471 + $0x24] sm:$0xf] %v6494
        %6496 = vst [vmem:[%s6471 + $0x28] sm:$0xf] %v6217
        %v6497 = vld [vmem:[%s6471 + $0x2c] sm:$0x1]
        %v6498 = vsel %vm321, %v6218, %v6497
        %6499 = vst [vmem:[%s6471 + $0x2c] sm:$0x1] %v6498
        %v6500 = vld [vmem:[%s6471 + $0x30] sm:$0xf]
        %v6501 = vsel %vm948, %v6225, %v6500
        %6502 = vst [vmem:[%s6471 + $0x30] sm:$0xf] %v6501
        %6503 = vst [vmem:[%s6471 + $0x34] sm:$0xf] %v6234
        %v6504 = vld [vmem:[%s6471 + $0x38] sm:$0x1]
        %v6505 = vsel %vm321, %v6235, %v6504
        %6506 = vst [vmem:[%s6471 + $0x38] sm:$0x1] %v6505
        %v6507 = vld [vmem:[%s6471 + $0x3c] sm:$0xf]
        %v6508 = vsel %vm948, %v6242, %v6507
        %6509 = vst [vmem:[%s6471 + $0x3c] sm:$0xf] %v6508
        %6510 = vst [vmem:[%s6471 + $0x40] sm:$0xf] %v6251
        %v6511 = vld [vmem:[%s6471 + $0x44] sm:$0x1]
        %v6512 = vsel %vm321, %v6252, %v6511
        %6513 = vst [vmem:[%s6471 + $0x44] sm:$0x1] %v6512
        %v6514 = vld [vmem:[%s6471 + $0x48] sm:$0xf]
        %v6515 = vsel %vm948, %v6259, %v6514
        %6516 = vst [vmem:[%s6471 + $0x48] sm:$0xf] %v6515
        %6517 = vst [vmem:[%s6471 + $0x4c] sm:$0xf] %v6268
        %v6518 = vld [vmem:[%s6471 + $0x50] sm:$0x1]
        %v6519 = vsel %vm321, %v6269, %v6518
        %6520 = vst [vmem:[%s6471 + $0x50] sm:$0x1] %v6519
        %v6521 = vld [vmem:[%s6471 + $0x54] sm:$0xf]
        %v6522 = vsel %vm948, %v6276, %v6521
        %6523 = vst [vmem:[%s6471 + $0x54] sm:$0xf] %v6522
        %6524 = vst [vmem:[%s6471 + $0x58] sm:$0xf] %v6285
        %v6525 = vld [vmem:[%s6471 + $0x5c] sm:$0x1]
        %v6526 = vsel %vm321, %v6286, %v6525
        %6527 = vst [vmem:[%s6471 + $0x5c] sm:$0x1] %v6526
        %v6528 = vld [vmem:[%s6471 + $0x60] sm:$0xf]
        %v6529 = vsel %vm948, %v6293, %v6528
        %6530 = vst [vmem:[%s6471 + $0x60] sm:$0xf] %v6529
        %6531 = vst [vmem:[%s6471 + $0x64] sm:$0xf] %v6302
        %v6532 = vld [vmem:[%s6471 + $0x68] sm:$0x1]
        %v6533 = vsel %vm321, %v6303, %v6532
        %6534 = vst [vmem:[%s6471 + $0x68] sm:$0x1] %v6533
        %v6535 = vld [vmem:[%s6471 + $0x6c] sm:$0xf]
        %v6536 = vsel %vm948, %v6310, %v6535
        %6537 = vst [vmem:[%s6471 + $0x6c] sm:$0xf] %v6536
        %6538 = vst [vmem:[%s6471 + $0x70] sm:$0xf] %v6319
        %v6539 = vld [vmem:[%s6471 + $0x74] sm:$0x1]
        %v6540 = vsel %vm321, %v6320, %v6539
        %6541 = vst [vmem:[%s6471 + $0x74] sm:$0x1] %v6540
        %v6542 = vld [vmem:[%s6471 + $0x78] sm:$0xf]
        %v6543 = vsel %vm948, %v6327, %v6542
        %6544 = vst [vmem:[%s6471 + $0x78] sm:$0xf] %v6543
        %6545 = vst [vmem:[%s6471 + $0x7c] sm:$0xf] %v6336
        %v6546 = vld [vmem:[%s6471 + $0x80] sm:$0x1]
        %v6547 = vsel %vm321, %v6337, %v6546
        %6548 = vst [vmem:[%s6471 + $0x80] sm:$0x1] %v6547
        %v6549 = vld [vmem:[%s6471 + $0x84] sm:$0xf]
        %v6550 = vsel %vm948, %v6344, %v6549
        %6551 = vst [vmem:[%s6471 + $0x84] sm:$0xf] %v6550
        %6552 = vst [vmem:[%s6471 + $0x88] sm:$0xf] %v6353
        %v6553 = vld [vmem:[%s6471 + $0x8c] sm:$0x1]
        %v6554 = vsel %vm321, %v6354, %v6553
        %6555 = vst [vmem:[%s6471 + $0x8c] sm:$0x1] %v6554
        %v6556 = vld [vmem:[%s6471 + $0x90] sm:$0xf]
        %v6557 = vsel %vm948, %v6361, %v6556
        %6558 = vst [vmem:[%s6471 + $0x90] sm:$0xf] %v6557
        %6559 = vst [vmem:[%s6471 + $0x94] sm:$0xf] %v6370
        %v6560 = vld [vmem:[%s6471 + $0x98] sm:$0x1]
        %v6561 = vsel %vm321, %v6371, %v6560
        %6562 = vst [vmem:[%s6471 + $0x98] sm:$0x1] %v6561
        %v6563 = vld [vmem:[%s6471 + $0x9c] sm:$0xf]
        %v6564 = vsel %vm948, %v6378, %v6563
        %6565 = vst [vmem:[%s6471 + $0x9c] sm:$0xf] %v6564
        %6566 = vst [vmem:[%s6471 + $0xa0] sm:$0xf] %v6387
        %v6567 = vld [vmem:[%s6471 + $0xa4] sm:$0x1]
        %v6568 = vsel %vm321, %v6388, %v6567
        %6569 = vst [vmem:[%s6471 + $0xa4] sm:$0x1] %v6568
        %v6570 = vld [vmem:[%s6471 + $0xa8] sm:$0xf]
        %v6571 = vsel %vm948, %v6395, %v6570
        %6572 = vst [vmem:[%s6471 + $0xa8] sm:$0xf] %v6571
        %6573 = vst [vmem:[%s6471 + $0xac] sm:$0xf] %v6404
        %v6574 = vld [vmem:[%s6471 + $0xb0] sm:$0x1]
        %v6575 = vsel %vm321, %v6405, %v6574
        %6576 = vst [vmem:[%s6471 + $0xb0] sm:$0x1] %v6575
        %v6577 = vld [vmem:[%s6471 + $0xb4] sm:$0xf]
        %v6578 = vsel %vm948, %v6412, %v6577
        %6579 = vst [vmem:[%s6471 + $0xb4] sm:$0xf] %v6578
        %6580 = vst [vmem:[%s6471 + $0xb8] sm:$0xf] %v6421
        %v6581 = vld [vmem:[%s6471 + $0xbc] sm:$0x1]
        %v6582 = vsel %vm321, %v6422, %v6581
        %6583 = vst [vmem:[%s6471 + $0xbc] sm:$0x1] %v6582
        %v6584 = vld [vmem:[#allocation3] sm:$0xf]
        %v6585 = vld [vmem:[#allocation3 + $0x4] sm:$0xf]
        %v6586 = vld [vmem:[#allocation3 + $0xc] sm:$0xf]
        %v6587 = vld [vmem:[#allocation3 + $0x10] sm:$0xf]
        %v6588 = vld [vmem:[#allocation3 + $0x18] sm:$0xf]
        %v6589 = vld [vmem:[#allocation3 + $0x1c] sm:$0xf]
        %v6590 = vld [vmem:[#allocation3 + $0x24] sm:$0xf]
        %v6591 = vld [vmem:[#allocation3 + $0x28] sm:$0xf]
        %v6592 = vld [vmem:[#allocation3 + $0x30] sm:$0xf]
        %v6593 = vld [vmem:[#allocation3 + $0x34] sm:$0xf]
        %v6594 = vld [vmem:[#allocation3 + $0x3c] sm:$0xf]
        %v6595 = vld [vmem:[#allocation3 + $0x40] sm:$0xf]
        %v6596 = vld [vmem:[#allocation3 + $0x48] sm:$0xf]
        %v6597 = vld [vmem:[#allocation3 + $0x4c] sm:$0xf]
        %v6598 = vld [vmem:[#allocation3 + $0x54] sm:$0xf]
        %v6599 = vld [vmem:[#allocation3 + $0x58] sm:$0xf]
        %v6600 = vld [vmem:[#allocation3 + $0x60] sm:$0xf]
        %v6601 = vld [vmem:[#allocation3 + $0x64] sm:$0xf]
        %v6602 = vld [vmem:[#allocation3 + $0x6c] sm:$0xf]
        %v6603 = vld [vmem:[#allocation3 + $0x70] sm:$0xf]
        %v6604 = vld [vmem:[#allocation3 + $0x78] sm:$0xf]
        %v6605 = vld [vmem:[#allocation3 + $0x7c] sm:$0xf]
        %v6606 = vld [vmem:[#allocation3 + $0x84] sm:$0xf]
        %v6607 = vld [vmem:[#allocation3 + $0x88] sm:$0xf]
        %v6608 = vld [vmem:[#allocation3 + $0x90] sm:$0xf]
        %v6609 = vld [vmem:[#allocation3 + $0x94] sm:$0xf]
        %v6610 = vld [vmem:[#allocation3 + $0x9c] sm:$0xf]
        %v6611 = vld [vmem:[#allocation3 + $0xa0] sm:$0xf]
        %v6612 = vld [vmem:[#allocation3 + $0xa8] sm:$0xf]
        %v6613 = vld [vmem:[#allocation3 + $0xac] sm:$0xf]
        %v6614 = vld [vmem:[#allocation3 + $0xb4] sm:$0xf]
        %v6615 = vld [vmem:[#allocation3 + $0xb8] sm:$0xf]
        %v6616 = vld [vmem:[#allocation6] sm:$0xf]
        %v6617 = vld [vmem:[#allocation6 + $0x4] sm:$0xf]
        %v6618 = vld [vmem:[#allocation6 + $0x8] sm:$0xf]
        %v6619 = vld [vmem:[#allocation6 + $0xc] sm:$0xf]
        %v6620 = vld [vmem:[#allocation6 + $0x10] sm:$0xf]
        %v6621 = vld [vmem:[#allocation6 + $0x14] sm:$0xf]
        %v6622 = vld [vmem:[#allocation6 + $0x18] sm:$0xf]
        %v6623 = vld [vmem:[#allocation6 + $0x1c] sm:$0xf]
        %v6624 = vld [vmem:[#allocation6 + $0x20] sm:$0xf]
        %v6625 = vld [vmem:[#allocation6 + $0x24] sm:$0xf]
        %v6626 = vld [vmem:[#allocation6 + $0x28] sm:$0xf]
        %v6627 = vld [vmem:[#allocation6 + $0x2c] sm:$0xf]
        %v6628 = vld [vmem:[#allocation6 + $0x30] sm:$0xf]
        %v6629 = vld [vmem:[#allocation6 + $0x34] sm:$0xf]
        %v6630 = vld [vmem:[#allocation6 + $0x38] sm:$0xf]
        %v6631 = vld [vmem:[#allocation6 + $0x3c] sm:$0xf]
        %v6632 = vld [vmem:[#allocation3 + $0x8] sm:$0x1]
        %v6633 = vld [vmem:[#allocation3 + $0x14] sm:$0x1]
        %v6634 = vld [vmem:[#allocation3 + $0x20] sm:$0x1]
        %v6635 = vld [vmem:[#allocation3 + $0x2c] sm:$0x1]
        %v6636 = vld [vmem:[#allocation3 + $0x38] sm:$0x1]
        %v6637 = vld [vmem:[#allocation3 + $0x44] sm:$0x1]
        %v6638 = vld [vmem:[#allocation3 + $0x50] sm:$0x1]
        %v6639 = vld [vmem:[#allocation3 + $0x5c] sm:$0x1]
        %v6640 = vld [vmem:[#allocation3 + $0x68] sm:$0x1]
        %v6641 = vld [vmem:[#allocation3 + $0x74] sm:$0x1]
        %v6642 = vld [vmem:[#allocation3 + $0x80] sm:$0x1]
        %v6643 = vld [vmem:[#allocation3 + $0x8c] sm:$0x1]
        %v6644 = vld [vmem:[#allocation3 + $0x98] sm:$0x1]
        %v6645 = vld [vmem:[#allocation3 + $0xa4] sm:$0x1]
        %v6646 = vld [vmem:[#allocation3 + $0xb0] sm:$0x1]
        %v6647 = vld [vmem:[#allocation3 + $0xbc] sm:$0x1]
        %v6649 = vshrl.u32 %v6584, 16
        %v6651 = vrot.slane %v6649, 4
        %v6652 = vshll.u32 %v6584, 16
        %v6654 = vrot.slane %v6652, 5
        %v6655 = vor.u32 %v6651, %v6654
        %v6656 = vrot.slane %v6655, 4
        %v6658 = vshll.u32 %v6585, 16
        %v6660 = vrot.slane %v6658, 5
        %v6661 = vsel %vm1127, %v6656, %v6660
        %v6662 = vshrl.u32 %v6585, 16
        %v6664 = vrot.slane %v6662, 4
        %v6665 = vor.u32 %v6664, %v6660
        %v6666 = vrot.slane %v6665, 4
        %v6668 = vshll.u32 %v6632, 16
        %v6670 = vrot.slane %v6668, 5
        %v6671 = vsel %vm1127, %v6666, %v6670
        %v6673 = vshrl.u32 %v6586, 16
        %v6675 = vrot.slane %v6673, 4
        %v6676 = vshll.u32 %v6586, 16
        %v6678 = vrot.slane %v6676, 5
        %v6679 = vor.u32 %v6675, %v6678
        %v6680 = vrot.slane %v6679, 4
        %v6682 = vshll.u32 %v6587, 16
        %v6684 = vrot.slane %v6682, 5
        %v6685 = vsel %vm1127, %v6680, %v6684
        %v6686 = vshrl.u32 %v6587, 16
        %v6688 = vrot.slane %v6686, 4
        %v6689 = vor.u32 %v6688, %v6684
        %v6690 = vrot.slane %v6689, 4
        %v6692 = vshll.u32 %v6633, 16
        %v6694 = vrot.slane %v6692, 5
        %v6695 = vsel %vm1127, %v6690, %v6694
        %v6697 = vshrl.u32 %v6588, 16
        %v6699 = vrot.slane %v6697, 4
        %v6700 = vshll.u32 %v6588, 16
        %v6702 = vrot.slane %v6700, 5
        %v6703 = vor.u32 %v6699, %v6702
        %v6704 = vrot.slane %v6703, 4
        %v6706 = vshll.u32 %v6589, 16
        %v6708 = vrot.slane %v6706, 5
        %v6709 = vsel %vm1127, %v6704, %v6708
        %v6710 = vshrl.u32 %v6589, 16
        %v6712 = vrot.slane %v6710, 4
        %v6713 = vor.u32 %v6712, %v6708
        %v6714 = vrot.slane %v6713, 4
        %v6716 = vshll.u32 %v6634, 16
        %v6718 = vrot.slane %v6716, 5
        %v6719 = vsel %vm1127, %v6714, %v6718
        %v6721 = vshrl.u32 %v6590, 16
        %v6723 = vrot.slane %v6721, 4
        %v6724 = vshll.u32 %v6590, 16
        %v6726 = vrot.slane %v6724, 5
        %v6727 = vor.u32 %v6723, %v6726
        %v6728 = vrot.slane %v6727, 4
        %v6730 = vshll.u32 %v6591, 16
        %v6732 = vrot.slane %v6730, 5
        %v6733 = vsel %vm1127, %v6728, %v6732
        %v6734 = vshrl.u32 %v6591, 16
        %v6736 = vrot.slane %v6734, 4
        %v6737 = vor.u32 %v6736, %v6732
        %v6738 = vrot.slane %v6737, 4
        %v6740 = vshll.u32 %v6635, 16
        %v6742 = vrot.slane %v6740, 5
        %v6743 = vsel %vm1127, %v6738, %v6742
        %v6745 = vshrl.u32 %v6592, 16
        %v6747 = vrot.slane %v6745, 4
        %v6748 = vshll.u32 %v6592, 16
        %v6750 = vrot.slane %v6748, 5
        %v6751 = vor.u32 %v6747, %v6750
        %v6752 = vrot.slane %v6751, 4
        %v6754 = vshll.u32 %v6593, 16
        %v6756 = vrot.slane %v6754, 5
        %v6757 = vsel %vm1127, %v6752, %v6756
        %v6758 = vshrl.u32 %v6593, 16
        %v6760 = vrot.slane %v6758, 4
        %v6761 = vor.u32 %v6760, %v6756
        %v6762 = vrot.slane %v6761, 4
        %v6764 = vshll.u32 %v6636, 16
        %v6766 = vrot.slane %v6764, 5
        %v6767 = vsel %vm1127, %v6762, %v6766
        %v6769 = vshrl.u32 %v6594, 16
        %v6771 = vrot.slane %v6769, 4
        %v6772 = vshll.u32 %v6594, 16
        %v6774 = vrot.slane %v6772, 5
        %v6775 = vor.u32 %v6771, %v6774
        %v6776 = vrot.slane %v6775, 4
        %v6778 = vshll.u32 %v6595, 16
        %v6780 = vrot.slane %v6778, 5
        %v6781 = vsel %vm1127, %v6776, %v6780
        %v6782 = vshrl.u32 %v6595, 16
        %v6784 = vrot.slane %v6782, 4
        %v6785 = vor.u32 %v6784, %v6780
        %v6786 = vrot.slane %v6785, 4
        %v6788 = vshll.u32 %v6637, 16
        %v6790 = vrot.slane %v6788, 5
        %v6791 = vsel %vm1127, %v6786, %v6790
        %v6793 = vshrl.u32 %v6596, 16
        %v6795 = vrot.slane %v6793, 4
        %v6796 = vshll.u32 %v6596, 16
        %v6798 = vrot.slane %v6796, 5
        %v6799 = vor.u32 %v6795, %v6798
        %v6800 = vrot.slane %v6799, 4
        %v6802 = vshll.u32 %v6597, 16
        %v6804 = vrot.slane %v6802, 5
        %v6805 = vsel %vm1127, %v6800, %v6804
        %v6806 = vshrl.u32 %v6597, 16
        %v6808 = vrot.slane %v6806, 4
        %v6809 = vor.u32 %v6808, %v6804
        %v6810 = vrot.slane %v6809, 4
        %v6812 = vshll.u32 %v6638, 16
        %v6814 = vrot.slane %v6812, 5
        %v6815 = vsel %vm1127, %v6810, %v6814
        %v6817 = vshrl.u32 %v6598, 16
        %v6819 = vrot.slane %v6817, 4
        %v6820 = vshll.u32 %v6598, 16
        %v6822 = vrot.slane %v6820, 5
        %v6823 = vor.u32 %v6819, %v6822
        %v6824 = vrot.slane %v6823, 4
        %v6826 = vshll.u32 %v6599, 16
        %v6828 = vrot.slane %v6826, 5
        %v6829 = vsel %vm1127, %v6824, %v6828
        %v6830 = vshrl.u32 %v6599, 16
        %v6832 = vrot.slane %v6830, 4
        %v6833 = vor.u32 %v6832, %v6828
        %v6834 = vrot.slane %v6833, 4
        %v6836 = vshll.u32 %v6639, 16
        %v6838 = vrot.slane %v6836, 5
        %v6839 = vsel %vm1127, %v6834, %v6838
        %v6841 = vshrl.u32 %v6600, 16
        %v6843 = vrot.slane %v6841, 4
        %v6844 = vshll.u32 %v6600, 16
        %v6846 = vrot.slane %v6844, 5
        %v6847 = vor.u32 %v6843, %v6846
        %v6848 = vrot.slane %v6847, 4
        %v6850 = vshll.u32 %v6601, 16
        %v6852 = vrot.slane %v6850, 5
        %v6853 = vsel %vm1127, %v6848, %v6852
        %v6854 = vshrl.u32 %v6601, 16
        %v6856 = vrot.slane %v6854, 4
        %v6857 = vor.u32 %v6856, %v6852
        %v6858 = vrot.slane %v6857, 4
        %v6860 = vshll.u32 %v6640, 16
        %v6862 = vrot.slane %v6860, 5
        %v6863 = vsel %vm1127, %v6858, %v6862
        %v6865 = vshrl.u32 %v6602, 16
        %v6867 = vrot.slane %v6865, 4
        %v6868 = vshll.u32 %v6602, 16
        %v6870 = vrot.slane %v6868, 5
        %v6871 = vor.u32 %v6867, %v6870
        %v6872 = vrot.slane %v6871, 4
        %v6874 = vshll.u32 %v6603, 16
        %v6876 = vrot.slane %v6874, 5
        %v6877 = vsel %vm1127, %v6872, %v6876
        %v6878 = vshrl.u32 %v6603, 16
        %v6880 = vrot.slane %v6878, 4
        %v6881 = vor.u32 %v6880, %v6876
        %v6882 = vrot.slane %v6881, 4
        %v6884 = vshll.u32 %v6641, 16
        %v6886 = vrot.slane %v6884, 5
        %v6887 = vsel %vm1127, %v6882, %v6886
        %v6889 = vshrl.u32 %v6604, 16
        %v6891 = vrot.slane %v6889, 4
        %v6892 = vshll.u32 %v6604, 16
        %v6894 = vrot.slane %v6892, 5
        %v6895 = vor.u32 %v6891, %v6894
        %v6896 = vrot.slane %v6895, 4
        %v6898 = vshll.u32 %v6605, 16
        %v6900 = vrot.slane %v6898, 5
        %v6901 = vsel %vm1127, %v6896, %v6900
        %v6902 = vshrl.u32 %v6605, 16
        %v6904 = vrot.slane %v6902, 4
        %v6905 = vor.u32 %v6904, %v6900
        %v6906 = vrot.slane %v6905, 4
        %v6908 = vshll.u32 %v6642, 16
        %v6910 = vrot.slane %v6908, 5
        %v6911 = vsel %vm1127, %v6906, %v6910
        %v6913 = vshrl.u32 %v6606, 16
        %v6915 = vrot.slane %v6913, 4
        %v6916 = vshll.u32 %v6606, 16
        %v6918 = vrot.slane %v6916, 5
        %v6919 = vor.u32 %v6915, %v6918
        %v6920 = vrot.slane %v6919, 4
        %v6922 = vshll.u32 %v6607, 16
        %v6924 = vrot.slane %v6922, 5
        %v6925 = vsel %vm1127, %v6920, %v6924
        %v6926 = vshrl.u32 %v6607, 16
        %v6928 = vrot.slane %v6926, 4
        %v6929 = vor.u32 %v6928, %v6924
        %v6930 = vrot.slane %v6929, 4
        %v6932 = vshll.u32 %v6643, 16
        %v6934 = vrot.slane %v6932, 5
        %v6935 = vsel %vm1127, %v6930, %v6934
        %v6937 = vshrl.u32 %v6608, 16
        %v6939 = vrot.slane %v6937, 4
        %v6940 = vshll.u32 %v6608, 16
        %v6942 = vrot.slane %v6940, 5
        %v6943 = vor.u32 %v6939, %v6942
        %v6944 = vrot.slane %v6943, 4
        %v6946 = vshll.u32 %v6609, 16
        %v6948 = vrot.slane %v6946, 5
        %v6949 = vsel %vm1127, %v6944, %v6948
        %v6950 = vshrl.u32 %v6609, 16
        %v6952 = vrot.slane %v6950, 4
        %v6953 = vor.u32 %v6952, %v6948
        %v6954 = vrot.slane %v6953, 4
        %v6956 = vshll.u32 %v6644, 16
        %v6958 = vrot.slane %v6956, 5
        %v6959 = vsel %vm1127, %v6954, %v6958
        %v6961 = vshrl.u32 %v6610, 16
        %v6963 = vrot.slane %v6961, 4
        %v6964 = vshll.u32 %v6610, 16
        %v6966 = vrot.slane %v6964, 5
        %v6967 = vor.u32 %v6963, %v6966
        %v6968 = vrot.slane %v6967, 4
        %v6970 = vshll.u32 %v6611, 16
        %v6972 = vrot.slane %v6970, 5
        %v6973 = vsel %vm1127, %v6968, %v6972
        %v6974 = vshrl.u32 %v6611, 16
        %v6976 = vrot.slane %v6974, 4
        %v6977 = vor.u32 %v6976, %v6972
        %v6978 = vrot.slane %v6977, 4
        %v6980 = vshll.u32 %v6645, 16
        %v6982 = vrot.slane %v6980, 5
        %v6983 = vsel %vm1127, %v6978, %v6982
        %v6985 = vshrl.u32 %v6612, 16
        %v6987 = vrot.slane %v6985, 4
        %v6988 = vshll.u32 %v6612, 16
        %v6990 = vrot.slane %v6988, 5
        %v6991 = vor.u32 %v6987, %v6990
        %v6992 = vrot.slane %v6991, 4
        %v6994 = vshll.u32 %v6613, 16
        %v6996 = vrot.slane %v6994, 5
        %v6997 = vsel %vm1127, %v6992, %v6996
        %v6998 = vshrl.u32 %v6613, 16
        %v7000 = vrot.slane %v6998, 4
        %v7001 = vor.u32 %v7000, %v6996
        %v7002 = vrot.slane %v7001, 4
        %v7004 = vshll.u32 %v6646, 16
        %v7006 = vrot.slane %v7004, 5
        %v7007 = vsel %vm1127, %v7002, %v7006
        %v7009 = vshrl.u32 %v6614, 16
        %v7011 = vrot.slane %v7009, 4
        %v7012 = vshll.u32 %v6614, 16
        %v7014 = vrot.slane %v7012, 5
        %v7015 = vor.u32 %v7011, %v7014
        %v7016 = vrot.slane %v7015, 4
        %v7018 = vshll.u32 %v6615, 16
        %v7020 = vrot.slane %v7018, 5
        %v7021 = vsel %vm1127, %v7016, %v7020
        %v7022 = vshrl.u32 %v6615, 16
        %v7024 = vrot.slane %v7022, 4
        %v7025 = vor.u32 %v7024, %v7020
        %v7026 = vrot.slane %v7025, 4
        %v7028 = vshll.u32 %v6647, 16
        %v7030 = vrot.slane %v7028, 5
        %v7031 = vsel %vm1127, %v7026, %v7030
        %s7032 = scalar_lea.vmem [#allocation6], 64
        %v7033 = vld [vmem:[%s7032] sm:$0xf]
        %v7034 = vld [vmem:[%s7032 + $0x4] sm:$0xf]
        %v7035 = vld [vmem:[%s7032 + $0x8] sm:$0xf]
        %v7036 = vld [vmem:[%s7032 + $0xc] sm:$0xf]
        %v7037 = vld [vmem:[%s7032 + $0x10] sm:$0xf]
        %v7038 = vld [vmem:[%s7032 + $0x14] sm:$0xf]
        %v7039 = vld [vmem:[%s7032 + $0x18] sm:$0xf]
        %v7040 = vld [vmem:[%s7032 + $0x1c] sm:$0xf]
        %v7041 = vld [vmem:[%s7032 + $0x20] sm:$0xf]
        %v7042 = vld [vmem:[%s7032 + $0x24] sm:$0xf]
        %v7043 = vld [vmem:[%s7032 + $0x28] sm:$0xf]
        %v7044 = vld [vmem:[%s7032 + $0x2c] sm:$0xf]
        %v7045 = vld [vmem:[%s7032 + $0x30] sm:$0xf]
        %v7046 = vld [vmem:[%s7032 + $0x34] sm:$0xf]
        %v7047 = vld [vmem:[%s7032 + $0x38] sm:$0xf]
        %v7048 = vld [vmem:[%s7032 + $0x3c] sm:$0xf]
        %v7049 = vunpack.c.l.b16 %v6661
        %v7050 = vunpack.c.l.b16 %v6671
        %v7051 = vunpack.c.l.b16 %v6685
        %v7052 = vunpack.c.l.b16 %v6695
        %v7053 = vunpack.c.l.b16 %v6709
        %v7054 = vunpack.c.l.b16 %v6719
        %v7055 = vunpack.c.l.b16 %v6733
        %v7056 = vunpack.c.l.b16 %v6743
        %v7057 = vunpack.c.l.b16 %v6757
        %v7058 = vunpack.c.l.b16 %v6767
        %v7059 = vunpack.c.l.b16 %v6781
        %v7060 = vunpack.c.l.b16 %v6791
        %v7061 = vunpack.c.l.b16 %v6805
        %v7062 = vunpack.c.l.b16 %v6815
        %v7063 = vunpack.c.l.b16 %v6829
        %v7064 = vunpack.c.l.b16 %v6839
        %v7065 = vunpack.c.l.b16 %v6853
        %v7066 = vunpack.c.l.b16 %v6863
        %v7067 = vunpack.c.l.b16 %v6877
        %v7068 = vunpack.c.l.b16 %v6887
        %v7069 = vunpack.c.l.b16 %v6901
        %v7070 = vunpack.c.l.b16 %v6911
        %v7071 = vunpack.c.l.b16 %v6925
        %v7072 = vunpack.c.l.b16 %v6935
        %v7073 = vunpack.c.l.b16 %v6949
        %v7074 = vunpack.c.l.b16 %v6959
        %v7075 = vunpack.c.l.b16 %v6973
        %v7076 = vunpack.c.l.b16 %v6983
        %v7077 = vunpack.c.l.b16 %v6997
        %v7078 = vunpack.c.l.b16 %v7007
        %v7079 = vunpack.c.l.b16 %v7021
        %v7080 = vunpack.c.l.b16 %v7031
        %v7081 = vpack.c.b16 %v7050, %v7049
        %v7082 = vpack.c.b16 %v7052, %v7051
        %v7083 = vpack.c.b16 %v7054, %v7053
        %v7084 = vpack.c.b16 %v7056, %v7055
        %v7085 = vpack.c.b16 %v7058, %v7057
        %v7086 = vpack.c.b16 %v7060, %v7059
        %v7087 = vpack.c.b16 %v7062, %v7061
        %v7088 = vpack.c.b16 %v7064, %v7063
        %v7089 = vpack.c.b16 %v7066, %v7065
        %v7090 = vpack.c.b16 %v7068, %v7067
        %v7091 = vpack.c.b16 %v7070, %v7069
        %v7092 = vpack.c.b16 %v7072, %v7071
        %v7093 = vpack.c.b16 %v7074, %v7073
        %v7094 = vpack.c.b16 %v7076, %v7075
        %v7095 = vpack.c.b16 %v7078, %v7077
        %v7096 = vpack.c.b16 %v7080, %v7079
        %v7129 = vunpack.c.l.b16 %v7033
        %v7130 = vunpack.c.l.b16 %v7034
        %v7131 = vunpack.c.l.b16 %v7035
        %v7132 = vunpack.c.l.b16 %v7036
        %v7133 = vunpack.c.l.b16 %v7037
        %v7134 = vunpack.c.l.b16 %v7038
        %v7135 = vunpack.c.l.b16 %v7039
        %v7136 = vunpack.c.l.b16 %v7040
        %v7137 = vunpack.c.l.b16 %v7041
        %v7138 = vunpack.c.l.b16 %v7042
        %v7139 = vunpack.c.l.b16 %v7043
        %v7140 = vunpack.c.l.b16 %v7044
        %v7141 = vunpack.c.l.b16 %v7045
        %v7142 = vunpack.c.l.b16 %v7046
        %v7143 = vunpack.c.l.b16 %v7047
        %v7144 = vunpack.c.l.b16 %v7048
        %v7145 = vpack.c.b16 %v7130, %v7129
        %v7146 = vpack.c.b16 %v7132, %v7131
        %v7147 = vpack.c.b16 %v7134, %v7133
        %v7148 = vpack.c.b16 %v7136, %v7135
        %v7149 = vpack.c.b16 %v7138, %v7137
        %v7150 = vpack.c.b16 %v7140, %v7139
        %v7151 = vpack.c.b16 %v7142, %v7141
        %v7152 = vpack.c.b16 %v7144, %v7143
        %7161 = vmatprep.subr.bf16.mxu0 0
        %7162 = vmatpush1.bf16.msra.mxu0 %v7152
        %7163 = vmatprep.subr.bf16.mxu0 0
        %7164 = vmatpush1.bf16.msra.mxu0 %v7151
        %7165 = vmatprep.subr.bf16.mxu0 0
        %7166 = vmatpush1.bf16.msra.mxu0 %v7150
        %7167 = vmatprep.subr.bf16.mxu0 0
        %7168 = vmatpush1.bf16.msra.mxu0 %v7149
        %7169 = vmatprep.subr.bf16.mxu0 0
        %7170 = vmatpush1.bf16.msra.mxu0 %v7148
        %7171 = vmatprep.subr.bf16.mxu0 0
        %7172 = vmatpush1.bf16.msra.mxu0 %v7147
        %7173 = vmatprep.subr.bf16.mxu0 0
        %7174 = vmatpush1.bf16.msra.mxu0 %v7146
        %7175 = vmatprep.subr.bf16.mxu0 0
        %7176 = vmatpush1.bf16.msra.mxu0 %v7145
        %7177 = vmatprep.subr.bf16.mxu0 0
        %7178 = vmatpush2.bf16.msra.mxu0 0
        %7179 = vmatprep.subr.bf16.mxu0 0
        %7180 = vmatpush2.bf16.msra.mxu0 0
        %7181 = vmatprep.subr.bf16.mxu0 0
        %7182 = vmatpush2.bf16.msra.mxu0 0
        %7183 = vmatprep.subr.bf16.mxu0 0
        %7184 = vmatpush2.bf16.msra.mxu0 0
        %7185 = vmatprep.subr.bf16.mxu0 0
        %7186 = vmatpush2.bf16.msra.mxu0 0
        %7187 = vmatprep.subr.bf16.mxu0 0
        %7188 = vmatpush2.bf16.msra.mxu0 0
        %7189 = vmatprep.subr.bf16.mxu0 0
        %7190 = vmatpush2.bf16.msra.mxu0 0
        %7191 = vmatprep.subr.bf16.mxu0 0
        %7192 = vmatpush2.bf16.msra.mxu0 0
        %7193 = vmatprep.mubr.bf16.mxu0 0
        %7194 = vmatmul.mubr.bf16.gmra.mxu0 %v7081
        %v7195 = vpop.f32.mrf.mxu0
        %v7196 = vadd.f32 0.0, %v7195
        %v7197 = vpop.f32.mrf.mxu0
        %v7198 = vpop.f32.mrf.mxu0
        %v7199 = vadd.f32 0.0, %v7198
        %v7200 = vpop.f32.mrf.mxu0
        %7201 = vmatprep.mubr.bf16.mxu0 0
        %7202 = vmatmul.mubr.bf16.gmra.mxu0 %v7082
        %v7203 = vpop.f32.mrf.mxu0
        %v7204 = vadd.f32 0.0, %v7203
        %v7205 = vpop.f32.mrf.mxu0
        %v7206 = vpop.f32.mrf.mxu0
        %v7207 = vadd.f32 0.0, %v7206
        %v7208 = vpop.f32.mrf.mxu0
        %7209 = vmatprep.mubr.bf16.mxu0 0
        %7210 = vmatmul.mubr.bf16.gmra.mxu0 %v7083
        %v7211 = vpop.f32.mrf.mxu0
        %v7212 = vadd.f32 0.0, %v7211
        %v7213 = vpop.f32.mrf.mxu0
        %v7214 = vpop.f32.mrf.mxu0
        %v7215 = vadd.f32 0.0, %v7214
        %v7216 = vpop.f32.mrf.mxu0
        %7217 = vmatprep.mubr.bf16.mxu0 0
        %7218 = vmatmul.mubr.bf16.gmra.mxu0 %v7084
        %v7219 = vpop.f32.mrf.mxu0
        %v7220 = vadd.f32 0.0, %v7219
        %v7221 = vpop.f32.mrf.mxu0
        %v7222 = vpop.f32.mrf.mxu0
        %v7223 = vadd.f32 0.0, %v7222
        %v7224 = vpop.f32.mrf.mxu0
        %7225 = vmatprep.mubr.bf16.mxu0 0
        %7226 = vmatmul.mubr.bf16.gmra.mxu0 %v7085
        %v7227 = vpop.f32.mrf.mxu0
        %v7228 = vadd.f32 0.0, %v7227
        %v7229 = vpop.f32.mrf.mxu0
        %v7230 = vpop.f32.mrf.mxu0
        %v7231 = vadd.f32 0.0, %v7230
        %v7232 = vpop.f32.mrf.mxu0
        %7233 = vmatprep.mubr.bf16.mxu0 0
        %7234 = vmatmul.mubr.bf16.gmra.mxu0 %v7086
        %v7235 = vpop.f32.mrf.mxu0
        %v7236 = vadd.f32 0.0, %v7235
        %v7237 = vpop.f32.mrf.mxu0
        %v7238 = vpop.f32.mrf.mxu0
        %v7239 = vadd.f32 0.0, %v7238
        %v7240 = vpop.f32.mrf.mxu0
        %7241 = vmatprep.mubr.bf16.mxu0 0
        %7242 = vmatmul.mubr.bf16.gmra.mxu0 %v7087
        %v7243 = vpop.f32.mrf.mxu0
        %v7244 = vadd.f32 0.0, %v7243
        %v7245 = vpop.f32.mrf.mxu0
        %v7246 = vpop.f32.mrf.mxu0
        %v7247 = vadd.f32 0.0, %v7246
        %v7248 = vpop.f32.mrf.mxu0
        %7249 = vmatprep.mubr.bf16.mxu0 0
        %7250 = vmatmul.mubr.bf16.gmra.mxu0 %v7088
        %v7251 = vpop.f32.mrf.mxu0
        %v7252 = vadd.f32 0.0, %v7251
        %v7253 = vpop.f32.mrf.mxu0
        %v7254 = vpop.f32.mrf.mxu0
        %v7255 = vadd.f32 0.0, %v7254
        %v7256 = vpop.f32.mrf.mxu0
        %7257 = vmatprep.mubr.bf16.mxu0 0
        %7258 = vmatmul.mubr.bf16.gmra.mxu0 %v7089
        %v7259 = vpop.f32.mrf.mxu0
        %v7260 = vadd.f32 0.0, %v7259
        %v7261 = vpop.f32.mrf.mxu0
        %v7262 = vpop.f32.mrf.mxu0
        %v7263 = vadd.f32 0.0, %v7262
        %v7264 = vpop.f32.mrf.mxu0
        %7265 = vmatprep.mubr.bf16.mxu0 0
        %7266 = vmatmul.mubr.bf16.gmra.mxu0 %v7090
        %v7267 = vpop.f32.mrf.mxu0
        %v7268 = vadd.f32 0.0, %v7267
        %v7269 = vpop.f32.mrf.mxu0
        %v7270 = vpop.f32.mrf.mxu0
        %v7271 = vadd.f32 0.0, %v7270
        %v7272 = vpop.f32.mrf.mxu0
        %7273 = vmatprep.mubr.bf16.mxu0 0
        %7274 = vmatmul.mubr.bf16.gmra.mxu0 %v7091
        %v7275 = vpop.f32.mrf.mxu0
        %v7276 = vadd.f32 0.0, %v7275
        %v7277 = vpop.f32.mrf.mxu0
        %v7278 = vpop.f32.mrf.mxu0
        %v7279 = vadd.f32 0.0, %v7278
        %v7280 = vpop.f32.mrf.mxu0
        %7281 = vmatprep.mubr.bf16.mxu0 0
        %7282 = vmatmul.mubr.bf16.gmra.mxu0 %v7092
        %v7283 = vpop.f32.mrf.mxu0
        %v7284 = vadd.f32 0.0, %v7283
        %v7285 = vpop.f32.mrf.mxu0
        %v7286 = vpop.f32.mrf.mxu0
        %v7287 = vadd.f32 0.0, %v7286
        %v7288 = vpop.f32.mrf.mxu0
        %7289 = vmatprep.mubr.bf16.mxu0 0
        %7290 = vmatmul.mubr.bf16.gmra.mxu0 %v7093
        %v7291 = vpop.f32.mrf.mxu0
        %v7292 = vadd.f32 0.0, %v7291
        %v7293 = vpop.f32.mrf.mxu0
        %v7294 = vpop.f32.mrf.mxu0
        %v7295 = vadd.f32 0.0, %v7294
        %v7296 = vpop.f32.mrf.mxu0
        %7297 = vmatprep.mubr.bf16.mxu0 0
        %7298 = vmatmul.mubr.bf16.gmra.mxu0 %v7094
        %v7299 = vpop.f32.mrf.mxu0
        %v7300 = vadd.f32 0.0, %v7299
        %v7301 = vpop.f32.mrf.mxu0
        %v7302 = vpop.f32.mrf.mxu0
        %v7303 = vadd.f32 0.0, %v7302
        %v7304 = vpop.f32.mrf.mxu0
        %7305 = vmatprep.mubr.bf16.mxu0 0
        %7306 = vmatmul.mubr.bf16.gmra.mxu0 %v7095
        %v7307 = vpop.f32.mrf.mxu0
        %v7308 = vadd.f32 0.0, %v7307
        %v7309 = vpop.f32.mrf.mxu0
        %v7310 = vpop.f32.mrf.mxu0
        %v7311 = vadd.f32 0.0, %v7310
        %v7312 = vpop.f32.mrf.mxu0
        %7313 = vmatprep.mubr.bf16.mxu0 0
        %7314 = vmatmul.mubr.bf16.gmra.mxu0 %v7096
        %v7315 = vpop.f32.mrf.mxu0
        %v7316 = vadd.f32 0.0, %v7315
        %v7317 = vpop.f32.mrf.mxu0
        %v7318 = vpop.f32.mrf.mxu0
        %v7319 = vadd.f32 0.0, %v7318
        %v7320 = vpop.f32.mrf.mxu0
        %7321 = vdwg.mxu0
        %v7354 = vunpack.c.l.b16 %v6584
        %v7355 = vunpack.c.l.b16 %v6585
        %v7356 = vunpack.c.l.b16 %v6586
        %v7357 = vunpack.c.l.b16 %v6587
        %v7358 = vunpack.c.l.b16 %v6588
        %v7359 = vunpack.c.l.b16 %v6589
        %v7360 = vunpack.c.l.b16 %v6590
        %v7361 = vunpack.c.l.b16 %v6591
        %v7362 = vunpack.c.l.b16 %v6592
        %v7363 = vunpack.c.l.b16 %v6593
        %v7364 = vunpack.c.l.b16 %v6594
        %v7365 = vunpack.c.l.b16 %v6595
        %v7366 = vunpack.c.l.b16 %v6596
        %v7367 = vunpack.c.l.b16 %v6597
        %v7368 = vunpack.c.l.b16 %v6598
        %v7369 = vunpack.c.l.b16 %v6599
        %v7370 = vunpack.c.l.b16 %v6600
        %v7371 = vunpack.c.l.b16 %v6601
        %v7372 = vunpack.c.l.b16 %v6602
        %v7373 = vunpack.c.l.b16 %v6603
        %v7374 = vunpack.c.l.b16 %v6604
        %v7375 = vunpack.c.l.b16 %v6605
        %v7376 = vunpack.c.l.b16 %v6606
        %v7377 = vunpack.c.l.b16 %v6607
        %v7378 = vunpack.c.l.b16 %v6608
        %v7379 = vunpack.c.l.b16 %v6609
        %v7380 = vunpack.c.l.b16 %v6610
        %v7381 = vunpack.c.l.b16 %v6611
        %v7382 = vunpack.c.l.b16 %v6612
        %v7383 = vunpack.c.l.b16 %v6613
        %v7384 = vunpack.c.l.b16 %v6614
        %v7385 = vunpack.c.l.b16 %v6615
        %v7386 = vpack.c.b16 %v7355, %v7354
        %v7387 = vpack.c.b16 %v7357, %v7356
        %v7388 = vpack.c.b16 %v7359, %v7358
        %v7389 = vpack.c.b16 %v7361, %v7360
        %v7390 = vpack.c.b16 %v7363, %v7362
        %v7391 = vpack.c.b16 %v7365, %v7364
        %v7392 = vpack.c.b16 %v7367, %v7366
        %v7393 = vpack.c.b16 %v7369, %v7368
        %v7394 = vpack.c.b16 %v7371, %v7370
        %v7395 = vpack.c.b16 %v7373, %v7372
        %v7396 = vpack.c.b16 %v7375, %v7374
        %v7397 = vpack.c.b16 %v7377, %v7376
        %v7398 = vpack.c.b16 %v7379, %v7378
        %v7399 = vpack.c.b16 %v7381, %v7380
        %v7400 = vpack.c.b16 %v7383, %v7382
        %v7401 = vpack.c.b16 %v7385, %v7384
        %v7434 = vunpack.c.l.b16 %v6616
        %v7435 = vunpack.c.l.b16 %v6617
        %v7436 = vunpack.c.l.b16 %v6618
        %v7437 = vunpack.c.l.b16 %v6619
        %v7438 = vunpack.c.l.b16 %v6620
        %v7439 = vunpack.c.l.b16 %v6621
        %v7440 = vunpack.c.l.b16 %v6622
        %v7441 = vunpack.c.l.b16 %v6623
        %v7442 = vunpack.c.l.b16 %v6624
        %v7443 = vunpack.c.l.b16 %v6625
        %v7444 = vunpack.c.l.b16 %v6626
        %v7445 = vunpack.c.l.b16 %v6627
        %v7446 = vunpack.c.l.b16 %v6628
        %v7447 = vunpack.c.l.b16 %v6629
        %v7448 = vunpack.c.l.b16 %v6630
        %v7449 = vunpack.c.l.b16 %v6631
        %v7450 = vpack.c.b16 %v7435, %v7434
        %v7451 = vpack.c.b16 %v7437, %v7436
        %v7452 = vpack.c.b16 %v7439, %v7438
        %v7453 = vpack.c.b16 %v7441, %v7440
        %v7454 = vpack.c.b16 %v7443, %v7442
        %v7455 = vpack.c.b16 %v7445, %v7444
        %v7456 = vpack.c.b16 %v7447, %v7446
        %v7457 = vpack.c.b16 %v7449, %v7448
        %7466 = vmatprep.subr.bf16.mxu0 0
        %7467 = vmatpush1.bf16.msra.mxu0 %v7457
        %7468 = vmatprep.subr.bf16.mxu0 0
        %7469 = vmatpush1.bf16.msra.mxu0 %v7456
        %7470 = vmatprep.subr.bf16.mxu0 0
        %7471 = vmatpush1.bf16.msra.mxu0 %v7455
        %7472 = vmatprep.subr.bf16.mxu0 0
        %7473 = vmatpush1.bf16.msra.mxu0 %v7454
        %7474 = vmatprep.subr.bf16.mxu0 0
        %7475 = vmatpush1.bf16.msra.mxu0 %v7453
        %7476 = vmatprep.subr.bf16.mxu0 0
        %7477 = vmatpush1.bf16.msra.mxu0 %v7452
        %7478 = vmatprep.subr.bf16.mxu0 0
        %7479 = vmatpush1.bf16.msra.mxu0 %v7451
        %7480 = vmatprep.subr.bf16.mxu0 0
        %7481 = vmatpush1.bf16.msra.mxu0 %v7450
        %7482 = vmatprep.subr.bf16.mxu0 0
        %7483 = vmatpush2.bf16.msra.mxu0 0
        %7484 = vmatprep.subr.bf16.mxu0 0
        %7485 = vmatpush2.bf16.msra.mxu0 0
        %7486 = vmatprep.subr.bf16.mxu0 0
        %7487 = vmatpush2.bf16.msra.mxu0 0
        %7488 = vmatprep.subr.bf16.mxu0 0
        %7489 = vmatpush2.bf16.msra.mxu0 0
        %7490 = vmatprep.subr.bf16.mxu0 0
        %7491 = vmatpush2.bf16.msra.mxu0 0
        %7492 = vmatprep.subr.bf16.mxu0 0
        %7493 = vmatpush2.bf16.msra.mxu0 0
        %7494 = vmatprep.subr.bf16.mxu0 0
        %7495 = vmatpush2.bf16.msra.mxu0 0
        %7496 = vmatprep.subr.bf16.mxu0 0
        %7497 = vmatpush2.bf16.msra.mxu0 0
        %7498 = vmatprep.mubr.bf16.mxu0 0
        %7499 = vmatmul.mubr.bf16.gmra.mxu0 %v7386
        %v7500 = vpop.f32.mrf.mxu0
        %v7501 = vadd.f32 %v7196, %v7500
        %v7502 = vpop.f32.mrf.mxu0
        %v7503 = vpop.f32.mrf.mxu0
        %v7504 = vadd.f32 %v7199, %v7503
        %v7505 = vpop.f32.mrf.mxu0
        %7506 = vmatprep.mubr.bf16.mxu0 0
        %7507 = vmatmul.mubr.bf16.gmra.mxu0 %v7387
        %v7508 = vpop.f32.mrf.mxu0
        %v7509 = vadd.f32 %v7204, %v7508
        %v7510 = vpop.f32.mrf.mxu0
        %v7511 = vpop.f32.mrf.mxu0
        %v7512 = vadd.f32 %v7207, %v7511
        %v7513 = vpop.f32.mrf.mxu0
        %7514 = vmatprep.mubr.bf16.mxu0 0
        %7515 = vmatmul.mubr.bf16.gmra.mxu0 %v7388
        %v7516 = vpop.f32.mrf.mxu0
        %v7517 = vadd.f32 %v7212, %v7516
        %v7518 = vpop.f32.mrf.mxu0
        %v7519 = vpop.f32.mrf.mxu0
        %v7520 = vadd.f32 %v7215, %v7519
        %v7521 = vpop.f32.mrf.mxu0
        %7522 = vmatprep.mubr.bf16.mxu0 0
        %7523 = vmatmul.mubr.bf16.gmra.mxu0 %v7389
        %v7524 = vpop.f32.mrf.mxu0
        %v7525 = vadd.f32 %v7220, %v7524
        %v7526 = vpop.f32.mrf.mxu0
        %v7527 = vpop.f32.mrf.mxu0
        %v7528 = vadd.f32 %v7223, %v7527
        %v7529 = vpop.f32.mrf.mxu0
        %7530 = vmatprep.mubr.bf16.mxu0 0
        %7531 = vmatmul.mubr.bf16.gmra.mxu0 %v7390
        %v7532 = vpop.f32.mrf.mxu0
        %v7533 = vadd.f32 %v7228, %v7532
        %v7534 = vpop.f32.mrf.mxu0
        %v7535 = vpop.f32.mrf.mxu0
        %v7536 = vadd.f32 %v7231, %v7535
        %v7537 = vpop.f32.mrf.mxu0
        %7538 = vmatprep.mubr.bf16.mxu0 0
        %7539 = vmatmul.mubr.bf16.gmra.mxu0 %v7391
        %v7540 = vpop.f32.mrf.mxu0
        %v7541 = vadd.f32 %v7236, %v7540
        %v7542 = vpop.f32.mrf.mxu0
        %v7543 = vpop.f32.mrf.mxu0
        %v7544 = vadd.f32 %v7239, %v7543
        %v7545 = vpop.f32.mrf.mxu0
        %7546 = vmatprep.mubr.bf16.mxu0 0
        %7547 = vmatmul.mubr.bf16.gmra.mxu0 %v7392
        %v7548 = vpop.f32.mrf.mxu0
        %v7549 = vadd.f32 %v7244, %v7548
        %v7550 = vpop.f32.mrf.mxu0
        %v7551 = vpop.f32.mrf.mxu0
        %v7552 = vadd.f32 %v7247, %v7551
        %v7553 = vpop.f32.mrf.mxu0
        %7554 = vmatprep.mubr.bf16.mxu0 0
        %7555 = vmatmul.mubr.bf16.gmra.mxu0 %v7393
        %v7556 = vpop.f32.mrf.mxu0
        %v7557 = vadd.f32 %v7252, %v7556
        %v7558 = vpop.f32.mrf.mxu0
        %v7559 = vpop.f32.mrf.mxu0
        %v7560 = vadd.f32 %v7255, %v7559
        %v7561 = vpop.f32.mrf.mxu0
        %7562 = vmatprep.mubr.bf16.mxu0 0
        %7563 = vmatmul.mubr.bf16.gmra.mxu0 %v7394
        %v7564 = vpop.f32.mrf.mxu0
        %v7565 = vadd.f32 %v7260, %v7564
        %v7566 = vpop.f32.mrf.mxu0
        %v7567 = vpop.f32.mrf.mxu0
        %v7568 = vadd.f32 %v7263, %v7567
        %v7569 = vpop.f32.mrf.mxu0
        %7570 = vmatprep.mubr.bf16.mxu0 0
        %7571 = vmatmul.mubr.bf16.gmra.mxu0 %v7395
        %v7572 = vpop.f32.mrf.mxu0
        %v7573 = vadd.f32 %v7268, %v7572
        %v7574 = vpop.f32.mrf.mxu0
        %v7575 = vpop.f32.mrf.mxu0
        %v7576 = vadd.f32 %v7271, %v7575
        %v7577 = vpop.f32.mrf.mxu0
        %7578 = vmatprep.mubr.bf16.mxu0 0
        %7579 = vmatmul.mubr.bf16.gmra.mxu0 %v7396
        %v7580 = vpop.f32.mrf.mxu0
        %v7581 = vadd.f32 %v7276, %v7580
        %v7582 = vpop.f32.mrf.mxu0
        %v7583 = vpop.f32.mrf.mxu0
        %v7584 = vadd.f32 %v7279, %v7583
        %v7585 = vpop.f32.mrf.mxu0
        %7586 = vmatprep.mubr.bf16.mxu0 0
        %7587 = vmatmul.mubr.bf16.gmra.mxu0 %v7397
        %v7588 = vpop.f32.mrf.mxu0
        %v7589 = vadd.f32 %v7284, %v7588
        %v7590 = vpop.f32.mrf.mxu0
        %v7591 = vpop.f32.mrf.mxu0
        %v7592 = vadd.f32 %v7287, %v7591
        %v7593 = vpop.f32.mrf.mxu0
        %7594 = vmatprep.mubr.bf16.mxu0 0
        %7595 = vmatmul.mubr.bf16.gmra.mxu0 %v7398
        %v7596 = vpop.f32.mrf.mxu0
        %v7597 = vadd.f32 %v7292, %v7596
        %v7598 = vpop.f32.mrf.mxu0
        %v7599 = vpop.f32.mrf.mxu0
        %v7600 = vadd.f32 %v7295, %v7599
        %v7601 = vpop.f32.mrf.mxu0
        %7602 = vmatprep.mubr.bf16.mxu0 0
        %7603 = vmatmul.mubr.bf16.gmra.mxu0 %v7399
        %v7604 = vpop.f32.mrf.mxu0
        %v7605 = vadd.f32 %v7300, %v7604
        %v7606 = vpop.f32.mrf.mxu0
        %v7607 = vpop.f32.mrf.mxu0
        %v7608 = vadd.f32 %v7303, %v7607
        %v7609 = vpop.f32.mrf.mxu0
        %7610 = vmatprep.mubr.bf16.mxu0 0
        %7611 = vmatmul.mubr.bf16.gmra.mxu0 %v7400
        %v7612 = vpop.f32.mrf.mxu0
        %v7613 = vadd.f32 %v7308, %v7612
        %v7614 = vpop.f32.mrf.mxu0
        %v7615 = vpop.f32.mrf.mxu0
        %v7616 = vadd.f32 %v7311, %v7615
        %v7617 = vpop.f32.mrf.mxu0
        %7618 = vmatprep.mubr.bf16.mxu0 0
        %7619 = vmatmul.mubr.bf16.gmra.mxu0 %v7401
        %v7620 = vpop.f32.mrf.mxu0
        %v7621 = vadd.f32 %v7316, %v7620
        %v7622 = vpop.f32.mrf.mxu0
        %v7623 = vpop.f32.mrf.mxu0
        %v7624 = vadd.f32 %v7319, %v7623
        %v7625 = vpop.f32.mrf.mxu0
        %7626 = vdwg.mxu0
        %v7627 = vld [vmem:[#allocation3] sm:$0xe]
        %v7628 = vld [vmem:[#allocation3 + $0xc] sm:$0xe]
        %v7629 = vld [vmem:[#allocation3 + $0x18] sm:$0xe]
        %v7630 = vld [vmem:[#allocation3 + $0x24] sm:$0xe]
        %v7631 = vld [vmem:[#allocation3 + $0x30] sm:$0xe]
        %v7632 = vld [vmem:[#allocation3 + $0x3c] sm:$0xe]
        %v7633 = vld [vmem:[#allocation3 + $0x48] sm:$0xe]
        %v7634 = vld [vmem:[#allocation3 + $0x54] sm:$0xe]
        %v7635 = vld [vmem:[#allocation3 + $0x60] sm:$0xe]
        %v7636 = vld [vmem:[#allocation3 + $0x6c] sm:$0xe]
        %v7637 = vld [vmem:[#allocation3 + $0x78] sm:$0xe]
        %v7638 = vld [vmem:[#allocation3 + $0x84] sm:$0xe]
        %v7639 = vld [vmem:[#allocation3 + $0x90] sm:$0xe]
        %v7640 = vld [vmem:[#allocation3 + $0x9c] sm:$0xe]
        %v7641 = vld [vmem:[#allocation3 + $0xa8] sm:$0xe]
        %v7642 = vld [vmem:[#allocation3 + $0xb4] sm:$0xe]
        %v7675 = vrot.slane %v7627, 5
        %v7676 = vrot.slane %v7675, 4
        %v7677 = vrot.slane %v6585, 5
        %v7678 = vsel %vm2157, %v7676, %v7677
        %v7679 = vrot.slane %v7677, 4
        %v7680 = vrot.slane %v6632, 5
        %v7681 = vsel %vm2157, %v7679, %v7680
        %v7682 = vrot.slane %v7628, 5
        %v7683 = vrot.slane %v7682, 4
        %v7684 = vrot.slane %v6587, 5
        %v7685 = vsel %vm2157, %v7683, %v7684
        %v7686 = vrot.slane %v7684, 4
        %v7687 = vrot.slane %v6633, 5
        %v7688 = vsel %vm2157, %v7686, %v7687
        %v7689 = vrot.slane %v7629, 5
        %v7690 = vrot.slane %v7689, 4
        %v7691 = vrot.slane %v6589, 5
        %v7692 = vsel %vm2157, %v7690, %v7691
        %v7693 = vrot.slane %v7691, 4
        %v7694 = vrot.slane %v6634, 5
        %v7695 = vsel %vm2157, %v7693, %v7694
        %v7696 = vrot.slane %v7630, 5
        %v7697 = vrot.slane %v7696, 4
        %v7698 = vrot.slane %v6591, 5
        %v7699 = vsel %vm2157, %v7697, %v7698
        %v7700 = vrot.slane %v7698, 4
        %v7701 = vrot.slane %v6635, 5
        %v7702 = vsel %vm2157, %v7700, %v7701
        %v7703 = vrot.slane %v7631, 5
        %v7704 = vrot.slane %v7703, 4
        %v7705 = vrot.slane %v6593, 5
        %v7706 = vsel %vm2157, %v7704, %v7705
        %v7707 = vrot.slane %v7705, 4
        %v7708 = vrot.slane %v6636, 5
        %v7709 = vsel %vm2157, %v7707, %v7708
        %v7710 = vrot.slane %v7632, 5
        %v7711 = vrot.slane %v7710, 4
        %v7712 = vrot.slane %v6595, 5
        %v7713 = vsel %vm2157, %v7711, %v7712
        %v7714 = vrot.slane %v7712, 4
        %v7715 = vrot.slane %v6637, 5
        %v7716 = vsel %vm2157, %v7714, %v7715
        %v7717 = vrot.slane %v7633, 5
        %v7718 = vrot.slane %v7717, 4
        %v7719 = vrot.slane %v6597, 5
        %v7720 = vsel %vm2157, %v7718, %v7719
        %v7721 = vrot.slane %v7719, 4
        %v7722 = vrot.slane %v6638, 5
        %v7723 = vsel %vm2157, %v7721, %v7722
        %v7724 = vrot.slane %v7634, 5
        %v7725 = vrot.slane %v7724, 4
        %v7726 = vrot.slane %v6599, 5
        %v7727 = vsel %vm2157, %v7725, %v7726
        %v7728 = vrot.slane %v7726, 4
        %v7729 = vrot.slane %v6639, 5
        %v7730 = vsel %vm2157, %v7728, %v7729
        %v7731 = vrot.slane %v7635, 5
        %v7732 = vrot.slane %v7731, 4
        %v7733 = vrot.slane %v6601, 5
        %v7734 = vsel %vm2157, %v7732, %v7733
        %v7735 = vrot.slane %v7733, 4
        %v7736 = vrot.slane %v6640, 5
        %v7737 = vsel %vm2157, %v7735, %v7736
        %v7738 = vrot.slane %v7636, 5
        %v7739 = vrot.slane %v7738, 4
        %v7740 = vrot.slane %v6603, 5
        %v7741 = vsel %vm2157, %v7739, %v7740
        %v7742 = vrot.slane %v7740, 4
        %v7743 = vrot.slane %v6641, 5
        %v7744 = vsel %vm2157, %v7742, %v7743
        %v7745 = vrot.slane %v7637, 5
        %v7746 = vrot.slane %v7745, 4
        %v7747 = vrot.slane %v6605, 5
        %v7748 = vsel %vm2157, %v7746, %v7747
        %v7749 = vrot.slane %v7747, 4
        %v7750 = vrot.slane %v6642, 5
        %v7751 = vsel %vm2157, %v7749, %v7750
        %v7752 = vrot.slane %v7638, 5
        %v7753 = vrot.slane %v7752, 4
        %v7754 = vrot.slane %v6607, 5
        %v7755 = vsel %vm2157, %v7753, %v7754
        %v7756 = vrot.slane %v7754, 4
        %v7757 = vrot.slane %v6643, 5
        %v7758 = vsel %vm2157, %v7756, %v7757
        %v7759 = vrot.slane %v7639, 5
        %v7760 = vrot.slane %v7759, 4
        %v7761 = vrot.slane %v6609, 5
        %v7762 = vsel %vm2157, %v7760, %v7761
        %v7763 = vrot.slane %v7761, 4
        %v7764 = vrot.slane %v6644, 5
        %v7765 = vsel %vm2157, %v7763, %v7764
        %v7766 = vrot.slane %v7640, 5
        %v7767 = vrot.slane %v7766, 4
        %v7768 = vrot.slane %v6611, 5
        %v7769 = vsel %vm2157, %v7767, %v7768
        %v7770 = vrot.slane %v7768, 4
        %v7771 = vrot.slane %v6645, 5
        %v7772 = vsel %vm2157, %v7770, %v7771
        %v7773 = vrot.slane %v7641, 5
        %v7774 = vrot.slane %v7773, 4
        %v7775 = vrot.slane %v6613, 5
        %v7776 = vsel %vm2157, %v7774, %v7775
        %v7777 = vrot.slane %v7775, 4
        %v7778 = vrot.slane %v6646, 5
        %v7779 = vsel %vm2157, %v7777, %v7778
        %v7780 = vrot.slane %v7642, 5
        %v7781 = vrot.slane %v7780, 4
        %v7782 = vrot.slane %v6615, 5
        %v7783 = vsel %vm2157, %v7781, %v7782
        %v7784 = vrot.slane %v7782, 4
        %v7785 = vrot.slane %v6647, 5
        %v7786 = vsel %vm2157, %v7784, %v7785
        %s7787 = scalar_lea.vmem [#allocation6], 128
        %v7788 = vld [vmem:[%s7787] sm:$0xf]
        %v7789 = vld [vmem:[%s7787 + $0x4] sm:$0xf]
        %v7790 = vld [vmem:[%s7787 + $0x8] sm:$0xf]
        %v7791 = vld [vmem:[%s7787 + $0xc] sm:$0xf]
        %v7792 = vld [vmem:[%s7787 + $0x10] sm:$0xf]
        %v7793 = vld [vmem:[%s7787 + $0x14] sm:$0xf]
        %v7794 = vld [vmem:[%s7787 + $0x18] sm:$0xf]
        %v7795 = vld [vmem:[%s7787 + $0x1c] sm:$0xf]
        %v7796 = vld [vmem:[%s7787 + $0x20] sm:$0xf]
        %v7797 = vld [vmem:[%s7787 + $0x24] sm:$0xf]
        %v7798 = vld [vmem:[%s7787 + $0x28] sm:$0xf]
        %v7799 = vld [vmem:[%s7787 + $0x2c] sm:$0xf]
        %v7800 = vld [vmem:[%s7787 + $0x30] sm:$0xf]
        %v7801 = vld [vmem:[%s7787 + $0x34] sm:$0xf]
        %v7802 = vld [vmem:[%s7787 + $0x38] sm:$0xf]
        %v7803 = vld [vmem:[%s7787 + $0x3c] sm:$0xf]
        %v7804 = vunpack.c.l.b16 %v7678
        %v7805 = vunpack.c.l.b16 %v7681
        %v7806 = vunpack.c.l.b16 %v7685
        %v7807 = vunpack.c.l.b16 %v7688
        %v7808 = vunpack.c.l.b16 %v7692
        %v7809 = vunpack.c.l.b16 %v7695
        %v7810 = vunpack.c.l.b16 %v7699
        %v7811 = vunpack.c.l.b16 %v7702
        %v7812 = vunpack.c.l.b16 %v7706
        %v7813 = vunpack.c.l.b16 %v7709
        %v7814 = vunpack.c.l.b16 %v7713
        %v7815 = vunpack.c.l.b16 %v7716
        %v7816 = vunpack.c.l.b16 %v7720
        %v7817 = vunpack.c.l.b16 %v7723
        %v7818 = vunpack.c.l.b16 %v7727
        %v7819 = vunpack.c.l.b16 %v7730
        %v7820 = vunpack.c.l.b16 %v7734
        %v7821 = vunpack.c.l.b16 %v7737
        %v7822 = vunpack.c.l.b16 %v7741
        %v7823 = vunpack.c.l.b16 %v7744
        %v7824 = vunpack.c.l.b16 %v7748
        %v7825 = vunpack.c.l.b16 %v7751
        %v7826 = vunpack.c.l.b16 %v7755
        %v7827 = vunpack.c.l.b16 %v7758
        %v7828 = vunpack.c.l.b16 %v7762
        %v7829 = vunpack.c.l.b16 %v7765
        %v7830 = vunpack.c.l.b16 %v7769
        %v7831 = vunpack.c.l.b16 %v7772
        %v7832 = vunpack.c.l.b16 %v7776
        %v7833 = vunpack.c.l.b16 %v7779
        %v7834 = vunpack.c.l.b16 %v7783
        %v7835 = vunpack.c.l.b16 %v7786
        %v7836 = vpack.c.b16 %v7805, %v7804
        %v7837 = vpack.c.b16 %v7807, %v7806
        %v7838 = vpack.c.b16 %v7809, %v7808
        %v7839 = vpack.c.b16 %v7811, %v7810
        %v7840 = vpack.c.b16 %v7813, %v7812
        %v7841 = vpack.c.b16 %v7815, %v7814
        %v7842 = vpack.c.b16 %v7817, %v7816
        %v7843 = vpack.c.b16 %v7819, %v7818
        %v7844 = vpack.c.b16 %v7821, %v7820
        %v7845 = vpack.c.b16 %v7823, %v7822
        %v7846 = vpack.c.b16 %v7825, %v7824
        %v7847 = vpack.c.b16 %v7827, %v7826
        %v7848 = vpack.c.b16 %v7829, %v7828
        %v7849 = vpack.c.b16 %v7831, %v7830
        %v7850 = vpack.c.b16 %v7833, %v7832
        %v7851 = vpack.c.b16 %v7835, %v7834
        %v7884 = vunpack.c.l.b16 %v7788
        %v7885 = vunpack.c.l.b16 %v7789
        %v7886 = vunpack.c.l.b16 %v7790
        %v7887 = vunpack.c.l.b16 %v7791
        %v7888 = vunpack.c.l.b16 %v7792
        %v7889 = vunpack.c.l.b16 %v7793
        %v7890 = vunpack.c.l.b16 %v7794
        %v7891 = vunpack.c.l.b16 %v7795
        %v7892 = vunpack.c.l.b16 %v7796
        %v7893 = vunpack.c.l.b16 %v7797
        %v7894 = vunpack.c.l.b16 %v7798
        %v7895 = vunpack.c.l.b16 %v7799
        %v7896 = vunpack.c.l.b16 %v7800
        %v7897 = vunpack.c.l.b16 %v7801
        %v7898 = vunpack.c.l.b16 %v7802
        %v7899 = vunpack.c.l.b16 %v7803
        %v7900 = vpack.c.b16 %v7885, %v7884
        %v7901 = vpack.c.b16 %v7887, %v7886
        %v7902 = vpack.c.b16 %v7889, %v7888
        %v7903 = vpack.c.b16 %v7891, %v7890
        %v7904 = vpack.c.b16 %v7893, %v7892
        %v7905 = vpack.c.b16 %v7895, %v7894
        %v7906 = vpack.c.b16 %v7897, %v7896
        %v7907 = vpack.c.b16 %v7899, %v7898
        %7916 = vmatprep.subr.bf16.mxu0 0
        %7917 = vmatpush1.bf16.msra.mxu0 %v7907
        %7918 = vmatprep.subr.bf16.mxu0 0
        %7919 = vmatpush1.bf16.msra.mxu0 %v7906
        %7920 = vmatprep.subr.bf16.mxu0 0
        %7921 = vmatpush1.bf16.msra.mxu0 %v7905
        %7922 = vmatprep.subr.bf16.mxu0 0
        %7923 = vmatpush1.bf16.msra.mxu0 %v7904
        %7924 = vmatprep.subr.bf16.mxu0 0
        %7925 = vmatpush1.bf16.msra.mxu0 %v7903
        %7926 = vmatprep.subr.bf16.mxu0 0
        %7927 = vmatpush1.bf16.msra.mxu0 %v7902
        %7928 = vmatprep.subr.bf16.mxu0 0
        %7929 = vmatpush1.bf16.msra.mxu0 %v7901
        %7930 = vmatprep.subr.bf16.mxu0 0
        %7931 = vmatpush1.bf16.msra.mxu0 %v7900
        %7932 = vmatprep.subr.bf16.mxu0 0
        %7933 = vmatpush2.bf16.msra.mxu0 0
        %7934 = vmatprep.subr.bf16.mxu0 0
        %7935 = vmatpush2.bf16.msra.mxu0 0
        %7936 = vmatprep.subr.bf16.mxu0 0
        %7937 = vmatpush2.bf16.msra.mxu0 0
        %7938 = vmatprep.subr.bf16.mxu0 0
        %7939 = vmatpush2.bf16.msra.mxu0 0
        %7940 = vmatprep.subr.bf16.mxu0 0
        %7941 = vmatpush2.bf16.msra.mxu0 0
        %7942 = vmatprep.subr.bf16.mxu0 0
        %7943 = vmatpush2.bf16.msra.mxu0 0
        %7944 = vmatprep.subr.bf16.mxu0 0
        %7945 = vmatpush2.bf16.msra.mxu0 0
        %7946 = vmatprep.subr.bf16.mxu0 0
        %7947 = vmatpush2.bf16.msra.mxu0 0
        %7948 = vmatprep.mubr.bf16.mxu0 0
        %7949 = vmatmul.mubr.bf16.gmra.mxu0 %v7836
        %v7950 = vpop.f32.mrf.mxu0
        %v7951 = vadd.f32 0.0, %v7950
        %v7952 = vpop.f32.mrf.mxu0
        %v7953 = vpop.f32.mrf.mxu0
        %v7954 = vadd.f32 0.0, %v7953
        %v7955 = vpop.f32.mrf.mxu0
        %7956 = vmatprep.mubr.bf16.mxu0 0
        %7957 = vmatmul.mubr.bf16.gmra.mxu0 %v7837
        %v7958 = vpop.f32.mrf.mxu0
        %v7959 = vadd.f32 0.0, %v7958
        %v7960 = vpop.f32.mrf.mxu0
        %v7961 = vpop.f32.mrf.mxu0
        %v7962 = vadd.f32 0.0, %v7961
        %v7963 = vpop.f32.mrf.mxu0
        %7964 = vmatprep.mubr.bf16.mxu0 0
        %7965 = vmatmul.mubr.bf16.gmra.mxu0 %v7838
        %v7966 = vpop.f32.mrf.mxu0
        %v7967 = vadd.f32 0.0, %v7966
        %v7968 = vpop.f32.mrf.mxu0
        %v7969 = vpop.f32.mrf.mxu0
        %v7970 = vadd.f32 0.0, %v7969
        %v7971 = vpop.f32.mrf.mxu0
        %7972 = vmatprep.mubr.bf16.mxu0 0
        %7973 = vmatmul.mubr.bf16.gmra.mxu0 %v7839
        %v7974 = vpop.f32.mrf.mxu0
        %v7975 = vadd.f32 0.0, %v7974
        %v7976 = vpop.f32.mrf.mxu0
        %v7977 = vpop.f32.mrf.mxu0
        %v7978 = vadd.f32 0.0, %v7977
        %v7979 = vpop.f32.mrf.mxu0
        %7980 = vmatprep.mubr.bf16.mxu0 0
        %7981 = vmatmul.mubr.bf16.gmra.mxu0 %v7840
        %v7982 = vpop.f32.mrf.mxu0
        %v7983 = vadd.f32 0.0, %v7982
        %v7984 = vpop.f32.mrf.mxu0
        %v7985 = vpop.f32.mrf.mxu0
        %v7986 = vadd.f32 0.0, %v7985
        %v7987 = vpop.f32.mrf.mxu0
        %7988 = vmatprep.mubr.bf16.mxu0 0
        %7989 = vmatmul.mubr.bf16.gmra.mxu0 %v7841
        %v7990 = vpop.f32.mrf.mxu0
        %v7991 = vadd.f32 0.0, %v7990
        %v7992 = vpop.f32.mrf.mxu0
        %v7993 = vpop.f32.mrf.mxu0
        %v7994 = vadd.f32 0.0, %v7993
        %v7995 = vpop.f32.mrf.mxu0
        %7996 = vmatprep.mubr.bf16.mxu0 0
        %7997 = vmatmul.mubr.bf16.gmra.mxu0 %v7842
        %v7998 = vpop.f32.mrf.mxu0
        %v7999 = vadd.f32 0.0, %v7998
        %v8000 = vpop.f32.mrf.mxu0
        %v8001 = vpop.f32.mrf.mxu0
        %v8002 = vadd.f32 0.0, %v8001
        %v8003 = vpop.f32.mrf.mxu0
        %8004 = vmatprep.mubr.bf16.mxu0 0
        %8005 = vmatmul.mubr.bf16.gmra.mxu0 %v7843
        %v8006 = vpop.f32.mrf.mxu0
        %v8007 = vadd.f32 0.0, %v8006
        %v8008 = vpop.f32.mrf.mxu0
        %v8009 = vpop.f32.mrf.mxu0
        %v8010 = vadd.f32 0.0, %v8009
        %v8011 = vpop.f32.mrf.mxu0
        %8012 = vmatprep.mubr.bf16.mxu0 0
        %8013 = vmatmul.mubr.bf16.gmra.mxu0 %v7844
        %v8014 = vpop.f32.mrf.mxu0
        %v8015 = vadd.f32 0.0, %v8014
        %v8016 = vpop.f32.mrf.mxu0
        %v8017 = vpop.f32.mrf.mxu0
        %v8018 = vadd.f32 0.0, %v8017
        %v8019 = vpop.f32.mrf.mxu0
        %8020 = vmatprep.mubr.bf16.mxu0 0
        %8021 = vmatmul.mubr.bf16.gmra.mxu0 %v7845
        %v8022 = vpop.f32.mrf.mxu0
        %v8023 = vadd.f32 0.0, %v8022
        %v8024 = vpop.f32.mrf.mxu0
        %v8025 = vpop.f32.mrf.mxu0
        %v8026 = vadd.f32 0.0, %v8025
        %v8027 = vpop.f32.mrf.mxu0
        %8028 = vmatprep.mubr.bf16.mxu0 0
        %8029 = vmatmul.mubr.bf16.gmra.mxu0 %v7846
        %v8030 = vpop.f32.mrf.mxu0
        %v8031 = vadd.f32 0.0, %v8030
        %v8032 = vpop.f32.mrf.mxu0
        %v8033 = vpop.f32.mrf.mxu0
        %v8034 = vadd.f32 0.0, %v8033
        %v8035 = vpop.f32.mrf.mxu0
        %8036 = vmatprep.mubr.bf16.mxu0 0
        %8037 = vmatmul.mubr.bf16.gmra.mxu0 %v7847
        %v8038 = vpop.f32.mrf.mxu0
        %v8039 = vadd.f32 0.0, %v8038
        %v8040 = vpop.f32.mrf.mxu0
        %v8041 = vpop.f32.mrf.mxu0
        %v8042 = vadd.f32 0.0, %v8041
        %v8043 = vpop.f32.mrf.mxu0
        %8044 = vmatprep.mubr.bf16.mxu0 0
        %8045 = vmatmul.mubr.bf16.gmra.mxu0 %v7848
        %v8046 = vpop.f32.mrf.mxu0
        %v8047 = vadd.f32 0.0, %v8046
        %v8048 = vpop.f32.mrf.mxu0
        %v8049 = vpop.f32.mrf.mxu0
        %v8050 = vadd.f32 0.0, %v8049
        %v8051 = vpop.f32.mrf.mxu0
        %8052 = vmatprep.mubr.bf16.mxu0 0
        %8053 = vmatmul.mubr.bf16.gmra.mxu0 %v7849
        %v8054 = vpop.f32.mrf.mxu0
        %v8055 = vadd.f32 0.0, %v8054
        %v8056 = vpop.f32.mrf.mxu0
        %v8057 = vpop.f32.mrf.mxu0
        %v8058 = vadd.f32 0.0, %v8057
        %v8059 = vpop.f32.mrf.mxu0
        %8060 = vmatprep.mubr.bf16.mxu0 0
        %8061 = vmatmul.mubr.bf16.gmra.mxu0 %v7850
        %v8062 = vpop.f32.mrf.mxu0
        %v8063 = vadd.f32 0.0, %v8062
        %v8064 = vpop.f32.mrf.mxu0
        %v8065 = vpop.f32.mrf.mxu0
        %v8066 = vadd.f32 0.0, %v8065
        %v8067 = vpop.f32.mrf.mxu0
        %8068 = vmatprep.mubr.bf16.mxu0 0
        %8069 = vmatmul.mubr.bf16.gmra.mxu0 %v7851
        %v8070 = vpop.f32.mrf.mxu0
        %v8071 = vadd.f32 0.0, %v8070
        %v8072 = vpop.f32.mrf.mxu0
        %v8073 = vpop.f32.mrf.mxu0
        %v8074 = vadd.f32 0.0, %v8073
        %v8075 = vpop.f32.mrf.mxu0
        %8076 = vdwg.mxu0
        %v8077 = vadd.f32 %v7501, %v7951
        %v8078 = vadd.f32 %v7504, %v7954
        %v8079 = vadd.f32 %v7509, %v7959
        %v8080 = vadd.f32 %v7512, %v7962
        %v8081 = vadd.f32 %v7517, %v7967
        %v8082 = vadd.f32 %v7520, %v7970
        %v8083 = vadd.f32 %v7525, %v7975
        %v8084 = vadd.f32 %v7528, %v7978
        %v8085 = vadd.f32 %v7533, %v7983
        %v8086 = vadd.f32 %v7536, %v7986
        %v8087 = vadd.f32 %v7541, %v7991
        %v8088 = vadd.f32 %v7544, %v7994
        %v8089 = vadd.f32 %v7549, %v7999
        %v8090 = vadd.f32 %v7552, %v8002
        %v8091 = vadd.f32 %v7557, %v8007
        %v8092 = vadd.f32 %v7560, %v8010
        %v8093 = vadd.f32 %v7565, %v8015
        %v8094 = vadd.f32 %v7568, %v8018
        %v8095 = vadd.f32 %v7573, %v8023
        %v8096 = vadd.f32 %v7576, %v8026
        %v8097 = vadd.f32 %v7581, %v8031
        %v8098 = vadd.f32 %v7584, %v8034
        %v8099 = vadd.f32 %v7589, %v8039
        %v8100 = vadd.f32 %v7592, %v8042
        %v8101 = vadd.f32 %v7597, %v8047
        %v8102 = vadd.f32 %v7600, %v8050
        %v8103 = vadd.f32 %v7605, %v8055
        %v8104 = vadd.f32 %v7608, %v8058
        %v8105 = vadd.f32 %v7613, %v8063
        %v8106 = vadd.f32 %v7616, %v8066
        %v8107 = vadd.f32 %v7621, %v8071
        %v8108 = vadd.f32 %v7624, %v8074
        %v8109 = vld [vmem:[%s6471] sm:$0xf]
        %v8110 = vld [vmem:[%s6471 + $0x4] sm:$0xf]
        %v8111 = vld [vmem:[%s6471 + $0xc] sm:$0xf]
        %v8112 = vld [vmem:[%s6471 + $0x10] sm:$0xf]
        %v8113 = vld [vmem:[%s6471 + $0x18] sm:$0xf]
        %v8114 = vld [vmem:[%s6471 + $0x1c] sm:$0xf]
        %v8115 = vld [vmem:[%s6471 + $0x24] sm:$0xf]
        %v8116 = vld [vmem:[%s6471 + $0x28] sm:$0xf]
        %v8117 = vld [vmem:[%s6471 + $0x30] sm:$0xf]
        %v8118 = vld [vmem:[%s6471 + $0x34] sm:$0xf]
        %v8119 = vld [vmem:[%s6471 + $0x3c] sm:$0xf]
        %v8120 = vld [vmem:[%s6471 + $0x40] sm:$0xf]
        %v8121 = vld [vmem:[%s6471 + $0x48] sm:$0xf]
        %v8122 = vld [vmem:[%s6471 + $0x4c] sm:$0xf]
        %v8123 = vld [vmem:[%s6471 + $0x54] sm:$0xf]
        %v8124 = vld [vmem:[%s6471 + $0x58] sm:$0xf]
        %v8125 = vld [vmem:[%s6471 + $0x60] sm:$0xf]
        %v8126 = vld [vmem:[%s6471 + $0x64] sm:$0xf]
        %v8127 = vld [vmem:[%s6471 + $0x6c] sm:$0xf]
        %v8128 = vld [vmem:[%s6471 + $0x70] sm:$0xf]
        %v8129 = vld [vmem:[%s6471 + $0x78] sm:$0xf]
        %v8130 = vld [vmem:[%s6471 + $0x7c] sm:$0xf]
        %v8131 = vld [vmem:[%s6471 + $0x84] sm:$0xf]
        %v8132 = vld [vmem:[%s6471 + $0x88] sm:$0xf]
        %v8133 = vld [vmem:[%s6471 + $0x90] sm:$0xf]
        %v8134 = vld [vmem:[%s6471 + $0x94] sm:$0xf]
        %v8135 = vld [vmem:[%s6471 + $0x9c] sm:$0xf]
        %v8136 = vld [vmem:[%s6471 + $0xa0] sm:$0xf]
        %v8137 = vld [vmem:[%s6471 + $0xa8] sm:$0xf]
        %v8138 = vld [vmem:[%s6471 + $0xac] sm:$0xf]
        %v8139 = vld [vmem:[%s6471 + $0xb4] sm:$0xf]
        %v8140 = vld [vmem:[%s6471 + $0xb8] sm:$0xf]
        %s8141 = scalar_lea.vmem [#allocation6], 192
        %v8142 = vld [vmem:[%s8141] sm:$0xf]
        %v8143 = vld [vmem:[%s8141 + $0x4] sm:$0xf]
        %v8144 = vld [vmem:[%s8141 + $0x8] sm:$0xf]
        %v8145 = vld [vmem:[%s8141 + $0xc] sm:$0xf]
        %v8146 = vld [vmem:[%s8141 + $0x10] sm:$0xf]
        %v8147 = vld [vmem:[%s8141 + $0x14] sm:$0xf]
        %v8148 = vld [vmem:[%s8141 + $0x18] sm:$0xf]
        %v8149 = vld [vmem:[%s8141 + $0x1c] sm:$0xf]
        %v8150 = vld [vmem:[%s8141 + $0x20] sm:$0xf]
        %v8151 = vld [vmem:[%s8141 + $0x24] sm:$0xf]
        %v8152 = vld [vmem:[%s8141 + $0x28] sm:$0xf]
        %v8153 = vld [vmem:[%s8141 + $0x2c] sm:$0xf]
        %v8154 = vld [vmem:[%s8141 + $0x30] sm:$0xf]
        %v8155 = vld [vmem:[%s8141 + $0x34] sm:$0xf]
        %v8156 = vld [vmem:[%s8141 + $0x38] sm:$0xf]
        %v8157 = vld [vmem:[%s8141 + $0x3c] sm:$0xf]
        %v8190 = vunpack.c.l.b16 %v8109
        %v8191 = vunpack.c.l.b16 %v8110
        %v8192 = vunpack.c.l.b16 %v8111
        %v8193 = vunpack.c.l.b16 %v8112
        %v8194 = vunpack.c.l.b16 %v8113
        %v8195 = vunpack.c.l.b16 %v8114
        %v8196 = vunpack.c.l.b16 %v8115
        %v8197 = vunpack.c.l.b16 %v8116
        %v8198 = vunpack.c.l.b16 %v8117
        %v8199 = vunpack.c.l.b16 %v8118
        %v8200 = vunpack.c.l.b16 %v8119
        %v8201 = vunpack.c.l.b16 %v8120
        %v8202 = vunpack.c.l.b16 %v8121
        %v8203 = vunpack.c.l.b16 %v8122
        %v8204 = vunpack.c.l.b16 %v8123
        %v8205 = vunpack.c.l.b16 %v8124
        %v8206 = vunpack.c.l.b16 %v8125
        %v8207 = vunpack.c.l.b16 %v8126
        %v8208 = vunpack.c.l.b16 %v8127
        %v8209 = vunpack.c.l.b16 %v8128
        %v8210 = vunpack.c.l.b16 %v8129
        %v8211 = vunpack.c.l.b16 %v8130
        %v8212 = vunpack.c.l.b16 %v8131
        %v8213 = vunpack.c.l.b16 %v8132
        %v8214 = vunpack.c.l.b16 %v8133
        %v8215 = vunpack.c.l.b16 %v8134
        %v8216 = vunpack.c.l.b16 %v8135
        %v8217 = vunpack.c.l.b16 %v8136
        %v8218 = vunpack.c.l.b16 %v8137
        %v8219 = vunpack.c.l.b16 %v8138
        %v8220 = vunpack.c.l.b16 %v8139
        %v8221 = vunpack.c.l.b16 %v8140
        %v8222 = vpack.c.b16 %v8191, %v8190
        %v8223 = vpack.c.b16 %v8193, %v8192
        %v8224 = vpack.c.b16 %v8195, %v8194
        %v8225 = vpack.c.b16 %v8197, %v8196
        %v8226 = vpack.c.b16 %v8199, %v8198
        %v8227 = vpack.c.b16 %v8201, %v8200
        %v8228 = vpack.c.b16 %v8203, %v8202
        %v8229 = vpack.c.b16 %v8205, %v8204
        %v8230 = vpack.c.b16 %v8207, %v8206
        %v8231 = vpack.c.b16 %v8209, %v8208
        %v8232 = vpack.c.b16 %v8211, %v8210
        %v8233 = vpack.c.b16 %v8213, %v8212
        %v8234 = vpack.c.b16 %v8215, %v8214
        %v8235 = vpack.c.b16 %v8217, %v8216
        %v8236 = vpack.c.b16 %v8219, %v8218
        %v8237 = vpack.c.b16 %v8221, %v8220
        %v8270 = vunpack.c.l.b16 %v8142
        %v8271 = vunpack.c.l.b16 %v8143
        %v8272 = vunpack.c.l.b16 %v8144
        %v8273 = vunpack.c.l.b16 %v8145
        %v8274 = vunpack.c.l.b16 %v8146
        %v8275 = vunpack.c.l.b16 %v8147
        %v8276 = vunpack.c.l.b16 %v8148
        %v8277 = vunpack.c.l.b16 %v8149
        %v8278 = vunpack.c.l.b16 %v8150
        %v8279 = vunpack.c.l.b16 %v8151
        %v8280 = vunpack.c.l.b16 %v8152
        %v8281 = vunpack.c.l.b16 %v8153
        %v8282 = vunpack.c.l.b16 %v8154
        %v8283 = vunpack.c.l.b16 %v8155
        %v8284 = vunpack.c.l.b16 %v8156
        %v8285 = vunpack.c.l.b16 %v8157
        %v8286 = vpack.c.b16 %v8271, %v8270
        %v8287 = vpack.c.b16 %v8273, %v8272
        %v8288 = vpack.c.b16 %v8275, %v8274
        %v8289 = vpack.c.b16 %v8277, %v8276
        %v8290 = vpack.c.b16 %v8279, %v8278
        %v8291 = vpack.c.b16 %v8281, %v8280
        %v8292 = vpack.c.b16 %v8283, %v8282
        %v8293 = vpack.c.b16 %v8285, %v8284
        %8302 = vmatprep.subr.bf16.mxu0 0
        %8303 = vmatpush1.bf16.msra.mxu0 %v8293
        %8304 = vmatprep.subr.bf16.mxu0 0
        %8305 = vmatpush1.bf16.msra.mxu0 %v8292
        %8306 = vmatprep.subr.bf16.mxu0 0
        %8307 = vmatpush1.bf16.msra.mxu0 %v8291
        %8308 = vmatprep.subr.bf16.mxu0 0
        %8309 = vmatpush1.bf16.msra.mxu0 %v8290
        %8310 = vmatprep.subr.bf16.mxu0 0
        %8311 = vmatpush1.bf16.msra.mxu0 %v8289
        %8312 = vmatprep.subr.bf16.mxu0 0
        %8313 = vmatpush1.bf16.msra.mxu0 %v8288
        %8314 = vmatprep.subr.bf16.mxu0 0
        %8315 = vmatpush1.bf16.msra.mxu0 %v8287
        %8316 = vmatprep.subr.bf16.mxu0 0
        %8317 = vmatpush1.bf16.msra.mxu0 %v8286
        %8318 = vmatprep.subr.bf16.mxu0 0
        %8319 = vmatpush2.bf16.msra.mxu0 0
        %8320 = vmatprep.subr.bf16.mxu0 0
        %8321 = vmatpush2.bf16.msra.mxu0 0
        %8322 = vmatprep.subr.bf16.mxu0 0
        %8323 = vmatpush2.bf16.msra.mxu0 0
        %8324 = vmatprep.subr.bf16.mxu0 0
        %8325 = vmatpush2.bf16.msra.mxu0 0
        %8326 = vmatprep.subr.bf16.mxu0 0
        %8327 = vmatpush2.bf16.msra.mxu0 0
        %8328 = vmatprep.subr.bf16.mxu0 0
        %8329 = vmatpush2.bf16.msra.mxu0 0
        %8330 = vmatprep.subr.bf16.mxu0 0
        %8331 = vmatpush2.bf16.msra.mxu0 0
        %8332 = vmatprep.subr.bf16.mxu0 0
        %8333 = vmatpush2.bf16.msra.mxu0 0
        %8334 = vmatprep.mubr.bf16.mxu0 0
        %8335 = vmatmul.mubr.bf16.gmra.mxu0 %v8222
        %v8336 = vpop.f32.mrf.mxu0
        %v8337 = vadd.f32 0.0, %v8336
        %v8338 = vpop.f32.mrf.mxu0
        %v8339 = vpop.f32.mrf.mxu0
        %v8340 = vadd.f32 0.0, %v8339
        %v8341 = vpop.f32.mrf.mxu0
        %8342 = vmatprep.mubr.bf16.mxu0 0
        %8343 = vmatmul.mubr.bf16.gmra.mxu0 %v8223
        %v8344 = vpop.f32.mrf.mxu0
        %v8345 = vadd.f32 0.0, %v8344
        %v8346 = vpop.f32.mrf.mxu0
        %v8347 = vpop.f32.mrf.mxu0
        %v8348 = vadd.f32 0.0, %v8347
        %v8349 = vpop.f32.mrf.mxu0
        %8350 = vmatprep.mubr.bf16.mxu0 0
        %8351 = vmatmul.mubr.bf16.gmra.mxu0 %v8224
        %v8352 = vpop.f32.mrf.mxu0
        %v8353 = vadd.f32 0.0, %v8352
        %v8354 = vpop.f32.mrf.mxu0
        %v8355 = vpop.f32.mrf.mxu0
        %v8356 = vadd.f32 0.0, %v8355
        %v8357 = vpop.f32.mrf.mxu0
        %8358 = vmatprep.mubr.bf16.mxu0 0
        %8359 = vmatmul.mubr.bf16.gmra.mxu0 %v8225
        %v8360 = vpop.f32.mrf.mxu0
        %v8361 = vadd.f32 0.0, %v8360
        %v8362 = vpop.f32.mrf.mxu0
        %v8363 = vpop.f32.mrf.mxu0
        %v8364 = vadd.f32 0.0, %v8363
        %v8365 = vpop.f32.mrf.mxu0
        %8366 = vmatprep.mubr.bf16.mxu0 0
        %8367 = vmatmul.mubr.bf16.gmra.mxu0 %v8226
        %v8368 = vpop.f32.mrf.mxu0
        %v8369 = vadd.f32 0.0, %v8368
        %v8370 = vpop.f32.mrf.mxu0
        %v8371 = vpop.f32.mrf.mxu0
        %v8372 = vadd.f32 0.0, %v8371
        %v8373 = vpop.f32.mrf.mxu0
        %8374 = vmatprep.mubr.bf16.mxu0 0
        %8375 = vmatmul.mubr.bf16.gmra.mxu0 %v8227
        %v8376 = vpop.f32.mrf.mxu0
        %v8377 = vadd.f32 0.0, %v8376
        %v8378 = vpop.f32.mrf.mxu0
        %v8379 = vpop.f32.mrf.mxu0
        %v8380 = vadd.f32 0.0, %v8379
        %v8381 = vpop.f32.mrf.mxu0
        %8382 = vmatprep.mubr.bf16.mxu0 0
        %8383 = vmatmul.mubr.bf16.gmra.mxu0 %v8228
        %v8384 = vpop.f32.mrf.mxu0
        %v8385 = vadd.f32 0.0, %v8384
        %v8386 = vpop.f32.mrf.mxu0
        %v8387 = vpop.f32.mrf.mxu0
        %v8388 = vadd.f32 0.0, %v8387
        %v8389 = vpop.f32.mrf.mxu0
        %8390 = vmatprep.mubr.bf16.mxu0 0
        %8391 = vmatmul.mubr.bf16.gmra.mxu0 %v8229
        %v8392 = vpop.f32.mrf.mxu0
        %v8393 = vadd.f32 0.0, %v8392
        %v8394 = vpop.f32.mrf.mxu0
        %v8395 = vpop.f32.mrf.mxu0
        %v8396 = vadd.f32 0.0, %v8395
        %v8397 = vpop.f32.mrf.mxu0
        %8398 = vmatprep.mubr.bf16.mxu0 0
        %8399 = vmatmul.mubr.bf16.gmra.mxu0 %v8230
        %v8400 = vpop.f32.mrf.mxu0
        %v8401 = vadd.f32 0.0, %v8400
        %v8402 = vpop.f32.mrf.mxu0
        %v8403 = vpop.f32.mrf.mxu0
        %v8404 = vadd.f32 0.0, %v8403
        %v8405 = vpop.f32.mrf.mxu0
        %8406 = vmatprep.mubr.bf16.mxu0 0
        %8407 = vmatmul.mubr.bf16.gmra.mxu0 %v8231
        %v8408 = vpop.f32.mrf.mxu0
        %v8409 = vadd.f32 0.0, %v8408
        %v8410 = vpop.f32.mrf.mxu0
        %v8411 = vpop.f32.mrf.mxu0
        %v8412 = vadd.f32 0.0, %v8411
        %v8413 = vpop.f32.mrf.mxu0
        %8414 = vmatprep.mubr.bf16.mxu0 0
        %8415 = vmatmul.mubr.bf16.gmra.mxu0 %v8232
        %v8416 = vpop.f32.mrf.mxu0
        %v8417 = vadd.f32 0.0, %v8416
        %v8418 = vpop.f32.mrf.mxu0
        %v8419 = vpop.f32.mrf.mxu0
        %v8420 = vadd.f32 0.0, %v8419
        %v8421 = vpop.f32.mrf.mxu0
        %8422 = vmatprep.mubr.bf16.mxu0 0
        %8423 = vmatmul.mubr.bf16.gmra.mxu0 %v8233
        %v8424 = vpop.f32.mrf.mxu0
        %v8425 = vadd.f32 0.0, %v8424
        %v8426 = vpop.f32.mrf.mxu0
        %v8427 = vpop.f32.mrf.mxu0
        %v8428 = vadd.f32 0.0, %v8427
        %v8429 = vpop.f32.mrf.mxu0
        %8430 = vmatprep.mubr.bf16.mxu0 0
        %8431 = vmatmul.mubr.bf16.gmra.mxu0 %v8234
        %v8432 = vpop.f32.mrf.mxu0
        %v8433 = vadd.f32 0.0, %v8432
        %v8434 = vpop.f32.mrf.mxu0
        %v8435 = vpop.f32.mrf.mxu0
        %v8436 = vadd.f32 0.0, %v8435
        %v8437 = vpop.f32.mrf.mxu0
        %8438 = vmatprep.mubr.bf16.mxu0 0
        %8439 = vmatmul.mubr.bf16.gmra.mxu0 %v8235
        %v8440 = vpop.f32.mrf.mxu0
        %v8441 = vadd.f32 0.0, %v8440
        %v8442 = vpop.f32.mrf.mxu0
        %v8443 = vpop.f32.mrf.mxu0
        %v8444 = vadd.f32 0.0, %v8443
        %v8445 = vpop.f32.mrf.mxu0
        %8446 = vmatprep.mubr.bf16.mxu0 0
        %8447 = vmatmul.mubr.bf16.gmra.mxu0 %v8236
        %v8448 = vpop.f32.mrf.mxu0
        %v8449 = vadd.f32 0.0, %v8448
        %v8450 = vpop.f32.mrf.mxu0
        %v8451 = vpop.f32.mrf.mxu0
        %v8452 = vadd.f32 0.0, %v8451
        %v8453 = vpop.f32.mrf.mxu0
        %8454 = vmatprep.mubr.bf16.mxu0 0
        %8455 = vmatmul.mubr.bf16.gmra.mxu0 %v8237
        %v8456 = vpop.f32.mrf.mxu0
        %v8457 = vadd.f32 0.0, %v8456
        %v8458 = vpop.f32.mrf.mxu0
        %v8459 = vpop.f32.mrf.mxu0
        %v8460 = vadd.f32 0.0, %v8459
        %v8461 = vpop.f32.mrf.mxu0
        %8462 = vdwg.mxu0
        %v8463 = vadd.f32 %v8077, %v8337
        %v8464 = vadd.f32 %v8078, %v8340
        %v8465 = vadd.f32 %v8079, %v8345
        %v8466 = vadd.f32 %v8080, %v8348
        %v8467 = vadd.f32 %v8081, %v8353
        %v8468 = vadd.f32 %v8082, %v8356
        %v8469 = vadd.f32 %v8083, %v8361
        %v8470 = vadd.f32 %v8084, %v8364
        %v8471 = vadd.f32 %v8085, %v8369
        %v8472 = vadd.f32 %v8086, %v8372
        %v8473 = vadd.f32 %v8087, %v8377
        %v8474 = vadd.f32 %v8088, %v8380
        %v8475 = vadd.f32 %v8089, %v8385
        %v8476 = vadd.f32 %v8090, %v8388
        %v8477 = vadd.f32 %v8091, %v8393
        %v8478 = vadd.f32 %v8092, %v8396
        %v8479 = vadd.f32 %v8093, %v8401
        %v8480 = vadd.f32 %v8094, %v8404
        %v8481 = vadd.f32 %v8095, %v8409
        %v8482 = vadd.f32 %v8096, %v8412
        %v8483 = vadd.f32 %v8097, %v8417
        %v8484 = vadd.f32 %v8098, %v8420
        %v8485 = vadd.f32 %v8099, %v8425
        %v8486 = vadd.f32 %v8100, %v8428
        %v8487 = vadd.f32 %v8101, %v8433
        %v8488 = vadd.f32 %v8102, %v8436
        %v8489 = vadd.f32 %v8103, %v8441
        %v8490 = vadd.f32 %v8104, %v8444
        %v8491 = vadd.f32 %v8105, %v8449
        %v8492 = vadd.f32 %v8106, %v8452
        %v8493 = vadd.f32 %v8107, %v8457
        %v8494 = vadd.f32 %v8108, %v8460
        %v8495 = vld [vmem:[%s6471] sm:$0xf]
        %v8496 = vld [vmem:[%s6471 + $0x4] sm:$0xf]
        %v8497 = vld [vmem:[%s6471 + $0x8] sm:$0x1]
        %v8498 = vld [vmem:[%s6471 + $0xc] sm:$0xf]
        %v8499 = vld [vmem:[%s6471 + $0x10] sm:$0xf]
        %v8500 = vld [vmem:[%s6471 + $0x14] sm:$0x1]
        %v8501 = vld [vmem:[%s6471 + $0x18] sm:$0xf]
        %v8502 = vld [vmem:[%s6471 + $0x1c] sm:$0xf]
        %v8503 = vld [vmem:[%s6471 + $0x20] sm:$0x1]
        %v8504 = vld [vmem:[%s6471 + $0x24] sm:$0xf]
        %v8505 = vld [vmem:[%s6471 + $0x28] sm:$0xf]
        %v8506 = vld [vmem:[%s6471 + $0x2c] sm:$0x1]
        %v8507 = vld [vmem:[%s6471 + $0x30] sm:$0xf]
        %v8508 = vld [vmem:[%s6471 + $0x34] sm:$0xf]
        %v8509 = vld [vmem:[%s6471 + $0x38] sm:$0x1]
        %v8510 = vld [vmem:[%s6471 + $0x3c] sm:$0xf]
        %v8511 = vld [vmem:[%s6471 + $0x40] sm:$0xf]
        %v8512 = vld [vmem:[%s6471 + $0x44] sm:$0x1]
        %v8513 = vld [vmem:[%s6471 + $0x48] sm:$0xf]
        %v8514 = vld [vmem:[%s6471 + $0x4c] sm:$0xf]
        %v8515 = vld [vmem:[%s6471 + $0x50] sm:$0x1]
        %v8516 = vld [vmem:[%s6471 + $0x54] sm:$0xf]
        %v8517 = vld [vmem:[%s6471 + $0x58] sm:$0xf]
        %v8518 = vld [vmem:[%s6471 + $0x5c] sm:$0x1]
        %v8519 = vld [vmem:[%s6471 + $0x60] sm:$0xf]
        %v8520 = vld [vmem:[%s6471 + $0x64] sm:$0xf]
        %v8521 = vld [vmem:[%s6471 + $0x68] sm:$0x1]
        %v8522 = vld [vmem:[%s6471 + $0x6c] sm:$0xf]
        %v8523 = vld [vmem:[%s6471 + $0x70] sm:$0xf]
        %v8524 = vld [vmem:[%s6471 + $0x74] sm:$0x1]
        %v8525 = vld [vmem:[%s6471 + $0x78] sm:$0xf]
        %v8526 = vld [vmem:[%s6471 + $0x7c] sm:$0xf]
        %v8527 = vld [vmem:[%s6471 + $0x80] sm:$0x1]
        %v8528 = vld [vmem:[%s6471 + $0x84] sm:$0xf]
        %v8529 = vld [vmem:[%s6471 + $0x88] sm:$0xf]
        %v8530 = vld [vmem:[%s6471 + $0x8c] sm:$0x1]
        %v8531 = vld [vmem:[%s6471 + $0x90] sm:$0xf]
        %v8532 = vld [vmem:[%s6471 + $0x94] sm:$0xf]
        %v8533 = vld [vmem:[%s6471 + $0x98] sm:$0x1]
        %v8534 = vld [vmem:[%s6471 + $0x9c] sm:$0xf]
        %v8535 = vld [vmem:[%s6471 + $0xa0] sm:$0xf]
        %v8536 = vld [vmem:[%s6471 + $0xa4] sm:$0x1]
        %v8537 = vld [vmem:[%s6471 + $0xa8] sm:$0xf]
        %v8538 = vld [vmem:[%s6471 + $0xac] sm:$0xf]
        %v8539 = vld [vmem:[%s6471 + $0xb0] sm:$0x1]
        %v8540 = vld [vmem:[%s6471 + $0xb4] sm:$0xf]
        %v8541 = vld [vmem:[%s6471 + $0xb8] sm:$0xf]
        %v8542 = vld [vmem:[%s6471 + $0xbc] sm:$0x1]
        %v8544 = vshrl.u32 %v8495, 16
        %v8546 = vrot.slane %v8544, 4
        %v8547 = vshll.u32 %v8495, 16
        %v8549 = vrot.slane %v8547, 5
        %v8550 = vor.u32 %v8546, %v8549
        %v8551 = vrot.slane %v8550, 4
        %v8553 = vshll.u32 %v8496, 16
        %v8555 = vrot.slane %v8553, 5
        %v8556 = vsel %vm1127, %v8551, %v8555
        %v8557 = vshrl.u32 %v8496, 16
        %v8559 = vrot.slane %v8557, 4
        %v8560 = vor.u32 %v8559, %v8555
        %v8561 = vrot.slane %v8560, 4
        %v8563 = vshll.u32 %v8497, 16
        %v8565 = vrot.slane %v8563, 5
        %v8566 = vsel %vm1127, %v8561, %v8565
        %v8568 = vshrl.u32 %v8498, 16
        %v8570 = vrot.slane %v8568, 4
        %v8571 = vshll.u32 %v8498, 16
        %v8573 = vrot.slane %v8571, 5
        %v8574 = vor.u32 %v8570, %v8573
        %v8575 = vrot.slane %v8574, 4
        %v8577 = vshll.u32 %v8499, 16
        %v8579 = vrot.slane %v8577, 5
        %v8580 = vsel %vm1127, %v8575, %v8579
        %v8581 = vshrl.u32 %v8499, 16
        %v8583 = vrot.slane %v8581, 4
        %v8584 = vor.u32 %v8583, %v8579
        %v8585 = vrot.slane %v8584, 4
        %v8587 = vshll.u32 %v8500, 16
        %v8589 = vrot.slane %v8587, 5
        %v8590 = vsel %vm1127, %v8585, %v8589
        %v8592 = vshrl.u32 %v8501, 16
        %v8594 = vrot.slane %v8592, 4
        %v8595 = vshll.u32 %v8501, 16
        %v8597 = vrot.slane %v8595, 5
        %v8598 = vor.u32 %v8594, %v8597
        %v8599 = vrot.slane %v8598, 4
        %v8601 = vshll.u32 %v8502, 16
        %v8603 = vrot.slane %v8601, 5
        %v8604 = vsel %vm1127, %v8599, %v8603
        %v8605 = vshrl.u32 %v8502, 16
        %v8607 = vrot.slane %v8605, 4
        %v8608 = vor.u32 %v8607, %v8603
        %v8609 = vrot.slane %v8608, 4
        %v8611 = vshll.u32 %v8503, 16
        %v8613 = vrot.slane %v8611, 5
        %v8614 = vsel %vm1127, %v8609, %v8613
        %v8616 = vshrl.u32 %v8504, 16
        %v8618 = vrot.slane %v8616, 4
        %v8619 = vshll.u32 %v8504, 16
        %v8621 = vrot.slane %v8619, 5
        %v8622 = vor.u32 %v8618, %v8621
        %v8623 = vrot.slane %v8622, 4
        %v8625 = vshll.u32 %v8505, 16
        %v8627 = vrot.slane %v8625, 5
        %v8628 = vsel %vm1127, %v8623, %v8627
        %v8629 = vshrl.u32 %v8505, 16
        %v8631 = vrot.slane %v8629, 4
        %v8632 = vor.u32 %v8631, %v8627
        %v8633 = vrot.slane %v8632, 4
        %v8635 = vshll.u32 %v8506, 16
        %v8637 = vrot.slane %v8635, 5
        %v8638 = vsel %vm1127, %v8633, %v8637
        %v8640 = vshrl.u32 %v8507, 16
        %v8642 = vrot.slane %v8640, 4
        %v8643 = vshll.u32 %v8507, 16
        %v8645 = vrot.slane %v8643, 5
        %v8646 = vor.u32 %v8642, %v8645
        %v8647 = vrot.slane %v8646, 4
        %v8649 = vshll.u32 %v8508, 16
        %v8651 = vrot.slane %v8649, 5
        %v8652 = vsel %vm1127, %v8647, %v8651
        %v8653 = vshrl.u32 %v8508, 16
        %v8655 = vrot.slane %v8653, 4
        %v8656 = vor.u32 %v8655, %v8651
        %v8657 = vrot.slane %v8656, 4
        %v8659 = vshll.u32 %v8509, 16
        %v8661 = vrot.slane %v8659, 5
        %v8662 = vsel %vm1127, %v8657, %v8661
        %v8664 = vshrl.u32 %v8510, 16
        %v8666 = vrot.slane %v8664, 4
        %v8667 = vshll.u32 %v8510, 16
        %v8669 = vrot.slane %v8667, 5
        %v8670 = vor.u32 %v8666, %v8669
        %v8671 = vrot.slane %v8670, 4
        %v8673 = vshll.u32 %v8511, 16
        %v8675 = vrot.slane %v8673, 5
        %v8676 = vsel %vm1127, %v8671, %v8675
        %v8677 = vshrl.u32 %v8511, 16
        %v8679 = vrot.slane %v8677, 4
        %v8680 = vor.u32 %v8679, %v8675
        %v8681 = vrot.slane %v8680, 4
        %v8683 = vshll.u32 %v8512, 16
        %v8685 = vrot.slane %v8683, 5
        %v8686 = vsel %vm1127, %v8681, %v8685
        %v8688 = vshrl.u32 %v8513, 16
        %v8690 = vrot.slane %v8688, 4
        %v8691 = vshll.u32 %v8513, 16
        %v8693 = vrot.slane %v8691, 5
        %v8694 = vor.u32 %v8690, %v8693
        %v8695 = vrot.slane %v8694, 4
        %v8697 = vshll.u32 %v8514, 16
        %v8699 = vrot.slane %v8697, 5
        %v8700 = vsel %vm1127, %v8695, %v8699
        %v8701 = vshrl.u32 %v8514, 16
        %v8703 = vrot.slane %v8701, 4
        %v8704 = vor.u32 %v8703, %v8699
        %v8705 = vrot.slane %v8704, 4
        %v8707 = vshll.u32 %v8515, 16
        %v8709 = vrot.slane %v8707, 5
        %v8710 = vsel %vm1127, %v8705, %v8709
        %v8712 = vshrl.u32 %v8516, 16
        %v8714 = vrot.slane %v8712, 4
        %v8715 = vshll.u32 %v8516, 16
        %v8717 = vrot.slane %v8715, 5
        %v8718 = vor.u32 %v8714, %v8717
        %v8719 = vrot.slane %v8718, 4
        %v8721 = vshll.u32 %v8517, 16
        %v8723 = vrot.slane %v8721, 5
        %v8724 = vsel %vm1127, %v8719, %v8723
        %v8725 = vshrl.u32 %v8517, 16
        %v8727 = vrot.slane %v8725, 4
        %v8728 = vor.u32 %v8727, %v8723
        %v8729 = vrot.slane %v8728, 4
        %v8731 = vshll.u32 %v8518, 16
        %v8733 = vrot.slane %v8731, 5
        %v8734 = vsel %vm1127, %v8729, %v8733
        %v8736 = vshrl.u32 %v8519, 16
        %v8738 = vrot.slane %v8736, 4
        %v8739 = vshll.u32 %v8519, 16
        %v8741 = vrot.slane %v8739, 5
        %v8742 = vor.u32 %v8738, %v8741
        %v8743 = vrot.slane %v8742, 4
        %v8745 = vshll.u32 %v8520, 16
        %v8747 = vrot.slane %v8745, 5
        %v8748 = vsel %vm1127, %v8743, %v8747
        %v8749 = vshrl.u32 %v8520, 16
        %v8751 = vrot.slane %v8749, 4
        %v8752 = vor.u32 %v8751, %v8747
        %v8753 = vrot.slane %v8752, 4
        %v8755 = vshll.u32 %v8521, 16
        %v8757 = vrot.slane %v8755, 5
        %v8758 = vsel %vm1127, %v8753, %v8757
        %v8760 = vshrl.u32 %v8522, 16
        %v8762 = vrot.slane %v8760, 4
        %v8763 = vshll.u32 %v8522, 16
        %v8765 = vrot.slane %v8763, 5
        %v8766 = vor.u32 %v8762, %v8765
        %v8767 = vrot.slane %v8766, 4
        %v8769 = vshll.u32 %v8523, 16
        %v8771 = vrot.slane %v8769, 5
        %v8772 = vsel %vm1127, %v8767, %v8771
        %v8773 = vshrl.u32 %v8523, 16
        %v8775 = vrot.slane %v8773, 4
        %v8776 = vor.u32 %v8775, %v8771
        %v8777 = vrot.slane %v8776, 4
        %v8779 = vshll.u32 %v8524, 16
        %v8781 = vrot.slane %v8779, 5
        %v8782 = vsel %vm1127, %v8777, %v8781
        %v8784 = vshrl.u32 %v8525, 16
        %v8786 = vrot.slane %v8784, 4
        %v8787 = vshll.u32 %v8525, 16
        %v8789 = vrot.slane %v8787, 5
        %v8790 = vor.u32 %v8786, %v8789
        %v8791 = vrot.slane %v8790, 4
        %v8793 = vshll.u32 %v8526, 16
        %v8795 = vrot.slane %v8793, 5
        %v8796 = vsel %vm1127, %v8791, %v8795
        %v8797 = vshrl.u32 %v8526, 16
        %v8799 = vrot.slane %v8797, 4
        %v8800 = vor.u32 %v8799, %v8795
        %v8801 = vrot.slane %v8800, 4
        %v8803 = vshll.u32 %v8527, 16
        %v8805 = vrot.slane %v8803, 5
        %v8806 = vsel %vm1127, %v8801, %v8805
        %v8808 = vshrl.u32 %v8528, 16
        %v8810 = vrot.slane %v8808, 4
        %v8811 = vshll.u32 %v8528, 16
        %v8813 = vrot.slane %v8811, 5
        %v8814 = vor.u32 %v8810, %v8813
        %v8815 = vrot.slane %v8814, 4
        %v8817 = vshll.u32 %v8529, 16
        %v8819 = vrot.slane %v8817, 5
        %v8820 = vsel %vm1127, %v8815, %v8819
        %v8821 = vshrl.u32 %v8529, 16
        %v8823 = vrot.slane %v8821, 4
        %v8824 = vor.u32 %v8823, %v8819
        %v8825 = vrot.slane %v8824, 4
        %v8827 = vshll.u32 %v8530, 16
        %v8829 = vrot.slane %v8827, 5
        %v8830 = vsel %vm1127, %v8825, %v8829
        %v8832 = vshrl.u32 %v8531, 16
        %v8834 = vrot.slane %v8832, 4
        %v8835 = vshll.u32 %v8531, 16
        %v8837 = vrot.slane %v8835, 5
        %v8838 = vor.u32 %v8834, %v8837
        %v8839 = vrot.slane %v8838, 4
        %v8841 = vshll.u32 %v8532, 16
        %v8843 = vrot.slane %v8841, 5
        %v8844 = vsel %vm1127, %v8839, %v8843
        %v8845 = vshrl.u32 %v8532, 16
        %v8847 = vrot.slane %v8845, 4
        %v8848 = vor.u32 %v8847, %v8843
        %v8849 = vrot.slane %v8848, 4
        %v8851 = vshll.u32 %v8533, 16
        %v8853 = vrot.slane %v8851, 5
        %v8854 = vsel %vm1127, %v8849, %v8853
        %v8856 = vshrl.u32 %v8534, 16
        %v8858 = vrot.slane %v8856, 4
        %v8859 = vshll.u32 %v8534, 16
        %v8861 = vrot.slane %v8859, 5
        %v8862 = vor.u32 %v8858, %v8861
        %v8863 = vrot.slane %v8862, 4
        %v8865 = vshll.u32 %v8535, 16
        %v8867 = vrot.slane %v8865, 5
        %v8868 = vsel %vm1127, %v8863, %v8867
        %v8869 = vshrl.u32 %v8535, 16
        %v8871 = vrot.slane %v8869, 4
        %v8872 = vor.u32 %v8871, %v8867
        %v8873 = vrot.slane %v8872, 4
        %v8875 = vshll.u32 %v8536, 16
        %v8877 = vrot.slane %v8875, 5
        %v8878 = vsel %vm1127, %v8873, %v8877
        %v8880 = vshrl.u32 %v8537, 16
        %v8882 = vrot.slane %v8880, 4
        %v8883 = vshll.u32 %v8537, 16
        %v8885 = vrot.slane %v8883, 5
        %v8886 = vor.u32 %v8882, %v8885
        %v8887 = vrot.slane %v8886, 4
        %v8889 = vshll.u32 %v8538, 16
        %v8891 = vrot.slane %v8889, 5
        %v8892 = vsel %vm1127, %v8887, %v8891
        %v8893 = vshrl.u32 %v8538, 16
        %v8895 = vrot.slane %v8893, 4
        %v8896 = vor.u32 %v8895, %v8891
        %v8897 = vrot.slane %v8896, 4
        %v8899 = vshll.u32 %v8539, 16
        %v8901 = vrot.slane %v8899, 5
        %v8902 = vsel %vm1127, %v8897, %v8901
        %v8904 = vshrl.u32 %v8540, 16
        %v8906 = vrot.slane %v8904, 4
        %v8907 = vshll.u32 %v8540, 16
        %v8909 = vrot.slane %v8907, 5
        %v8910 = vor.u32 %v8906, %v8909
        %v8911 = vrot.slane %v8910, 4
        %v8913 = vshll.u32 %v8541, 16
        %v8915 = vrot.slane %v8913, 5
        %v8916 = vsel %vm1127, %v8911, %v8915
        %v8917 = vshrl.u32 %v8541, 16
        %v8919 = vrot.slane %v8917, 4
        %v8920 = vor.u32 %v8919, %v8915
        %v8921 = vrot.slane %v8920, 4
        %v8923 = vshll.u32 %v8542, 16
        %v8925 = vrot.slane %v8923, 5
        %v8926 = vsel %vm1127, %v8921, %v8925
        %s8927 = scalar_lea.vmem [#allocation6], 256
        %v8928 = vld [vmem:[%s8927] sm:$0xf]
        %v8929 = vld [vmem:[%s8927 + $0x4] sm:$0xf]
        %v8930 = vld [vmem:[%s8927 + $0x8] sm:$0xf]
        %v8931 = vld [vmem:[%s8927 + $0xc] sm:$0xf]
        %v8932 = vld [vmem:[%s8927 + $0x10] sm:$0xf]
        %v8933 = vld [vmem:[%s8927 + $0x14] sm:$0xf]
        %v8934 = vld [vmem:[%s8927 + $0x18] sm:$0xf]
        %v8935 = vld [vmem:[%s8927 + $0x1c] sm:$0xf]
        %v8936 = vld [vmem:[%s8927 + $0x20] sm:$0xf]
        %v8937 = vld [vmem:[%s8927 + $0x24] sm:$0xf]
        %v8938 = vld [vmem:[%s8927 + $0x28] sm:$0xf]
        %v8939 = vld [vmem:[%s8927 + $0x2c] sm:$0xf]
        %v8940 = vld [vmem:[%s8927 + $0x30] sm:$0xf]
        %v8941 = vld [vmem:[%s8927 + $0x34] sm:$0xf]
        %v8942 = vld [vmem:[%s8927 + $0x38] sm:$0xf]
        %v8943 = vld [vmem:[%s8927 + $0x3c] sm:$0xf]
        %v8944 = vunpack.c.l.b16 %v8556
        %v8945 = vunpack.c.l.b16 %v8566
        %v8946 = vunpack.c.l.b16 %v8580
        %v8947 = vunpack.c.l.b16 %v8590
        %v8948 = vunpack.c.l.b16 %v8604
        %v8949 = vunpack.c.l.b16 %v8614
        %v8950 = vunpack.c.l.b16 %v8628
        %v8951 = vunpack.c.l.b16 %v8638
        %v8952 = vunpack.c.l.b16 %v8652
        %v8953 = vunpack.c.l.b16 %v8662
        %v8954 = vunpack.c.l.b16 %v8676
        %v8955 = vunpack.c.l.b16 %v8686
        %v8956 = vunpack.c.l.b16 %v8700
        %v8957 = vunpack.c.l.b16 %v8710
        %v8958 = vunpack.c.l.b16 %v8724
        %v8959 = vunpack.c.l.b16 %v8734
        %v8960 = vunpack.c.l.b16 %v8748
        %v8961 = vunpack.c.l.b16 %v8758
        %v8962 = vunpack.c.l.b16 %v8772
        %v8963 = vunpack.c.l.b16 %v8782
        %v8964 = vunpack.c.l.b16 %v8796
        %v8965 = vunpack.c.l.b16 %v8806
        %v8966 = vunpack.c.l.b16 %v8820
        %v8967 = vunpack.c.l.b16 %v8830
        %v8968 = vunpack.c.l.b16 %v8844
        %v8969 = vunpack.c.l.b16 %v8854
        %v8970 = vunpack.c.l.b16 %v8868
        %v8971 = vunpack.c.l.b16 %v8878
        %v8972 = vunpack.c.l.b16 %v8892
        %v8973 = vunpack.c.l.b16 %v8902
        %v8974 = vunpack.c.l.b16 %v8916
        %v8975 = vunpack.c.l.b16 %v8926
        %v8976 = vpack.c.b16 %v8945, %v8944
        %v8977 = vpack.c.b16 %v8947, %v8946
        %v8978 = vpack.c.b16 %v8949, %v8948
        %v8979 = vpack.c.b16 %v8951, %v8950
        %v8980 = vpack.c.b16 %v8953, %v8952
        %v8981 = vpack.c.b16 %v8955, %v8954
        %v8982 = vpack.c.b16 %v8957, %v8956
        %v8983 = vpack.c.b16 %v8959, %v8958
        %v8984 = vpack.c.b16 %v8961, %v8960
        %v8985 = vpack.c.b16 %v8963, %v8962
        %v8986 = vpack.c.b16 %v8965, %v8964
        %v8987 = vpack.c.b16 %v8967, %v8966
        %v8988 = vpack.c.b16 %v8969, %v8968
        %v8989 = vpack.c.b16 %v8971, %v8970
        %v8990 = vpack.c.b16 %v8973, %v8972
        %v8991 = vpack.c.b16 %v8975, %v8974
        %v9024 = vunpack.c.l.b16 %v8928
        %v9025 = vunpack.c.l.b16 %v8929
        %v9026 = vunpack.c.l.b16 %v8930
        %v9027 = vunpack.c.l.b16 %v8931
        %v9028 = vunpack.c.l.b16 %v8932
        %v9029 = vunpack.c.l.b16 %v8933
        %v9030 = vunpack.c.l.b16 %v8934
        %v9031 = vunpack.c.l.b16 %v8935
        %v9032 = vunpack.c.l.b16 %v8936
        %v9033 = vunpack.c.l.b16 %v8937
        %v9034 = vunpack.c.l.b16 %v8938
        %v9035 = vunpack.c.l.b16 %v8939
        %v9036 = vunpack.c.l.b16 %v8940
        %v9037 = vunpack.c.l.b16 %v8941
        %v9038 = vunpack.c.l.b16 %v8942
        %v9039 = vunpack.c.l.b16 %v8943
        %v9040 = vpack.c.b16 %v9025, %v9024
        %v9041 = vpack.c.b16 %v9027, %v9026
        %v9042 = vpack.c.b16 %v9029, %v9028
        %v9043 = vpack.c.b16 %v9031, %v9030
        %v9044 = vpack.c.b16 %v9033, %v9032
        %v9045 = vpack.c.b16 %v9035, %v9034
        %v9046 = vpack.c.b16 %v9037, %v9036
        %v9047 = vpack.c.b16 %v9039, %v9038
        %9056 = vmatprep.subr.bf16.mxu0 0
        %9057 = vmatpush1.bf16.msra.mxu0 %v9047
        %9058 = vmatprep.subr.bf16.mxu0 0
        %9059 = vmatpush1.bf16.msra.mxu0 %v9046
        %9060 = vmatprep.subr.bf16.mxu0 0
        %9061 = vmatpush1.bf16.msra.mxu0 %v9045
        %9062 = vmatprep.subr.bf16.mxu0 0
        %9063 = vmatpush1.bf16.msra.mxu0 %v9044
        %9064 = vmatprep.subr.bf16.mxu0 0
        %9065 = vmatpush1.bf16.msra.mxu0 %v9043
        %9066 = vmatprep.subr.bf16.mxu0 0
        %9067 = vmatpush1.bf16.msra.mxu0 %v9042
        %9068 = vmatprep.subr.bf16.mxu0 0
        %9069 = vmatpush1.bf16.msra.mxu0 %v9041
        %9070 = vmatprep.subr.bf16.mxu0 0
        %9071 = vmatpush1.bf16.msra.mxu0 %v9040
        %9072 = vmatprep.subr.bf16.mxu0 0
        %9073 = vmatpush2.bf16.msra.mxu0 0
        %9074 = vmatprep.subr.bf16.mxu0 0
        %9075 = vmatpush2.bf16.msra.mxu0 0
        %9076 = vmatprep.subr.bf16.mxu0 0
        %9077 = vmatpush2.bf16.msra.mxu0 0
        %9078 = vmatprep.subr.bf16.mxu0 0
        %9079 = vmatpush2.bf16.msra.mxu0 0
        %9080 = vmatprep.subr.bf16.mxu0 0
        %9081 = vmatpush2.bf16.msra.mxu0 0
        %9082 = vmatprep.subr.bf16.mxu0 0
        %9083 = vmatpush2.bf16.msra.mxu0 0
        %9084 = vmatprep.subr.bf16.mxu0 0
        %9085 = vmatpush2.bf16.msra.mxu0 0
        %9086 = vmatprep.subr.bf16.mxu0 0
        %9087 = vmatpush2.bf16.msra.mxu0 0
        %9088 = vmatprep.mubr.bf16.mxu0 0
        %9089 = vmatmul.mubr.bf16.gmra.mxu0 %v8976
        %v9090 = vpop.f32.mrf.mxu0
        %v9091 = vadd.f32 0.0, %v9090
        %v9092 = vpop.f32.mrf.mxu0
        %v9093 = vpop.f32.mrf.mxu0
        %v9094 = vadd.f32 0.0, %v9093
        %v9095 = vpop.f32.mrf.mxu0
        %9096 = vmatprep.mubr.bf16.mxu0 0
        %9097 = vmatmul.mubr.bf16.gmra.mxu0 %v8977
        %v9098 = vpop.f32.mrf.mxu0
        %v9099 = vadd.f32 0.0, %v9098
        %v9100 = vpop.f32.mrf.mxu0
        %v9101 = vpop.f32.mrf.mxu0
        %v9102 = vadd.f32 0.0, %v9101
        %v9103 = vpop.f32.mrf.mxu0
        %9104 = vmatprep.mubr.bf16.mxu0 0
        %9105 = vmatmul.mubr.bf16.gmra.mxu0 %v8978
        %v9106 = vpop.f32.mrf.mxu0
        %v9107 = vadd.f32 0.0, %v9106
        %v9108 = vpop.f32.mrf.mxu0
        %v9109 = vpop.f32.mrf.mxu0
        %v9110 = vadd.f32 0.0, %v9109
        %v9111 = vpop.f32.mrf.mxu0
        %9112 = vmatprep.mubr.bf16.mxu0 0
        %9113 = vmatmul.mubr.bf16.gmra.mxu0 %v8979
        %v9114 = vpop.f32.mrf.mxu0
        %v9115 = vadd.f32 0.0, %v9114
        %v9116 = vpop.f32.mrf.mxu0
        %v9117 = vpop.f32.mrf.mxu0
        %v9118 = vadd.f32 0.0, %v9117
        %v9119 = vpop.f32.mrf.mxu0
        %9120 = vmatprep.mubr.bf16.mxu0 0
        %9121 = vmatmul.mubr.bf16.gmra.mxu0 %v8980
        %v9122 = vpop.f32.mrf.mxu0
        %v9123 = vadd.f32 0.0, %v9122
        %v9124 = vpop.f32.mrf.mxu0
        %v9125 = vpop.f32.mrf.mxu0
        %v9126 = vadd.f32 0.0, %v9125
        %v9127 = vpop.f32.mrf.mxu0
        %9128 = vmatprep.mubr.bf16.mxu0 0
        %9129 = vmatmul.mubr.bf16.gmra.mxu0 %v8981
        %v9130 = vpop.f32.mrf.mxu0
        %v9131 = vadd.f32 0.0, %v9130
        %v9132 = vpop.f32.mrf.mxu0
        %v9133 = vpop.f32.mrf.mxu0
        %v9134 = vadd.f32 0.0, %v9133
        %v9135 = vpop.f32.mrf.mxu0
        %9136 = vmatprep.mubr.bf16.mxu0 0
        %9137 = vmatmul.mubr.bf16.gmra.mxu0 %v8982
        %v9138 = vpop.f32.mrf.mxu0
        %v9139 = vadd.f32 0.0, %v9138
        %v9140 = vpop.f32.mrf.mxu0
        %v9141 = vpop.f32.mrf.mxu0
        %v9142 = vadd.f32 0.0, %v9141
        %v9143 = vpop.f32.mrf.mxu0
        %9144 = vmatprep.mubr.bf16.mxu0 0
        %9145 = vmatmul.mubr.bf16.gmra.mxu0 %v8983
        %v9146 = vpop.f32.mrf.mxu0
        %v9147 = vadd.f32 0.0, %v9146
        %v9148 = vpop.f32.mrf.mxu0
        %v9149 = vpop.f32.mrf.mxu0
        %v9150 = vadd.f32 0.0, %v9149
        %v9151 = vpop.f32.mrf.mxu0
        %9152 = vmatprep.mubr.bf16.mxu0 0
        %9153 = vmatmul.mubr.bf16.gmra.mxu0 %v8984
        %v9154 = vpop.f32.mrf.mxu0
        %v9155 = vadd.f32 0.0, %v9154
        %v9156 = vpop.f32.mrf.mxu0
        %v9157 = vpop.f32.mrf.mxu0
        %v9158 = vadd.f32 0.0, %v9157
        %v9159 = vpop.f32.mrf.mxu0
        %9160 = vmatprep.mubr.bf16.mxu0 0
        %9161 = vmatmul.mubr.bf16.gmra.mxu0 %v8985
        %v9162 = vpop.f32.mrf.mxu0
        %v9163 = vadd.f32 0.0, %v9162
        %v9164 = vpop.f32.mrf.mxu0
        %v9165 = vpop.f32.mrf.mxu0
        %v9166 = vadd.f32 0.0, %v9165
        %v9167 = vpop.f32.mrf.mxu0
        %9168 = vmatprep.mubr.bf16.mxu0 0
        %9169 = vmatmul.mubr.bf16.gmra.mxu0 %v8986
        %v9170 = vpop.f32.mrf.mxu0
        %v9171 = vadd.f32 0.0, %v9170
        %v9172 = vpop.f32.mrf.mxu0
        %v9173 = vpop.f32.mrf.mxu0
        %v9174 = vadd.f32 0.0, %v9173
        %v9175 = vpop.f32.mrf.mxu0
        %9176 = vmatprep.mubr.bf16.mxu0 0
        %9177 = vmatmul.mubr.bf16.gmra.mxu0 %v8987
        %v9178 = vpop.f32.mrf.mxu0
        %v9179 = vadd.f32 0.0, %v9178
        %v9180 = vpop.f32.mrf.mxu0
        %v9181 = vpop.f32.mrf.mxu0
        %v9182 = vadd.f32 0.0, %v9181
        %v9183 = vpop.f32.mrf.mxu0
        %9184 = vmatprep.mubr.bf16.mxu0 0
        %9185 = vmatmul.mubr.bf16.gmra.mxu0 %v8988
        %v9186 = vpop.f32.mrf.mxu0
        %v9187 = vadd.f32 0.0, %v9186
        %v9188 = vpop.f32.mrf.mxu0
        %v9189 = vpop.f32.mrf.mxu0
        %v9190 = vadd.f32 0.0, %v9189
        %v9191 = vpop.f32.mrf.mxu0
        %9192 = vmatprep.mubr.bf16.mxu0 0
        %9193 = vmatmul.mubr.bf16.gmra.mxu0 %v8989
        %v9194 = vpop.f32.mrf.mxu0
        %v9195 = vadd.f32 0.0, %v9194
        %v9196 = vpop.f32.mrf.mxu0
        %v9197 = vpop.f32.mrf.mxu0
        %v9198 = vadd.f32 0.0, %v9197
        %v9199 = vpop.f32.mrf.mxu0
        %9200 = vmatprep.mubr.bf16.mxu0 0
        %9201 = vmatmul.mubr.bf16.gmra.mxu0 %v8990
        %v9202 = vpop.f32.mrf.mxu0
        %v9203 = vadd.f32 0.0, %v9202
        %v9204 = vpop.f32.mrf.mxu0
        %v9205 = vpop.f32.mrf.mxu0
        %v9206 = vadd.f32 0.0, %v9205
        %v9207 = vpop.f32.mrf.mxu0
        %9208 = vmatprep.mubr.bf16.mxu0 0
        %9209 = vmatmul.mubr.bf16.gmra.mxu0 %v8991
        %v9210 = vpop.f32.mrf.mxu0
        %v9211 = vadd.f32 0.0, %v9210
        %v9212 = vpop.f32.mrf.mxu0
        %v9213 = vpop.f32.mrf.mxu0
        %v9214 = vadd.f32 0.0, %v9213
        %v9215 = vpop.f32.mrf.mxu0
        %9216 = vdwg.mxu0
        %v9217 = vadd.f32 %v8463, %v9091
        %v9218 = vadd.f32 %v8464, %v9094
        %v9219 = vadd.f32 %v8465, %v9099
        %v9220 = vadd.f32 %v8466, %v9102
        %v9221 = vadd.f32 %v8467, %v9107
        %v9222 = vadd.f32 %v8468, %v9110
        %v9223 = vadd.f32 %v8469, %v9115
        %v9224 = vadd.f32 %v8470, %v9118
        %v9225 = vadd.f32 %v8471, %v9123
        %v9226 = vadd.f32 %v8472, %v9126
        %v9227 = vadd.f32 %v8473, %v9131
        %v9228 = vadd.f32 %v8474, %v9134
        %v9229 = vadd.f32 %v8475, %v9139
        %v9230 = vadd.f32 %v8476, %v9142
        %v9231 = vadd.f32 %v8477, %v9147
        %v9232 = vadd.f32 %v8478, %v9150
        %v9233 = vadd.f32 %v8479, %v9155
        %v9234 = vadd.f32 %v8480, %v9158
        %v9235 = vadd.f32 %v8481, %v9163
        %v9236 = vadd.f32 %v8482, %v9166
        %v9237 = vadd.f32 %v8483, %v9171
        %v9238 = vadd.f32 %v8484, %v9174
        %v9239 = vadd.f32 %v8485, %v9179
        %v9240 = vadd.f32 %v8486, %v9182
        %v9241 = vadd.f32 %v8487, %v9187
        %v9242 = vadd.f32 %v8488, %v9190
        %v9243 = vadd.f32 %v8489, %v9195
        %v9244 = vadd.f32 %v8490, %v9198
        %v9245 = vadd.f32 %v8491, %v9203
        %v9246 = vadd.f32 %v8492, %v9206
        %v9247 = vadd.f32 %v8493, %v9211
        %v9248 = vadd.f32 %v8494, %v9214
        %v9249 = vld [vmem:[%s6471] sm:$0xe]
        %v9250 = vld [vmem:[%s6471 + $0xc] sm:$0xe]
        %v9251 = vld [vmem:[%s6471 + $0x18] sm:$0xe]
        %v9252 = vld [vmem:[%s6471 + $0x24] sm:$0xe]
        %v9253 = vld [vmem:[%s6471 + $0x30] sm:$0xe]
        %v9254 = vld [vmem:[%s6471 + $0x3c] sm:$0xe]
        %v9255 = vld [vmem:[%s6471 + $0x48] sm:$0xe]
        %v9256 = vld [vmem:[%s6471 + $0x54] sm:$0xe]
        %v9257 = vld [vmem:[%s6471 + $0x60] sm:$0xe]
        %v9258 = vld [vmem:[%s6471 + $0x6c] sm:$0xe]
        %v9259 = vld [vmem:[%s6471 + $0x78] sm:$0xe]
        %v9260 = vld [vmem:[%s6471 + $0x84] sm:$0xe]
        %v9261 = vld [vmem:[%s6471 + $0x90] sm:$0xe]
        %v9262 = vld [vmem:[%s6471 + $0x9c] sm:$0xe]
        %v9263 = vld [vmem:[%s6471 + $0xa8] sm:$0xe]
        %v9264 = vld [vmem:[%s6471 + $0xb4] sm:$0xe]
        %v9313 = vrot.slane %v9249, 5
        %v9314 = vrot.slane %v9313, 4
        %v9315 = vrot.slane %v8496, 5
        %v9316 = vsel %vm2157, %v9314, %v9315
        %v9317 = vrot.slane %v9315, 4
        %v9318 = vrot.slane %v8497, 5
        %v9319 = vsel %vm2157, %v9317, %v9318
        %v9320 = vrot.slane %v9250, 5
        %v9321 = vrot.slane %v9320, 4
        %v9322 = vrot.slane %v8499, 5
        %v9323 = vsel %vm2157, %v9321, %v9322
        %v9324 = vrot.slane %v9322, 4
        %v9325 = vrot.slane %v8500, 5
        %v9326 = vsel %vm2157, %v9324, %v9325
        %v9327 = vrot.slane %v9251, 5
        %v9328 = vrot.slane %v9327, 4
        %v9329 = vrot.slane %v8502, 5
        %v9330 = vsel %vm2157, %v9328, %v9329
        %v9331 = vrot.slane %v9329, 4
        %v9332 = vrot.slane %v8503, 5
        %v9333 = vsel %vm2157, %v9331, %v9332
        %v9334 = vrot.slane %v9252, 5
        %v9335 = vrot.slane %v9334, 4
        %v9336 = vrot.slane %v8505, 5
        %v9337 = vsel %vm2157, %v9335, %v9336
        %v9338 = vrot.slane %v9336, 4
        %v9339 = vrot.slane %v8506, 5
        %v9340 = vsel %vm2157, %v9338, %v9339
        %v9341 = vrot.slane %v9253, 5
        %v9342 = vrot.slane %v9341, 4
        %v9343 = vrot.slane %v8508, 5
        %v9344 = vsel %vm2157, %v9342, %v9343
        %v9345 = vrot.slane %v9343, 4
        %v9346 = vrot.slane %v8509, 5
        %v9347 = vsel %vm2157, %v9345, %v9346
        %v9348 = vrot.slane %v9254, 5
        %v9349 = vrot.slane %v9348, 4
        %v9350 = vrot.slane %v8511, 5
        %v9351 = vsel %vm2157, %v9349, %v9350
        %v9352 = vrot.slane %v9350, 4
        %v9353 = vrot.slane %v8512, 5
        %v9354 = vsel %vm2157, %v9352, %v9353
        %v9355 = vrot.slane %v9255, 5
        %v9356 = vrot.slane %v9355, 4
        %v9357 = vrot.slane %v8514, 5
        %v9358 = vsel %vm2157, %v9356, %v9357
        %v9359 = vrot.slane %v9357, 4
        %v9360 = vrot.slane %v8515, 5
        %v9361 = vsel %vm2157, %v9359, %v9360
        %v9362 = vrot.slane %v9256, 5
        %v9363 = vrot.slane %v9362, 4
        %v9364 = vrot.slane %v8517, 5
        %v9365 = vsel %vm2157, %v9363, %v9364
        %v9366 = vrot.slane %v9364, 4
        %v9367 = vrot.slane %v8518, 5
        %v9368 = vsel %vm2157, %v9366, %v9367
        %v9369 = vrot.slane %v9257, 5
        %v9370 = vrot.slane %v9369, 4
        %v9371 = vrot.slane %v8520, 5
        %v9372 = vsel %vm2157, %v9370, %v9371
        %v9373 = vrot.slane %v9371, 4
        %v9374 = vrot.slane %v8521, 5
        %v9375 = vsel %vm2157, %v9373, %v9374
        %v9376 = vrot.slane %v9258, 5
        %v9377 = vrot.slane %v9376, 4
        %v9378 = vrot.slane %v8523, 5
        %v9379 = vsel %vm2157, %v9377, %v9378
        %v9380 = vrot.slane %v9378, 4
        %v9381 = vrot.slane %v8524, 5
        %v9382 = vsel %vm2157, %v9380, %v9381
        %v9383 = vrot.slane %v9259, 5
        %v9384 = vrot.slane %v9383, 4
        %v9385 = vrot.slane %v8526, 5
        %v9386 = vsel %vm2157, %v9384, %v9385
        %v9387 = vrot.slane %v9385, 4
        %v9388 = vrot.slane %v8527, 5
        %v9389 = vsel %vm2157, %v9387, %v9388
        %v9390 = vrot.slane %v9260, 5
        %v9391 = vrot.slane %v9390, 4
        %v9392 = vrot.slane %v8529, 5
        %v9393 = vsel %vm2157, %v9391, %v9392
        %v9394 = vrot.slane %v9392, 4
        %v9395 = vrot.slane %v8530, 5
        %v9396 = vsel %vm2157, %v9394, %v9395
        %v9397 = vrot.slane %v9261, 5
        %v9398 = vrot.slane %v9397, 4
        %v9399 = vrot.slane %v8532, 5
        %v9400 = vsel %vm2157, %v9398, %v9399
        %v9401 = vrot.slane %v9399, 4
        %v9402 = vrot.slane %v8533, 5
        %v9403 = vsel %vm2157, %v9401, %v9402
        %v9404 = vrot.slane %v9262, 5
        %v9405 = vrot.slane %v9404, 4
        %v9406 = vrot.slane %v8535, 5
        %v9407 = vsel %vm2157, %v9405, %v9406
        %v9408 = vrot.slane %v9406, 4
        %v9409 = vrot.slane %v8536, 5
        %v9410 = vsel %vm2157, %v9408, %v9409
        %v9411 = vrot.slane %v9263, 5
        %v9412 = vrot.slane %v9411, 4
        %v9413 = vrot.slane %v8538, 5
        %v9414 = vsel %vm2157, %v9412, %v9413
        %v9415 = vrot.slane %v9413, 4
        %v9416 = vrot.slane %v8539, 5
        %v9417 = vsel %vm2157, %v9415, %v9416
        %v9418 = vrot.slane %v9264, 5
        %v9419 = vrot.slane %v9418, 4
        %v9420 = vrot.slane %v8541, 5
        %v9421 = vsel %vm2157, %v9419, %v9420
        %v9422 = vrot.slane %v9420, 4
        %v9423 = vrot.slane %v8542, 5
        %v9424 = vsel %vm2157, %v9422, %v9423
        %s9425 = scalar_lea.vmem [#allocation6], 320
        %v9426 = vld [vmem:[%s9425] sm:$0xf]
        %v9427 = vld [vmem:[%s9425 + $0x4] sm:$0xf]
        %v9428 = vld [vmem:[%s9425 + $0x8] sm:$0xf]
        %v9429 = vld [vmem:[%s9425 + $0xc] sm:$0xf]
        %v9430 = vld [vmem:[%s9425 + $0x10] sm:$0xf]
        %v9431 = vld [vmem:[%s9425 + $0x14] sm:$0xf]
        %v9432 = vld [vmem:[%s9425 + $0x18] sm:$0xf]
        %v9433 = vld [vmem:[%s9425 + $0x1c] sm:$0xf]
        %v9434 = vld [vmem:[%s9425 + $0x20] sm:$0xf]
        %v9435 = vld [vmem:[%s9425 + $0x24] sm:$0xf]
        %v9436 = vld [vmem:[%s9425 + $0x28] sm:$0xf]
        %v9437 = vld [vmem:[%s9425 + $0x2c] sm:$0xf]
        %v9438 = vld [vmem:[%s9425 + $0x30] sm:$0xf]
        %v9439 = vld [vmem:[%s9425 + $0x34] sm:$0xf]
        %v9440 = vld [vmem:[%s9425 + $0x38] sm:$0xf]
        %v9441 = vld [vmem:[%s9425 + $0x3c] sm:$0xf]
        %v9442 = vunpack.c.l.b16 %v9316
        %v9443 = vunpack.c.l.b16 %v9319
        %v9444 = vunpack.c.l.b16 %v9323
        %v9445 = vunpack.c.l.b16 %v9326
        %v9446 = vunpack.c.l.b16 %v9330
        %v9447 = vunpack.c.l.b16 %v9333
        %v9448 = vunpack.c.l.b16 %v9337
        %v9449 = vunpack.c.l.b16 %v9340
        %v9450 = vunpack.c.l.b16 %v9344
        %v9451 = vunpack.c.l.b16 %v9347
        %v9452 = vunpack.c.l.b16 %v9351
        %v9453 = vunpack.c.l.b16 %v9354
        %v9454 = vunpack.c.l.b16 %v9358
        %v9455 = vunpack.c.l.b16 %v9361
        %v9456 = vunpack.c.l.b16 %v9365
        %v9457 = vunpack.c.l.b16 %v9368
        %v9458 = vunpack.c.l.b16 %v9372
        %v9459 = vunpack.c.l.b16 %v9375
        %v9460 = vunpack.c.l.b16 %v9379
        %v9461 = vunpack.c.l.b16 %v9382
        %v9462 = vunpack.c.l.b16 %v9386
        %v9463 = vunpack.c.l.b16 %v9389
        %v9464 = vunpack.c.l.b16 %v9393
        %v9465 = vunpack.c.l.b16 %v9396
        %v9466 = vunpack.c.l.b16 %v9400
        %v9467 = vunpack.c.l.b16 %v9403
        %v9468 = vunpack.c.l.b16 %v9407
        %v9469 = vunpack.c.l.b16 %v9410
        %v9470 = vunpack.c.l.b16 %v9414
        %v9471 = vunpack.c.l.b16 %v9417
        %v9472 = vunpack.c.l.b16 %v9421
        %v9473 = vunpack.c.l.b16 %v9424
        %v9474 = vpack.c.b16 %v9443, %v9442
        %v9475 = vpack.c.b16 %v9445, %v9444
        %v9476 = vpack.c.b16 %v9447, %v9446
        %v9477 = vpack.c.b16 %v9449, %v9448
        %v9478 = vpack.c.b16 %v9451, %v9450
        %v9479 = vpack.c.b16 %v9453, %v9452
        %v9480 = vpack.c.b16 %v9455, %v9454
        %v9481 = vpack.c.b16 %v9457, %v9456
        %v9482 = vpack.c.b16 %v9459, %v9458
        %v9483 = vpack.c.b16 %v9461, %v9460
        %v9484 = vpack.c.b16 %v9463, %v9462
        %v9485 = vpack.c.b16 %v9465, %v9464
        %v9486 = vpack.c.b16 %v9467, %v9466
        %v9487 = vpack.c.b16 %v9469, %v9468
        %v9488 = vpack.c.b16 %v9471, %v9470
        %v9489 = vpack.c.b16 %v9473, %v9472
        %v9522 = vunpack.c.l.b16 %v9426
        %v9523 = vunpack.c.l.b16 %v9427
        %v9524 = vunpack.c.l.b16 %v9428
        %v9525 = vunpack.c.l.b16 %v9429
        %v9526 = vunpack.c.l.b16 %v9430
        %v9527 = vunpack.c.l.b16 %v9431
        %v9528 = vunpack.c.l.b16 %v9432
        %v9529 = vunpack.c.l.b16 %v9433
        %v9530 = vunpack.c.l.b16 %v9434
        %v9531 = vunpack.c.l.b16 %v9435
        %v9532 = vunpack.c.l.b16 %v9436
        %v9533 = vunpack.c.l.b16 %v9437
        %v9534 = vunpack.c.l.b16 %v9438
        %v9535 = vunpack.c.l.b16 %v9439
        %v9536 = vunpack.c.l.b16 %v9440
        %v9537 = vunpack.c.l.b16 %v9441
        %v9538 = vpack.c.b16 %v9523, %v9522
        %v9539 = vpack.c.b16 %v9525, %v9524
        %v9540 = vpack.c.b16 %v9527, %v9526
        %v9541 = vpack.c.b16 %v9529, %v9528
        %v9542 = vpack.c.b16 %v9531, %v9530
        %v9543 = vpack.c.b16 %v9533, %v9532
        %v9544 = vpack.c.b16 %v9535, %v9534
        %v9545 = vpack.c.b16 %v9537, %v9536
        %9554 = vmatprep.subr.bf16.mxu0 0
        %9555 = vmatpush1.bf16.msra.mxu0 %v9545
        %9556 = vmatprep.subr.bf16.mxu0 0
        %9557 = vmatpush1.bf16.msra.mxu0 %v9544
        %9558 = vmatprep.subr.bf16.mxu0 0
        %9559 = vmatpush1.bf16.msra.mxu0 %v9543
        %9560 = vmatprep.subr.bf16.mxu0 0
        %9561 = vmatpush1.bf16.msra.mxu0 %v9542
        %9562 = vmatprep.subr.bf16.mxu0 0
        %9563 = vmatpush1.bf16.msra.mxu0 %v9541
        %9564 = vmatprep.subr.bf16.mxu0 0
        %9565 = vmatpush1.bf16.msra.mxu0 %v9540
        %9566 = vmatprep.subr.bf16.mxu0 0
        %9567 = vmatpush1.bf16.msra.mxu0 %v9539
        %9568 = vmatprep.subr.bf16.mxu0 0
        %9569 = vmatpush1.bf16.msra.mxu0 %v9538
        %9570 = vmatprep.subr.bf16.mxu0 0
        %9571 = vmatpush2.bf16.msra.mxu0 0
        %9572 = vmatprep.subr.bf16.mxu0 0
        %9573 = vmatpush2.bf16.msra.mxu0 0
        %9574 = vmatprep.subr.bf16.mxu0 0
        %9575 = vmatpush2.bf16.msra.mxu0 0
        %9576 = vmatprep.subr.bf16.mxu0 0
        %9577 = vmatpush2.bf16.msra.mxu0 0
        %9578 = vmatprep.subr.bf16.mxu0 0
        %9579 = vmatpush2.bf16.msra.mxu0 0
        %9580 = vmatprep.subr.bf16.mxu0 0
        %9581 = vmatpush2.bf16.msra.mxu0 0
        %9582 = vmatprep.subr.bf16.mxu0 0
        %9583 = vmatpush2.bf16.msra.mxu0 0
        %9584 = vmatprep.subr.bf16.mxu0 0
        %9585 = vmatpush2.bf16.msra.mxu0 0
        %9586 = vmatprep.mubr.bf16.mxu0 0
        %9587 = vmatmul.mubr.bf16.gmra.mxu0 %v9474
        %v9588 = vpop.f32.mrf.mxu0
        %v9589 = vadd.f32 0.0, %v9588
        %v9590 = vpop.f32.mrf.mxu0
        %v9591 = vpop.f32.mrf.mxu0
        %v9592 = vadd.f32 0.0, %v9591
        %v9593 = vpop.f32.mrf.mxu0
        %9594 = vmatprep.mubr.bf16.mxu0 0
        %9595 = vmatmul.mubr.bf16.gmra.mxu0 %v9475
        %v9596 = vpop.f32.mrf.mxu0
        %v9597 = vadd.f32 0.0, %v9596
        %v9598 = vpop.f32.mrf.mxu0
        %v9599 = vpop.f32.mrf.mxu0
        %v9600 = vadd.f32 0.0, %v9599
        %v9601 = vpop.f32.mrf.mxu0
        %9602 = vmatprep.mubr.bf16.mxu0 0
        %9603 = vmatmul.mubr.bf16.gmra.mxu0 %v9476
        %v9604 = vpop.f32.mrf.mxu0
        %v9605 = vadd.f32 0.0, %v9604
        %v9606 = vpop.f32.mrf.mxu0
        %v9607 = vpop.f32.mrf.mxu0
        %v9608 = vadd.f32 0.0, %v9607
        %v9609 = vpop.f32.mrf.mxu0
        %9610 = vmatprep.mubr.bf16.mxu0 0
        %9611 = vmatmul.mubr.bf16.gmra.mxu0 %v9477
        %v9612 = vpop.f32.mrf.mxu0
        %v9613 = vadd.f32 0.0, %v9612
        %v9614 = vpop.f32.mrf.mxu0
        %v9615 = vpop.f32.mrf.mxu0
        %v9616 = vadd.f32 0.0, %v9615
        %v9617 = vpop.f32.mrf.mxu0
        %9618 = vmatprep.mubr.bf16.mxu0 0
        %9619 = vmatmul.mubr.bf16.gmra.mxu0 %v9478
        %v9620 = vpop.f32.mrf.mxu0
        %v9621 = vadd.f32 0.0, %v9620
        %v9622 = vpop.f32.mrf.mxu0
        %v9623 = vpop.f32.mrf.mxu0
        %v9624 = vadd.f32 0.0, %v9623
        %v9625 = vpop.f32.mrf.mxu0
        %9626 = vmatprep.mubr.bf16.mxu0 0
        %9627 = vmatmul.mubr.bf16.gmra.mxu0 %v9479
        %v9628 = vpop.f32.mrf.mxu0
        %v9629 = vadd.f32 0.0, %v9628
        %v9630 = vpop.f32.mrf.mxu0
        %v9631 = vpop.f32.mrf.mxu0
        %v9632 = vadd.f32 0.0, %v9631
        %v9633 = vpop.f32.mrf.mxu0
        %9634 = vmatprep.mubr.bf16.mxu0 0
        %9635 = vmatmul.mubr.bf16.gmra.mxu0 %v9480
        %v9636 = vpop.f32.mrf.mxu0
        %v9637 = vadd.f32 0.0, %v9636
        %v9638 = vpop.f32.mrf.mxu0
        %v9639 = vpop.f32.mrf.mxu0
        %v9640 = vadd.f32 0.0, %v9639
        %v9641 = vpop.f32.mrf.mxu0
        %9642 = vmatprep.mubr.bf16.mxu0 0
        %9643 = vmatmul.mubr.bf16.gmra.mxu0 %v9481
        %v9644 = vpop.f32.mrf.mxu0
        %v9645 = vadd.f32 0.0, %v9644
        %v9646 = vpop.f32.mrf.mxu0
        %v9647 = vpop.f32.mrf.mxu0
        %v9648 = vadd.f32 0.0, %v9647
        %v9649 = vpop.f32.mrf.mxu0
        %9650 = vmatprep.mubr.bf16.mxu0 0
        %9651 = vmatmul.mubr.bf16.gmra.mxu0 %v9482
        %v9652 = vpop.f32.mrf.mxu0
        %v9653 = vadd.f32 0.0, %v9652
        %v9654 = vpop.f32.mrf.mxu0
        %v9655 = vpop.f32.mrf.mxu0
        %v9656 = vadd.f32 0.0, %v9655
        %v9657 = vpop.f32.mrf.mxu0
        %9658 = vmatprep.mubr.bf16.mxu0 0
        %9659 = vmatmul.mubr.bf16.gmra.mxu0 %v9483
        %v9660 = vpop.f32.mrf.mxu0
        %v9661 = vadd.f32 0.0, %v9660
        %v9662 = vpop.f32.mrf.mxu0
        %v9663 = vpop.f32.mrf.mxu0
        %v9664 = vadd.f32 0.0, %v9663
        %v9665 = vpop.f32.mrf.mxu0
        %9666 = vmatprep.mubr.bf16.mxu0 0
        %9667 = vmatmul.mubr.bf16.gmra.mxu0 %v9484
        %v9668 = vpop.f32.mrf.mxu0
        %v9669 = vadd.f32 0.0, %v9668
        %v9670 = vpop.f32.mrf.mxu0
        %v9671 = vpop.f32.mrf.mxu0
        %v9672 = vadd.f32 0.0, %v9671
        %v9673 = vpop.f32.mrf.mxu0
        %9674 = vmatprep.mubr.bf16.mxu0 0
        %9675 = vmatmul.mubr.bf16.gmra.mxu0 %v9485
        %v9676 = vpop.f32.mrf.mxu0
        %v9677 = vadd.f32 0.0, %v9676
        %v9678 = vpop.f32.mrf.mxu0
        %v9679 = vpop.f32.mrf.mxu0
        %v9680 = vadd.f32 0.0, %v9679
        %v9681 = vpop.f32.mrf.mxu0
        %9682 = vmatprep.mubr.bf16.mxu0 0
        %9683 = vmatmul.mubr.bf16.gmra.mxu0 %v9486
        %v9684 = vpop.f32.mrf.mxu0
        %v9685 = vadd.f32 0.0, %v9684
        %v9686 = vpop.f32.mrf.mxu0
        %v9687 = vpop.f32.mrf.mxu0
        %v9688 = vadd.f32 0.0, %v9687
        %v9689 = vpop.f32.mrf.mxu0
        %9690 = vmatprep.mubr.bf16.mxu0 0
        %9691 = vmatmul.mubr.bf16.gmra.mxu0 %v9487
        %v9692 = vpop.f32.mrf.mxu0
        %v9693 = vadd.f32 0.0, %v9692
        %v9694 = vpop.f32.mrf.mxu0
        %v9695 = vpop.f32.mrf.mxu0
        %v9696 = vadd.f32 0.0, %v9695
        %v9697 = vpop.f32.mrf.mxu0
        %9698 = vmatprep.mubr.bf16.mxu0 0
        %9699 = vmatmul.mubr.bf16.gmra.mxu0 %v9488
        %v9700 = vpop.f32.mrf.mxu0
        %v9701 = vadd.f32 0.0, %v9700
        %v9702 = vpop.f32.mrf.mxu0
        %v9703 = vpop.f32.mrf.mxu0
        %v9704 = vadd.f32 0.0, %v9703
        %v9705 = vpop.f32.mrf.mxu0
        %9706 = vmatprep.mubr.bf16.mxu0 0
        %9707 = vmatmul.mubr.bf16.gmra.mxu0 %v9489
        %v9708 = vpop.f32.mrf.mxu0
        %v9709 = vadd.f32 0.0, %v9708
        %v9710 = vpop.f32.mrf.mxu0
        %v9711 = vpop.f32.mrf.mxu0
        %v9712 = vadd.f32 0.0, %v9711
        %v9713 = vpop.f32.mrf.mxu0
        %9714 = vdwg.mxu0
        %v9715 = vadd.f32 %v9217, %v9589
        %v9716 = vadd.f32 %v9218, %v9592
        %v9717 = vadd.f32 %v9219, %v9597
        %v9718 = vadd.f32 %v9220, %v9600
        %v9719 = vadd.f32 %v9221, %v9605
        %v9720 = vadd.f32 %v9222, %v9608
        %v9721 = vadd.f32 %v9223, %v9613
        %v9722 = vadd.f32 %v9224, %v9616
        %v9723 = vadd.f32 %v9225, %v9621
        %v9724 = vadd.f32 %v9226, %v9624
        %v9725 = vadd.f32 %v9227, %v9629
        %v9726 = vadd.f32 %v9228, %v9632
        %v9727 = vadd.f32 %v9229, %v9637
        %v9728 = vadd.f32 %v9230, %v9640
        %v9729 = vadd.f32 %v9231, %v9645
        %v9730 = vadd.f32 %v9232, %v9648
        %v9731 = vadd.f32 %v9233, %v9653
        %v9732 = vadd.f32 %v9234, %v9656
        %v9733 = vadd.f32 %v9235, %v9661
        %v9734 = vadd.f32 %v9236, %v9664
        %v9735 = vadd.f32 %v9237, %v9669
        %v9736 = vadd.f32 %v9238, %v9672
        %v9737 = vadd.f32 %v9239, %v9677
        %v9738 = vadd.f32 %v9240, %v9680
        %v9739 = vadd.f32 %v9241, %v9685
        %v9740 = vadd.f32 %v9242, %v9688
        %v9741 = vadd.f32 %v9243, %v9693
        %v9742 = vadd.f32 %v9244, %v9696
        %v9743 = vadd.f32 %v9245, %v9701
        %v9744 = vadd.f32 %v9246, %v9704
        %v9745 = vadd.f32 %v9247, %v9709
        %v9746 = vadd.f32 %v9248, %v9712
        %s9747 = scalar_lea.vmem [#allocation3], 24
        %v9748 = vld [vmem:[%s9747] sm:$0xf]
        %v9749 = vld [vmem:[%s9747 + $0x4] sm:$0xf]
        %v9750 = vld [vmem:[%s9747 + $0xc] sm:$0xf]
        %v9751 = vld [vmem:[%s9747 + $0x10] sm:$0xf]
        %v9752 = vld [vmem:[%s9747 + $0x18] sm:$0xf]
        %v9753 = vld [vmem:[%s9747 + $0x1c] sm:$0xf]
        %v9754 = vld [vmem:[%s9747 + $0x24] sm:$0xf]
        %v9755 = vld [vmem:[%s9747 + $0x28] sm:$0xf]
        %v9756 = vld [vmem:[%s9747 + $0x30] sm:$0xf]
        %v9757 = vld [vmem:[%s9747 + $0x34] sm:$0xf]
        %v9758 = vld [vmem:[%s9747 + $0x3c] sm:$0xf]
        %v9759 = vld [vmem:[%s9747 + $0x40] sm:$0xf]
        %v9760 = vld [vmem:[%s9747 + $0x48] sm:$0xf]
        %v9761 = vld [vmem:[%s9747 + $0x4c] sm:$0xf]
        %v9762 = vld [vmem:[%s9747 + $0x54] sm:$0xf]
        %v9763 = vld [vmem:[%s9747 + $0x58] sm:$0xf]
        %v9764 = vld [vmem:[%s9747 + $0x60] sm:$0xf]
        %v9765 = vld [vmem:[%s9747 + $0x64] sm:$0xf]
        %v9766 = vld [vmem:[%s9747 + $0x6c] sm:$0xf]
        %v9767 = vld [vmem:[%s9747 + $0x70] sm:$0xf]
        %v9768 = vld [vmem:[%s9747 + $0x78] sm:$0xf]
        %v9769 = vld [vmem:[%s9747 + $0x7c] sm:$0xf]
        %v9770 = vld [vmem:[%s9747 + $0x84] sm:$0xf]
        %v9771 = vld [vmem:[%s9747 + $0x88] sm:$0xf]
        %v9772 = vld [vmem:[%s9747 + $0x90] sm:$0xf]
        %v9773 = vld [vmem:[%s9747 + $0x94] sm:$0xf]
        %v9774 = vld [vmem:[%s9747 + $0x9c] sm:$0xf]
        %v9775 = vld [vmem:[%s9747 + $0xa0] sm:$0xf]
        %v9776 = vld [vmem:[%s9747 + $0xa8] sm:$0xf]
        %v9777 = vld [vmem:[%s9747 + $0xac] sm:$0xf]
        %v9778 = vld [vmem:[%s9747 + $0xb4] sm:$0xf]
        %v9779 = vld [vmem:[%s9747 + $0xb8] sm:$0xf]
        %s9780 = scalar_lea.vmem [#allocation6], 384
        %v9781 = vld [vmem:[%s9780] sm:$0xf]
        %v9782 = vld [vmem:[%s9780 + $0x4] sm:$0xf]
        %v9783 = vld [vmem:[%s9780 + $0x8] sm:$0xf]
        %v9784 = vld [vmem:[%s9780 + $0xc] sm:$0xf]
        %v9785 = vld [vmem:[%s9780 + $0x10] sm:$0xf]
        %v9786 = vld [vmem:[%s9780 + $0x14] sm:$0xf]
        %v9787 = vld [vmem:[%s9780 + $0x18] sm:$0xf]
        %v9788 = vld [vmem:[%s9780 + $0x1c] sm:$0xf]
        %v9789 = vld [vmem:[%s9780 + $0x20] sm:$0xf]
        %v9790 = vld [vmem:[%s9780 + $0x24] sm:$0xf]
        %v9791 = vld [vmem:[%s9780 + $0x28] sm:$0xf]
        %v9792 = vld [vmem:[%s9780 + $0x2c] sm:$0xf]
        %v9793 = vld [vmem:[%s9780 + $0x30] sm:$0xf]
        %v9794 = vld [vmem:[%s9780 + $0x34] sm:$0xf]
        %v9795 = vld [vmem:[%s9780 + $0x38] sm:$0xf]
        %v9796 = vld [vmem:[%s9780 + $0x3c] sm:$0xf]
        %v9829 = vunpack.c.l.b16 %v9748
        %v9830 = vunpack.c.l.b16 %v9749
        %v9831 = vunpack.c.l.b16 %v9750
        %v9832 = vunpack.c.l.b16 %v9751
        %v9833 = vunpack.c.l.b16 %v9752
        %v9834 = vunpack.c.l.b16 %v9753
        %v9835 = vunpack.c.l.b16 %v9754
        %v9836 = vunpack.c.l.b16 %v9755
        %v9837 = vunpack.c.l.b16 %v9756
        %v9838 = vunpack.c.l.b16 %v9757
        %v9839 = vunpack.c.l.b16 %v9758
        %v9840 = vunpack.c.l.b16 %v9759
        %v9841 = vunpack.c.l.b16 %v9760
        %v9842 = vunpack.c.l.b16 %v9761
        %v9843 = vunpack.c.l.b16 %v9762
        %v9844 = vunpack.c.l.b16 %v9763
        %v9845 = vunpack.c.l.b16 %v9764
        %v9846 = vunpack.c.l.b16 %v9765
        %v9847 = vunpack.c.l.b16 %v9766
        %v9848 = vunpack.c.l.b16 %v9767
        %v9849 = vunpack.c.l.b16 %v9768
        %v9850 = vunpack.c.l.b16 %v9769
        %v9851 = vunpack.c.l.b16 %v9770
        %v9852 = vunpack.c.l.b16 %v9771
        %v9853 = vunpack.c.l.b16 %v9772
        %v9854 = vunpack.c.l.b16 %v9773
        %v9855 = vunpack.c.l.b16 %v9774
        %v9856 = vunpack.c.l.b16 %v9775
        %v9857 = vunpack.c.l.b16 %v9776
        %v9858 = vunpack.c.l.b16 %v9777
        %v9859 = vunpack.c.l.b16 %v9778
        %v9860 = vunpack.c.l.b16 %v9779
        %v9861 = vpack.c.b16 %v9830, %v9829
        %v9862 = vpack.c.b16 %v9832, %v9831
        %v9863 = vpack.c.b16 %v9834, %v9833
        %v9864 = vpack.c.b16 %v9836, %v9835
        %v9865 = vpack.c.b16 %v9838, %v9837
        %v9866 = vpack.c.b16 %v9840, %v9839
        %v9867 = vpack.c.b16 %v9842, %v9841
        %v9868 = vpack.c.b16 %v9844, %v9843
        %v9869 = vpack.c.b16 %v9846, %v9845
        %v9870 = vpack.c.b16 %v9848, %v9847
        %v9871 = vpack.c.b16 %v9850, %v9849
        %v9872 = vpack.c.b16 %v9852, %v9851
        %v9873 = vpack.c.b16 %v9854, %v9853
        %v9874 = vpack.c.b16 %v9856, %v9855
        %v9875 = vpack.c.b16 %v9858, %v9857
        %v9876 = vpack.c.b16 %v9860, %v9859
        %v9909 = vunpack.c.l.b16 %v9781
        %v9910 = vunpack.c.l.b16 %v9782
        %v9911 = vunpack.c.l.b16 %v9783
        %v9912 = vunpack.c.l.b16 %v9784
        %v9913 = vunpack.c.l.b16 %v9785
        %v9914 = vunpack.c.l.b16 %v9786
        %v9915 = vunpack.c.l.b16 %v9787
        %v9916 = vunpack.c.l.b16 %v9788
        %v9917 = vunpack.c.l.b16 %v9789
        %v9918 = vunpack.c.l.b16 %v9790
        %v9919 = vunpack.c.l.b16 %v9791
        %v9920 = vunpack.c.l.b16 %v9792
        %v9921 = vunpack.c.l.b16 %v9793
        %v9922 = vunpack.c.l.b16 %v9794
        %v9923 = vunpack.c.l.b16 %v9795
        %v9924 = vunpack.c.l.b16 %v9796
        %v9925 = vpack.c.b16 %v9910, %v9909
        %v9926 = vpack.c.b16 %v9912, %v9911
        %v9927 = vpack.c.b16 %v9914, %v9913
        %v9928 = vpack.c.b16 %v9916, %v9915
        %v9929 = vpack.c.b16 %v9918, %v9917
        %v9930 = vpack.c.b16 %v9920, %v9919
        %v9931 = vpack.c.b16 %v9922, %v9921
        %v9932 = vpack.c.b16 %v9924, %v9923
        %9941 = vmatprep.subr.bf16.mxu0 0
        %9942 = vmatpush1.bf16.msra.mxu0 %v9932
        %9943 = vmatprep.subr.bf16.mxu0 0
        %9944 = vmatpush1.bf16.msra.mxu0 %v9931
        %9945 = vmatprep.subr.bf16.mxu0 0
        %9946 = vmatpush1.bf16.msra.mxu0 %v9930
        %9947 = vmatprep.subr.bf16.mxu0 0
        %9948 = vmatpush1.bf16.msra.mxu0 %v9929
        %9949 = vmatprep.subr.bf16.mxu0 0
        %9950 = vmatpush1.bf16.msra.mxu0 %v9928
        %9951 = vmatprep.subr.bf16.mxu0 0
        %9952 = vmatpush1.bf16.msra.mxu0 %v9927
        %9953 = vmatprep.subr.bf16.mxu0 0
        %9954 = vmatpush1.bf16.msra.mxu0 %v9926
        %9955 = vmatprep.subr.bf16.mxu0 0
        %9956 = vmatpush1.bf16.msra.mxu0 %v9925
        %9957 = vmatprep.subr.bf16.mxu0 0
        %9958 = vmatpush2.bf16.msra.mxu0 0
        %9959 = vmatprep.subr.bf16.mxu0 0
        %9960 = vmatpush2.bf16.msra.mxu0 0
        %9961 = vmatprep.subr.bf16.mxu0 0
        %9962 = vmatpush2.bf16.msra.mxu0 0
        %9963 = vmatprep.subr.bf16.mxu0 0
        %9964 = vmatpush2.bf16.msra.mxu0 0
        %9965 = vmatprep.subr.bf16.mxu0 0
        %9966 = vmatpush2.bf16.msra.mxu0 0
        %9967 = vmatprep.subr.bf16.mxu0 0
        %9968 = vmatpush2.bf16.msra.mxu0 0
        %9969 = vmatprep.subr.bf16.mxu0 0
        %9970 = vmatpush2.bf16.msra.mxu0 0
        %9971 = vmatprep.subr.bf16.mxu0 0
        %9972 = vmatpush2.bf16.msra.mxu0 0
        %9973 = vmatprep.mubr.bf16.mxu0 0
        %9974 = vmatmul.mubr.bf16.gmra.mxu0 %v9861
        %v9975 = vpop.f32.mrf.mxu0
        %v9976 = vadd.f32 0.0, %v9975
        %v9977 = vpop.f32.mrf.mxu0
        %v9978 = vpop.f32.mrf.mxu0
        %v9979 = vadd.f32 0.0, %v9978
        %v9980 = vpop.f32.mrf.mxu0
        %9981 = vmatprep.mubr.bf16.mxu0 0
        %9982 = vmatmul.mubr.bf16.gmra.mxu0 %v9862
        %v9983 = vpop.f32.mrf.mxu0
        %v9984 = vadd.f32 0.0, %v9983
        %v9985 = vpop.f32.mrf.mxu0
        %v9986 = vpop.f32.mrf.mxu0
        %v9987 = vadd.f32 0.0, %v9986
        %v9988 = vpop.f32.mrf.mxu0
        %9989 = vmatprep.mubr.bf16.mxu0 0
        %9990 = vmatmul.mubr.bf16.gmra.mxu0 %v9863
        %v9991 = vpop.f32.mrf.mxu0
        %v9992 = vadd.f32 0.0, %v9991
        %v9993 = vpop.f32.mrf.mxu0
        %v9994 = vpop.f32.mrf.mxu0
        %v9995 = vadd.f32 0.0, %v9994
        %v9996 = vpop.f32.mrf.mxu0
        %9997 = vmatprep.mubr.bf16.mxu0 0
        %9998 = vmatmul.mubr.bf16.gmra.mxu0 %v9864
        %v9999 = vpop.f32.mrf.mxu0
        %v10000 = vadd.f32 0.0, %v9999
        %v10001 = vpop.f32.mrf.mxu0
        %v10002 = vpop.f32.mrf.mxu0
        %v10003 = vadd.f32 0.0, %v10002
        %v10004 = vpop.f32.mrf.mxu0
        %10005 = vmatprep.mubr.bf16.mxu0 0
        %10006 = vmatmul.mubr.bf16.gmra.mxu0 %v9865
        %v10007 = vpop.f32.mrf.mxu0
        %v10008 = vadd.f32 0.0, %v10007
        %v10009 = vpop.f32.mrf.mxu0
        %v10010 = vpop.f32.mrf.mxu0
        %v10011 = vadd.f32 0.0, %v10010
        %v10012 = vpop.f32.mrf.mxu0
        %10013 = vmatprep.mubr.bf16.mxu0 0
        %10014 = vmatmul.mubr.bf16.gmra.mxu0 %v9866
        %v10015 = vpop.f32.mrf.mxu0
        %v10016 = vadd.f32 0.0, %v10015
        %v10017 = vpop.f32.mrf.mxu0
        %v10018 = vpop.f32.mrf.mxu0
        %v10019 = vadd.f32 0.0, %v10018
        %v10020 = vpop.f32.mrf.mxu0
        %10021 = vmatprep.mubr.bf16.mxu0 0
        %10022 = vmatmul.mubr.bf16.gmra.mxu0 %v9867
        %v10023 = vpop.f32.mrf.mxu0
        %v10024 = vadd.f32 0.0, %v10023
        %v10025 = vpop.f32.mrf.mxu0
        %v10026 = vpop.f32.mrf.mxu0
        %v10027 = vadd.f32 0.0, %v10026
        %v10028 = vpop.f32.mrf.mxu0
        %10029 = vmatprep.mubr.bf16.mxu0 0
        %10030 = vmatmul.mubr.bf16.gmra.mxu0 %v9868
        %v10031 = vpop.f32.mrf.mxu0
        %v10032 = vadd.f32 0.0, %v10031
        %v10033 = vpop.f32.mrf.mxu0
        %v10034 = vpop.f32.mrf.mxu0
        %v10035 = vadd.f32 0.0, %v10034
        %v10036 = vpop.f32.mrf.mxu0
        %10037 = vmatprep.mubr.bf16.mxu0 0
        %10038 = vmatmul.mubr.bf16.gmra.mxu0 %v9869
        %v10039 = vpop.f32.mrf.mxu0
        %v10040 = vadd.f32 0.0, %v10039
        %v10041 = vpop.f32.mrf.mxu0
        %v10042 = vpop.f32.mrf.mxu0
        %v10043 = vadd.f32 0.0, %v10042
        %v10044 = vpop.f32.mrf.mxu0
        %10045 = vmatprep.mubr.bf16.mxu0 0
        %10046 = vmatmul.mubr.bf16.gmra.mxu0 %v9870
        %v10047 = vpop.f32.mrf.mxu0
        %v10048 = vadd.f32 0.0, %v10047
        %v10049 = vpop.f32.mrf.mxu0
        %v10050 = vpop.f32.mrf.mxu0
        %v10051 = vadd.f32 0.0, %v10050
        %v10052 = vpop.f32.mrf.mxu0
        %10053 = vmatprep.mubr.bf16.mxu0 0
        %10054 = vmatmul.mubr.bf16.gmra.mxu0 %v9871
        %v10055 = vpop.f32.mrf.mxu0
        %v10056 = vadd.f32 0.0, %v10055
        %v10057 = vpop.f32.mrf.mxu0
        %v10058 = vpop.f32.mrf.mxu0
        %v10059 = vadd.f32 0.0, %v10058
        %v10060 = vpop.f32.mrf.mxu0
        %10061 = vmatprep.mubr.bf16.mxu0 0
        %10062 = vmatmul.mubr.bf16.gmra.mxu0 %v9872
        %v10063 = vpop.f32.mrf.mxu0
        %v10064 = vadd.f32 0.0, %v10063
        %v10065 = vpop.f32.mrf.mxu0
        %v10066 = vpop.f32.mrf.mxu0
        %v10067 = vadd.f32 0.0, %v10066
        %v10068 = vpop.f32.mrf.mxu0
        %10069 = vmatprep.mubr.bf16.mxu0 0
        %10070 = vmatmul.mubr.bf16.gmra.mxu0 %v9873
        %v10071 = vpop.f32.mrf.mxu0
        %v10072 = vadd.f32 0.0, %v10071
        %v10073 = vpop.f32.mrf.mxu0
        %v10074 = vpop.f32.mrf.mxu0
        %v10075 = vadd.f32 0.0, %v10074
        %v10076 = vpop.f32.mrf.mxu0
        %10077 = vmatprep.mubr.bf16.mxu0 0
        %10078 = vmatmul.mubr.bf16.gmra.mxu0 %v9874
        %v10079 = vpop.f32.mrf.mxu0
        %v10080 = vadd.f32 0.0, %v10079
        %v10081 = vpop.f32.mrf.mxu0
        %v10082 = vpop.f32.mrf.mxu0
        %v10083 = vadd.f32 0.0, %v10082
        %v10084 = vpop.f32.mrf.mxu0
        %10085 = vmatprep.mubr.bf16.mxu0 0
        %10086 = vmatmul.mubr.bf16.gmra.mxu0 %v9875
        %v10087 = vpop.f32.mrf.mxu0
        %v10088 = vadd.f32 0.0, %v10087
        %v10089 = vpop.f32.mrf.mxu0
        %v10090 = vpop.f32.mrf.mxu0
        %v10091 = vadd.f32 0.0, %v10090
        %v10092 = vpop.f32.mrf.mxu0
        %10093 = vmatprep.mubr.bf16.mxu0 0
        %10094 = vmatmul.mubr.bf16.gmra.mxu0 %v9876
        %v10095 = vpop.f32.mrf.mxu0
        %v10096 = vadd.f32 0.0, %v10095
        %v10097 = vpop.f32.mrf.mxu0
        %v10098 = vpop.f32.mrf.mxu0
        %v10099 = vadd.f32 0.0, %v10098
        %v10100 = vpop.f32.mrf.mxu0
        %10101 = vdwg.mxu0
        %v10102 = vadd.f32 %v9715, %v9976
        %v10103 = vadd.f32 %v9716, %v9979
        %v10104 = vadd.f32 %v9717, %v9984
        %v10105 = vadd.f32 %v9718, %v9987
        %v10106 = vadd.f32 %v9719, %v9992
        %v10107 = vadd.f32 %v9720, %v9995
        %v10108 = vadd.f32 %v9721, %v10000
        %v10109 = vadd.f32 %v9722, %v10003
        %v10110 = vadd.f32 %v9723, %v10008
        %v10111 = vadd.f32 %v9724, %v10011
        %v10112 = vadd.f32 %v9725, %v10016
        %v10113 = vadd.f32 %v9726, %v10019
        %v10114 = vadd.f32 %v9727, %v10024
        %v10115 = vadd.f32 %v9728, %v10027
        %v10116 = vadd.f32 %v9729, %v10032
        %v10117 = vadd.f32 %v9730, %v10035
        %v10118 = vadd.f32 %v9731, %v10040
        %v10119 = vadd.f32 %v9732, %v10043
        %v10120 = vadd.f32 %v9733, %v10048
        %v10121 = vadd.f32 %v9734, %v10051
        %v10122 = vadd.f32 %v9735, %v10056
        %v10123 = vadd.f32 %v9736, %v10059
        %v10124 = vadd.f32 %v9737, %v10064
        %v10125 = vadd.f32 %v9738, %v10067
        %v10126 = vadd.f32 %v9739, %v10072
        %v10127 = vadd.f32 %v9740, %v10075
        %v10128 = vadd.f32 %v9741, %v10080
        %v10129 = vadd.f32 %v9742, %v10083
        %v10130 = vadd.f32 %v9743, %v10088
        %v10131 = vadd.f32 %v9744, %v10091
        %v10132 = vadd.f32 %v9745, %v10096
        %v10133 = vadd.f32 %v9746, %v10099
        %v10134 = vld [vmem:[%s9747] sm:$0xf]
        %v10135 = vld [vmem:[%s9747 + $0x4] sm:$0xf]
        %v10136 = vld [vmem:[%s9747 + $0x8] sm:$0x1]
        %v10137 = vld [vmem:[%s9747 + $0xc] sm:$0xf]
        %v10138 = vld [vmem:[%s9747 + $0x10] sm:$0xf]
        %v10139 = vld [vmem:[%s9747 + $0x14] sm:$0x1]
        %v10140 = vld [vmem:[%s9747 + $0x18] sm:$0xf]
        %v10141 = vld [vmem:[%s9747 + $0x1c] sm:$0xf]
        %v10142 = vld [vmem:[%s9747 + $0x20] sm:$0x1]
        %v10143 = vld [vmem:[%s9747 + $0x24] sm:$0xf]
        %v10144 = vld [vmem:[%s9747 + $0x28] sm:$0xf]
        %v10145 = vld [vmem:[%s9747 + $0x2c] sm:$0x1]
        %v10146 = vld [vmem:[%s9747 + $0x30] sm:$0xf]
        %v10147 = vld [vmem:[%s9747 + $0x34] sm:$0xf]
        %v10148 = vld [vmem:[%s9747 + $0x38] sm:$0x1]
        %v10149 = vld [vmem:[%s9747 + $0x3c] sm:$0xf]
        %v10150 = vld [vmem:[%s9747 + $0x40] sm:$0xf]
        %v10151 = vld [vmem:[%s9747 + $0x44] sm:$0x1]
        %v10152 = vld [vmem:[%s9747 + $0x48] sm:$0xf]
        %v10153 = vld [vmem:[%s9747 + $0x4c] sm:$0xf]
        %v10154 = vld [vmem:[%s9747 + $0x50] sm:$0x1]
        %v10155 = vld [vmem:[%s9747 + $0x54] sm:$0xf]
        %v10156 = vld [vmem:[%s9747 + $0x58] sm:$0xf]
        %v10157 = vld [vmem:[%s9747 + $0x5c] sm:$0x1]
        %v10158 = vld [vmem:[%s9747 + $0x60] sm:$0xf]
        %v10159 = vld [vmem:[%s9747 + $0x64] sm:$0xf]
        %v10160 = vld [vmem:[%s9747 + $0x68] sm:$0x1]
        %v10161 = vld [vmem:[%s9747 + $0x6c] sm:$0xf]
        %v10162 = vld [vmem:[%s9747 + $0x70] sm:$0xf]
        %v10163 = vld [vmem:[%s9747 + $0x74] sm:$0x1]
        %v10164 = vld [vmem:[%s9747 + $0x78] sm:$0xf]
        %v10165 = vld [vmem:[%s9747 + $0x7c] sm:$0xf]
        %v10166 = vld [vmem:[%s9747 + $0x80] sm:$0x1]
        %v10167 = vld [vmem:[%s9747 + $0x84] sm:$0xf]
        %v10168 = vld [vmem:[%s9747 + $0x88] sm:$0xf]
        %v10169 = vld [vmem:[%s9747 + $0x8c] sm:$0x1]
        %v10170 = vld [vmem:[%s9747 + $0x90] sm:$0xf]
        %v10171 = vld [vmem:[%s9747 + $0x94] sm:$0xf]
        %v10172 = vld [vmem:[%s9747 + $0x98] sm:$0x1]
        %v10173 = vld [vmem:[%s9747 + $0x9c] sm:$0xf]
        %v10174 = vld [vmem:[%s9747 + $0xa0] sm:$0xf]
        %v10175 = vld [vmem:[%s9747 + $0xa4] sm:$0x1]
        %v10176 = vld [vmem:[%s9747 + $0xa8] sm:$0xf]
        %v10177 = vld [vmem:[%s9747 + $0xac] sm:$0xf]
        %v10178 = vld [vmem:[%s9747 + $0xb0] sm:$0x1]
        %v10179 = vld [vmem:[%s9747 + $0xb4] sm:$0xf]
        %v10180 = vld [vmem:[%s9747 + $0xb8] sm:$0xf]
        %v10181 = vld [vmem:[%s9747 + $0xbc] sm:$0x1]
        %v10183 = vshrl.u32 %v10134, 16
        %v10185 = vrot.slane %v10183, 4
        %v10186 = vshll.u32 %v10134, 16
        %v10188 = vrot.slane %v10186, 5
        %v10189 = vor.u32 %v10185, %v10188
        %v10190 = vrot.slane %v10189, 4
        %v10192 = vshll.u32 %v10135, 16
        %v10194 = vrot.slane %v10192, 5
        %v10195 = vsel %vm1127, %v10190, %v10194
        %v10196 = vshrl.u32 %v10135, 16
        %v10198 = vrot.slane %v10196, 4
        %v10199 = vor.u32 %v10198, %v10194
        %v10200 = vrot.slane %v10199, 4
        %v10202 = vshll.u32 %v10136, 16
        %v10204 = vrot.slane %v10202, 5
        %v10205 = vsel %vm1127, %v10200, %v10204
        %v10207 = vshrl.u32 %v10137, 16
        %v10209 = vrot.slane %v10207, 4
        %v10210 = vshll.u32 %v10137, 16
        %v10212 = vrot.slane %v10210, 5
        %v10213 = vor.u32 %v10209, %v10212
        %v10214 = vrot.slane %v10213, 4
        %v10216 = vshll.u32 %v10138, 16
        %v10218 = vrot.slane %v10216, 5
        %v10219 = vsel %vm1127, %v10214, %v10218
        %v10220 = vshrl.u32 %v10138, 16
        %v10222 = vrot.slane %v10220, 4
        %v10223 = vor.u32 %v10222, %v10218
        %v10224 = vrot.slane %v10223, 4
        %v10226 = vshll.u32 %v10139, 16
        %v10228 = vrot.slane %v10226, 5
        %v10229 = vsel %vm1127, %v10224, %v10228
        %v10231 = vshrl.u32 %v10140, 16
        %v10233 = vrot.slane %v10231, 4
        %v10234 = vshll.u32 %v10140, 16
        %v10236 = vrot.slane %v10234, 5
        %v10237 = vor.u32 %v10233, %v10236
        %v10238 = vrot.slane %v10237, 4
        %v10240 = vshll.u32 %v10141, 16
        %v10242 = vrot.slane %v10240, 5
        %v10243 = vsel %vm1127, %v10238, %v10242
        %v10244 = vshrl.u32 %v10141, 16
        %v10246 = vrot.slane %v10244, 4
        %v10247 = vor.u32 %v10246, %v10242
        %v10248 = vrot.slane %v10247, 4
        %v10250 = vshll.u32 %v10142, 16
        %v10252 = vrot.slane %v10250, 5
        %v10253 = vsel %vm1127, %v10248, %v10252
        %v10255 = vshrl.u32 %v10143, 16
        %v10257 = vrot.slane %v10255, 4
        %v10258 = vshll.u32 %v10143, 16
        %v10260 = vrot.slane %v10258, 5
        %v10261 = vor.u32 %v10257, %v10260
        %v10262 = vrot.slane %v10261, 4
        %v10264 = vshll.u32 %v10144, 16
        %v10266 = vrot.slane %v10264, 5
        %v10267 = vsel %vm1127, %v10262, %v10266
        %v10268 = vshrl.u32 %v10144, 16
        %v10270 = vrot.slane %v10268, 4
        %v10271 = vor.u32 %v10270, %v10266
        %v10272 = vrot.slane %v10271, 4
        %v10274 = vshll.u32 %v10145, 16
        %v10276 = vrot.slane %v10274, 5
        %v10277 = vsel %vm1127, %v10272, %v10276
        %v10279 = vshrl.u32 %v10146, 16
        %v10281 = vrot.slane %v10279, 4
        %v10282 = vshll.u32 %v10146, 16
        %v10284 = vrot.slane %v10282, 5
        %v10285 = vor.u32 %v10281, %v10284
        %v10286 = vrot.slane %v10285, 4
        %v10288 = vshll.u32 %v10147, 16
        %v10290 = vrot.slane %v10288, 5
        %v10291 = vsel %vm1127, %v10286, %v10290
        %v10292 = vshrl.u32 %v10147, 16
        %v10294 = vrot.slane %v10292, 4
        %v10295 = vor.u32 %v10294, %v10290
        %v10296 = vrot.slane %v10295, 4
        %v10298 = vshll.u32 %v10148, 16
        %v10300 = vrot.slane %v10298, 5
        %v10301 = vsel %vm1127, %v10296, %v10300
        %v10303 = vshrl.u32 %v10149, 16
        %v10305 = vrot.slane %v10303, 4
        %v10306 = vshll.u32 %v10149, 16
        %v10308 = vrot.slane %v10306, 5
        %v10309 = vor.u32 %v10305, %v10308
        %v10310 = vrot.slane %v10309, 4
        %v10312 = vshll.u32 %v10150, 16
        %v10314 = vrot.slane %v10312, 5
        %v10315 = vsel %vm1127, %v10310, %v10314
        %v10316 = vshrl.u32 %v10150, 16
        %v10318 = vrot.slane %v10316, 4
        %v10319 = vor.u32 %v10318, %v10314
        %v10320 = vrot.slane %v10319, 4
        %v10322 = vshll.u32 %v10151, 16
        %v10324 = vrot.slane %v10322, 5
        %v10325 = vsel %vm1127, %v10320, %v10324
        %v10327 = vshrl.u32 %v10152, 16
        %v10329 = vrot.slane %v10327, 4
        %v10330 = vshll.u32 %v10152, 16
        %v10332 = vrot.slane %v10330, 5
        %v10333 = vor.u32 %v10329, %v10332
        %v10334 = vrot.slane %v10333, 4
        %v10336 = vshll.u32 %v10153, 16
        %v10338 = vrot.slane %v10336, 5
        %v10339 = vsel %vm1127, %v10334, %v10338
        %v10340 = vshrl.u32 %v10153, 16
        %v10342 = vrot.slane %v10340, 4
        %v10343 = vor.u32 %v10342, %v10338
        %v10344 = vrot.slane %v10343, 4
        %v10346 = vshll.u32 %v10154, 16
        %v10348 = vrot.slane %v10346, 5
        %v10349 = vsel %vm1127, %v10344, %v10348
        %v10351 = vshrl.u32 %v10155, 16
        %v10353 = vrot.slane %v10351, 4
        %v10354 = vshll.u32 %v10155, 16
        %v10356 = vrot.slane %v10354, 5
        %v10357 = vor.u32 %v10353, %v10356
        %v10358 = vrot.slane %v10357, 4
        %v10360 = vshll.u32 %v10156, 16
        %v10362 = vrot.slane %v10360, 5
        %v10363 = vsel %vm1127, %v10358, %v10362
        %v10364 = vshrl.u32 %v10156, 16
        %v10366 = vrot.slane %v10364, 4
        %v10367 = vor.u32 %v10366, %v10362
        %v10368 = vrot.slane %v10367, 4
        %v10370 = vshll.u32 %v10157, 16
        %v10372 = vrot.slane %v10370, 5
        %v10373 = vsel %vm1127, %v10368, %v10372
        %v10375 = vshrl.u32 %v10158, 16
        %v10377 = vrot.slane %v10375, 4
        %v10378 = vshll.u32 %v10158, 16
        %v10380 = vrot.slane %v10378, 5
        %v10381 = vor.u32 %v10377, %v10380
        %v10382 = vrot.slane %v10381, 4
        %v10384 = vshll.u32 %v10159, 16
        %v10386 = vrot.slane %v10384, 5
        %v10387 = vsel %vm1127, %v10382, %v10386
        %v10388 = vshrl.u32 %v10159, 16
        %v10390 = vrot.slane %v10388, 4
        %v10391 = vor.u32 %v10390, %v10386
        %v10392 = vrot.slane %v10391, 4
        %v10394 = vshll.u32 %v10160, 16
        %v10396 = vrot.slane %v10394, 5
        %v10397 = vsel %vm1127, %v10392, %v10396
        %v10399 = vshrl.u32 %v10161, 16
        %v10401 = vrot.slane %v10399, 4
        %v10402 = vshll.u32 %v10161, 16
        %v10404 = vrot.slane %v10402, 5
        %v10405 = vor.u32 %v10401, %v10404
        %v10406 = vrot.slane %v10405, 4
        %v10408 = vshll.u32 %v10162, 16
        %v10410 = vrot.slane %v10408, 5
        %v10411 = vsel %vm1127, %v10406, %v10410
        %v10412 = vshrl.u32 %v10162, 16
        %v10414 = vrot.slane %v10412, 4
        %v10415 = vor.u32 %v10414, %v10410
        %v10416 = vrot.slane %v10415, 4
        %v10418 = vshll.u32 %v10163, 16
        %v10420 = vrot.slane %v10418, 5
        %v10421 = vsel %vm1127, %v10416, %v10420
        %v10423 = vshrl.u32 %v10164, 16
        %v10425 = vrot.slane %v10423, 4
        %v10426 = vshll.u32 %v10164, 16
        %v10428 = vrot.slane %v10426, 5
        %v10429 = vor.u32 %v10425, %v10428
        %v10430 = vrot.slane %v10429, 4
        %v10432 = vshll.u32 %v10165, 16
        %v10434 = vrot.slane %v10432, 5
        %v10435 = vsel %vm1127, %v10430, %v10434
        %v10436 = vshrl.u32 %v10165, 16
        %v10438 = vrot.slane %v10436, 4
        %v10439 = vor.u32 %v10438, %v10434
        %v10440 = vrot.slane %v10439, 4
        %v10442 = vshll.u32 %v10166, 16
        %v10444 = vrot.slane %v10442, 5
        %v10445 = vsel %vm1127, %v10440, %v10444
        %v10447 = vshrl.u32 %v10167, 16
        %v10449 = vrot.slane %v10447, 4
        %v10450 = vshll.u32 %v10167, 16
        %v10452 = vrot.slane %v10450, 5
        %v10453 = vor.u32 %v10449, %v10452
        %v10454 = vrot.slane %v10453, 4
        %v10456 = vshll.u32 %v10168, 16
        %v10458 = vrot.slane %v10456, 5
        %v10459 = vsel %vm1127, %v10454, %v10458
        %v10460 = vshrl.u32 %v10168, 16
        %v10462 = vrot.slane %v10460, 4
        %v10463 = vor.u32 %v10462, %v10458
        %v10464 = vrot.slane %v10463, 4
        %v10466 = vshll.u32 %v10169, 16
        %v10468 = vrot.slane %v10466, 5
        %v10469 = vsel %vm1127, %v10464, %v10468
        %v10471 = vshrl.u32 %v10170, 16
        %v10473 = vrot.slane %v10471, 4
        %v10474 = vshll.u32 %v10170, 16
        %v10476 = vrot.slane %v10474, 5
        %v10477 = vor.u32 %v10473, %v10476
        %v10478 = vrot.slane %v10477, 4
        %v10480 = vshll.u32 %v10171, 16
        %v10482 = vrot.slane %v10480, 5
        %v10483 = vsel %vm1127, %v10478, %v10482
        %v10484 = vshrl.u32 %v10171, 16
        %v10486 = vrot.slane %v10484, 4
        %v10487 = vor.u32 %v10486, %v10482
        %v10488 = vrot.slane %v10487, 4
        %v10490 = vshll.u32 %v10172, 16
        %v10492 = vrot.slane %v10490, 5
        %v10493 = vsel %vm1127, %v10488, %v10492
        %v10495 = vshrl.u32 %v10173, 16
        %v10497 = vrot.slane %v10495, 4
        %v10498 = vshll.u32 %v10173, 16
        %v10500 = vrot.slane %v10498, 5
        %v10501 = vor.u32 %v10497, %v10500
        %v10502 = vrot.slane %v10501, 4
        %v10504 = vshll.u32 %v10174, 16
        %v10506 = vrot.slane %v10504, 5
        %v10507 = vsel %vm1127, %v10502, %v10506
        %v10508 = vshrl.u32 %v10174, 16
        %v10510 = vrot.slane %v10508, 4
        %v10511 = vor.u32 %v10510, %v10506
        %v10512 = vrot.slane %v10511, 4
        %v10514 = vshll.u32 %v10175, 16
        %v10516 = vrot.slane %v10514, 5
        %v10517 = vsel %vm1127, %v10512, %v10516
        %v10519 = vshrl.u32 %v10176, 16
        %v10521 = vrot.slane %v10519, 4
        %v10522 = vshll.u32 %v10176, 16
        %v10524 = vrot.slane %v10522, 5
        %v10525 = vor.u32 %v10521, %v10524
        %v10526 = vrot.slane %v10525, 4
        %v10528 = vshll.u32 %v10177, 16
        %v10530 = vrot.slane %v10528, 5
        %v10531 = vsel %vm1127, %v10526, %v10530
        %v10532 = vshrl.u32 %v10177, 16
        %v10534 = vrot.slane %v10532, 4
        %v10535 = vor.u32 %v10534, %v10530
        %v10536 = vrot.slane %v10535, 4
        %v10538 = vshll.u32 %v10178, 16
        %v10540 = vrot.slane %v10538, 5
        %v10541 = vsel %vm1127, %v10536, %v10540
        %v10543 = vshrl.u32 %v10179, 16
        %v10545 = vrot.slane %v10543, 4
        %v10546 = vshll.u32 %v10179, 16
        %v10548 = vrot.slane %v10546, 5
        %v10549 = vor.u32 %v10545, %v10548
        %v10550 = vrot.slane %v10549, 4
        %v10552 = vshll.u32 %v10180, 16
        %v10554 = vrot.slane %v10552, 5
        %v10555 = vsel %vm1127, %v10550, %v10554
        %v10556 = vshrl.u32 %v10180, 16
        %v10558 = vrot.slane %v10556, 4
        %v10559 = vor.u32 %v10558, %v10554
        %v10560 = vrot.slane %v10559, 4
        %v10562 = vshll.u32 %v10181, 16
        %v10564 = vrot.slane %v10562, 5
        %v10565 = vsel %vm1127, %v10560, %v10564
        %s10566 = scalar_lea.vmem [#allocation6], 448
        %v10567 = vld [vmem:[%s10566] sm:$0xf]
        %v10568 = vld [vmem:[%s10566 + $0x4] sm:$0xf]
        %v10569 = vld [vmem:[%s10566 + $0x8] sm:$0xf]
        %v10570 = vld [vmem:[%s10566 + $0xc] sm:$0xf]
        %v10571 = vld [vmem:[%s10566 + $0x10] sm:$0xf]
        %v10572 = vld [vmem:[%s10566 + $0x14] sm:$0xf]
        %v10573 = vld [vmem:[%s10566 + $0x18] sm:$0xf]
        %v10574 = vld [vmem:[%s10566 + $0x1c] sm:$0xf]
        %v10575 = vld [vmem:[%s10566 + $0x20] sm:$0xf]
        %v10576 = vld [vmem:[%s10566 + $0x24] sm:$0xf]
        %v10577 = vld [vmem:[%s10566 + $0x28] sm:$0xf]
        %v10578 = vld [vmem:[%s10566 + $0x2c] sm:$0xf]
        %v10579 = vld [vmem:[%s10566 + $0x30] sm:$0xf]
        %v10580 = vld [vmem:[%s10566 + $0x34] sm:$0xf]
        %v10581 = vld [vmem:[%s10566 + $0x38] sm:$0xf]
        %v10582 = vld [vmem:[%s10566 + $0x3c] sm:$0xf]
        %v10583 = vunpack.c.l.b16 %v10195
        %v10584 = vunpack.c.l.b16 %v10205
        %v10585 = vunpack.c.l.b16 %v10219
        %v10586 = vunpack.c.l.b16 %v10229
        %v10587 = vunpack.c.l.b16 %v10243
        %v10588 = vunpack.c.l.b16 %v10253
        %v10589 = vunpack.c.l.b16 %v10267
        %v10590 = vunpack.c.l.b16 %v10277
        %v10591 = vunpack.c.l.b16 %v10291
        %v10592 = vunpack.c.l.b16 %v10301
        %v10593 = vunpack.c.l.b16 %v10315
        %v10594 = vunpack.c.l.b16 %v10325
        %v10595 = vunpack.c.l.b16 %v10339
        %v10596 = vunpack.c.l.b16 %v10349
        %v10597 = vunpack.c.l.b16 %v10363
        %v10598 = vunpack.c.l.b16 %v10373
        %v10599 = vunpack.c.l.b16 %v10387
        %v10600 = vunpack.c.l.b16 %v10397
        %v10601 = vunpack.c.l.b16 %v10411
        %v10602 = vunpack.c.l.b16 %v10421
        %v10603 = vunpack.c.l.b16 %v10435
        %v10604 = vunpack.c.l.b16 %v10445
        %v10605 = vunpack.c.l.b16 %v10459
        %v10606 = vunpack.c.l.b16 %v10469
        %v10607 = vunpack.c.l.b16 %v10483
        %v10608 = vunpack.c.l.b16 %v10493
        %v10609 = vunpack.c.l.b16 %v10507
        %v10610 = vunpack.c.l.b16 %v10517
        %v10611 = vunpack.c.l.b16 %v10531
        %v10612 = vunpack.c.l.b16 %v10541
        %v10613 = vunpack.c.l.b16 %v10555
        %v10614 = vunpack.c.l.b16 %v10565
        %v10615 = vpack.c.b16 %v10584, %v10583
        %v10616 = vpack.c.b16 %v10586, %v10585
        %v10617 = vpack.c.b16 %v10588, %v10587
        %v10618 = vpack.c.b16 %v10590, %v10589
        %v10619 = vpack.c.b16 %v10592, %v10591
        %v10620 = vpack.c.b16 %v10594, %v10593
        %v10621 = vpack.c.b16 %v10596, %v10595
        %v10622 = vpack.c.b16 %v10598, %v10597
        %v10623 = vpack.c.b16 %v10600, %v10599
        %v10624 = vpack.c.b16 %v10602, %v10601
        %v10625 = vpack.c.b16 %v10604, %v10603
        %v10626 = vpack.c.b16 %v10606, %v10605
        %v10627 = vpack.c.b16 %v10608, %v10607
        %v10628 = vpack.c.b16 %v10610, %v10609
        %v10629 = vpack.c.b16 %v10612, %v10611
        %v10630 = vpack.c.b16 %v10614, %v10613
        %v10663 = vunpack.c.l.b16 %v10567
        %v10664 = vunpack.c.l.b16 %v10568
        %v10665 = vunpack.c.l.b16 %v10569
        %v10666 = vunpack.c.l.b16 %v10570
        %v10667 = vunpack.c.l.b16 %v10571
        %v10668 = vunpack.c.l.b16 %v10572
        %v10669 = vunpack.c.l.b16 %v10573
        %v10670 = vunpack.c.l.b16 %v10574
        %v10671 = vunpack.c.l.b16 %v10575
        %v10672 = vunpack.c.l.b16 %v10576
        %v10673 = vunpack.c.l.b16 %v10577
        %v10674 = vunpack.c.l.b16 %v10578
        %v10675 = vunpack.c.l.b16 %v10579
        %v10676 = vunpack.c.l.b16 %v10580
        %v10677 = vunpack.c.l.b16 %v10581
        %v10678 = vunpack.c.l.b16 %v10582
        %v10679 = vpack.c.b16 %v10664, %v10663
        %v10680 = vpack.c.b16 %v10666, %v10665
        %v10681 = vpack.c.b16 %v10668, %v10667
        %v10682 = vpack.c.b16 %v10670, %v10669
        %v10683 = vpack.c.b16 %v10672, %v10671
        %v10684 = vpack.c.b16 %v10674, %v10673
        %v10685 = vpack.c.b16 %v10676, %v10675
        %v10686 = vpack.c.b16 %v10678, %v10677
        %10695 = vmatprep.subr.bf16.mxu0 0
        %10696 = vmatpush1.bf16.msra.mxu0 %v10686
        %10697 = vmatprep.subr.bf16.mxu0 0
        %10698 = vmatpush1.bf16.msra.mxu0 %v10685
        %10699 = vmatprep.subr.bf16.mxu0 0
        %10700 = vmatpush1.bf16.msra.mxu0 %v10684
        %10701 = vmatprep.subr.bf16.mxu0 0
        %10702 = vmatpush1.bf16.msra.mxu0 %v10683
        %10703 = vmatprep.subr.bf16.mxu0 0
        %10704 = vmatpush1.bf16.msra.mxu0 %v10682
        %10705 = vmatprep.subr.bf16.mxu0 0
        %10706 = vmatpush1.bf16.msra.mxu0 %v10681
        %10707 = vmatprep.subr.bf16.mxu0 0
        %10708 = vmatpush1.bf16.msra.mxu0 %v10680
        %10709 = vmatprep.subr.bf16.mxu0 0
        %10710 = vmatpush1.bf16.msra.mxu0 %v10679
        %10711 = vmatprep.subr.bf16.mxu0 0
        %10712 = vmatpush2.bf16.msra.mxu0 0
        %10713 = vmatprep.subr.bf16.mxu0 0
        %10714 = vmatpush2.bf16.msra.mxu0 0
        %10715 = vmatprep.subr.bf16.mxu0 0
        %10716 = vmatpush2.bf16.msra.mxu0 0
        %10717 = vmatprep.subr.bf16.mxu0 0
        %10718 = vmatpush2.bf16.msra.mxu0 0
        %10719 = vmatprep.subr.bf16.mxu0 0
        %10720 = vmatpush2.bf16.msra.mxu0 0
        %10721 = vmatprep.subr.bf16.mxu0 0
        %10722 = vmatpush2.bf16.msra.mxu0 0
        %10723 = vmatprep.subr.bf16.mxu0 0
        %10724 = vmatpush2.bf16.msra.mxu0 0
        %10725 = vmatprep.subr.bf16.mxu0 0
        %10726 = vmatpush2.bf16.msra.mxu0 0
        %10727 = vmatprep.mubr.bf16.mxu0 0
        %10728 = vmatmul.mubr.bf16.gmra.mxu0 %v10615
        %v10729 = vpop.f32.mrf.mxu0
        %v10730 = vadd.f32 0.0, %v10729
        %v10731 = vpop.f32.mrf.mxu0
        %v10732 = vpop.f32.mrf.mxu0
        %v10733 = vadd.f32 0.0, %v10732
        %v10734 = vpop.f32.mrf.mxu0
        %10735 = vmatprep.mubr.bf16.mxu0 0
        %10736 = vmatmul.mubr.bf16.gmra.mxu0 %v10616
        %v10737 = vpop.f32.mrf.mxu0
        %v10738 = vadd.f32 0.0, %v10737
        %v10739 = vpop.f32.mrf.mxu0
        %v10740 = vpop.f32.mrf.mxu0
        %v10741 = vadd.f32 0.0, %v10740
        %v10742 = vpop.f32.mrf.mxu0
        %10743 = vmatprep.mubr.bf16.mxu0 0
        %10744 = vmatmul.mubr.bf16.gmra.mxu0 %v10617
        %v10745 = vpop.f32.mrf.mxu0
        %v10746 = vadd.f32 0.0, %v10745
        %v10747 = vpop.f32.mrf.mxu0
        %v10748 = vpop.f32.mrf.mxu0
        %v10749 = vadd.f32 0.0, %v10748
        %v10750 = vpop.f32.mrf.mxu0
        %10751 = vmatprep.mubr.bf16.mxu0 0
        %10752 = vmatmul.mubr.bf16.gmra.mxu0 %v10618
        %v10753 = vpop.f32.mrf.mxu0
        %v10754 = vadd.f32 0.0, %v10753
        %v10755 = vpop.f32.mrf.mxu0
        %v10756 = vpop.f32.mrf.mxu0
        %v10757 = vadd.f32 0.0, %v10756
        %v10758 = vpop.f32.mrf.mxu0
        %10759 = vmatprep.mubr.bf16.mxu0 0
        %10760 = vmatmul.mubr.bf16.gmra.mxu0 %v10619
        %v10761 = vpop.f32.mrf.mxu0
        %v10762 = vadd.f32 0.0, %v10761
        %v10763 = vpop.f32.mrf.mxu0
        %v10764 = vpop.f32.mrf.mxu0
        %v10765 = vadd.f32 0.0, %v10764
        %v10766 = vpop.f32.mrf.mxu0
        %10767 = vmatprep.mubr.bf16.mxu0 0
        %10768 = vmatmul.mubr.bf16.gmra.mxu0 %v10620
        %v10769 = vpop.f32.mrf.mxu0
        %v10770 = vadd.f32 0.0, %v10769
        %v10771 = vpop.f32.mrf.mxu0
        %v10772 = vpop.f32.mrf.mxu0
        %v10773 = vadd.f32 0.0, %v10772
        %v10774 = vpop.f32.mrf.mxu0
        %10775 = vmatprep.mubr.bf16.mxu0 0
        %10776 = vmatmul.mubr.bf16.gmra.mxu0 %v10621
        %v10777 = vpop.f32.mrf.mxu0
        %v10778 = vadd.f32 0.0, %v10777
        %v10779 = vpop.f32.mrf.mxu0
        %v10780 = vpop.f32.mrf.mxu0
        %v10781 = vadd.f32 0.0, %v10780
        %v10782 = vpop.f32.mrf.mxu0
        %10783 = vmatprep.mubr.bf16.mxu0 0
        %10784 = vmatmul.mubr.bf16.gmra.mxu0 %v10622
        %v10785 = vpop.f32.mrf.mxu0
        %v10786 = vadd.f32 0.0, %v10785
        %v10787 = vpop.f32.mrf.mxu0
        %v10788 = vpop.f32.mrf.mxu0
        %v10789 = vadd.f32 0.0, %v10788
        %v10790 = vpop.f32.mrf.mxu0
        %10791 = vmatprep.mubr.bf16.mxu0 0
        %10792 = vmatmul.mubr.bf16.gmra.mxu0 %v10623
        %v10793 = vpop.f32.mrf.mxu0
        %v10794 = vadd.f32 0.0, %v10793
        %v10795 = vpop.f32.mrf.mxu0
        %v10796 = vpop.f32.mrf.mxu0
        %v10797 = vadd.f32 0.0, %v10796
        %v10798 = vpop.f32.mrf.mxu0
        %10799 = vmatprep.mubr.bf16.mxu0 0
        %10800 = vmatmul.mubr.bf16.gmra.mxu0 %v10624
        %v10801 = vpop.f32.mrf.mxu0
        %v10802 = vadd.f32 0.0, %v10801
        %v10803 = vpop.f32.mrf.mxu0
        %v10804 = vpop.f32.mrf.mxu0
        %v10805 = vadd.f32 0.0, %v10804
        %v10806 = vpop.f32.mrf.mxu0
        %10807 = vmatprep.mubr.bf16.mxu0 0
        %10808 = vmatmul.mubr.bf16.gmra.mxu0 %v10625
        %v10809 = vpop.f32.mrf.mxu0
        %v10810 = vadd.f32 0.0, %v10809
        %v10811 = vpop.f32.mrf.mxu0
        %v10812 = vpop.f32.mrf.mxu0
        %v10813 = vadd.f32 0.0, %v10812
        %v10814 = vpop.f32.mrf.mxu0
        %10815 = vmatprep.mubr.bf16.mxu0 0
        %10816 = vmatmul.mubr.bf16.gmra.mxu0 %v10626
        %v10817 = vpop.f32.mrf.mxu0
        %v10818 = vadd.f32 0.0, %v10817
        %v10819 = vpop.f32.mrf.mxu0
        %v10820 = vpop.f32.mrf.mxu0
        %v10821 = vadd.f32 0.0, %v10820
        %v10822 = vpop.f32.mrf.mxu0
        %10823 = vmatprep.mubr.bf16.mxu0 0
        %10824 = vmatmul.mubr.bf16.gmra.mxu0 %v10627
        %v10825 = vpop.f32.mrf.mxu0
        %v10826 = vadd.f32 0.0, %v10825
        %v10827 = vpop.f32.mrf.mxu0
        %v10828 = vpop.f32.mrf.mxu0
        %v10829 = vadd.f32 0.0, %v10828
        %v10830 = vpop.f32.mrf.mxu0
        %10831 = vmatprep.mubr.bf16.mxu0 0
        %10832 = vmatmul.mubr.bf16.gmra.mxu0 %v10628
        %v10833 = vpop.f32.mrf.mxu0
        %v10834 = vadd.f32 0.0, %v10833
        %v10835 = vpop.f32.mrf.mxu0
        %v10836 = vpop.f32.mrf.mxu0
        %v10837 = vadd.f32 0.0, %v10836
        %v10838 = vpop.f32.mrf.mxu0
        %10839 = vmatprep.mubr.bf16.mxu0 0
        %10840 = vmatmul.mubr.bf16.gmra.mxu0 %v10629
        %v10841 = vpop.f32.mrf.mxu0
        %v10842 = vadd.f32 0.0, %v10841
        %v10843 = vpop.f32.mrf.mxu0
        %v10844 = vpop.f32.mrf.mxu0
        %v10845 = vadd.f32 0.0, %v10844
        %v10846 = vpop.f32.mrf.mxu0
        %10847 = vmatprep.mubr.bf16.mxu0 0
        %10848 = vmatmul.mubr.bf16.gmra.mxu0 %v10630
        %v10849 = vpop.f32.mrf.mxu0
        %v10850 = vadd.f32 0.0, %v10849
        %v10851 = vpop.f32.mrf.mxu0
        %v10852 = vpop.f32.mrf.mxu0
        %v10853 = vadd.f32 0.0, %v10852
        %v10854 = vpop.f32.mrf.mxu0
        %10855 = vdwg.mxu0
        %v10856 = vadd.f32 %v10102, %v10730
        %v10857 = vadd.f32 %v10103, %v10733
        %v10858 = vadd.f32 %v10104, %v10738
        %v10859 = vadd.f32 %v10105, %v10741
        %v10860 = vadd.f32 %v10106, %v10746
        %v10861 = vadd.f32 %v10107, %v10749
        %v10862 = vadd.f32 %v10108, %v10754
        %v10863 = vadd.f32 %v10109, %v10757
        %v10864 = vadd.f32 %v10110, %v10762
        %v10865 = vadd.f32 %v10111, %v10765
        %v10866 = vadd.f32 %v10112, %v10770
        %v10867 = vadd.f32 %v10113, %v10773
        %v10868 = vadd.f32 %v10114, %v10778
        %v10869 = vadd.f32 %v10115, %v10781
        %v10870 = vadd.f32 %v10116, %v10786
        %v10871 = vadd.f32 %v10117, %v10789
        %v10872 = vadd.f32 %v10118, %v10794
        %v10873 = vadd.f32 %v10119, %v10797
        %v10874 = vadd.f32 %v10120, %v10802
        %v10875 = vadd.f32 %v10121, %v10805
        %v10876 = vadd.f32 %v10122, %v10810
        %v10877 = vadd.f32 %v10123, %v10813
        %v10878 = vadd.f32 %v10124, %v10818
        %v10879 = vadd.f32 %v10125, %v10821
        %v10880 = vadd.f32 %v10126, %v10826
        %v10881 = vadd.f32 %v10127, %v10829
        %v10882 = vadd.f32 %v10128, %v10834
        %v10883 = vadd.f32 %v10129, %v10837
        %v10884 = vadd.f32 %v10130, %v10842
        %v10885 = vadd.f32 %v10131, %v10845
        %v10886 = vadd.f32 %v10132, %v10850
        %v10887 = vadd.f32 %v10133, %v10853
        %v10888 = vld [vmem:[%s9747] sm:$0xe]
        %v10889 = vld [vmem:[%s9747 + $0xc] sm:$0xe]
        %v10890 = vld [vmem:[%s9747 + $0x18] sm:$0xe]
        %v10891 = vld [vmem:[%s9747 + $0x24] sm:$0xe]
        %v10892 = vld [vmem:[%s9747 + $0x30] sm:$0xe]
        %v10893 = vld [vmem:[%s9747 + $0x3c] sm:$0xe]
        %v10894 = vld [vmem:[%s9747 + $0x48] sm:$0xe]
        %v10895 = vld [vmem:[%s9747 + $0x54] sm:$0xe]
        %v10896 = vld [vmem:[%s9747 + $0x60] sm:$0xe]
        %v10897 = vld [vmem:[%s9747 + $0x6c] sm:$0xe]
        %v10898 = vld [vmem:[%s9747 + $0x78] sm:$0xe]
        %v10899 = vld [vmem:[%s9747 + $0x84] sm:$0xe]
        %v10900 = vld [vmem:[%s9747 + $0x90] sm:$0xe]
        %v10901 = vld [vmem:[%s9747 + $0x9c] sm:$0xe]
        %v10902 = vld [vmem:[%s9747 + $0xa8] sm:$0xe]
        %v10903 = vld [vmem:[%s9747 + $0xb4] sm:$0xe]
        %v10952 = vrot.slane %v10888, 5
        %v10953 = vrot.slane %v10952, 4
        %v10954 = vrot.slane %v10135, 5
        %v10955 = vsel %vm2157, %v10953, %v10954
        %v10956 = vrot.slane %v10954, 4
        %v10957 = vrot.slane %v10136, 5
        %v10958 = vsel %vm2157, %v10956, %v10957
        %v10959 = vrot.slane %v10889, 5
        %v10960 = vrot.slane %v10959, 4
        %v10961 = vrot.slane %v10138, 5
        %v10962 = vsel %vm2157, %v10960, %v10961
        %v10963 = vrot.slane %v10961, 4
        %v10964 = vrot.slane %v10139, 5
        %v10965 = vsel %vm2157, %v10963, %v10964
        %v10966 = vrot.slane %v10890, 5
        %v10967 = vrot.slane %v10966, 4
        %v10968 = vrot.slane %v10141, 5
        %v10969 = vsel %vm2157, %v10967, %v10968
        %v10970 = vrot.slane %v10968, 4
        %v10971 = vrot.slane %v10142, 5
        %v10972 = vsel %vm2157, %v10970, %v10971
        %v10973 = vrot.slane %v10891, 5
        %v10974 = vrot.slane %v10973, 4
        %v10975 = vrot.slane %v10144, 5
        %v10976 = vsel %vm2157, %v10974, %v10975
        %v10977 = vrot.slane %v10975, 4
        %v10978 = vrot.slane %v10145, 5
        %v10979 = vsel %vm2157, %v10977, %v10978
        %v10980 = vrot.slane %v10892, 5
        %v10981 = vrot.slane %v10980, 4
        %v10982 = vrot.slane %v10147, 5
        %v10983 = vsel %vm2157, %v10981, %v10982
        %v10984 = vrot.slane %v10982, 4
        %v10985 = vrot.slane %v10148, 5
        %v10986 = vsel %vm2157, %v10984, %v10985
        %v10987 = vrot.slane %v10893, 5
        %v10988 = vrot.slane %v10987, 4
        %v10989 = vrot.slane %v10150, 5
        %v10990 = vsel %vm2157, %v10988, %v10989
        %v10991 = vrot.slane %v10989, 4
        %v10992 = vrot.slane %v10151, 5
        %v10993 = vsel %vm2157, %v10991, %v10992
        %v10994 = vrot.slane %v10894, 5
        %v10995 = vrot.slane %v10994, 4
        %v10996 = vrot.slane %v10153, 5
        %v10997 = vsel %vm2157, %v10995, %v10996
        %v10998 = vrot.slane %v10996, 4
        %v10999 = vrot.slane %v10154, 5
        %v11000 = vsel %vm2157, %v10998, %v10999
        %v11001 = vrot.slane %v10895, 5
        %v11002 = vrot.slane %v11001, 4
        %v11003 = vrot.slane %v10156, 5
        %v11004 = vsel %vm2157, %v11002, %v11003
        %v11005 = vrot.slane %v11003, 4
        %v11006 = vrot.slane %v10157, 5
        %v11007 = vsel %vm2157, %v11005, %v11006
        %v11008 = vrot.slane %v10896, 5
        %v11009 = vrot.slane %v11008, 4
        %v11010 = vrot.slane %v10159, 5
        %v11011 = vsel %vm2157, %v11009, %v11010
        %v11012 = vrot.slane %v11010, 4
        %v11013 = vrot.slane %v10160, 5
        %v11014 = vsel %vm2157, %v11012, %v11013
        %v11015 = vrot.slane %v10897, 5
        %v11016 = vrot.slane %v11015, 4
        %v11017 = vrot.slane %v10162, 5
        %v11018 = vsel %vm2157, %v11016, %v11017
        %v11019 = vrot.slane %v11017, 4
        %v11020 = vrot.slane %v10163, 5
        %v11021 = vsel %vm2157, %v11019, %v11020
        %v11022 = vrot.slane %v10898, 5
        %v11023 = vrot.slane %v11022, 4
        %v11024 = vrot.slane %v10165, 5
        %v11025 = vsel %vm2157, %v11023, %v11024
        %v11026 = vrot.slane %v11024, 4
        %v11027 = vrot.slane %v10166, 5
        %v11028 = vsel %vm2157, %v11026, %v11027
        %v11029 = vrot.slane %v10899, 5
        %v11030 = vrot.slane %v11029, 4
        %v11031 = vrot.slane %v10168, 5
        %v11032 = vsel %vm2157, %v11030, %v11031
        %v11033 = vrot.slane %v11031, 4
        %v11034 = vrot.slane %v10169, 5
        %v11035 = vsel %vm2157, %v11033, %v11034
        %v11036 = vrot.slane %v10900, 5
        %v11037 = vrot.slane %v11036, 4
        %v11038 = vrot.slane %v10171, 5
        %v11039 = vsel %vm2157, %v11037, %v11038
        %v11040 = vrot.slane %v11038, 4
        %v11041 = vrot.slane %v10172, 5
        %v11042 = vsel %vm2157, %v11040, %v11041
        %v11043 = vrot.slane %v10901, 5
        %v11044 = vrot.slane %v11043, 4
        %v11045 = vrot.slane %v10174, 5
        %v11046 = vsel %vm2157, %v11044, %v11045
        %v11047 = vrot.slane %v11045, 4
        %v11048 = vrot.slane %v10175, 5
        %v11049 = vsel %vm2157, %v11047, %v11048
        %v11050 = vrot.slane %v10902, 5
        %v11051 = vrot.slane %v11050, 4
        %v11052 = vrot.slane %v10177, 5
        %v11053 = vsel %vm2157, %v11051, %v11052
        %v11054 = vrot.slane %v11052, 4
        %v11055 = vrot.slane %v10178, 5
        %v11056 = vsel %vm2157, %v11054, %v11055
        %v11057 = vrot.slane %v10903, 5
        %v11058 = vrot.slane %v11057, 4
        %v11059 = vrot.slane %v10180, 5
        %v11060 = vsel %vm2157, %v11058, %v11059
        %v11061 = vrot.slane %v11059, 4
        %v11062 = vrot.slane %v10181, 5
        %v11063 = vsel %vm2157, %v11061, %v11062
        %s11064 = scalar_lea.vmem [#allocation6], 512
        %v11065 = vld [vmem:[%s11064] sm:$0xf]
        %v11066 = vld [vmem:[%s11064 + $0x4] sm:$0xf]
        %v11067 = vld [vmem:[%s11064 + $0x8] sm:$0xf]
        %v11068 = vld [vmem:[%s11064 + $0xc] sm:$0xf]
        %v11069 = vld [vmem:[%s11064 + $0x10] sm:$0xf]
        %v11070 = vld [vmem:[%s11064 + $0x14] sm:$0xf]
        %v11071 = vld [vmem:[%s11064 + $0x18] sm:$0xf]
        %v11072 = vld [vmem:[%s11064 + $0x1c] sm:$0xf]
        %v11073 = vld [vmem:[%s11064 + $0x20] sm:$0xf]
        %v11074 = vld [vmem:[%s11064 + $0x24] sm:$0xf]
        %v11075 = vld [vmem:[%s11064 + $0x28] sm:$0xf]
        %v11076 = vld [vmem:[%s11064 + $0x2c] sm:$0xf]
        %v11077 = vld [vmem:[%s11064 + $0x30] sm:$0xf]
        %v11078 = vld [vmem:[%s11064 + $0x34] sm:$0xf]
        %v11079 = vld [vmem:[%s11064 + $0x38] sm:$0xf]
        %v11080 = vld [vmem:[%s11064 + $0x3c] sm:$0xf]
        %v11081 = vunpack.c.l.b16 %v10955
        %v11082 = vunpack.c.l.b16 %v10958
        %v11083 = vunpack.c.l.b16 %v10962
        %v11084 = vunpack.c.l.b16 %v10965
        %v11085 = vunpack.c.l.b16 %v10969
        %v11086 = vunpack.c.l.b16 %v10972
        %v11087 = vunpack.c.l.b16 %v10976
        %v11088 = vunpack.c.l.b16 %v10979
        %v11089 = vunpack.c.l.b16 %v10983
        %v11090 = vunpack.c.l.b16 %v10986
        %v11091 = vunpack.c.l.b16 %v10990
        %v11092 = vunpack.c.l.b16 %v10993
        %v11093 = vunpack.c.l.b16 %v10997
        %v11094 = vunpack.c.l.b16 %v11000
        %v11095 = vunpack.c.l.b16 %v11004
        %v11096 = vunpack.c.l.b16 %v11007
        %v11097 = vunpack.c.l.b16 %v11011
        %v11098 = vunpack.c.l.b16 %v11014
        %v11099 = vunpack.c.l.b16 %v11018
        %v11100 = vunpack.c.l.b16 %v11021
        %v11101 = vunpack.c.l.b16 %v11025
        %v11102 = vunpack.c.l.b16 %v11028
        %v11103 = vunpack.c.l.b16 %v11032
        %v11104 = vunpack.c.l.b16 %v11035
        %v11105 = vunpack.c.l.b16 %v11039
        %v11106 = vunpack.c.l.b16 %v11042
        %v11107 = vunpack.c.l.b16 %v11046
        %v11108 = vunpack.c.l.b16 %v11049
        %v11109 = vunpack.c.l.b16 %v11053
        %v11110 = vunpack.c.l.b16 %v11056
        %v11111 = vunpack.c.l.b16 %v11060
        %v11112 = vunpack.c.l.b16 %v11063
        %v11113 = vpack.c.b16 %v11082, %v11081
        %v11114 = vpack.c.b16 %v11084, %v11083
        %v11115 = vpack.c.b16 %v11086, %v11085
        %v11116 = vpack.c.b16 %v11088, %v11087
        %v11117 = vpack.c.b16 %v11090, %v11089
        %v11118 = vpack.c.b16 %v11092, %v11091
        %v11119 = vpack.c.b16 %v11094, %v11093
        %v11120 = vpack.c.b16 %v11096, %v11095
        %v11121 = vpack.c.b16 %v11098, %v11097
        %v11122 = vpack.c.b16 %v11100, %v11099
        %v11123 = vpack.c.b16 %v11102, %v11101
        %v11124 = vpack.c.b16 %v11104, %v11103
        %v11125 = vpack.c.b16 %v11106, %v11105
        %v11126 = vpack.c.b16 %v11108, %v11107
        %v11127 = vpack.c.b16 %v11110, %v11109
        %v11128 = vpack.c.b16 %v11112, %v11111
        %v11161 = vunpack.c.l.b16 %v11065
        %v11162 = vunpack.c.l.b16 %v11066
        %v11163 = vunpack.c.l.b16 %v11067
        %v11164 = vunpack.c.l.b16 %v11068
        %v11165 = vunpack.c.l.b16 %v11069
        %v11166 = vunpack.c.l.b16 %v11070
        %v11167 = vunpack.c.l.b16 %v11071
        %v11168 = vunpack.c.l.b16 %v11072
        %v11169 = vunpack.c.l.b16 %v11073
        %v11170 = vunpack.c.l.b16 %v11074
        %v11171 = vunpack.c.l.b16 %v11075
        %v11172 = vunpack.c.l.b16 %v11076
        %v11173 = vunpack.c.l.b16 %v11077
        %v11174 = vunpack.c.l.b16 %v11078
        %v11175 = vunpack.c.l.b16 %v11079
        %v11176 = vunpack.c.l.b16 %v11080
        %v11177 = vpack.c.b16 %v11162, %v11161
        %v11178 = vpack.c.b16 %v11164, %v11163
        %v11179 = vpack.c.b16 %v11166, %v11165
        %v11180 = vpack.c.b16 %v11168, %v11167
        %v11181 = vpack.c.b16 %v11170, %v11169
        %v11182 = vpack.c.b16 %v11172, %v11171
        %v11183 = vpack.c.b16 %v11174, %v11173
        %v11184 = vpack.c.b16 %v11176, %v11175
        %11193 = vmatprep.subr.bf16.mxu0 0
        %11194 = vmatpush1.bf16.msra.mxu0 %v11184
        %11195 = vmatprep.subr.bf16.mxu0 0
        %11196 = vmatpush1.bf16.msra.mxu0 %v11183
        %11197 = vmatprep.subr.bf16.mxu0 0
        %11198 = vmatpush1.bf16.msra.mxu0 %v11182
        %11199 = vmatprep.subr.bf16.mxu0 0
        %11200 = vmatpush1.bf16.msra.mxu0 %v11181
        %11201 = vmatprep.subr.bf16.mxu0 0
        %11202 = vmatpush1.bf16.msra.mxu0 %v11180
        %11203 = vmatprep.subr.bf16.mxu0 0
        %11204 = vmatpush1.bf16.msra.mxu0 %v11179
        %11205 = vmatprep.subr.bf16.mxu0 0
        %11206 = vmatpush1.bf16.msra.mxu0 %v11178
        %11207 = vmatprep.subr.bf16.mxu0 0
        %11208 = vmatpush1.bf16.msra.mxu0 %v11177
        %11209 = vmatprep.subr.bf16.mxu0 0
        %11210 = vmatpush2.bf16.msra.mxu0 0
        %11211 = vmatprep.subr.bf16.mxu0 0
        %11212 = vmatpush2.bf16.msra.mxu0 0
        %11213 = vmatprep.subr.bf16.mxu0 0
        %11214 = vmatpush2.bf16.msra.mxu0 0
        %11215 = vmatprep.subr.bf16.mxu0 0
        %11216 = vmatpush2.bf16.msra.mxu0 0
        %11217 = vmatprep.subr.bf16.mxu0 0
        %11218 = vmatpush2.bf16.msra.mxu0 0
        %11219 = vmatprep.subr.bf16.mxu0 0
        %11220 = vmatpush2.bf16.msra.mxu0 0
        %11221 = vmatprep.subr.bf16.mxu0 0
        %11222 = vmatpush2.bf16.msra.mxu0 0
        %11223 = vmatprep.subr.bf16.mxu0 0
        %11224 = vmatpush2.bf16.msra.mxu0 0
        %11225 = vmatprep.mubr.bf16.mxu0 0
        %11226 = vmatmul.mubr.bf16.gmra.mxu0 %v11113
        %v11227 = vpop.f32.mrf.mxu0
        %v11228 = vadd.f32 0.0, %v11227
        %v11229 = vpop.f32.mrf.mxu0
        %v11230 = vpop.f32.mrf.mxu0
        %v11231 = vadd.f32 0.0, %v11230
        %v11232 = vpop.f32.mrf.mxu0
        %11233 = vmatprep.mubr.bf16.mxu0 0
        %11234 = vmatmul.mubr.bf16.gmra.mxu0 %v11114
        %v11235 = vpop.f32.mrf.mxu0
        %v11236 = vadd.f32 0.0, %v11235
        %v11237 = vpop.f32.mrf.mxu0
        %v11238 = vpop.f32.mrf.mxu0
        %v11239 = vadd.f32 0.0, %v11238
        %v11240 = vpop.f32.mrf.mxu0
        %11241 = vmatprep.mubr.bf16.mxu0 0
        %11242 = vmatmul.mubr.bf16.gmra.mxu0 %v11115
        %v11243 = vpop.f32.mrf.mxu0
        %v11244 = vadd.f32 0.0, %v11243
        %v11245 = vpop.f32.mrf.mxu0
        %v11246 = vpop.f32.mrf.mxu0
        %v11247 = vadd.f32 0.0, %v11246
        %v11248 = vpop.f32.mrf.mxu0
        %11249 = vmatprep.mubr.bf16.mxu0 0
        %11250 = vmatmul.mubr.bf16.gmra.mxu0 %v11116
        %v11251 = vpop.f32.mrf.mxu0
        %v11252 = vadd.f32 0.0, %v11251
        %v11253 = vpop.f32.mrf.mxu0
        %v11254 = vpop.f32.mrf.mxu0
        %v11255 = vadd.f32 0.0, %v11254
        %v11256 = vpop.f32.mrf.mxu0
        %11257 = vmatprep.mubr.bf16.mxu0 0
        %11258 = vmatmul.mubr.bf16.gmra.mxu0 %v11117
        %v11259 = vpop.f32.mrf.mxu0
        %v11260 = vadd.f32 0.0, %v11259
        %v11261 = vpop.f32.mrf.mxu0
        %v11262 = vpop.f32.mrf.mxu0
        %v11263 = vadd.f32 0.0, %v11262
        %v11264 = vpop.f32.mrf.mxu0
        %11265 = vmatprep.mubr.bf16.mxu0 0
        %11266 = vmatmul.mubr.bf16.gmra.mxu0 %v11118
        %v11267 = vpop.f32.mrf.mxu0
        %v11268 = vadd.f32 0.0, %v11267
        %v11269 = vpop.f32.mrf.mxu0
        %v11270 = vpop.f32.mrf.mxu0
        %v11271 = vadd.f32 0.0, %v11270
        %v11272 = vpop.f32.mrf.mxu0
        %11273 = vmatprep.mubr.bf16.mxu0 0
        %11274 = vmatmul.mubr.bf16.gmra.mxu0 %v11119
        %v11275 = vpop.f32.mrf.mxu0
        %v11276 = vadd.f32 0.0, %v11275
        %v11277 = vpop.f32.mrf.mxu0
        %v11278 = vpop.f32.mrf.mxu0
        %v11279 = vadd.f32 0.0, %v11278
        %v11280 = vpop.f32.mrf.mxu0
        %11281 = vmatprep.mubr.bf16.mxu0 0
        %11282 = vmatmul.mubr.bf16.gmra.mxu0 %v11120
        %v11283 = vpop.f32.mrf.mxu0
        %v11284 = vadd.f32 0.0, %v11283
        %v11285 = vpop.f32.mrf.mxu0
        %v11286 = vpop.f32.mrf.mxu0
        %v11287 = vadd.f32 0.0, %v11286
        %v11288 = vpop.f32.mrf.mxu0
        %11289 = vmatprep.mubr.bf16.mxu0 0
        %11290 = vmatmul.mubr.bf16.gmra.mxu0 %v11121
        %v11291 = vpop.f32.mrf.mxu0
        %v11292 = vadd.f32 0.0, %v11291
        %v11293 = vpop.f32.mrf.mxu0
        %v11294 = vpop.f32.mrf.mxu0
        %v11295 = vadd.f32 0.0, %v11294
        %v11296 = vpop.f32.mrf.mxu0
        %11297 = vmatprep.mubr.bf16.mxu0 0
        %11298 = vmatmul.mubr.bf16.gmra.mxu0 %v11122
        %v11299 = vpop.f32.mrf.mxu0
        %v11300 = vadd.f32 0.0, %v11299
        %v11301 = vpop.f32.mrf.mxu0
        %v11302 = vpop.f32.mrf.mxu0
        %v11303 = vadd.f32 0.0, %v11302
        %v11304 = vpop.f32.mrf.mxu0
        %11305 = vmatprep.mubr.bf16.mxu0 0
        %11306 = vmatmul.mubr.bf16.gmra.mxu0 %v11123
        %v11307 = vpop.f32.mrf.mxu0
        %v11308 = vadd.f32 0.0, %v11307
        %v11309 = vpop.f32.mrf.mxu0
        %v11310 = vpop.f32.mrf.mxu0
        %v11311 = vadd.f32 0.0, %v11310
        %v11312 = vpop.f32.mrf.mxu0
        %11313 = vmatprep.mubr.bf16.mxu0 0
        %11314 = vmatmul.mubr.bf16.gmra.mxu0 %v11124
        %v11315 = vpop.f32.mrf.mxu0
        %v11316 = vadd.f32 0.0, %v11315
        %v11317 = vpop.f32.mrf.mxu0
        %v11318 = vpop.f32.mrf.mxu0
        %v11319 = vadd.f32 0.0, %v11318
        %v11320 = vpop.f32.mrf.mxu0
        %11321 = vmatprep.mubr.bf16.mxu0 0
        %11322 = vmatmul.mubr.bf16.gmra.mxu0 %v11125
        %v11323 = vpop.f32.mrf.mxu0
        %v11324 = vadd.f32 0.0, %v11323
        %v11325 = vpop.f32.mrf.mxu0
        %v11326 = vpop.f32.mrf.mxu0
        %v11327 = vadd.f32 0.0, %v11326
        %v11328 = vpop.f32.mrf.mxu0
        %11329 = vmatprep.mubr.bf16.mxu0 0
        %11330 = vmatmul.mubr.bf16.gmra.mxu0 %v11126
        %v11331 = vpop.f32.mrf.mxu0
        %v11332 = vadd.f32 0.0, %v11331
        %v11333 = vpop.f32.mrf.mxu0
        %v11334 = vpop.f32.mrf.mxu0
        %v11335 = vadd.f32 0.0, %v11334
        %v11336 = vpop.f32.mrf.mxu0
        %11337 = vmatprep.mubr.bf16.mxu0 0
        %11338 = vmatmul.mubr.bf16.gmra.mxu0 %v11127
        %v11339 = vpop.f32.mrf.mxu0
        %v11340 = vadd.f32 0.0, %v11339
        %v11341 = vpop.f32.mrf.mxu0
        %v11342 = vpop.f32.mrf.mxu0
        %v11343 = vadd.f32 0.0, %v11342
        %v11344 = vpop.f32.mrf.mxu0
        %11345 = vmatprep.mubr.bf16.mxu0 0
        %11346 = vmatmul.mubr.bf16.gmra.mxu0 %v11128
        %v11347 = vpop.f32.mrf.mxu0
        %v11348 = vadd.f32 0.0, %v11347
        %v11349 = vpop.f32.mrf.mxu0
        %v11350 = vpop.f32.mrf.mxu0
        %v11351 = vadd.f32 0.0, %v11350
        %v11352 = vpop.f32.mrf.mxu0
        %11353 = vdwg.mxu0
        %v11354 = vadd.f32 %v10856, %v11228
        %v11355 = vadd.f32 %v10857, %v11231
        %v11356 = vadd.f32 %v10858, %v11236
        %v11357 = vadd.f32 %v10859, %v11239
        %v11358 = vadd.f32 %v10860, %v11244
        %v11359 = vadd.f32 %v10861, %v11247
        %v11360 = vadd.f32 %v10862, %v11252
        %v11361 = vadd.f32 %v10863, %v11255
        %v11362 = vadd.f32 %v10864, %v11260
        %v11363 = vadd.f32 %v10865, %v11263
        %v11364 = vadd.f32 %v10866, %v11268
        %v11365 = vadd.f32 %v10867, %v11271
        %v11366 = vadd.f32 %v10868, %v11276
        %v11367 = vadd.f32 %v10869, %v11279
        %v11368 = vadd.f32 %v10870, %v11284
        %v11369 = vadd.f32 %v10871, %v11287
        %v11370 = vadd.f32 %v10872, %v11292
        %v11371 = vadd.f32 %v10873, %v11295
        %v11372 = vadd.f32 %v10874, %v11300
        %v11373 = vadd.f32 %v10875, %v11303
        %v11374 = vadd.f32 %v10876, %v11308
        %v11375 = vadd.f32 %v10877, %v11311
        %v11376 = vadd.f32 %v10878, %v11316
        %v11377 = vadd.f32 %v10879, %v11319
        %v11378 = vadd.f32 %v10880, %v11324
        %v11379 = vadd.f32 %v10881, %v11327
        %v11380 = vadd.f32 %v10882, %v11332
        %v11381 = vadd.f32 %v10883, %v11335
        %v11382 = vadd.f32 %v10884, %v11340
        %v11383 = vadd.f32 %v10885, %v11343
        %v11384 = vadd.f32 %v10886, %v11348
        %v11385 = vadd.f32 %v10887, %v11351
        %v11386 = vld [vmem:[%s4] sm:$0x1]
        %v11388 = vlaneseq
        %v11389 = vshrl.u32 %v11388, 7
        %v11390 = vsub.s32 0, %v11389
        %v11391 = vrot.slane %v11386, %v11390
        %v11393 = vadd.f32 %v11354, %v11391
        %v11394 = vadd.f32 %v11355, %v11391
        %v11395 = vadd.f32 %v11356, %v11391
        %v11396 = vadd.f32 %v11357, %v11391
        %v11397 = vadd.f32 %v11358, %v11391
        %v11398 = vadd.f32 %v11359, %v11391
        %v11399 = vadd.f32 %v11360, %v11391
        %v11400 = vadd.f32 %v11361, %v11391
        %v11401 = vadd.f32 %v11362, %v11391
        %v11402 = vadd.f32 %v11363, %v11391
        %v11403 = vadd.f32 %v11364, %v11391
        %v11404 = vadd.f32 %v11365, %v11391
        %v11405 = vadd.f32 %v11366, %v11391
        %v11406 = vadd.f32 %v11367, %v11391
        %v11407 = vadd.f32 %v11368, %v11391
        %v11408 = vadd.f32 %v11369, %v11391
        %v11409 = vadd.f32 %v11370, %v11391
        %v11410 = vadd.f32 %v11371, %v11391
        %v11411 = vadd.f32 %v11372, %v11391
        %v11412 = vadd.f32 %v11373, %v11391
        %v11413 = vadd.f32 %v11374, %v11391
        %v11414 = vadd.f32 %v11375, %v11391
        %v11415 = vadd.f32 %v11376, %v11391
        %v11416 = vadd.f32 %v11377, %v11391
        %v11417 = vadd.f32 %v11378, %v11391
        %v11418 = vadd.f32 %v11379, %v11391
        %v11419 = vadd.f32 %v11380, %v11391
        %v11420 = vadd.f32 %v11381, %v11391
        %v11421 = vadd.f32 %v11382, %v11391
        %v11422 = vadd.f32 %v11383, %v11391
        %v11423 = vadd.f32 %v11384, %v11391
        %v11424 = vadd.f32 %v11385, %v11391
        %11425 = vxpose.xlu0.b32.start [1/16] %v11393, 128
        %11426 = vxpose.xlu0.b32.cont [2/16] %v11394, 128
        %11427 = vxpose.xlu0.b32.cont [3/16] %v11395, 128
        %11428 = vxpose.xlu0.b32.cont [4/16] %v11396, 128
        %11429 = vxpose.xlu0.b32.cont [5/16] %v11397, 128
        %11430 = vxpose.xlu0.b32.cont [6/16] %v11398, 128
        %11431 = vxpose.xlu0.b32.cont [7/16] %v11399, 128
        %11432 = vxpose.xlu0.b32.cont [8/16] %v11400, 128
        %11433 = vxpose.xlu0.b32.cont [9/16] %v11401, 128
        %11434 = vxpose.xlu0.b32.cont [10/16] %v11402, 128
        %11435 = vxpose.xlu0.b32.cont [11/16] %v11403, 128
        %11436 = vxpose.xlu0.b32.cont [12/16] %v11404, 128
        %11437 = vxpose.xlu0.b32.cont [13/16] %v11405, 128
        %11438 = vxpose.xlu0.b32.cont [14/16] %v11406, 128
        %11439 = vxpose.xlu0.b32.cont [15/16] %v11407, 128
        %11440 = vxpose.xlu0.b32.end [16/16] %v11408, 128
        %v11441 = vpop.trf.xlu0
        %v11442 = vpop.trf.xlu0
        %v11443 = vpop.trf.xlu0
        %v11444 = vpop.trf.xlu0
        %v11445 = vpop.trf.xlu0
        %v11446 = vpop.trf.xlu0
        %v11447 = vpop.trf.xlu0
        %v11448 = vpop.trf.xlu0
        %v11449 = vpop.trf.xlu0
        %v11450 = vpop.trf.xlu0
        %v11451 = vpop.trf.xlu0
        %v11452 = vpop.trf.xlu0
        %v11453 = vpop.trf.xlu0
        %v11454 = vpop.trf.xlu0
        %v11455 = vpop.trf.xlu0
        %v11456 = vpop.trf.xlu0
        %11457 = vxpose.xlu0.b32.start [1/16] %v11409, 128
        %11458 = vxpose.xlu0.b32.cont [2/16] %v11410, 128
        %11459 = vxpose.xlu0.b32.cont [3/16] %v11411, 128
        %11460 = vxpose.xlu0.b32.cont [4/16] %v11412, 128
        %11461 = vxpose.xlu0.b32.cont [5/16] %v11413, 128
        %11462 = vxpose.xlu0.b32.cont [6/16] %v11414, 128
        %11463 = vxpose.xlu0.b32.cont [7/16] %v11415, 128
        %11464 = vxpose.xlu0.b32.cont [8/16] %v11416, 128
        %11465 = vxpose.xlu0.b32.cont [9/16] %v11417, 128
        %11466 = vxpose.xlu0.b32.cont [10/16] %v11418, 128
        %11467 = vxpose.xlu0.b32.cont [11/16] %v11419, 128
        %11468 = vxpose.xlu0.b32.cont [12/16] %v11420, 128
        %11469 = vxpose.xlu0.b32.cont [13/16] %v11421, 128
        %11470 = vxpose.xlu0.b32.cont [14/16] %v11422, 128
        %11471 = vxpose.xlu0.b32.cont [15/16] %v11423, 128
        %11472 = vxpose.xlu0.b32.end [16/16] %v11424, 128
        %v11473 = vpop.trf.xlu0
        %v11474 = vpop.trf.xlu0
        %v11475 = vpop.trf.xlu0
        %v11476 = vpop.trf.xlu0
        %v11477 = vpop.trf.xlu0
        %v11478 = vpop.trf.xlu0
        %v11479 = vpop.trf.xlu0
        %v11480 = vpop.trf.xlu0
        %v11481 = vpop.trf.xlu0
        %v11482 = vpop.trf.xlu0
        %v11483 = vpop.trf.xlu0
        %v11484 = vpop.trf.xlu0
        %v11485 = vpop.trf.xlu0
        %v11486 = vpop.trf.xlu0
        %v11487 = vpop.trf.xlu0
        %v11488 = vpop.trf.xlu0
        %v11489 = vunpack.c.l.bf16 %v296
        %v11490 = vunpack.c.h.bf16 %v296
        %v11491 = vunpack.c.l.bf16 %v297
        %v11492 = vunpack.c.h.bf16 %v297
        %v11493 = vunpack.c.l.bf16 %v298
        %v11494 = vunpack.c.h.bf16 %v298
        %v11495 = vunpack.c.l.bf16 %v299
        %v11496 = vunpack.c.h.bf16 %v299
        %v11497 = vunpack.c.l.bf16 %v300
        %v11498 = vunpack.c.h.bf16 %v300
        %v11499 = vunpack.c.l.bf16 %v301
        %v11500 = vunpack.c.h.bf16 %v301
        %v11501 = vunpack.c.l.bf16 %v302
        %v11502 = vunpack.c.h.bf16 %v302
        %v11503 = vunpack.c.l.bf16 %v303
        %v11504 = vunpack.c.h.bf16 %v303
        %v11505 = vunpack.c.l.bf16 %v304
        %v11506 = vunpack.c.h.bf16 %v304
        %v11507 = vunpack.c.l.bf16 %v305
        %v11508 = vunpack.c.h.bf16 %v305
        %v11509 = vunpack.c.l.bf16 %v306
        %v11510 = vunpack.c.h.bf16 %v306
        %v11511 = vunpack.c.l.bf16 %v307
        %v11512 = vunpack.c.h.bf16 %v307
        %v11513 = vunpack.c.l.bf16 %v308
        %v11514 = vunpack.c.h.bf16 %v308
        %v11515 = vunpack.c.l.bf16 %v309
        %v11516 = vunpack.c.h.bf16 %v309
        %v11517 = vunpack.c.l.bf16 %v310
        %v11518 = vunpack.c.h.bf16 %v310
        %v11519 = vunpack.c.l.bf16 %v311
        %v11520 = vunpack.c.h.bf16 %v311
        %v11521 = vadd.f32 %v11441, %v11489
        %v11522 = vadd.f32 %v11473, %v11490
        %v11523 = vadd.f32 %v11442, %v11491
        %v11524 = vadd.f32 %v11474, %v11492
        %v11525 = vadd.f32 %v11443, %v11493
        %v11526 = vadd.f32 %v11475, %v11494
        %v11527 = vadd.f32 %v11444, %v11495
        %v11528 = vadd.f32 %v11476, %v11496
        %v11529 = vadd.f32 %v11445, %v11497
        %v11530 = vadd.f32 %v11477, %v11498
        %v11531 = vadd.f32 %v11446, %v11499
        %v11532 = vadd.f32 %v11478, %v11500
        %v11533 = vadd.f32 %v11447, %v11501
        %v11534 = vadd.f32 %v11479, %v11502
        %v11535 = vadd.f32 %v11448, %v11503
        %v11536 = vadd.f32 %v11480, %v11504
        %v11537 = vadd.f32 %v11449, %v11505
        %v11538 = vadd.f32 %v11481, %v11506
        %v11539 = vadd.f32 %v11450, %v11507
        %v11540 = vadd.f32 %v11482, %v11508
        %v11541 = vadd.f32 %v11451, %v11509
        %v11542 = vadd.f32 %v11483, %v11510
        %v11543 = vadd.f32 %v11452, %v11511
        %v11544 = vadd.f32 %v11484, %v11512
        %v11545 = vadd.f32 %v11453, %v11513
        %v11546 = vadd.f32 %v11485, %v11514
        %v11547 = vadd.f32 %v11454, %v11515
        %v11548 = vadd.f32 %v11486, %v11516
        %v11549 = vadd.f32 %v11455, %v11517
        %v11550 = vadd.f32 %v11487, %v11518
        %v11551 = vadd.f32 %v11456, %v11519
        %v11552 = vadd.f32 %v11488, %v11520
        %v11553 = vpack.c.bf16 %v11523, %v11521
        %v11554 = vpack.c.bf16 %v11524, %v11522
        %v11555 = vpack.c.bf16 %v11527, %v11525
        %v11556 = vpack.c.bf16 %v11528, %v11526
        %v11557 = vpack.c.bf16 %v11531, %v11529
        %v11558 = vpack.c.bf16 %v11532, %v11530
        %v11559 = vpack.c.bf16 %v11535, %v11533
        %v11560 = vpack.c.bf16 %v11536, %v11534
        %v11561 = vpack.c.bf16 %v11539, %v11537
        %v11562 = vpack.c.bf16 %v11540, %v11538
        %v11563 = vpack.c.bf16 %v11543, %v11541
        %v11564 = vpack.c.bf16 %v11544, %v11542
        %v11565 = vpack.c.bf16 %v11547, %v11545
        %v11566 = vpack.c.bf16 %v11548, %v11546
        %v11567 = vpack.c.bf16 %v11551, %v11549
        %v11568 = vpack.c.bf16 %v11552, %v11550
        %v11585 = vunpack.c.l.b16 %v11553
        %v11586 = vunpack.c.l.b16 %v11554
        %v11587 = vunpack.c.h.b16 %v11553
        %v11588 = vunpack.c.h.b16 %v11554
        %v11589 = vunpack.c.l.b16 %v11555
        %v11590 = vunpack.c.l.b16 %v11556
        %v11591 = vunpack.c.h.b16 %v11555
        %v11592 = vunpack.c.h.b16 %v11556
        %v11593 = vunpack.c.l.b16 %v11557
        %v11594 = vunpack.c.l.b16 %v11558
        %v11595 = vunpack.c.h.b16 %v11557
        %v11596 = vunpack.c.h.b16 %v11558
        %v11597 = vunpack.c.l.b16 %v11559
        %v11598 = vunpack.c.l.b16 %v11560
        %v11599 = vunpack.c.h.b16 %v11559
        %v11600 = vunpack.c.h.b16 %v11560
        %v11601 = vunpack.c.l.b16 %v11561
        %v11602 = vunpack.c.l.b16 %v11562
        %v11603 = vunpack.c.h.b16 %v11561
        %v11604 = vunpack.c.h.b16 %v11562
        %v11605 = vunpack.c.l.b16 %v11563
        %v11606 = vunpack.c.l.b16 %v11564
        %v11607 = vunpack.c.h.b16 %v11563
        %v11608 = vunpack.c.h.b16 %v11564
        %v11609 = vunpack.c.l.b16 %v11565
        %v11610 = vunpack.c.l.b16 %v11566
        %v11611 = vunpack.c.h.b16 %v11565
        %v11612 = vunpack.c.h.b16 %v11566
        %v11613 = vunpack.c.l.b16 %v11567
        %v11614 = vunpack.c.l.b16 %v11568
        %v11615 = vunpack.c.h.b16 %v11567
        %v11616 = vunpack.c.h.b16 %v11568
        %v11617 = vpack.c.b16 %v11586, %v11585
        %v11618 = vpack.c.b16 %v11588, %v11587
        %v11619 = vpack.c.b16 %v11590, %v11589
        %v11620 = vpack.c.b16 %v11592, %v11591
        %v11621 = vpack.c.b16 %v11594, %v11593
        %v11622 = vpack.c.b16 %v11596, %v11595
        %v11623 = vpack.c.b16 %v11598, %v11597
        %v11624 = vpack.c.b16 %v11600, %v11599
        %v11625 = vpack.c.b16 %v11602, %v11601
        %v11626 = vpack.c.b16 %v11604, %v11603
        %v11627 = vpack.c.b16 %v11606, %v11605
        %v11628 = vpack.c.b16 %v11608, %v11607
        %v11629 = vpack.c.b16 %v11610, %v11609
        %v11630 = vpack.c.b16 %v11612, %v11611
        %v11631 = vpack.c.b16 %v11614, %v11613
        %v11632 = vpack.c.b16 %v11616, %v11615
        %11649 = vst [vmem:[%s294] sm:$0xff] %v11617
        %11650 = vst [vmem:[%s294 + $0x8] sm:$0xff] %v11618
        %11651 = vst [vmem:[%s294 + $0x10] sm:$0xff] %v11619
        %11652 = vst [vmem:[%s294 + $0x18] sm:$0xff] %v11620
        %11653 = vst [vmem:[%s294 + $0x20] sm:$0xff] %v11621
        %11654 = vst [vmem:[%s294 + $0x28] sm:$0xff] %v11622
        %11655 = vst [vmem:[%s294 + $0x30] sm:$0xff] %v11623
        %11656 = vst [vmem:[%s294 + $0x38] sm:$0xff] %v11624
        %11657 = vst [vmem:[%s294 + $0x40] sm:$0xff] %v11625
        %11658 = vst [vmem:[%s294 + $0x48] sm:$0xff] %v11626
        %11659 = vst [vmem:[%s294 + $0x50] sm:$0xff] %v11627
        %11660 = vst [vmem:[%s294 + $0x58] sm:$0xff] %v11628
        %11661 = vst [vmem:[%s294 + $0x60] sm:$0xff] %v11629
        %11662 = vst [vmem:[%s294 + $0x68] sm:$0xff] %v11630
        %11663 = vst [vmem:[%s294 + $0x70] sm:$0xff] %v11631
        %11664 = vst [vmem:[%s294 + $0x78] sm:$0xff] %v11632
        %v11665 = vmax.f32 %v11521, 0.0
        %v11666 = vmax.f32 %v11522, 0.0
        %v11667 = vmax.f32 %v11523, 0.0
        %v11668 = vmax.f32 %v11524, 0.0
        %v11669 = vmax.f32 %v11525, 0.0
        %v11670 = vmax.f32 %v11526, 0.0
        %v11671 = vmax.f32 %v11527, 0.0
        %v11672 = vmax.f32 %v11528, 0.0
        %v11673 = vmax.f32 %v11529, 0.0
        %v11674 = vmax.f32 %v11530, 0.0
        %v11675 = vmax.f32 %v11531, 0.0
        %v11676 = vmax.f32 %v11532, 0.0
        %v11677 = vmax.f32 %v11533, 0.0
        %v11678 = vmax.f32 %v11534, 0.0
        %v11679 = vmax.f32 %v11535, 0.0
        %v11680 = vmax.f32 %v11536, 0.0
        %v11681 = vmax.f32 %v11537, 0.0
        %v11682 = vmax.f32 %v11538, 0.0
        %v11683 = vmax.f32 %v11539, 0.0
        %v11684 = vmax.f32 %v11540, 0.0
        %v11685 = vmax.f32 %v11541, 0.0
        %v11686 = vmax.f32 %v11542, 0.0
        %v11687 = vmax.f32 %v11543, 0.0
        %v11688 = vmax.f32 %v11544, 0.0
        %v11689 = vmax.f32 %v11545, 0.0
        %v11690 = vmax.f32 %v11546, 0.0
        %v11691 = vmax.f32 %v11547, 0.0
        %v11692 = vmax.f32 %v11548, 0.0
        %v11693 = vmax.f32 %v11549, 0.0
        %v11694 = vmax.f32 %v11550, 0.0
        %v11695 = vmax.f32 %v11551, 0.0
        %v11696 = vmax.f32 %v11552, 0.0
        %v11697 = vpack.c.bf16 %v11667, %v11665
        %v11698 = vpack.c.bf16 %v11668, %v11666
        %v11699 = vpack.c.bf16 %v11671, %v11669
        %v11700 = vpack.c.bf16 %v11672, %v11670
        %v11701 = vpack.c.bf16 %v11675, %v11673
        %v11702 = vpack.c.bf16 %v11676, %v11674
        %v11703 = vpack.c.bf16 %v11679, %v11677
        %v11704 = vpack.c.bf16 %v11680, %v11678
        %v11705 = vpack.c.bf16 %v11683, %v11681
        %v11706 = vpack.c.bf16 %v11684, %v11682
        %v11707 = vpack.c.bf16 %v11687, %v11685
        %v11708 = vpack.c.bf16 %v11688, %v11686
        %v11709 = vpack.c.bf16 %v11691, %v11689
        %v11710 = vpack.c.bf16 %v11692, %v11690
        %v11711 = vpack.c.bf16 %v11695, %v11693
        %v11712 = vpack.c.bf16 %v11696, %v11694
        %v11729 = vunpack.c.l.b16 %v11697
        %v11730 = vunpack.c.l.b16 %v11698
        %v11731 = vunpack.c.h.b16 %v11697
        %v11732 = vunpack.c.h.b16 %v11698
        %v11733 = vunpack.c.l.b16 %v11699
        %v11734 = vunpack.c.l.b16 %v11700
        %v11735 = vunpack.c.h.b16 %v11699
        %v11736 = vunpack.c.h.b16 %v11700
        %v11737 = vunpack.c.l.b16 %v11701
        %v11738 = vunpack.c.l.b16 %v11702
        %v11739 = vunpack.c.h.b16 %v11701
        %v11740 = vunpack.c.h.b16 %v11702
        %v11741 = vunpack.c.l.b16 %v11703
        %v11742 = vunpack.c.l.b16 %v11704
        %v11743 = vunpack.c.h.b16 %v11703
        %v11744 = vunpack.c.h.b16 %v11704
        %v11745 = vunpack.c.l.b16 %v11705
        %v11746 = vunpack.c.l.b16 %v11706
        %v11747 = vunpack.c.h.b16 %v11705
        %v11748 = vunpack.c.h.b16 %v11706
        %v11749 = vunpack.c.l.b16 %v11707
        %v11750 = vunpack.c.l.b16 %v11708
        %v11751 = vunpack.c.h.b16 %v11707
        %v11752 = vunpack.c.h.b16 %v11708
        %v11753 = vunpack.c.l.b16 %v11709
        %v11754 = vunpack.c.l.b16 %v11710
        %v11755 = vunpack.c.h.b16 %v11709
        %v11756 = vunpack.c.h.b16 %v11710
        %v11757 = vunpack.c.l.b16 %v11711
        %v11758 = vunpack.c.l.b16 %v11712
        %v11759 = vunpack.c.h.b16 %v11711
        %v11760 = vunpack.c.h.b16 %v11712
        %v11761 = vpack.c.b16 %v11730, %v11729
        %v11762 = vpack.c.b16 %v11732, %v11731
        %v11763 = vpack.c.b16 %v11734, %v11733
        %v11764 = vpack.c.b16 %v11736, %v11735
        %v11765 = vpack.c.b16 %v11738, %v11737
        %v11766 = vpack.c.b16 %v11740, %v11739
        %v11767 = vpack.c.b16 %v11742, %v11741
        %v11768 = vpack.c.b16 %v11744, %v11743
        %v11769 = vpack.c.b16 %v11746, %v11745
        %v11770 = vpack.c.b16 %v11748, %v11747
        %v11771 = vpack.c.b16 %v11750, %v11749
        %v11772 = vpack.c.b16 %v11752, %v11751
        %v11773 = vpack.c.b16 %v11754, %v11753
        %v11774 = vpack.c.b16 %v11756, %v11755
        %v11775 = vpack.c.b16 %v11758, %v11757
        %v11776 = vpack.c.b16 %v11760, %v11759
        %11793 = vst [vmem:[%s289] sm:$0xff] %v11761
        %11794 = vst [vmem:[%s289 + $0x8] sm:$0xff] %v11762
        %11795 = vst [vmem:[%s289 + $0x10] sm:$0xff] %v11763
        %11796 = vst [vmem:[%s289 + $0x18] sm:$0xff] %v11764
        %11797 = vst [vmem:[%s289 + $0x20] sm:$0xff] %v11765
        %11798 = vst [vmem:[%s289 + $0x28] sm:$0xff] %v11766
        %11799 = vst [vmem:[%s289 + $0x30] sm:$0xff] %v11767
        %11800 = vst [vmem:[%s289 + $0x38] sm:$0xff] %v11768
        %11801 = vst [vmem:[%s289 + $0x40] sm:$0xff] %v11769
        %11802 = vst [vmem:[%s289 + $0x48] sm:$0xff] %v11770
        %11803 = vst [vmem:[%s289 + $0x50] sm:$0xff] %v11771
        %11804 = vst [vmem:[%s289 + $0x58] sm:$0xff] %v11772
        %11805 = vst [vmem:[%s289 + $0x60] sm:$0xff] %v11773
        %11806 = vst [vmem:[%s289 + $0x68] sm:$0xff] %v11774
        %11807 = vst [vmem:[%s289 + $0x70] sm:$0xff] %v11775
        %11808 = vst [vmem:[%s289 + $0x78] sm:$0xff] %v11776
        %p11809 = scmp.lt.s32.totalorder %s20, 1
        %s11810 = scalar_select %p11809, %s20, 1
        %s11811 = smul.addr %s11810, 32
        %s11812 = smul.addr %s11811, 4
        %s11813 = scalar_lea.vmem %s5, %s11812
        %p11814 = scmp.lt.s32.totalorder %s20, 1
        %s11815 = scalar_select %p11814, %s20, 1
        %s11816 = smul.addr %s11815, 32
        %s11817 = smul.addr %s11816, 4
        %s11818 = scalar_lea.vmem %s6, %s11817
        // Predicated region
        $region49: #{basic_block_forward.1} parent=39 // pred_check
          %p11819 = pneg %p148
        $region50: #{basic_block_forward.1} parent=39 // pred_check_branch
          %11821 = sbr.rel (%p11819) target = $region52
        $region51: #{basic_block_forward.1} parent=39 // pred_region
          _
        $region52: #{basic_block_forward.1} parent=39 // pred_fallthru
          _
        // Predicated region
        $region53: #{basic_block_forward.1} parent=39 // pred_check
          %p11822 = pneg %p174
        $region54: #{basic_block_forward.1} parent=39 // pred_check_branch
          %11824 = sbr.rel (%p11822) target = $region56
        $region55: #{basic_block_forward.1} parent=39 // pred_region
          _
        $region56: #{basic_block_forward.1} parent=39 // pred_fallthru
          _
      $region40: #{basic_block_forward.1} parent=5 // pred_fallthru
        _
      %p11825 = scmp.le.s32.totalorder 2, %s15
      // Predicated region
      $region57: #{basic_block_forward.1} parent=5 // pred_check
        %p11826 = pneg %p11825
      $region58: #{basic_block_forward.1} parent=5 // pred_check_branch
        %11828 = sbr.rel (%p11826) target = $region60
      $region59: #{basic_block_forward.1} parent=5 // pred_region
        %s11829 = ssub.s32 %s15, 2
        // Predicated region
        $region61: #{basic_block_forward.1} parent=59 // pred_check
          %p11830 = pneg %p154
        $region62: #{basic_block_forward.1} parent=59 // pred_check_branch
          %11832 = sbr.rel (%p11830) target = $region64
        $region63: #{basic_block_forward.1} parent=59 // pred_region
          %p11833 = scmp.lt.s32.totalorder %s21, 1
          %s11834 = scalar_select %p11833, %s21, 1
          %s11835 = smul.addr %s11834, 32
          %s11836 = smul.addr %s11835, 4
          %s11837 = scalar_lea.vmem %s5, %s11836
        $region64: #{basic_block_forward.1} parent=59 // pred_fallthru
          _
        // Predicated region
        $region65: #{basic_block_forward.1} parent=59 // pred_check
          %p11838 = pneg %p180
        $region66: #{basic_block_forward.1} parent=59 // pred_check_branch
          %11840 = sbr.rel (%p11838) target = $region68
        $region67: #{basic_block_forward.1} parent=59 // pred_region
          %p11841 = scmp.lt.s32.totalorder %s21, 1
          %s11842 = scalar_select %p11841, %s21, 1
          %s11843 = smul.addr %s11842, 32
          %s11844 = smul.addr %s11843, 4
          %s11845 = scalar_lea.vmem %s6, %s11844
        $region68: #{basic_block_forward.1} parent=59 // pred_fallthru
          _
      $region60: #{basic_block_forward.1} parent=5 // pred_fallthru
        _
    $region6: #{basic_block_forward.1} parent=1 // loop_footer
      %s19 = sadd.s32 1, %s15
    $region7: #{basic_block_forward.1} parent=1 // loop_footer_branch
      %14 = sbr.rel target = $region3
    $region8: #{basic_block_forward.1} parent=1 // loop_exit
      _
    %11846 = vsyncpa [#allocation5], 1
    %s11847 = scalar_lea.sflag [#allocation5], 1
    %11848 = vsyncpa %s11847, 1
    %11849 = vsyncpa [#allocation7], 1

</llo_original>
